<compile_context>
chip_gen: v7x
topology: tpu7x:2x2x1
jax: 0.10.0
libtpu: 0.0.40
codegen_flags: <defaults>
</compile_context>

<pallas_src>
import functools

import jax
import jax.numpy as jnp
from jax.experimental import pallas as pl
from jax.experimental.pallas import tpu as pltpu


def _transition_up_kernel(x_ref, w_ref, b_ref, o_ref, *, cout, rows, width):
    # x_ref: (1, Cin, S)            S = rows*width, contiguous NCHW input rows
    # w_ref: (4*Cout, Cin)          rows ordered (ki, kj, o), o fastest
    # b_ref: (4*Cout, 1)            bias tiled over the 4 kernel positions
    # o_ref: (1, Cout, rows, 4*W)   rows 2i / 2i+1 are the two lane halves
    x = x_ref[0]                                                 # (Cin, S)
    acc = jnp.dot(w_ref[...], x, preferred_element_type=jnp.float32)
    acc = acc + b_ref[...]                                       # (4*Cout, S)

    # Split into the four (Cout, rows, width) kernel-position slabs.
    a = acc.reshape(4 * cout, rows, width)
    s00 = a[0 * cout:1 * cout]   # ki=0, kj=0
    s01 = a[1 * cout:2 * cout]   # ki=0, kj=1
    s10 = a[2 * cout:3 * cout]   # ki=1, kj=0
    s11 = a[3 * cout:4 * cout]   # ki=1, kj=1

    # kj lane-interleave within each output row: (Cout, rows, 2*width).
    r0 = jnp.stack([s00, s01], axis=-1).reshape(cout, rows, 2 * width)
    r1 = jnp.stack([s10, s11], axis=-1).reshape(cout, rows, 2 * width)

    # Output rows 2i (ki=0) and 2i+1 (ki=1) are adjacent in memory, i.e. the
    # two lane halves of this block row -> no ki row interleave needed.
    o_ref[0, :, :, 0:2 * width] = r0.astype(o_ref.dtype)
    o_ref[0, :, :, 2 * width:4 * width] = r1.astype(o_ref.dtype)


def _vmem_capacity_bytes():
    """Per-core VMEM capacity; conservative (v7x) fallback if unavailable."""
    try:
        info = pltpu.get_tpu_info()
        cap = getattr(info, "vmem_capacity_bytes", None)
        if cap:
            return int(cap)
    except Exception:
        pass
    return 64 * 1024 * 1024


def _vmem_estimate(R, W, Cin, Cout, in_itemsize, out_itemsize):
    """Footprint: double-buffered blocks + f32 acc + ~2 relayout temporaries."""
    S = R * W
    blocks = 2 * Cin * S * in_itemsize                 # input, 2 buffers
    blocks += 2 * 4 * Cout * S * out_itemsize          # output, 2 buffers
    temps = 3 * 4 * Cout * S * 4                       # acc + kj-interleave copies
    consts = 4 * Cout * Cin * in_itemsize + 4 * Cout * 4
    return blocks + temps + consts


def _choose_rows(N, H, W, Cin, Cout, in_itemsize, out_itemsize, budget):
    """Pick input rows per grid step (R).

    Validity: R == H (full blocks), or H % R == 0 with R % 8 == 0 (output
    block sublane rule) and (R*W) % 128 == 0 (flattened input lane rule).
    Prefer the largest valid R whose VMEM footprint fits the budget, but keep
    >= 2 total grid steps when possible (v7x megacore).
    """
    cands = [H]
    for r in range(8, H, 8):
        if H % r == 0 and (r * W) % 128 == 0:
            cands.append(r)

    def est(r):
        return _vmem_estimate(r, W, Cin, Cout, in_itemsize, out_itemsize)

    fitting = [r for r in cands if est(r) <= budget]
    if not fitting:
        return min(cands, key=est)
    r = max(fitting)
    if N * (H // r) < 2:
        smaller = [c for c in fitting if N * (H // c) >= 2]
        if smaller:
            r = max(smaller)
    return r


def transition_up(x_nchw, weight, bias, *, vmem_budget_bytes=None,
                  use_bf16_matmul=False):
    """ConvTranspose2d(kernel_size=2, stride=2) matching PyTorch semantics.

    x_nchw : (N, Cin, H, W)
    weight : (Cin, Cout, 2, 2)   (PyTorch ConvTranspose2d weight layout)
    bias   : (Cout,)
    returns: (N, Cout, 2H, 2W)
    """
    N, Cin, H, W = x_nchw.shape
    Cout = weight.shape[1]
    out_dtype = x_nchw.dtype

    cap = _vmem_capacity_bytes()
    if vmem_budget_bytes is None:
        # Blocks+temps budget: half of physical VMEM, capped (v7x: 32 MiB,
        # v5e/v6e: 64 MiB).
        vmem_budget_bytes = min(cap // 2, 64 * 1024 * 1024)

    in_dtype = jnp.bfloat16 if use_bf16_matmul else x_nchw.dtype
    in_itemsize = jnp.dtype(in_dtype).itemsize
    out_itemsize = jnp.dtype(out_dtype).itemsize

    R = _choose_rows(N, H, W, Cin, Cout, in_itemsize, out_itemsize,
                     vmem_budget_bytes)
    S = R * W
    n_tiles = H // R

    # Free reshape (no transpose): NCHW -> (N, Cin, H*W).
    x3 = x_nchw.reshape(N, Cin, H * W).astype(in_dtype)
    # Weight (Cin, Cout, kh, kw) -> (kh, kw, Cout, Cin) -> (4*Cout, Cin).
    wt = jnp.transpose(weight, (2, 3, 1, 0)).reshape(4 * Cout, Cin)
    wt = wt.astype(in_dtype)
    # Bias tiled over the 4 kernel positions, column vector (lane broadcast).
    b2 = jnp.tile(bias, 4).reshape(4 * Cout, 1).astype(jnp.float32)

    est = _vmem_estimate(R, W, Cin, Cout, in_itemsize, out_itemsize)
    vmem_limit = int(min(max(est + 4 * 1024 * 1024, 16 * 1024 * 1024),
                         int(cap * 0.75)))

    flops = 8 * N * Cout * Cin * H * W
    bytes_accessed = (x3.size * in_itemsize + wt.size * in_itemsize
                      + b2.size * 4 + N * Cout * 4 * H * W * out_itemsize)

    kernel = functools.partial(_transition_up_kernel,
                               cout=Cout, rows=R, width=W)

    out4 = pl.pallas_call(
        kernel,
        out_shape=jax.ShapeDtypeStruct((N, Cout, H, 4 * W), out_dtype),
        grid_spec=pltpu.PrefetchScalarGridSpec(
            num_scalar_prefetch=0,
            grid=(N, n_tiles),
            in_specs=[
                pl.BlockSpec((1, Cin, S), lambda n, t: (n, 0, t)),
                pl.BlockSpec((4 * Cout, Cin), lambda n, t: (0, 0)),
                pl.BlockSpec((4 * Cout, 1), lambda n, t: (0, 0)),
            ],
            out_specs=pl.BlockSpec((1, Cout, R, 4 * W),
                                   lambda n, t: (n, 0, t, 0)),
        ),
        compiler_params=pltpu.CompilerParams(
            dimension_semantics=("parallel", "parallel"),
            vmem_limit_bytes=vmem_limit,
        ),
        cost_estimate=pl.CostEstimate(flops=flops, transcendentals=0,
                                      bytes_accessed=bytes_accessed),
    )(x3, wt, b2)

    # Free, contiguous reshape: (N, Cout, H, 2*2W) -> (N, Cout, 2H, 2W).
    return out4.reshape(N, Cout, 2 * H, 2 * W)


def _reference(x_nchw, weight, bias):
    # Pure-JAX reference for ConvTranspose2d(k=2, s=2): no overlap, so
    # out[n, o, 2i+ki, 2j+kj] = sum_c x[n,c,i,j] * W[c,o,ki,kj] + b[o]
    N, Cin, H, W = x_nchw.shape
    Cout = weight.shape[1]
    y = jnp.einsum("ncij,coab->noiajb", x_nchw, weight)  # (N,Cout,H,2,W,2)
    y = y.reshape(N, Cout, 2 * H, 2 * W) + bias[None, :, None, None]
    return y


if __name__ == "__main__":
    key = jax.random.PRNGKey(0)
    k1, k2, k3 = jax.random.split(key, 3)

    N, Cin, Cout, H, W = 2, 8, 4, 16, 16

    x = jax.random.normal(k1, (N, Cin, H, W), dtype=jnp.float32)
    # Deterministic "init" of ConvTranspose2d params (shapes per nn module).
    weight = jax.random.normal(k2, (Cin, Cout, 2, 2), dtype=jnp.float32) * 0.1
    bias = jax.random.normal(k3, (Cout,), dtype=jnp.float32) * 0.1

    out = transition_up(x, weight, bias)
    out = jax.block_until_ready(out)

    ref = _reference(x, weight, bias)
    assert out.shape == (N, Cout, 2 * H, 2 * W), out.shape
    assert jnp.allclose(out, ref, atol=1e-5, rtol=1e-5), float(
        jnp.max(jnp.abs(out - ref)))

    print("KERNEL_OK")
</pallas_src>

<mosaic_0001>
module attributes {stable_mosaic.version = 11 : i64} {
  func.func @_transition_up_kernel(%arg0: i32, %arg1: i32, %arg2: memref<1x8x256xf32, #tpu.memory_space<vmem>>, %arg3: memref<16x8xf32, #tpu.memory_space<vmem>>, %arg4: memref<16x1xf32, #tpu.memory_space<vmem>>, %arg5: memref<1x4x16x64xf32, #tpu.memory_space<vmem>>) attributes {dimension_semantics = [#tpu.dimension_semantics<parallel>, #tpu.dimension_semantics<parallel>], iteration_bounds = array<i64: 2, 1>, scalar_prefetch = 0 : i64, scratch_operands = 0 : i64, tpu.core_type = #tpu.core_type<tc>, window_params = [{transform_indices = @transform_0, window_bounds = array<i64: 1, 8, 256>}, {pipeline_mode = #tpu.pipeline_mode<synchronous>, transform_indices = @transform_1, window_bounds = array<i64: 16, 8>}, {pipeline_mode = #tpu.pipeline_mode<synchronous>, transform_indices = @transform_2, window_bounds = array<i64: 16, 1>}, {transform_indices = @transform_3, window_bounds = array<i64: 1, 4, 16, 64>}]} {
    %c0 = arith.constant 0 : index
    %c0_0 = arith.constant 0 : index
    %c0_1 = arith.constant 0 : index
    %0 = vector.load %arg2[%c0, %c0_0, %c0_1] : memref<1x8x256xf32, #tpu.memory_space<vmem>>, vector<1x8x256xf32>
    %1 = vector.shape_cast %0 : vector<1x8x256xf32> to vector<8x256xf32>
    %c0_2 = arith.constant 0 : index
    %c0_3 = arith.constant 0 : index
    %2 = vector.load %arg3[%c0_2, %c0_3] : memref<16x8xf32, #tpu.memory_space<vmem>>, vector<16x8xf32>
    %cst = arith.constant dense<0.000000e+00> : vector<16x256xf32>
    %3 = tpu.matmul %2, %1, %cst {dimension_numbers = #tpu.dot_dimension_numbers<[1], [0], [0], [1], [0, 0, 1, 1], [], []>} : vector<16x8xf32>, vector<8x256xf32>, vector<16x256xf32> -> vector<16x256xf32>
    %c0_4 = arith.constant 0 : index
    %c0_5 = arith.constant 0 : index
    %4 = vector.load %arg4[%c0_4, %c0_5] : memref<16x1xf32, #tpu.memory_space<vmem>>, vector<16x1xf32>
    %5 = vector.broadcast %4 : vector<16x1xf32> to vector<16x256xf32>
    %6 = arith.addf %3, %5 : vector<16x256xf32>
    %7 = vector.shape_cast %6 : vector<16x256xf32> to vector<16x16x16xf32>
    %8 = vector.extract_strided_slice %7 {offsets = [0, 0, 0], sizes = [4, 16, 16], strides = [1, 1, 1]} : vector<16x16x16xf32> to vector<4x16x16xf32>
    %9 = vector.extract_strided_slice %7 {offsets = [4, 0, 0], sizes = [4, 16, 16], strides = [1, 1, 1]} : vector<16x16x16xf32> to vector<4x16x16xf32>
    %10 = vector.extract_strided_slice %7 {offsets = [8, 0, 0], sizes = [4, 16, 16], strides = [1, 1, 1]} : vector<16x16x16xf32> to vector<4x16x16xf32>
    %11 = vector.extract_strided_slice %7 {offsets = [12, 0, 0], sizes = [4, 16, 16], strides = [1, 1, 1]} : vector<16x16x16xf32> to vector<4x16x16xf32>
    %12 = vector.shape_cast %8 : vector<4x16x16xf32> to vector<4x16x16x1xf32>
    %13 = vector.shape_cast %9 : vector<4x16x16xf32> to vector<4x16x16x1xf32>
    %14 = tpu.concatenate %12, %13 in 3 : vector<4x16x16x1xf32>, vector<4x16x16x1xf32> -> vector<4x16x16x2xf32>
    %15 = vector.shape_cast %14 : vector<4x16x16x2xf32> to vector<4x16x32xf32>
    %16 = vector.shape_cast %10 : vector<4x16x16xf32> to vector<4x16x16x1xf32>
    %17 = vector.shape_cast %11 : vector<4x16x16xf32> to vector<4x16x16x1xf32>
    %18 = tpu.concatenate %16, %17 in 3 : vector<4x16x16x1xf32>, vector<4x16x16x1xf32> -> vector<4x16x16x2xf32>
    %19 = vector.shape_cast %18 : vector<4x16x16x2xf32> to vector<4x16x32xf32>
    %c0_6 = arith.constant 0 : index
    %c0_7 = arith.constant 0 : index
    %c0_8 = arith.constant 0 : index
    %c0_9 = arith.constant 0 : index
    %20 = vector.load %arg5[%c0_6, %c0_7, %c0_8, %c0_9] : memref<1x4x16x64xf32, #tpu.memory_space<vmem>>, vector<1x4x16x32xf32>
    %21 = vector.shape_cast %20 : vector<1x4x16x32xf32> to vector<4x16x32xf32>
    %22 = vector.shape_cast %15 : vector<4x16x32xf32> to vector<1x4x16x32xf32>
    tpu.vector_store %arg5[%c0_6, %c0_7, %c0_8, %c0_9], %22 {strides = array<i32>} : memref<1x4x16x64xf32, #tpu.memory_space<vmem>>, vector<1x4x16x32xf32>,
    %c0_10 = arith.constant 0 : index
    %c0_11 = arith.constant 0 : index
    %c0_12 = arith.constant 0 : index
    %c32 = arith.constant 32 : index
    %23 = vector.load %arg5[%c0_10, %c0_11, %c0_12, %c32] : memref<1x4x16x64xf32, #tpu.memory_space<vmem>>, vector<1x4x16x32xf32>
    %24 = vector.shape_cast %23 : vector<1x4x16x32xf32> to vector<4x16x32xf32>
    %25 = vector.shape_cast %19 : vector<4x16x32xf32> to vector<1x4x16x32xf32>
    tpu.vector_store %arg5[%c0_10, %c0_11, %c0_12, %c32], %25 {strides = array<i32>} : memref<1x4x16x64xf32, #tpu.memory_space<vmem>>, vector<1x4x16x32xf32>,
    return
  }
  func.func @transform_0(%arg0: i32, %arg1: i32) -> (i32, i32, i32) {
    %c0_i32 = arith.constant 0 : i32
    %c0_i32_0 = arith.constant 0 : i32
    return %arg0, %c0_i32, %arg1 : i32, i32, i32
  }
  func.func @transform_1(%arg0: i32, %arg1: i32) -> (i32, i32) {
    %c0_i32 = arith.constant 0 : i32
    %c0_i32_0 = arith.constant 0 : i32
    %c0_i32_1 = arith.constant 0 : i32
    return %c0_i32, %c0_i32_0 : i32, i32
  }
  func.func @transform_2(%arg0: i32, %arg1: i32) -> (i32, i32) {
    %c0_i32 = arith.constant 0 : i32
    %c0_i32_0 = arith.constant 0 : i32
    %c0_i32_1 = arith.constant 0 : i32
    return %c0_i32, %c0_i32_0 : i32, i32
  }
  func.func @transform_3(%arg0: i32, %arg1: i32) -> (i32, i32, i32, i32) {
    %c0_i32 = arith.constant 0 : i32
    %c0_i32_0 = arith.constant 0 : i32
    %c0_i32_1 = arith.constant 0 : i32
    return %arg0, %c0_i32, %arg1, %c0_i32_0 : i32, i32, i32, i32
  }
}

</mosaic_0001>

<llo_original>
// kernel: tpu_custom_call.1
$region0: #{tpu_custom_call.1}
  #allocation0 [shape = 'u32[]', space=smem, size = 0x4, offset = 0x4, fixed_abs, tag = 'smem constant byte address 0x4 - core index']
  #allocation1 [shape = 'u32[144,128]{1,0:T(1,128)}', space=vmem, size = 0x12000, scoped, tag = 'internal scratch']
  %s0 = inlined_call_operand.vmem [shape: f32[2,8,256], index: 0, kind: input, shape index: {}]
  %s1 = inlined_call_operand.vmem [shape: f32[16,8], index: 1, kind: input, shape index: {}]
  %s2 = inlined_call_operand.vmem [shape: f32[16,1], index: 2, kind: input, shape index: {}]
  %s3 = inlined_call_operand.hbm [shape: f32[2,4,16,64], index: 3, kind: output, shape index: {}]
  %s4 = sld [smem:[#allocation0]]
  $region45: #{tpu_custom_call.1} parent=0
    _
  %s6 = ssub.s32 1, %s4
  %s7 = scalar_select 0, %s6, %s4
  $region1: #{tpu_custom_call.1} parent=0
    #allocation2 [shape = 'u8[65536]{0}', space=vmem, size = 0x10000, scoped, tag = 'output window, operand 0']
    #allocation3 [shape = 's32[2]{0}', space=sflag, size = 0x8, scoped, tag = 'scoped memory for tpu_custom_call.1']
    %8 = vsyncpa [#allocation3], 0
    %s9 = scalar_lea.sflag [#allocation3], 1
    %10 = vsyncpa %s9, 0
    loop: start=0, step=1, limit=4
    $region2: #{tpu_custom_call.1} parent=1 // loop_pre_header
      _
    $region3: #{tpu_custom_call.1} parent=1 // loop_header
      %s12 = sphi 0, %s16
      %p13 = scmp.ge.s32.totalorder %s12, 4
      %s19 = sphi 0, %s31
      %s20 = sphi 0, %s27
      %s21 = sphi 0, %s19
      %s22 = sphi 0, %s20
      %s23 = sphi 0, %s21
      %s24 = sphi 0, %s22
      %s36 = sphi 0, %s38
      %s39 = sphi 0, %s36
      %s40 = sphi 0, %s39
      %s56 = sphi 0, %s40
      %s60 = sphi 0, %s60
      %s62 = sphi 0, %s60
      %s63 = sphi 0, %s62
      %s77 = sphi 0, %s63
      %s81 = sphi 0, %s81
      %s83 = sphi 0, %s81
      %s84 = sphi 0, %s83
      %s98 = sphi 0, %s84
      %s106 = sphi 0, %s108
      %s109 = sphi 0, %s106
      %s110 = sphi 0, %s109
      %s126 = sphi 0, %s110
    $region4: #{tpu_custom_call.1} parent=1 // loop_header_branch
      %15 = sbr.rel (%p13) target = $region8
    $region5: #{tpu_custom_call.1} parent=1 // loop_body
      %s17 = ssub.s32 %s12, 1
      %s18 = ssub.s32 %s12, 2
      %s25 = sadd.s32 1, %s20
      %p26 = scmp.ge.s32.totalorder %s25, 1
      %s27 = scalar_select %p26, 0, %s25
      %s28 = sadd.s32 1, %s19
      %s29 = scalar_select %p26, %s28, %s19
      %p30 = scmp.ge.s32.totalorder %s29, 2
      %s31 = scalar_select %p30, 0, %s29
      %s32 = ssub.s32 %s19, %s31
      %s33 = ssub.s32 %s20, %s27
      %s34 = sor.u32 %s32, %s33
      %p35 = scmp.eq.s32.totalorder %s34, 0
      %s37 = sadd.s32 %s36, 1
      %s38 = scalar_select %p35, %s36, %s37
      %p41 = pneg %p35
      %p42 = scmp.eq.s32.totalorder %s12, 1
      %p43 = por %p41, %p42
      %p44 = scmp.ne.s32.totalorder %s36, %s39
      %p45 = scmp.eq.s32.totalorder %s12, 0
      %p46 = por %p44, %p45
      %p47 = scmp.ne.s32.totalorder %s36, %s39
      %p48 = scmp.eq.s32.totalorder %s17, 1
      %p49 = por %p47, %p48
      %p50 = scmp.ne.s32.totalorder %s39, %s40
      %p51 = scmp.eq.s32.totalorder %s17, 0
      %p52 = por %p50, %p51
      %p53 = scmp.ne.s32.totalorder %s39, %s40
      %p54 = scmp.eq.s32.totalorder %s18, 1
      %p55 = por %p53, %p54
      %p57 = scmp.ne.s32.totalorder %s40, %s56
      %p58 = scmp.eq.s32.totalorder %s18, 0
      %p59 = por %p57, %p58
      %s61 = sadd.s32 %s60, 1
      %p64 = scmp.eq.s32.totalorder %s12, 1
      %p65 = scmp.ne.s32.totalorder %s60, %s62
      %p66 = scmp.eq.s32.totalorder %s12, 0
      %p67 = por %p65, %p66
      %p68 = scmp.ne.s32.totalorder %s60, %s62
      %p69 = scmp.eq.s32.totalorder %s17, 1
      %p70 = por %p68, %p69
      %p71 = scmp.ne.s32.totalorder %s62, %s63
      %p72 = scmp.eq.s32.totalorder %s17, 0
      %p73 = por %p71, %p72
      %p74 = scmp.ne.s32.totalorder %s62, %s63
      %p75 = scmp.eq.s32.totalorder %s18, 1
      %p76 = por %p74, %p75
      %p78 = scmp.ne.s32.totalorder %s63, %s77
      %p79 = scmp.eq.s32.totalorder %s18, 0
      %p80 = por %p78, %p79
      %s82 = sadd.s32 %s81, 1
      %p85 = scmp.eq.s32.totalorder %s12, 1
      %p86 = scmp.ne.s32.totalorder %s81, %s83
      %p87 = scmp.eq.s32.totalorder %s12, 0
      %p88 = por %p86, %p87
      %p89 = scmp.ne.s32.totalorder %s81, %s83
      %p90 = scmp.eq.s32.totalorder %s17, 1
      %p91 = por %p89, %p90
      %p92 = scmp.ne.s32.totalorder %s83, %s84
      %p93 = scmp.eq.s32.totalorder %s17, 0
      %p94 = por %p92, %p93
      %p95 = scmp.ne.s32.totalorder %s83, %s84
      %p96 = scmp.eq.s32.totalorder %s18, 1
      %p97 = por %p95, %p96
      %p99 = scmp.ne.s32.totalorder %s84, %s98
      %p100 = scmp.eq.s32.totalorder %s18, 0
      %p101 = por %p99, %p100
      %s102 = ssub.s32 %s19, %s31
      %s103 = ssub.s32 %s20, %s27
      %s104 = sor.u32 %s102, %s103
      %p105 = scmp.eq.s32.totalorder %s104, 0
      %s107 = sadd.s32 %s106, 1
      %s108 = scalar_select %p105, %s106, %s107
      %p111 = pneg %p105
      %p112 = scmp.eq.s32.totalorder %s12, 1
      %p113 = por %p111, %p112
      %p114 = scmp.ne.s32.totalorder %s106, %s109
      %p115 = scmp.eq.s32.totalorder %s12, 0
      %p116 = por %p114, %p115
      %p117 = scmp.ne.s32.totalorder %s106, %s109
      %p118 = scmp.eq.s32.totalorder %s17, 1
      %p119 = por %p117, %p118
      %p120 = scmp.ne.s32.totalorder %s109, %s110
      %p121 = scmp.eq.s32.totalorder %s17, 0
      %p122 = por %p120, %p121
      %p123 = scmp.ne.s32.totalorder %s109, %s110
      %p124 = scmp.eq.s32.totalorder %s18, 1
      %p125 = por %p123, %p124
      %p127 = scmp.ne.s32.totalorder %s110, %s126
      %p128 = scmp.eq.s32.totalorder %s18, 0
      %p129 = por %p127, %p128
      %p130 = scmp.le.s32.totalorder 1, %s12
      %p131 = scmp.lt.s32.totalorder %s12, 3
      %p132 = pnand %p130, %p131
      %p133 = pneg %p132
      // Predicated region
      $region9: #{tpu_custom_call.1} parent=5 // pred_check
        _
      $region10: #{tpu_custom_call.1} parent=5 // pred_check_branch
        %135 = sbr.rel (%p132) target = $region12
      $region11: #{tpu_custom_call.1} parent=5 // pred_region
        %s136 = ssub.s32 %s12, 1
        // Predicated region
        $region13: #{tpu_custom_call.1} parent=11 // pred_check
          %p137 = pneg %p73
        $region14: #{tpu_custom_call.1} parent=11 // pred_check_branch
          %139 = sbr.rel (%p137) target = $region16
        $region15: #{tpu_custom_call.1} parent=11 // pred_region
          _
        $region16: #{tpu_custom_call.1} parent=11 // pred_fallthru
          _
        // Predicated region
        $region17: #{tpu_custom_call.1} parent=11 // pred_check
          %p140 = pneg %p94
        $region18: #{tpu_custom_call.1} parent=11 // pred_check_branch
          %142 = sbr.rel (%p140) target = $region20
        $region19: #{tpu_custom_call.1} parent=11 // pred_region
          _
        $region20: #{tpu_custom_call.1} parent=11 // pred_fallthru
          _
      $region12: #{tpu_custom_call.1} parent=5 // pred_fallthru
        _
      %p143 = scmp.lt.s32.totalorder %s12, 2
      // Predicated region
      $region21: #{tpu_custom_call.1} parent=5 // pred_check
        %p144 = pneg %p143
      $region22: #{tpu_custom_call.1} parent=5 // pred_check_branch
        %146 = sbr.rel (%p144) target = $region24
      $region23: #{tpu_custom_call.1} parent=5 // pred_region
        // Predicated region
        $region25: #{tpu_custom_call.1} parent=23 // pred_check
          %p147 = pneg %p46
        $region26: #{tpu_custom_call.1} parent=23 // pred_check_branch
          %149 = sbr.rel (%p147) target = $region28
        $region27: #{tpu_custom_call.1} parent=23 // pred_region
          %s150 = smul.u32 2, %s20
          %p151 = scmp.lt.s32.totalorder %s19, 1
          %s152 = scalar_select %p151, %s19, 1
          %p153 = scmp.lt.s32.totalorder %s150, 1
          %s154 = scalar_select %p153, %s150, 1
          %s155 = smul.addr %s152, 2
          %s156 = sadd.s32 %s154, %s155
          %s157 = smul.addr %s156, 8
          %s158 = scalar_lea.vmem %s0, %s157
          %s159 = smul.u32 2, %s20
        $region28: #{tpu_custom_call.1} parent=23 // pred_fallthru
          _
      $region24: #{tpu_custom_call.1} parent=5 // pred_fallthru
        _
      %p160 = scmp.le.s32.totalorder 1, %s12
      %p161 = scmp.lt.s32.totalorder %s12, 3
      %p162 = pnand %p160, %p161
      %p163 = pneg %p162
      // Predicated region
      $region29: #{tpu_custom_call.1} parent=5 // pred_check
        _
      $region30: #{tpu_custom_call.1} parent=5 // pred_check_branch
        %165 = sbr.rel (%p162) target = $region32
      $region31: #{tpu_custom_call.1} parent=5 // pred_region
        %s166 = ssub.s32 %s12, 1
        %s167 = smul.u32 2, %s22
        %p168 = scmp.lt.s32.totalorder %s21, 1
        %s169 = scalar_select %p168, %s21, 1
        %p170 = scmp.lt.s32.totalorder %s167, 1
        %s171 = scalar_select %p170, %s167, 1
        %s172 = smul.addr %s169, 2
        %s173 = sadd.s32 %s171, %s172
        %s174 = smul.addr %s173, 8
        %s175 = scalar_lea.vmem %s0, %s174
        %p176 = pneg %p52
        %p177 = pneg %p49
        %p178 = pneg %p73
        %p179 = pneg %p70
        %p180 = pneg %p94
        %p181 = pneg %p91
        %p182 = pneg %p122
        %p183 = pneg %p119
        %s184 = sand.u32 %s109, 1
        %s185 = scalar_lea.sflag [#allocation3], %s184
        %s186 = sand.u32 %s109, 1
        %s187 = smul.addr %s186, 64
        %s188 = scalar_lea.vmem [#allocation2], %s187
        %s189 = smul.u32 2, %s22
        %p190 = scmp.lt.s32.totalorder %s21, 1
        %s191 = scalar_select %p190, %s21, 1
        %p192 = scmp.lt.s32.totalorder %s189, 1
        %s193 = scalar_select %p192, %s189, 1
        %s194 = smul.addr %s191, 2
        %s195 = sadd.s32 %s193, %s194
        %s196 = smul.addr %s195, 8
        %s197 = scalar_lea.vmem %s0, %s196
        %s198 = smul.u32 2, %s22
        %s199 = smul.u32 2, %s22
        %v200 = vld [vmem:[%s197] sm:$0xff]
        %v201 = vld [vmem:[%s197 + $0x8] sm:$0xff]
        %v202 = vld [vmem:[%s1] sm:$0xff]
        %v203 = vld [vmem:[%s1 + $0x8] sm:$0xff]
        %v204 = vld [vmem:[%s2] sm:$0xff]
        %v205 = vld [vmem:[%s2 + $0x8] sm:$0xff]
        %207 = vset.pattern.permute.xlu0 0
        %208 = vperm.xlu0 %207, %v204
        %v209 = vpop.permute.xlu0 %208
        %212 = vset.pattern.permute.xlu0 0
        %213 = vperm.xlu0 %212, %v205
        %v214 = vpop.permute.xlu0 %213
        %vm216 = vcmask 64512
        %v218 = vsel %vm216, %v202, 0
        %v221 = vsel %vm216, %v203, 0
        %223 = vmatprep.subr.mxu0 %v201
        %224 = vmatpush1.msra.mxu0 %v200
        %225 = vmatprep.subr.mxu0 0.0
        %226 = vmatpush1.msra.mxu0 0.0
        %227 = vmatprep.subr.mxu0 0.0
        %228 = vmatpush1.msra.mxu0 0.0
        %229 = vmatprep.subr.mxu0 0.0
        %230 = vmatpush1.msra.mxu0 0.0
        %231 = vmatprep.subr.mxu0 0.0
        %232 = vmatpush1.msra.mxu0 0.0
        %233 = vmatprep.subr.mxu0 0.0
        %234 = vmatpush1.msra.mxu0 0.0
        %235 = vmatprep.subr.mxu0 0.0
        %236 = vmatpush1.msra.mxu0 0.0
        %237 = vmatprep.subr.mxu0 0.0
        %238 = vmatpush1.msra.mxu0 0.0
        %239 = vmatprep.subr.mxu0 0.0
        %240 = vmatpush1.msra.mxu0 0.0
        %241 = vmatprep.subr.mxu0 0.0
        %242 = vmatpush1.msra.mxu0 0.0
        %243 = vmatprep.subr.mxu0 0.0
        %244 = vmatpush1.msra.mxu0 0.0
        %245 = vmatprep.subr.mxu0 0.0
        %246 = vmatpush1.msra.mxu0 0.0
        %247 = vmatprep.subr.mxu0 0.0
        %248 = vmatpush1.msra.mxu0 0.0
        %249 = vmatprep.subr.mxu0 0.0
        %250 = vmatpush1.msra.mxu0 0.0
        %251 = vmatprep.subr.mxu0 0.0
        %252 = vmatpush1.msra.mxu0 0.0
        %253 = vmatprep.subr.mxu0 0.0
        %254 = vmatpush1.msra.mxu0 0.0
        %255 = vmatprep.subr.mxu0 0.0
        %256 = vmatpush1.msra.mxu0 0.0
        %257 = vmatprep.subr.mxu0 0.0
        %258 = vmatpush1.msra.mxu0 0.0
        %259 = vmatprep.subr.mxu0 0.0
        %260 = vmatpush1.msra.mxu0 0.0
        %261 = vmatprep.subr.mxu0 0.0
        %262 = vmatpush1.msra.mxu0 0.0
        %263 = vmatprep.subr.mxu0 0.0
        %264 = vmatpush1.msra.mxu0 0.0
        %265 = vmatprep.subr.mxu0 0.0
        %266 = vmatpush1.msra.mxu0 0.0
        %267 = vmatprep.subr.mxu0 0.0
        %268 = vmatpush1.msra.mxu0 0.0
        %269 = vmatprep.subr.mxu0 0.0
        %270 = vmatpush1.msra.mxu0 0.0
        %271 = vmatprep.subr.mxu0 0.0
        %272 = vmatpush1.msra.mxu0 0.0
        %273 = vmatprep.subr.mxu0 0.0
        %274 = vmatpush1.msra.mxu0 0.0
        %275 = vmatprep.subr.mxu0 0.0
        %276 = vmatpush1.msra.mxu0 0.0
        %277 = vmatprep.subr.mxu0 0.0
        %278 = vmatpush1.msra.mxu0 0.0
        %279 = vmatprep.subr.mxu0 0.0
        %280 = vmatpush1.msra.mxu0 0.0
        %281 = vmatprep.subr.mxu0 0.0
        %282 = vmatpush1.msra.mxu0 0.0
        %283 = vmatprep.subr.mxu0 0.0
        %284 = vmatpush1.msra.mxu0 0.0
        %285 = vmatprep.subr.mxu0 0.0
        %286 = vmatpush1.msra.mxu0 0.0
        %287 = vmatprep.mubr.f32.mxu0 0.0
        %288 = vmatmul.mubr.f32.gmra.mrb[0].mxu0 %v218
        %v289 = vpop.f32.mrb[0].mxu0
        %v290 = vadd.f32 %v209, %v289
        %v291 = vpop.f32.mrb[0].mxu0
        %v292 = vadd.f32 %v209, %v291
        %293 = vmatprep.mubr.f32.mxu0 0.0
        %294 = vmatmul.mubr.f32.gmra.mrb[0].mxu0 %v221
        %v295 = vpop.f32.mrb[0].mxu0
        %v296 = vadd.f32 %v214, %v295
        %v297 = vpop.f32.mrb[0].mxu0
        %v298 = vadd.f32 %v214, %v297
        %299 = vdwg.mxu0
        %302 = vrot.lane.b32.xlu0 %v290, 112
        %v303 = vpop.permute.xlu0 %302
        %304 = vrot.lane.b32.xlu0 %v296, 112
        %v305 = vpop.permute.xlu0 %304
        %308 = vrot.lane.b32.xlu0 %v290, 96
        %v309 = vpop.permute.xlu0 %308
        %310 = vrot.lane.b32.xlu0 %v296, 96
        %v311 = vpop.permute.xlu0 %310
        %314 = vrot.lane.b32.xlu0 %v290, 80
        %v315 = vpop.permute.xlu0 %314
        %316 = vrot.lane.b32.xlu0 %v296, 80
        %v317 = vpop.permute.xlu0 %316
        %320 = vrot.lane.b32.xlu0 %v290, 64
        %v321 = vpop.permute.xlu0 %320
        %322 = vrot.lane.b32.xlu0 %v296, 64
        %v323 = vpop.permute.xlu0 %322
        %326 = vrot.lane.b32.xlu0 %v290, 48
        %v327 = vpop.permute.xlu0 %326
        %328 = vrot.lane.b32.xlu0 %v296, 48
        %v329 = vpop.permute.xlu0 %328
        %332 = vrot.lane.b32.xlu0 %v290, 32
        %v333 = vpop.permute.xlu0 %332
        %334 = vrot.lane.b32.xlu0 %v296, 32
        %v335 = vpop.permute.xlu0 %334
        %338 = vrot.lane.b32.xlu0 %v290, 16
        %v339 = vpop.permute.xlu0 %338
        %340 = vrot.lane.b32.xlu0 %v296, 16
        %v341 = vpop.permute.xlu0 %340
        %346 = vrot.lane.b32.xlu0 %v292, 112
        %v347 = vpop.permute.xlu0 %346
        %348 = vrot.lane.b32.xlu0 %v298, 112
        %v349 = vpop.permute.xlu0 %348
        %352 = vrot.lane.b32.xlu0 %v292, 96
        %v353 = vpop.permute.xlu0 %352
        %354 = vrot.lane.b32.xlu0 %v298, 96
        %v355 = vpop.permute.xlu0 %354
        %358 = vrot.lane.b32.xlu0 %v292, 80
        %v359 = vpop.permute.xlu0 %358
        %360 = vrot.lane.b32.xlu0 %v298, 80
        %v361 = vpop.permute.xlu0 %360
        %364 = vrot.lane.b32.xlu0 %v292, 64
        %v365 = vpop.permute.xlu0 %364
        %366 = vrot.lane.b32.xlu0 %v298, 64
        %v367 = vpop.permute.xlu0 %366
        %370 = vrot.lane.b32.xlu0 %v292, 48
        %v371 = vpop.permute.xlu0 %370
        %372 = vrot.lane.b32.xlu0 %v298, 48
        %v373 = vpop.permute.xlu0 %372
        %376 = vrot.lane.b32.xlu0 %v292, 32
        %v377 = vpop.permute.xlu0 %376
        %378 = vrot.lane.b32.xlu0 %v298, 32
        %v379 = vpop.permute.xlu0 %378
        %382 = vrot.lane.b32.xlu0 %v292, 16
        %v383 = vpop.permute.xlu0 %382
        %384 = vrot.lane.b32.xlu0 %v298, 16
        %v385 = vpop.permute.xlu0 %384
        %v388 = vcombine.low %v290, %v309
        %v389 = vcombine.high %v290, %v309
        %v391 = vunpack.c.l.s4 1983009808
        %v392 = vunpack.c.0.s8 %v391
        %v393 = vlaneseq
        %v394 = vshrl.u32 %v393, 7
        %v395 = vsub.s32 %v392, %v394
        %v396 = vrot.slane %v388, %v395
        %v398 = vunpack.c.l.s4 1983009808
        %v399 = vunpack.c.0.s8 %v398
        %v400 = vlaneseq
        %v401 = vshrl.u32 %v400, 7
        %v402 = vsub.s32 %v399, %v401
        %v403 = vrot.slane %v389, %v402
        %v404 = vcombine.low %v303, %v315
        %v405 = vcombine.high %v303, %v315
        %v407 = vunpack.c.l.s4 1983009808
        %v408 = vunpack.c.0.s8 %v407
        %v409 = vlaneseq
        %v410 = vshrl.u32 %v409, 7
        %v411 = vsub.s32 %v408, %v410
        %v412 = vrot.slane %v404, %v411
        %v414 = vunpack.c.l.s4 1983009808
        %v415 = vunpack.c.0.s8 %v414
        %v416 = vlaneseq
        %v417 = vshrl.u32 %v416, 7
        %v418 = vsub.s32 %v415, %v417
        %v419 = vrot.slane %v405, %v418
        %v420 = vcombine.low %v321, %v333
        %v421 = vcombine.high %v321, %v333
        %v423 = vunpack.c.l.s4 1983009808
        %v424 = vunpack.c.0.s8 %v423
        %v425 = vlaneseq
        %v426 = vshrl.u32 %v425, 7
        %v427 = vsub.s32 %v424, %v426
        %v428 = vrot.slane %v420, %v427
        %v430 = vunpack.c.l.s4 1983009808
        %v431 = vunpack.c.0.s8 %v430
        %v432 = vlaneseq
        %v433 = vshrl.u32 %v432, 7
        %v434 = vsub.s32 %v431, %v433
        %v435 = vrot.slane %v421, %v434
        %v436 = vcombine.low %v327, %v339
        %v437 = vcombine.high %v327, %v339
        %v439 = vunpack.c.l.s4 1983009808
        %v440 = vunpack.c.0.s8 %v439
        %v441 = vlaneseq
        %v442 = vshrl.u32 %v441, 7
        %v443 = vsub.s32 %v440, %v442
        %v444 = vrot.slane %v436, %v443
        %v446 = vunpack.c.l.s4 1983009808
        %v447 = vunpack.c.0.s8 %v446
        %v448 = vlaneseq
        %v449 = vshrl.u32 %v448, 7
        %v450 = vsub.s32 %v447, %v449
        %v451 = vrot.slane %v437, %v450
        %v452 = vcombine.low %v396, %v412
        %v453 = vcombine.high %v396, %v412
        %v455 = vunpack.c.l.s4 1934713408
        %v456 = vunpack.c.0.s8 %v455
        %v457 = vlaneseq
        %v458 = vshrl.u32 %v457, 7
        %v459 = vsub.s32 %v456, %v458
        %v460 = vrot.slane %v452, %v459
        %v462 = vunpack.c.l.s4 1934713408
        %v463 = vunpack.c.0.s8 %v462
        %v464 = vlaneseq
        %v465 = vshrl.u32 %v464, 7
        %v466 = vsub.s32 %v463, %v465
        %v467 = vrot.slane %v453, %v466
        %v468 = vcombine.low %v403, %v419
        %v469 = vcombine.high %v403, %v419
        %v471 = vunpack.c.l.s4 1934713408
        %v472 = vunpack.c.0.s8 %v471
        %v473 = vlaneseq
        %v474 = vshrl.u32 %v473, 7
        %v475 = vsub.s32 %v472, %v474
        %v476 = vrot.slane %v468, %v475
        %v478 = vunpack.c.l.s4 1934713408
        %v479 = vunpack.c.0.s8 %v478
        %v480 = vlaneseq
        %v481 = vshrl.u32 %v480, 7
        %v482 = vsub.s32 %v479, %v481
        %v483 = vrot.slane %v469, %v482
        %v484 = vcombine.low %v428, %v444
        %v485 = vcombine.high %v428, %v444
        %v487 = vunpack.c.l.s4 1934713408
        %v488 = vunpack.c.0.s8 %v487
        %v489 = vlaneseq
        %v490 = vshrl.u32 %v489, 7
        %v491 = vsub.s32 %v488, %v490
        %v492 = vrot.slane %v484, %v491
        %v494 = vunpack.c.l.s4 1934713408
        %v495 = vunpack.c.0.s8 %v494
        %v496 = vlaneseq
        %v497 = vshrl.u32 %v496, 7
        %v498 = vsub.s32 %v495, %v497
        %v499 = vrot.slane %v485, %v498
        %v500 = vcombine.low %v435, %v451
        %v501 = vcombine.high %v435, %v451
        %v503 = vunpack.c.l.s4 1934713408
        %v504 = vunpack.c.0.s8 %v503
        %v505 = vlaneseq
        %v506 = vshrl.u32 %v505, 7
        %v507 = vsub.s32 %v504, %v506
        %v508 = vrot.slane %v500, %v507
        %v510 = vunpack.c.l.s4 1934713408
        %v511 = vunpack.c.0.s8 %v510
        %v512 = vlaneseq
        %v513 = vshrl.u32 %v512, 7
        %v514 = vsub.s32 %v511, %v513
        %v515 = vrot.slane %v501, %v514
        %v516 = vcombine.low %v460, %v492
        %v517 = vcombine.high %v460, %v492
        %v518 = vcombine.low %v467, %v499
        %v519 = vcombine.high %v467, %v499
        %v520 = vcombine.low %v476, %v508
        %v521 = vcombine.high %v476, %v508
        %v522 = vcombine.low %v483, %v515
        %v523 = vcombine.high %v483, %v515
        %v524 = vcombine.low %v292, %v353
        %v525 = vcombine.high %v292, %v353
        %v527 = vunpack.c.l.s4 1983009808
        %v528 = vunpack.c.0.s8 %v527
        %v529 = vlaneseq
        %v530 = vshrl.u32 %v529, 7
        %v531 = vsub.s32 %v528, %v530
        %v532 = vrot.slane %v524, %v531
        %v534 = vunpack.c.l.s4 1983009808
        %v535 = vunpack.c.0.s8 %v534
        %v536 = vlaneseq
        %v537 = vshrl.u32 %v536, 7
        %v538 = vsub.s32 %v535, %v537
        %v539 = vrot.slane %v525, %v538
        %v540 = vcombine.low %v347, %v359
        %v541 = vcombine.high %v347, %v359
        %v543 = vunpack.c.l.s4 1983009808
        %v544 = vunpack.c.0.s8 %v543
        %v545 = vlaneseq
        %v546 = vshrl.u32 %v545, 7
        %v547 = vsub.s32 %v544, %v546
        %v548 = vrot.slane %v540, %v547
        %v550 = vunpack.c.l.s4 1983009808
        %v551 = vunpack.c.0.s8 %v550
        %v552 = vlaneseq
        %v553 = vshrl.u32 %v552, 7
        %v554 = vsub.s32 %v551, %v553
        %v555 = vrot.slane %v541, %v554
        %v556 = vcombine.low %v365, %v377
        %v557 = vcombine.high %v365, %v377
        %v559 = vunpack.c.l.s4 1983009808
        %v560 = vunpack.c.0.s8 %v559
        %v561 = vlaneseq
        %v562 = vshrl.u32 %v561, 7
        %v563 = vsub.s32 %v560, %v562
        %v564 = vrot.slane %v556, %v563
        %v566 = vunpack.c.l.s4 1983009808
        %v567 = vunpack.c.0.s8 %v566
        %v568 = vlaneseq
        %v569 = vshrl.u32 %v568, 7
        %v570 = vsub.s32 %v567, %v569
        %v571 = vrot.slane %v557, %v570
        %v572 = vcombine.low %v371, %v383
        %v573 = vcombine.high %v371, %v383
        %v575 = vunpack.c.l.s4 1983009808
        %v576 = vunpack.c.0.s8 %v575
        %v577 = vlaneseq
        %v578 = vshrl.u32 %v577, 7
        %v579 = vsub.s32 %v576, %v578
        %v580 = vrot.slane %v572, %v579
        %v582 = vunpack.c.l.s4 1983009808
        %v583 = vunpack.c.0.s8 %v582
        %v584 = vlaneseq
        %v585 = vshrl.u32 %v584, 7
        %v586 = vsub.s32 %v583, %v585
        %v587 = vrot.slane %v573, %v586
        %v588 = vcombine.low %v532, %v548
        %v589 = vcombine.high %v532, %v548
        %v591 = vunpack.c.l.s4 1934713408
        %v592 = vunpack.c.0.s8 %v591
        %v593 = vlaneseq
        %v594 = vshrl.u32 %v593, 7
        %v595 = vsub.s32 %v592, %v594
        %v596 = vrot.slane %v588, %v595
        %v598 = vunpack.c.l.s4 1934713408
        %v599 = vunpack.c.0.s8 %v598
        %v600 = vlaneseq
        %v601 = vshrl.u32 %v600, 7
        %v602 = vsub.s32 %v599, %v601
        %v603 = vrot.slane %v589, %v602
        %v604 = vcombine.low %v539, %v555
        %v605 = vcombine.high %v539, %v555
        %v607 = vunpack.c.l.s4 1934713408
        %v608 = vunpack.c.0.s8 %v607
        %v609 = vlaneseq
        %v610 = vshrl.u32 %v609, 7
        %v611 = vsub.s32 %v608, %v610
        %v612 = vrot.slane %v604, %v611
        %v614 = vunpack.c.l.s4 1934713408
        %v615 = vunpack.c.0.s8 %v614
        %v616 = vlaneseq
        %v617 = vshrl.u32 %v616, 7
        %v618 = vsub.s32 %v615, %v617
        %v619 = vrot.slane %v605, %v618
        %v620 = vcombine.low %v564, %v580
        %v621 = vcombine.high %v564, %v580
        %v623 = vunpack.c.l.s4 1934713408
        %v624 = vunpack.c.0.s8 %v623
        %v625 = vlaneseq
        %v626 = vshrl.u32 %v625, 7
        %v627 = vsub.s32 %v624, %v626
        %v628 = vrot.slane %v620, %v627
        %v630 = vunpack.c.l.s4 1934713408
        %v631 = vunpack.c.0.s8 %v630
        %v632 = vlaneseq
        %v633 = vshrl.u32 %v632, 7
        %v634 = vsub.s32 %v631, %v633
        %v635 = vrot.slane %v621, %v634
        %v636 = vcombine.low %v571, %v587
        %v637 = vcombine.high %v571, %v587
        %v639 = vunpack.c.l.s4 1934713408
        %v640 = vunpack.c.0.s8 %v639
        %v641 = vlaneseq
        %v642 = vshrl.u32 %v641, 7
        %v643 = vsub.s32 %v640, %v642
        %v644 = vrot.slane %v636, %v643
        %v646 = vunpack.c.l.s4 1934713408
        %v647 = vunpack.c.0.s8 %v646
        %v648 = vlaneseq
        %v649 = vshrl.u32 %v648, 7
        %v650 = vsub.s32 %v647, %v649
        %v651 = vrot.slane %v637, %v650
        %v652 = vcombine.low %v596, %v628
        %v653 = vcombine.high %v596, %v628
        %v654 = vcombine.low %v603, %v635
        %v655 = vcombine.high %v603, %v635
        %v656 = vcombine.low %v612, %v644
        %v657 = vcombine.high %v612, %v644
        %v658 = vcombine.low %v619, %v651
        %v659 = vcombine.high %v619, %v651
        %v660 = vcombine.low %v296, %v311
        %v661 = vcombine.high %v296, %v311
        %v663 = vunpack.c.l.s4 1983009808
        %v664 = vunpack.c.0.s8 %v663
        %v665 = vlaneseq
        %v666 = vshrl.u32 %v665, 7
        %v667 = vsub.s32 %v664, %v666
        %v668 = vrot.slane %v660, %v667
        %v670 = vunpack.c.l.s4 1983009808
        %v671 = vunpack.c.0.s8 %v670
        %v672 = vlaneseq
        %v673 = vshrl.u32 %v672, 7
        %v674 = vsub.s32 %v671, %v673
        %v675 = vrot.slane %v661, %v674
        %v676 = vcombine.low %v305, %v317
        %v677 = vcombine.high %v305, %v317
        %v679 = vunpack.c.l.s4 1983009808
        %v680 = vunpack.c.0.s8 %v679
        %v681 = vlaneseq
        %v682 = vshrl.u32 %v681, 7
        %v683 = vsub.s32 %v680, %v682
        %v684 = vrot.slane %v676, %v683
        %v686 = vunpack.c.l.s4 1983009808
        %v687 = vunpack.c.0.s8 %v686
        %v688 = vlaneseq
        %v689 = vshrl.u32 %v688, 7
        %v690 = vsub.s32 %v687, %v689
        %v691 = vrot.slane %v677, %v690
        %v692 = vcombine.low %v323, %v335
        %v693 = vcombine.high %v323, %v335
        %v695 = vunpack.c.l.s4 1983009808
        %v696 = vunpack.c.0.s8 %v695
        %v697 = vlaneseq
        %v698 = vshrl.u32 %v697, 7
        %v699 = vsub.s32 %v696, %v698
        %v700 = vrot.slane %v692, %v699
        %v702 = vunpack.c.l.s4 1983009808
        %v703 = vunpack.c.0.s8 %v702
        %v704 = vlaneseq
        %v705 = vshrl.u32 %v704, 7
        %v706 = vsub.s32 %v703, %v705
        %v707 = vrot.slane %v693, %v706
        %v708 = vcombine.low %v329, %v341
        %v709 = vcombine.high %v329, %v341
        %v711 = vunpack.c.l.s4 1983009808
        %v712 = vunpack.c.0.s8 %v711
        %v713 = vlaneseq
        %v714 = vshrl.u32 %v713, 7
        %v715 = vsub.s32 %v712, %v714
        %v716 = vrot.slane %v708, %v715
        %v718 = vunpack.c.l.s4 1983009808
        %v719 = vunpack.c.0.s8 %v718
        %v720 = vlaneseq
        %v721 = vshrl.u32 %v720, 7
        %v722 = vsub.s32 %v719, %v721
        %v723 = vrot.slane %v709, %v722
        %v724 = vcombine.low %v668, %v684
        %v725 = vcombine.high %v668, %v684
        %v727 = vunpack.c.l.s4 1934713408
        %v728 = vunpack.c.0.s8 %v727
        %v729 = vlaneseq
        %v730 = vshrl.u32 %v729, 7
        %v731 = vsub.s32 %v728, %v730
        %v732 = vrot.slane %v724, %v731
        %v734 = vunpack.c.l.s4 1934713408
        %v735 = vunpack.c.0.s8 %v734
        %v736 = vlaneseq
        %v737 = vshrl.u32 %v736, 7
        %v738 = vsub.s32 %v735, %v737
        %v739 = vrot.slane %v725, %v738
        %v740 = vcombine.low %v675, %v691
        %v741 = vcombine.high %v675, %v691
        %v743 = vunpack.c.l.s4 1934713408
        %v744 = vunpack.c.0.s8 %v743
        %v745 = vlaneseq
        %v746 = vshrl.u32 %v745, 7
        %v747 = vsub.s32 %v744, %v746
        %v748 = vrot.slane %v740, %v747
        %v750 = vunpack.c.l.s4 1934713408
        %v751 = vunpack.c.0.s8 %v750
        %v752 = vlaneseq
        %v753 = vshrl.u32 %v752, 7
        %v754 = vsub.s32 %v751, %v753
        %v755 = vrot.slane %v741, %v754
        %v756 = vcombine.low %v700, %v716
        %v757 = vcombine.high %v700, %v716
        %v759 = vunpack.c.l.s4 1934713408
        %v760 = vunpack.c.0.s8 %v759
        %v761 = vlaneseq
        %v762 = vshrl.u32 %v761, 7
        %v763 = vsub.s32 %v760, %v762
        %v764 = vrot.slane %v756, %v763
        %v766 = vunpack.c.l.s4 1934713408
        %v767 = vunpack.c.0.s8 %v766
        %v768 = vlaneseq
        %v769 = vshrl.u32 %v768, 7
        %v770 = vsub.s32 %v767, %v769
        %v771 = vrot.slane %v757, %v770
        %v772 = vcombine.low %v707, %v723
        %v773 = vcombine.high %v707, %v723
        %v775 = vunpack.c.l.s4 1934713408
        %v776 = vunpack.c.0.s8 %v775
        %v777 = vlaneseq
        %v778 = vshrl.u32 %v777, 7
        %v779 = vsub.s32 %v776, %v778
        %v780 = vrot.slane %v772, %v779
        %v782 = vunpack.c.l.s4 1934713408
        %v783 = vunpack.c.0.s8 %v782
        %v784 = vlaneseq
        %v785 = vshrl.u32 %v784, 7
        %v786 = vsub.s32 %v783, %v785
        %v787 = vrot.slane %v773, %v786
        %v788 = vcombine.low %v732, %v764
        %v789 = vcombine.high %v732, %v764
        %v790 = vcombine.low %v739, %v771
        %v791 = vcombine.high %v739, %v771
        %v792 = vcombine.low %v748, %v780
        %v793 = vcombine.high %v748, %v780
        %v794 = vcombine.low %v755, %v787
        %v795 = vcombine.high %v755, %v787
        %v796 = vcombine.low %v298, %v355
        %v797 = vcombine.high %v298, %v355
        %v799 = vunpack.c.l.s4 1983009808
        %v800 = vunpack.c.0.s8 %v799
        %v801 = vlaneseq
        %v802 = vshrl.u32 %v801, 7
        %v803 = vsub.s32 %v800, %v802
        %v804 = vrot.slane %v796, %v803
        %v806 = vunpack.c.l.s4 1983009808
        %v807 = vunpack.c.0.s8 %v806
        %v808 = vlaneseq
        %v809 = vshrl.u32 %v808, 7
        %v810 = vsub.s32 %v807, %v809
        %v811 = vrot.slane %v797, %v810
        %v812 = vcombine.low %v349, %v361
        %v813 = vcombine.high %v349, %v361
        %v815 = vunpack.c.l.s4 1983009808
        %v816 = vunpack.c.0.s8 %v815
        %v817 = vlaneseq
        %v818 = vshrl.u32 %v817, 7
        %v819 = vsub.s32 %v816, %v818
        %v820 = vrot.slane %v812, %v819
        %v822 = vunpack.c.l.s4 1983009808
        %v823 = vunpack.c.0.s8 %v822
        %v824 = vlaneseq
        %v825 = vshrl.u32 %v824, 7
        %v826 = vsub.s32 %v823, %v825
        %v827 = vrot.slane %v813, %v826
        %v828 = vcombine.low %v367, %v379
        %v829 = vcombine.high %v367, %v379
        %v831 = vunpack.c.l.s4 1983009808
        %v832 = vunpack.c.0.s8 %v831
        %v833 = vlaneseq
        %v834 = vshrl.u32 %v833, 7
        %v835 = vsub.s32 %v832, %v834
        %v836 = vrot.slane %v828, %v835
        %v838 = vunpack.c.l.s4 1983009808
        %v839 = vunpack.c.0.s8 %v838
        %v840 = vlaneseq
        %v841 = vshrl.u32 %v840, 7
        %v842 = vsub.s32 %v839, %v841
        %v843 = vrot.slane %v829, %v842
        %v844 = vcombine.low %v373, %v385
        %v845 = vcombine.high %v373, %v385
        %v847 = vunpack.c.l.s4 1983009808
        %v848 = vunpack.c.0.s8 %v847
        %v849 = vlaneseq
        %v850 = vshrl.u32 %v849, 7
        %v851 = vsub.s32 %v848, %v850
        %v852 = vrot.slane %v844, %v851
        %v854 = vunpack.c.l.s4 1983009808
        %v855 = vunpack.c.0.s8 %v854
        %v856 = vlaneseq
        %v857 = vshrl.u32 %v856, 7
        %v858 = vsub.s32 %v855, %v857
        %v859 = vrot.slane %v845, %v858
        %v860 = vcombine.low %v804, %v820
        %v861 = vcombine.high %v804, %v820
        %v863 = vunpack.c.l.s4 1934713408
        %v864 = vunpack.c.0.s8 %v863
        %v865 = vlaneseq
        %v866 = vshrl.u32 %v865, 7
        %v867 = vsub.s32 %v864, %v866
        %v868 = vrot.slane %v860, %v867
        %v870 = vunpack.c.l.s4 1934713408
        %v871 = vunpack.c.0.s8 %v870
        %v872 = vlaneseq
        %v873 = vshrl.u32 %v872, 7
        %v874 = vsub.s32 %v871, %v873
        %v875 = vrot.slane %v861, %v874
        %v876 = vcombine.low %v811, %v827
        %v877 = vcombine.high %v811, %v827
        %v879 = vunpack.c.l.s4 1934713408
        %v880 = vunpack.c.0.s8 %v879
        %v881 = vlaneseq
        %v882 = vshrl.u32 %v881, 7
        %v883 = vsub.s32 %v880, %v882
        %v884 = vrot.slane %v876, %v883
        %v886 = vunpack.c.l.s4 1934713408
        %v887 = vunpack.c.0.s8 %v886
        %v888 = vlaneseq
        %v889 = vshrl.u32 %v888, 7
        %v890 = vsub.s32 %v887, %v889
        %v891 = vrot.slane %v877, %v890
        %v892 = vcombine.low %v836, %v852
        %v893 = vcombine.high %v836, %v852
        %v895 = vunpack.c.l.s4 1934713408
        %v896 = vunpack.c.0.s8 %v895
        %v897 = vlaneseq
        %v898 = vshrl.u32 %v897, 7
        %v899 = vsub.s32 %v896, %v898
        %v900 = vrot.slane %v892, %v899
        %v902 = vunpack.c.l.s4 1934713408
        %v903 = vunpack.c.0.s8 %v902
        %v904 = vlaneseq
        %v905 = vshrl.u32 %v904, 7
        %v906 = vsub.s32 %v903, %v905
        %v907 = vrot.slane %v893, %v906
        %v908 = vcombine.low %v843, %v859
        %v909 = vcombine.high %v843, %v859
        %v911 = vunpack.c.l.s4 1934713408
        %v912 = vunpack.c.0.s8 %v911
        %v913 = vlaneseq
        %v914 = vshrl.u32 %v913, 7
        %v915 = vsub.s32 %v912, %v914
        %v916 = vrot.slane %v908, %v915
        %v918 = vunpack.c.l.s4 1934713408
        %v919 = vunpack.c.0.s8 %v918
        %v920 = vlaneseq
        %v921 = vshrl.u32 %v920, 7
        %v922 = vsub.s32 %v919, %v921
        %v923 = vrot.slane %v909, %v922
        %v924 = vcombine.low %v868, %v900
        %v925 = vcombine.high %v868, %v900
        %v926 = vcombine.low %v875, %v907
        %v927 = vcombine.high %v875, %v907
        %v928 = vcombine.low %v884, %v916
        %v929 = vcombine.high %v884, %v916
        %v930 = vcombine.low %v891, %v923
        %v931 = vcombine.high %v891, %v923
        %v932 = vlaneseq
        %v933 = vshrl.u32 %v932, 7
        %v934 = vsub.s32 0, %v933
        %v935 = vrot.slane %v516, %v934
        %937 = vbcast.lane.b32.xlu0 %v935, 256
        %v938 = vpop.permute.xlu0 %937
        %s940 = sor.u32 256, 8
        %941 = vbcast.lane.b32.xlu0 %v935, %s940
        %v942 = vpop.permute.xlu0 %941
        %v943 = vlaneseq
        %v944 = vshrl.u32 %v943, 7
        %v945 = vsub.s32 1, %v944
        %v946 = vrot.slane %v516, %v945
        %948 = vbcast.lane.b32.xlu0 %v946, 256
        %v949 = vpop.permute.xlu0 %948
        %s951 = sor.u32 256, 8
        %952 = vbcast.lane.b32.xlu0 %v946, %s951
        %v953 = vpop.permute.xlu0 %952
        %v954 = vlaneseq
        %v955 = vshrl.u32 %v954, 7
        %v956 = vsub.s32 2, %v955
        %v957 = vrot.slane %v516, %v956
        %959 = vbcast.lane.b32.xlu0 %v957, 256
        %v960 = vpop.permute.xlu0 %959
        %s962 = sor.u32 256, 8
        %963 = vbcast.lane.b32.xlu0 %v957, %s962
        %v964 = vpop.permute.xlu0 %963
        %v965 = vlaneseq
        %v966 = vshrl.u32 %v965, 7
        %v967 = vsub.s32 3, %v966
        %v968 = vrot.slane %v516, %v967
        %970 = vbcast.lane.b32.xlu0 %v968, 256
        %v971 = vpop.permute.xlu0 %970
        %s973 = sor.u32 256, 8
        %974 = vbcast.lane.b32.xlu0 %v968, %s973
        %v975 = vpop.permute.xlu0 %974
        %v976 = vlaneseq
        %v977 = vshrl.u32 %v976, 7
        %v978 = vsub.s32 4, %v977
        %v979 = vrot.slane %v516, %v978
        %981 = vbcast.lane.b32.xlu0 %v979, 256
        %v982 = vpop.permute.xlu0 %981
        %s984 = sor.u32 256, 8
        %985 = vbcast.lane.b32.xlu0 %v979, %s984
        %v986 = vpop.permute.xlu0 %985
        %v987 = vlaneseq
        %v988 = vshrl.u32 %v987, 7
        %v989 = vsub.s32 5, %v988
        %v990 = vrot.slane %v516, %v989
        %992 = vbcast.lane.b32.xlu0 %v990, 256
        %v993 = vpop.permute.xlu0 %992
        %s995 = sor.u32 256, 8
        %996 = vbcast.lane.b32.xlu0 %v990, %s995
        %v997 = vpop.permute.xlu0 %996
        %v998 = vlaneseq
        %v999 = vshrl.u32 %v998, 7
        %v1000 = vsub.s32 6, %v999
        %v1001 = vrot.slane %v516, %v1000
        %1003 = vbcast.lane.b32.xlu0 %v1001, 256
        %v1004 = vpop.permute.xlu0 %1003
        %s1006 = sor.u32 256, 8
        %1007 = vbcast.lane.b32.xlu0 %v1001, %s1006
        %v1008 = vpop.permute.xlu0 %1007
        %v1009 = vlaneseq
        %v1010 = vshrl.u32 %v1009, 7
        %v1011 = vsub.s32 7, %v1010
        %v1012 = vrot.slane %v516, %v1011
        %1014 = vbcast.lane.b32.xlu0 %v1012, 256
        %v1015 = vpop.permute.xlu0 %1014
        %s1017 = sor.u32 256, 8
        %1018 = vbcast.lane.b32.xlu0 %v1012, %s1017
        %v1019 = vpop.permute.xlu0 %1018
        %v1020 = vlaneseq
        %v1021 = vshrl.u32 %v1020, 7
        %v1022 = vsub.s32 0, %v1021
        %v1023 = vrot.slane %v652, %v1022
        %1025 = vbcast.lane.b32.xlu0 %v1023, 256
        %v1026 = vpop.permute.xlu0 %1025
        %s1028 = sor.u32 256, 8
        %1029 = vbcast.lane.b32.xlu0 %v1023, %s1028
        %v1030 = vpop.permute.xlu0 %1029
        %v1031 = vlaneseq
        %v1032 = vshrl.u32 %v1031, 7
        %v1033 = vsub.s32 1, %v1032
        %v1034 = vrot.slane %v652, %v1033
        %1036 = vbcast.lane.b32.xlu0 %v1034, 256
        %v1037 = vpop.permute.xlu0 %1036
        %s1039 = sor.u32 256, 8
        %1040 = vbcast.lane.b32.xlu0 %v1034, %s1039
        %v1041 = vpop.permute.xlu0 %1040
        %v1042 = vlaneseq
        %v1043 = vshrl.u32 %v1042, 7
        %v1044 = vsub.s32 2, %v1043
        %v1045 = vrot.slane %v652, %v1044
        %1047 = vbcast.lane.b32.xlu0 %v1045, 256
        %v1048 = vpop.permute.xlu0 %1047
        %s1050 = sor.u32 256, 8
        %1051 = vbcast.lane.b32.xlu0 %v1045, %s1050
        %v1052 = vpop.permute.xlu0 %1051
        %v1053 = vlaneseq
        %v1054 = vshrl.u32 %v1053, 7
        %v1055 = vsub.s32 3, %v1054
        %v1056 = vrot.slane %v652, %v1055
        %1058 = vbcast.lane.b32.xlu0 %v1056, 256
        %v1059 = vpop.permute.xlu0 %1058
        %s1061 = sor.u32 256, 8
        %1062 = vbcast.lane.b32.xlu0 %v1056, %s1061
        %v1063 = vpop.permute.xlu0 %1062
        %v1064 = vlaneseq
        %v1065 = vshrl.u32 %v1064, 7
        %v1066 = vsub.s32 4, %v1065
        %v1067 = vrot.slane %v652, %v1066
        %1069 = vbcast.lane.b32.xlu0 %v1067, 256
        %v1070 = vpop.permute.xlu0 %1069
        %s1072 = sor.u32 256, 8
        %1073 = vbcast.lane.b32.xlu0 %v1067, %s1072
        %v1074 = vpop.permute.xlu0 %1073
        %v1075 = vlaneseq
        %v1076 = vshrl.u32 %v1075, 7
        %v1077 = vsub.s32 5, %v1076
        %v1078 = vrot.slane %v652, %v1077
        %1080 = vbcast.lane.b32.xlu0 %v1078, 256
        %v1081 = vpop.permute.xlu0 %1080
        %s1083 = sor.u32 256, 8
        %1084 = vbcast.lane.b32.xlu0 %v1078, %s1083
        %v1085 = vpop.permute.xlu0 %1084
        %v1086 = vlaneseq
        %v1087 = vshrl.u32 %v1086, 7
        %v1088 = vsub.s32 6, %v1087
        %v1089 = vrot.slane %v652, %v1088
        %1091 = vbcast.lane.b32.xlu0 %v1089, 256
        %v1092 = vpop.permute.xlu0 %1091
        %s1094 = sor.u32 256, 8
        %1095 = vbcast.lane.b32.xlu0 %v1089, %s1094
        %v1096 = vpop.permute.xlu0 %1095
        %v1097 = vlaneseq
        %v1098 = vshrl.u32 %v1097, 7
        %v1099 = vsub.s32 7, %v1098
        %v1100 = vrot.slane %v652, %v1099
        %1102 = vbcast.lane.b32.xlu0 %v1100, 256
        %v1103 = vpop.permute.xlu0 %1102
        %s1105 = sor.u32 256, 8
        %1106 = vbcast.lane.b32.xlu0 %v1100, %s1105
        %v1107 = vpop.permute.xlu0 %1106
        %v1108 = vlaneseq
        %v1109 = vshrl.u32 %v1108, 7
        %v1110 = vsub.s32 0, %v1109
        %v1111 = vrot.slane %v517, %v1110
        %1113 = vbcast.lane.b32.xlu0 %v1111, 256
        %v1114 = vpop.permute.xlu0 %1113
        %s1116 = sor.u32 256, 8
        %1117 = vbcast.lane.b32.xlu0 %v1111, %s1116
        %v1118 = vpop.permute.xlu0 %1117
        %v1119 = vlaneseq
        %v1120 = vshrl.u32 %v1119, 7
        %v1121 = vsub.s32 1, %v1120
        %v1122 = vrot.slane %v517, %v1121
        %1124 = vbcast.lane.b32.xlu0 %v1122, 256
        %v1125 = vpop.permute.xlu0 %1124
        %s1127 = sor.u32 256, 8
        %1128 = vbcast.lane.b32.xlu0 %v1122, %s1127
        %v1129 = vpop.permute.xlu0 %1128
        %v1130 = vlaneseq
        %v1131 = vshrl.u32 %v1130, 7
        %v1132 = vsub.s32 2, %v1131
        %v1133 = vrot.slane %v517, %v1132
        %1135 = vbcast.lane.b32.xlu0 %v1133, 256
        %v1136 = vpop.permute.xlu0 %1135
        %s1138 = sor.u32 256, 8
        %1139 = vbcast.lane.b32.xlu0 %v1133, %s1138
        %v1140 = vpop.permute.xlu0 %1139
        %v1141 = vlaneseq
        %v1142 = vshrl.u32 %v1141, 7
        %v1143 = vsub.s32 3, %v1142
        %v1144 = vrot.slane %v517, %v1143
        %1146 = vbcast.lane.b32.xlu0 %v1144, 256
        %v1147 = vpop.permute.xlu0 %1146
        %s1149 = sor.u32 256, 8
        %1150 = vbcast.lane.b32.xlu0 %v1144, %s1149
        %v1151 = vpop.permute.xlu0 %1150
        %v1152 = vlaneseq
        %v1153 = vshrl.u32 %v1152, 7
        %v1154 = vsub.s32 4, %v1153
        %v1155 = vrot.slane %v517, %v1154
        %1157 = vbcast.lane.b32.xlu0 %v1155, 256
        %v1158 = vpop.permute.xlu0 %1157
        %s1160 = sor.u32 256, 8
        %1161 = vbcast.lane.b32.xlu0 %v1155, %s1160
        %v1162 = vpop.permute.xlu0 %1161
        %v1163 = vlaneseq
        %v1164 = vshrl.u32 %v1163, 7
        %v1165 = vsub.s32 5, %v1164
        %v1166 = vrot.slane %v517, %v1165
        %1168 = vbcast.lane.b32.xlu0 %v1166, 256
        %v1169 = vpop.permute.xlu0 %1168
        %s1171 = sor.u32 256, 8
        %1172 = vbcast.lane.b32.xlu0 %v1166, %s1171
        %v1173 = vpop.permute.xlu0 %1172
        %v1174 = vlaneseq
        %v1175 = vshrl.u32 %v1174, 7
        %v1176 = vsub.s32 6, %v1175
        %v1177 = vrot.slane %v517, %v1176
        %1179 = vbcast.lane.b32.xlu0 %v1177, 256
        %v1180 = vpop.permute.xlu0 %1179
        %s1182 = sor.u32 256, 8
        %1183 = vbcast.lane.b32.xlu0 %v1177, %s1182
        %v1184 = vpop.permute.xlu0 %1183
        %v1185 = vlaneseq
        %v1186 = vshrl.u32 %v1185, 7
        %v1187 = vsub.s32 7, %v1186
        %v1188 = vrot.slane %v517, %v1187
        %1190 = vbcast.lane.b32.xlu0 %v1188, 256
        %v1191 = vpop.permute.xlu0 %1190
        %s1193 = sor.u32 256, 8
        %1194 = vbcast.lane.b32.xlu0 %v1188, %s1193
        %v1195 = vpop.permute.xlu0 %1194
        %v1196 = vlaneseq
        %v1197 = vshrl.u32 %v1196, 7
        %v1198 = vsub.s32 0, %v1197
        %v1199 = vrot.slane %v653, %v1198
        %1201 = vbcast.lane.b32.xlu0 %v1199, 256
        %v1202 = vpop.permute.xlu0 %1201
        %s1204 = sor.u32 256, 8
        %1205 = vbcast.lane.b32.xlu0 %v1199, %s1204
        %v1206 = vpop.permute.xlu0 %1205
        %v1207 = vlaneseq
        %v1208 = vshrl.u32 %v1207, 7
        %v1209 = vsub.s32 1, %v1208
        %v1210 = vrot.slane %v653, %v1209
        %1212 = vbcast.lane.b32.xlu0 %v1210, 256
        %v1213 = vpop.permute.xlu0 %1212
        %s1215 = sor.u32 256, 8
        %1216 = vbcast.lane.b32.xlu0 %v1210, %s1215
        %v1217 = vpop.permute.xlu0 %1216
        %v1218 = vlaneseq
        %v1219 = vshrl.u32 %v1218, 7
        %v1220 = vsub.s32 2, %v1219
        %v1221 = vrot.slane %v653, %v1220
        %1223 = vbcast.lane.b32.xlu0 %v1221, 256
        %v1224 = vpop.permute.xlu0 %1223
        %s1226 = sor.u32 256, 8
        %1227 = vbcast.lane.b32.xlu0 %v1221, %s1226
        %v1228 = vpop.permute.xlu0 %1227
        %v1229 = vlaneseq
        %v1230 = vshrl.u32 %v1229, 7
        %v1231 = vsub.s32 3, %v1230
        %v1232 = vrot.slane %v653, %v1231
        %1234 = vbcast.lane.b32.xlu0 %v1232, 256
        %v1235 = vpop.permute.xlu0 %1234
        %s1237 = sor.u32 256, 8
        %1238 = vbcast.lane.b32.xlu0 %v1232, %s1237
        %v1239 = vpop.permute.xlu0 %1238
        %v1240 = vlaneseq
        %v1241 = vshrl.u32 %v1240, 7
        %v1242 = vsub.s32 4, %v1241
        %v1243 = vrot.slane %v653, %v1242
        %1245 = vbcast.lane.b32.xlu0 %v1243, 256
        %v1246 = vpop.permute.xlu0 %1245
        %s1248 = sor.u32 256, 8
        %1249 = vbcast.lane.b32.xlu0 %v1243, %s1248
        %v1250 = vpop.permute.xlu0 %1249
        %v1251 = vlaneseq
        %v1252 = vshrl.u32 %v1251, 7
        %v1253 = vsub.s32 5, %v1252
        %v1254 = vrot.slane %v653, %v1253
        %1256 = vbcast.lane.b32.xlu0 %v1254, 256
        %v1257 = vpop.permute.xlu0 %1256
        %s1259 = sor.u32 256, 8
        %1260 = vbcast.lane.b32.xlu0 %v1254, %s1259
        %v1261 = vpop.permute.xlu0 %1260
        %v1262 = vlaneseq
        %v1263 = vshrl.u32 %v1262, 7
        %v1264 = vsub.s32 6, %v1263
        %v1265 = vrot.slane %v653, %v1264
        %1267 = vbcast.lane.b32.xlu0 %v1265, 256
        %v1268 = vpop.permute.xlu0 %1267
        %s1270 = sor.u32 256, 8
        %1271 = vbcast.lane.b32.xlu0 %v1265, %s1270
        %v1272 = vpop.permute.xlu0 %1271
        %v1273 = vlaneseq
        %v1274 = vshrl.u32 %v1273, 7
        %v1275 = vsub.s32 7, %v1274
        %v1276 = vrot.slane %v653, %v1275
        %1278 = vbcast.lane.b32.xlu0 %v1276, 256
        %v1279 = vpop.permute.xlu0 %1278
        %s1281 = sor.u32 256, 8
        %1282 = vbcast.lane.b32.xlu0 %v1276, %s1281
        %v1283 = vpop.permute.xlu0 %1282
        %v1284 = vlaneseq
        %v1285 = vshrl.u32 %v1284, 7
        %v1286 = vsub.s32 0, %v1285
        %v1287 = vrot.slane %v518, %v1286
        %1289 = vbcast.lane.b32.xlu0 %v1287, 256
        %v1290 = vpop.permute.xlu0 %1289
        %s1292 = sor.u32 256, 8
        %1293 = vbcast.lane.b32.xlu0 %v1287, %s1292
        %v1294 = vpop.permute.xlu0 %1293
        %v1295 = vlaneseq
        %v1296 = vshrl.u32 %v1295, 7
        %v1297 = vsub.s32 1, %v1296
        %v1298 = vrot.slane %v518, %v1297
        %1300 = vbcast.lane.b32.xlu0 %v1298, 256
        %v1301 = vpop.permute.xlu0 %1300
        %s1303 = sor.u32 256, 8
        %1304 = vbcast.lane.b32.xlu0 %v1298, %s1303
        %v1305 = vpop.permute.xlu0 %1304
        %v1306 = vlaneseq
        %v1307 = vshrl.u32 %v1306, 7
        %v1308 = vsub.s32 2, %v1307
        %v1309 = vrot.slane %v518, %v1308
        %1311 = vbcast.lane.b32.xlu0 %v1309, 256
        %v1312 = vpop.permute.xlu0 %1311
        %s1314 = sor.u32 256, 8
        %1315 = vbcast.lane.b32.xlu0 %v1309, %s1314
        %v1316 = vpop.permute.xlu0 %1315
        %v1317 = vlaneseq
        %v1318 = vshrl.u32 %v1317, 7
        %v1319 = vsub.s32 3, %v1318
        %v1320 = vrot.slane %v518, %v1319
        %1322 = vbcast.lane.b32.xlu0 %v1320, 256
        %v1323 = vpop.permute.xlu0 %1322
        %s1325 = sor.u32 256, 8
        %1326 = vbcast.lane.b32.xlu0 %v1320, %s1325
        %v1327 = vpop.permute.xlu0 %1326
        %v1328 = vlaneseq
        %v1329 = vshrl.u32 %v1328, 7
        %v1330 = vsub.s32 4, %v1329
        %v1331 = vrot.slane %v518, %v1330
        %1333 = vbcast.lane.b32.xlu0 %v1331, 256
        %v1334 = vpop.permute.xlu0 %1333
        %s1336 = sor.u32 256, 8
        %1337 = vbcast.lane.b32.xlu0 %v1331, %s1336
        %v1338 = vpop.permute.xlu0 %1337
        %v1339 = vlaneseq
        %v1340 = vshrl.u32 %v1339, 7
        %v1341 = vsub.s32 5, %v1340
        %v1342 = vrot.slane %v518, %v1341
        %1344 = vbcast.lane.b32.xlu0 %v1342, 256
        %v1345 = vpop.permute.xlu0 %1344
        %s1347 = sor.u32 256, 8
        %1348 = vbcast.lane.b32.xlu0 %v1342, %s1347
        %v1349 = vpop.permute.xlu0 %1348
        %v1350 = vlaneseq
        %v1351 = vshrl.u32 %v1350, 7
        %v1352 = vsub.s32 6, %v1351
        %v1353 = vrot.slane %v518, %v1352
        %1355 = vbcast.lane.b32.xlu0 %v1353, 256
        %v1356 = vpop.permute.xlu0 %1355
        %s1358 = sor.u32 256, 8
        %1359 = vbcast.lane.b32.xlu0 %v1353, %s1358
        %v1360 = vpop.permute.xlu0 %1359
        %v1361 = vlaneseq
        %v1362 = vshrl.u32 %v1361, 7
        %v1363 = vsub.s32 7, %v1362
        %v1364 = vrot.slane %v518, %v1363
        %1366 = vbcast.lane.b32.xlu0 %v1364, 256
        %v1367 = vpop.permute.xlu0 %1366
        %s1369 = sor.u32 256, 8
        %1370 = vbcast.lane.b32.xlu0 %v1364, %s1369
        %v1371 = vpop.permute.xlu0 %1370
        %v1372 = vlaneseq
        %v1373 = vshrl.u32 %v1372, 7
        %v1374 = vsub.s32 0, %v1373
        %v1375 = vrot.slane %v654, %v1374
        %1377 = vbcast.lane.b32.xlu0 %v1375, 256
        %v1378 = vpop.permute.xlu0 %1377
        %s1380 = sor.u32 256, 8
        %1381 = vbcast.lane.b32.xlu0 %v1375, %s1380
        %v1382 = vpop.permute.xlu0 %1381
        %v1383 = vlaneseq
        %v1384 = vshrl.u32 %v1383, 7
        %v1385 = vsub.s32 1, %v1384
        %v1386 = vrot.slane %v654, %v1385
        %1388 = vbcast.lane.b32.xlu0 %v1386, 256
        %v1389 = vpop.permute.xlu0 %1388
        %s1391 = sor.u32 256, 8
        %1392 = vbcast.lane.b32.xlu0 %v1386, %s1391
        %v1393 = vpop.permute.xlu0 %1392
        %v1394 = vlaneseq
        %v1395 = vshrl.u32 %v1394, 7
        %v1396 = vsub.s32 2, %v1395
        %v1397 = vrot.slane %v654, %v1396
        %1399 = vbcast.lane.b32.xlu0 %v1397, 256
        %v1400 = vpop.permute.xlu0 %1399
        %s1402 = sor.u32 256, 8
        %1403 = vbcast.lane.b32.xlu0 %v1397, %s1402
        %v1404 = vpop.permute.xlu0 %1403
        %v1405 = vlaneseq
        %v1406 = vshrl.u32 %v1405, 7
        %v1407 = vsub.s32 3, %v1406
        %v1408 = vrot.slane %v654, %v1407
        %1410 = vbcast.lane.b32.xlu0 %v1408, 256
        %v1411 = vpop.permute.xlu0 %1410
        %s1413 = sor.u32 256, 8
        %1414 = vbcast.lane.b32.xlu0 %v1408, %s1413
        %v1415 = vpop.permute.xlu0 %1414
        %v1416 = vlaneseq
        %v1417 = vshrl.u32 %v1416, 7
        %v1418 = vsub.s32 4, %v1417
        %v1419 = vrot.slane %v654, %v1418
        %1421 = vbcast.lane.b32.xlu0 %v1419, 256
        %v1422 = vpop.permute.xlu0 %1421
        %s1424 = sor.u32 256, 8
        %1425 = vbcast.lane.b32.xlu0 %v1419, %s1424
        %v1426 = vpop.permute.xlu0 %1425
        %v1427 = vlaneseq
        %v1428 = vshrl.u32 %v1427, 7
        %v1429 = vsub.s32 5, %v1428
        %v1430 = vrot.slane %v654, %v1429
        %1432 = vbcast.lane.b32.xlu0 %v1430, 256
        %v1433 = vpop.permute.xlu0 %1432
        %s1435 = sor.u32 256, 8
        %1436 = vbcast.lane.b32.xlu0 %v1430, %s1435
        %v1437 = vpop.permute.xlu0 %1436
        %v1438 = vlaneseq
        %v1439 = vshrl.u32 %v1438, 7
        %v1440 = vsub.s32 6, %v1439
        %v1441 = vrot.slane %v654, %v1440
        %1443 = vbcast.lane.b32.xlu0 %v1441, 256
        %v1444 = vpop.permute.xlu0 %1443
        %s1446 = sor.u32 256, 8
        %1447 = vbcast.lane.b32.xlu0 %v1441, %s1446
        %v1448 = vpop.permute.xlu0 %1447
        %v1449 = vlaneseq
        %v1450 = vshrl.u32 %v1449, 7
        %v1451 = vsub.s32 7, %v1450
        %v1452 = vrot.slane %v654, %v1451
        %1454 = vbcast.lane.b32.xlu0 %v1452, 256
        %v1455 = vpop.permute.xlu0 %1454
        %s1457 = sor.u32 256, 8
        %1458 = vbcast.lane.b32.xlu0 %v1452, %s1457
        %v1459 = vpop.permute.xlu0 %1458
        %v1460 = vlaneseq
        %v1461 = vshrl.u32 %v1460, 7
        %v1462 = vsub.s32 0, %v1461
        %v1463 = vrot.slane %v519, %v1462
        %1465 = vbcast.lane.b32.xlu0 %v1463, 256
        %v1466 = vpop.permute.xlu0 %1465
        %s1468 = sor.u32 256, 8
        %1469 = vbcast.lane.b32.xlu0 %v1463, %s1468
        %v1470 = vpop.permute.xlu0 %1469
        %v1471 = vlaneseq
        %v1472 = vshrl.u32 %v1471, 7
        %v1473 = vsub.s32 1, %v1472
        %v1474 = vrot.slane %v519, %v1473
        %1476 = vbcast.lane.b32.xlu0 %v1474, 256
        %v1477 = vpop.permute.xlu0 %1476
        %s1479 = sor.u32 256, 8
        %1480 = vbcast.lane.b32.xlu0 %v1474, %s1479
        %v1481 = vpop.permute.xlu0 %1480
        %v1482 = vlaneseq
        %v1483 = vshrl.u32 %v1482, 7
        %v1484 = vsub.s32 2, %v1483
        %v1485 = vrot.slane %v519, %v1484
        %1487 = vbcast.lane.b32.xlu0 %v1485, 256
        %v1488 = vpop.permute.xlu0 %1487
        %s1490 = sor.u32 256, 8
        %1491 = vbcast.lane.b32.xlu0 %v1485, %s1490
        %v1492 = vpop.permute.xlu0 %1491
        %v1493 = vlaneseq
        %v1494 = vshrl.u32 %v1493, 7
        %v1495 = vsub.s32 3, %v1494
        %v1496 = vrot.slane %v519, %v1495
        %1498 = vbcast.lane.b32.xlu0 %v1496, 256
        %v1499 = vpop.permute.xlu0 %1498
        %s1501 = sor.u32 256, 8
        %1502 = vbcast.lane.b32.xlu0 %v1496, %s1501
        %v1503 = vpop.permute.xlu0 %1502
        %v1504 = vlaneseq
        %v1505 = vshrl.u32 %v1504, 7
        %v1506 = vsub.s32 4, %v1505
        %v1507 = vrot.slane %v519, %v1506
        %1509 = vbcast.lane.b32.xlu0 %v1507, 256
        %v1510 = vpop.permute.xlu0 %1509
        %s1512 = sor.u32 256, 8
        %1513 = vbcast.lane.b32.xlu0 %v1507, %s1512
        %v1514 = vpop.permute.xlu0 %1513
        %v1515 = vlaneseq
        %v1516 = vshrl.u32 %v1515, 7
        %v1517 = vsub.s32 5, %v1516
        %v1518 = vrot.slane %v519, %v1517
        %1520 = vbcast.lane.b32.xlu0 %v1518, 256
        %v1521 = vpop.permute.xlu0 %1520
        %s1523 = sor.u32 256, 8
        %1524 = vbcast.lane.b32.xlu0 %v1518, %s1523
        %v1525 = vpop.permute.xlu0 %1524
        %v1526 = vlaneseq
        %v1527 = vshrl.u32 %v1526, 7
        %v1528 = vsub.s32 6, %v1527
        %v1529 = vrot.slane %v519, %v1528
        %1531 = vbcast.lane.b32.xlu0 %v1529, 256
        %v1532 = vpop.permute.xlu0 %1531
        %s1534 = sor.u32 256, 8
        %1535 = vbcast.lane.b32.xlu0 %v1529, %s1534
        %v1536 = vpop.permute.xlu0 %1535
        %v1537 = vlaneseq
        %v1538 = vshrl.u32 %v1537, 7
        %v1539 = vsub.s32 7, %v1538
        %v1540 = vrot.slane %v519, %v1539
        %1542 = vbcast.lane.b32.xlu0 %v1540, 256
        %v1543 = vpop.permute.xlu0 %1542
        %s1545 = sor.u32 256, 8
        %1546 = vbcast.lane.b32.xlu0 %v1540, %s1545
        %v1547 = vpop.permute.xlu0 %1546
        %v1548 = vlaneseq
        %v1549 = vshrl.u32 %v1548, 7
        %v1550 = vsub.s32 0, %v1549
        %v1551 = vrot.slane %v655, %v1550
        %1553 = vbcast.lane.b32.xlu0 %v1551, 256
        %v1554 = vpop.permute.xlu0 %1553
        %s1556 = sor.u32 256, 8
        %1557 = vbcast.lane.b32.xlu0 %v1551, %s1556
        %v1558 = vpop.permute.xlu0 %1557
        %v1559 = vlaneseq
        %v1560 = vshrl.u32 %v1559, 7
        %v1561 = vsub.s32 1, %v1560
        %v1562 = vrot.slane %v655, %v1561
        %1564 = vbcast.lane.b32.xlu0 %v1562, 256
        %v1565 = vpop.permute.xlu0 %1564
        %s1567 = sor.u32 256, 8
        %1568 = vbcast.lane.b32.xlu0 %v1562, %s1567
        %v1569 = vpop.permute.xlu0 %1568
        %v1570 = vlaneseq
        %v1571 = vshrl.u32 %v1570, 7
        %v1572 = vsub.s32 2, %v1571
        %v1573 = vrot.slane %v655, %v1572
        %1575 = vbcast.lane.b32.xlu0 %v1573, 256
        %v1576 = vpop.permute.xlu0 %1575
        %s1578 = sor.u32 256, 8
        %1579 = vbcast.lane.b32.xlu0 %v1573, %s1578
        %v1580 = vpop.permute.xlu0 %1579
        %v1581 = vlaneseq
        %v1582 = vshrl.u32 %v1581, 7
        %v1583 = vsub.s32 3, %v1582
        %v1584 = vrot.slane %v655, %v1583
        %1586 = vbcast.lane.b32.xlu0 %v1584, 256
        %v1587 = vpop.permute.xlu0 %1586
        %s1589 = sor.u32 256, 8
        %1590 = vbcast.lane.b32.xlu0 %v1584, %s1589
        %v1591 = vpop.permute.xlu0 %1590
        %v1592 = vlaneseq
        %v1593 = vshrl.u32 %v1592, 7
        %v1594 = vsub.s32 4, %v1593
        %v1595 = vrot.slane %v655, %v1594
        %1597 = vbcast.lane.b32.xlu0 %v1595, 256
        %v1598 = vpop.permute.xlu0 %1597
        %s1600 = sor.u32 256, 8
        %1601 = vbcast.lane.b32.xlu0 %v1595, %s1600
        %v1602 = vpop.permute.xlu0 %1601
        %v1603 = vlaneseq
        %v1604 = vshrl.u32 %v1603, 7
        %v1605 = vsub.s32 5, %v1604
        %v1606 = vrot.slane %v655, %v1605
        %1608 = vbcast.lane.b32.xlu0 %v1606, 256
        %v1609 = vpop.permute.xlu0 %1608
        %s1611 = sor.u32 256, 8
        %1612 = vbcast.lane.b32.xlu0 %v1606, %s1611
        %v1613 = vpop.permute.xlu0 %1612
        %v1614 = vlaneseq
        %v1615 = vshrl.u32 %v1614, 7
        %v1616 = vsub.s32 6, %v1615
        %v1617 = vrot.slane %v655, %v1616
        %1619 = vbcast.lane.b32.xlu0 %v1617, 256
        %v1620 = vpop.permute.xlu0 %1619
        %s1622 = sor.u32 256, 8
        %1623 = vbcast.lane.b32.xlu0 %v1617, %s1622
        %v1624 = vpop.permute.xlu0 %1623
        %v1625 = vlaneseq
        %v1626 = vshrl.u32 %v1625, 7
        %v1627 = vsub.s32 7, %v1626
        %v1628 = vrot.slane %v655, %v1627
        %1630 = vbcast.lane.b32.xlu0 %v1628, 256
        %v1631 = vpop.permute.xlu0 %1630
        %s1633 = sor.u32 256, 8
        %1634 = vbcast.lane.b32.xlu0 %v1628, %s1633
        %v1635 = vpop.permute.xlu0 %1634
        %v1636 = vlaneseq
        %v1637 = vshrl.u32 %v1636, 7
        %v1638 = vsub.s32 0, %v1637
        %v1639 = vrot.slane %v520, %v1638
        %1641 = vbcast.lane.b32.xlu0 %v1639, 256
        %v1642 = vpop.permute.xlu0 %1641
        %s1644 = sor.u32 256, 8
        %1645 = vbcast.lane.b32.xlu0 %v1639, %s1644
        %v1646 = vpop.permute.xlu0 %1645
        %v1647 = vlaneseq
        %v1648 = vshrl.u32 %v1647, 7
        %v1649 = vsub.s32 1, %v1648
        %v1650 = vrot.slane %v520, %v1649
        %1652 = vbcast.lane.b32.xlu0 %v1650, 256
        %v1653 = vpop.permute.xlu0 %1652
        %s1655 = sor.u32 256, 8
        %1656 = vbcast.lane.b32.xlu0 %v1650, %s1655
        %v1657 = vpop.permute.xlu0 %1656
        %v1658 = vlaneseq
        %v1659 = vshrl.u32 %v1658, 7
        %v1660 = vsub.s32 2, %v1659
        %v1661 = vrot.slane %v520, %v1660
        %1663 = vbcast.lane.b32.xlu0 %v1661, 256
        %v1664 = vpop.permute.xlu0 %1663
        %s1666 = sor.u32 256, 8
        %1667 = vbcast.lane.b32.xlu0 %v1661, %s1666
        %v1668 = vpop.permute.xlu0 %1667
        %v1669 = vlaneseq
        %v1670 = vshrl.u32 %v1669, 7
        %v1671 = vsub.s32 3, %v1670
        %v1672 = vrot.slane %v520, %v1671
        %1674 = vbcast.lane.b32.xlu0 %v1672, 256
        %v1675 = vpop.permute.xlu0 %1674
        %s1677 = sor.u32 256, 8
        %1678 = vbcast.lane.b32.xlu0 %v1672, %s1677
        %v1679 = vpop.permute.xlu0 %1678
        %v1680 = vlaneseq
        %v1681 = vshrl.u32 %v1680, 7
        %v1682 = vsub.s32 4, %v1681
        %v1683 = vrot.slane %v520, %v1682
        %1685 = vbcast.lane.b32.xlu0 %v1683, 256
        %v1686 = vpop.permute.xlu0 %1685
        %s1688 = sor.u32 256, 8
        %1689 = vbcast.lane.b32.xlu0 %v1683, %s1688
        %v1690 = vpop.permute.xlu0 %1689
        %v1691 = vlaneseq
        %v1692 = vshrl.u32 %v1691, 7
        %v1693 = vsub.s32 5, %v1692
        %v1694 = vrot.slane %v520, %v1693
        %1696 = vbcast.lane.b32.xlu0 %v1694, 256
        %v1697 = vpop.permute.xlu0 %1696
        %s1699 = sor.u32 256, 8
        %1700 = vbcast.lane.b32.xlu0 %v1694, %s1699
        %v1701 = vpop.permute.xlu0 %1700
        %v1702 = vlaneseq
        %v1703 = vshrl.u32 %v1702, 7
        %v1704 = vsub.s32 6, %v1703
        %v1705 = vrot.slane %v520, %v1704
        %1707 = vbcast.lane.b32.xlu0 %v1705, 256
        %v1708 = vpop.permute.xlu0 %1707
        %s1710 = sor.u32 256, 8
        %1711 = vbcast.lane.b32.xlu0 %v1705, %s1710
        %v1712 = vpop.permute.xlu0 %1711
        %v1713 = vlaneseq
        %v1714 = vshrl.u32 %v1713, 7
        %v1715 = vsub.s32 7, %v1714
        %v1716 = vrot.slane %v520, %v1715
        %1718 = vbcast.lane.b32.xlu0 %v1716, 256
        %v1719 = vpop.permute.xlu0 %1718
        %s1721 = sor.u32 256, 8
        %1722 = vbcast.lane.b32.xlu0 %v1716, %s1721
        %v1723 = vpop.permute.xlu0 %1722
        %v1724 = vlaneseq
        %v1725 = vshrl.u32 %v1724, 7
        %v1726 = vsub.s32 0, %v1725
        %v1727 = vrot.slane %v656, %v1726
        %1729 = vbcast.lane.b32.xlu0 %v1727, 256
        %v1730 = vpop.permute.xlu0 %1729
        %s1732 = sor.u32 256, 8
        %1733 = vbcast.lane.b32.xlu0 %v1727, %s1732
        %v1734 = vpop.permute.xlu0 %1733
        %v1735 = vlaneseq
        %v1736 = vshrl.u32 %v1735, 7
        %v1737 = vsub.s32 1, %v1736
        %v1738 = vrot.slane %v656, %v1737
        %1740 = vbcast.lane.b32.xlu0 %v1738, 256
        %v1741 = vpop.permute.xlu0 %1740
        %s1743 = sor.u32 256, 8
        %1744 = vbcast.lane.b32.xlu0 %v1738, %s1743
        %v1745 = vpop.permute.xlu0 %1744
        %v1746 = vlaneseq
        %v1747 = vshrl.u32 %v1746, 7
        %v1748 = vsub.s32 2, %v1747
        %v1749 = vrot.slane %v656, %v1748
        %1751 = vbcast.lane.b32.xlu0 %v1749, 256
        %v1752 = vpop.permute.xlu0 %1751
        %s1754 = sor.u32 256, 8
        %1755 = vbcast.lane.b32.xlu0 %v1749, %s1754
        %v1756 = vpop.permute.xlu0 %1755
        %v1757 = vlaneseq
        %v1758 = vshrl.u32 %v1757, 7
        %v1759 = vsub.s32 3, %v1758
        %v1760 = vrot.slane %v656, %v1759
        %1762 = vbcast.lane.b32.xlu0 %v1760, 256
        %v1763 = vpop.permute.xlu0 %1762
        %s1765 = sor.u32 256, 8
        %1766 = vbcast.lane.b32.xlu0 %v1760, %s1765
        %v1767 = vpop.permute.xlu0 %1766
        %v1768 = vlaneseq
        %v1769 = vshrl.u32 %v1768, 7
        %v1770 = vsub.s32 4, %v1769
        %v1771 = vrot.slane %v656, %v1770
        %1773 = vbcast.lane.b32.xlu0 %v1771, 256
        %v1774 = vpop.permute.xlu0 %1773
        %s1776 = sor.u32 256, 8
        %1777 = vbcast.lane.b32.xlu0 %v1771, %s1776
        %v1778 = vpop.permute.xlu0 %1777
        %v1779 = vlaneseq
        %v1780 = vshrl.u32 %v1779, 7
        %v1781 = vsub.s32 5, %v1780
        %v1782 = vrot.slane %v656, %v1781
        %1784 = vbcast.lane.b32.xlu0 %v1782, 256
        %v1785 = vpop.permute.xlu0 %1784
        %s1787 = sor.u32 256, 8
        %1788 = vbcast.lane.b32.xlu0 %v1782, %s1787
        %v1789 = vpop.permute.xlu0 %1788
        %v1790 = vlaneseq
        %v1791 = vshrl.u32 %v1790, 7
        %v1792 = vsub.s32 6, %v1791
        %v1793 = vrot.slane %v656, %v1792
        %1795 = vbcast.lane.b32.xlu0 %v1793, 256
        %v1796 = vpop.permute.xlu0 %1795
        %s1798 = sor.u32 256, 8
        %1799 = vbcast.lane.b32.xlu0 %v1793, %s1798
        %v1800 = vpop.permute.xlu0 %1799
        %v1801 = vlaneseq
        %v1802 = vshrl.u32 %v1801, 7
        %v1803 = vsub.s32 7, %v1802
        %v1804 = vrot.slane %v656, %v1803
        %1806 = vbcast.lane.b32.xlu0 %v1804, 256
        %v1807 = vpop.permute.xlu0 %1806
        %s1809 = sor.u32 256, 8
        %1810 = vbcast.lane.b32.xlu0 %v1804, %s1809
        %v1811 = vpop.permute.xlu0 %1810
        %v1812 = vlaneseq
        %v1813 = vshrl.u32 %v1812, 7
        %v1814 = vsub.s32 0, %v1813
        %v1815 = vrot.slane %v521, %v1814
        %1817 = vbcast.lane.b32.xlu0 %v1815, 256
        %v1818 = vpop.permute.xlu0 %1817
        %s1820 = sor.u32 256, 8
        %1821 = vbcast.lane.b32.xlu0 %v1815, %s1820
        %v1822 = vpop.permute.xlu0 %1821
        %v1823 = vlaneseq
        %v1824 = vshrl.u32 %v1823, 7
        %v1825 = vsub.s32 1, %v1824
        %v1826 = vrot.slane %v521, %v1825
        %1828 = vbcast.lane.b32.xlu0 %v1826, 256
        %v1829 = vpop.permute.xlu0 %1828
        %s1831 = sor.u32 256, 8
        %1832 = vbcast.lane.b32.xlu0 %v1826, %s1831
        %v1833 = vpop.permute.xlu0 %1832
        %v1834 = vlaneseq
        %v1835 = vshrl.u32 %v1834, 7
        %v1836 = vsub.s32 2, %v1835
        %v1837 = vrot.slane %v521, %v1836
        %1839 = vbcast.lane.b32.xlu0 %v1837, 256
        %v1840 = vpop.permute.xlu0 %1839
        %s1842 = sor.u32 256, 8
        %1843 = vbcast.lane.b32.xlu0 %v1837, %s1842
        %v1844 = vpop.permute.xlu0 %1843
        %v1845 = vlaneseq
        %v1846 = vshrl.u32 %v1845, 7
        %v1847 = vsub.s32 3, %v1846
        %v1848 = vrot.slane %v521, %v1847
        %1850 = vbcast.lane.b32.xlu0 %v1848, 256
        %v1851 = vpop.permute.xlu0 %1850
        %s1853 = sor.u32 256, 8
        %1854 = vbcast.lane.b32.xlu0 %v1848, %s1853
        %v1855 = vpop.permute.xlu0 %1854
        %v1856 = vlaneseq
        %v1857 = vshrl.u32 %v1856, 7
        %v1858 = vsub.s32 4, %v1857
        %v1859 = vrot.slane %v521, %v1858
        %1861 = vbcast.lane.b32.xlu0 %v1859, 256
        %v1862 = vpop.permute.xlu0 %1861
        %s1864 = sor.u32 256, 8
        %1865 = vbcast.lane.b32.xlu0 %v1859, %s1864
        %v1866 = vpop.permute.xlu0 %1865
        %v1867 = vlaneseq
        %v1868 = vshrl.u32 %v1867, 7
        %v1869 = vsub.s32 5, %v1868
        %v1870 = vrot.slane %v521, %v1869
        %1872 = vbcast.lane.b32.xlu0 %v1870, 256
        %v1873 = vpop.permute.xlu0 %1872
        %s1875 = sor.u32 256, 8
        %1876 = vbcast.lane.b32.xlu0 %v1870, %s1875
        %v1877 = vpop.permute.xlu0 %1876
        %v1878 = vlaneseq
        %v1879 = vshrl.u32 %v1878, 7
        %v1880 = vsub.s32 6, %v1879
        %v1881 = vrot.slane %v521, %v1880
        %1883 = vbcast.lane.b32.xlu0 %v1881, 256
        %v1884 = vpop.permute.xlu0 %1883
        %s1886 = sor.u32 256, 8
        %1887 = vbcast.lane.b32.xlu0 %v1881, %s1886
        %v1888 = vpop.permute.xlu0 %1887
        %v1889 = vlaneseq
        %v1890 = vshrl.u32 %v1889, 7
        %v1891 = vsub.s32 7, %v1890
        %v1892 = vrot.slane %v521, %v1891
        %1894 = vbcast.lane.b32.xlu0 %v1892, 256
        %v1895 = vpop.permute.xlu0 %1894
        %s1897 = sor.u32 256, 8
        %1898 = vbcast.lane.b32.xlu0 %v1892, %s1897
        %v1899 = vpop.permute.xlu0 %1898
        %v1900 = vlaneseq
        %v1901 = vshrl.u32 %v1900, 7
        %v1902 = vsub.s32 0, %v1901
        %v1903 = vrot.slane %v657, %v1902
        %1905 = vbcast.lane.b32.xlu0 %v1903, 256
        %v1906 = vpop.permute.xlu0 %1905
        %s1908 = sor.u32 256, 8
        %1909 = vbcast.lane.b32.xlu0 %v1903, %s1908
        %v1910 = vpop.permute.xlu0 %1909
        %v1911 = vlaneseq
        %v1912 = vshrl.u32 %v1911, 7
        %v1913 = vsub.s32 1, %v1912
        %v1914 = vrot.slane %v657, %v1913
        %1916 = vbcast.lane.b32.xlu0 %v1914, 256
        %v1917 = vpop.permute.xlu0 %1916
        %s1919 = sor.u32 256, 8
        %1920 = vbcast.lane.b32.xlu0 %v1914, %s1919
        %v1921 = vpop.permute.xlu0 %1920
        %v1922 = vlaneseq
        %v1923 = vshrl.u32 %v1922, 7
        %v1924 = vsub.s32 2, %v1923
        %v1925 = vrot.slane %v657, %v1924
        %1927 = vbcast.lane.b32.xlu0 %v1925, 256
        %v1928 = vpop.permute.xlu0 %1927
        %s1930 = sor.u32 256, 8
        %1931 = vbcast.lane.b32.xlu0 %v1925, %s1930
        %v1932 = vpop.permute.xlu0 %1931
        %v1933 = vlaneseq
        %v1934 = vshrl.u32 %v1933, 7
        %v1935 = vsub.s32 3, %v1934
        %v1936 = vrot.slane %v657, %v1935
        %1938 = vbcast.lane.b32.xlu0 %v1936, 256
        %v1939 = vpop.permute.xlu0 %1938
        %s1941 = sor.u32 256, 8
        %1942 = vbcast.lane.b32.xlu0 %v1936, %s1941
        %v1943 = vpop.permute.xlu0 %1942
        %v1944 = vlaneseq
        %v1945 = vshrl.u32 %v1944, 7
        %v1946 = vsub.s32 4, %v1945
        %v1947 = vrot.slane %v657, %v1946
        %1949 = vbcast.lane.b32.xlu0 %v1947, 256
        %v1950 = vpop.permute.xlu0 %1949
        %s1952 = sor.u32 256, 8
        %1953 = vbcast.lane.b32.xlu0 %v1947, %s1952
        %v1954 = vpop.permute.xlu0 %1953
        %v1955 = vlaneseq
        %v1956 = vshrl.u32 %v1955, 7
        %v1957 = vsub.s32 5, %v1956
        %v1958 = vrot.slane %v657, %v1957
        %1960 = vbcast.lane.b32.xlu0 %v1958, 256
        %v1961 = vpop.permute.xlu0 %1960
        %s1963 = sor.u32 256, 8
        %1964 = vbcast.lane.b32.xlu0 %v1958, %s1963
        %v1965 = vpop.permute.xlu0 %1964
        %v1966 = vlaneseq
        %v1967 = vshrl.u32 %v1966, 7
        %v1968 = vsub.s32 6, %v1967
        %v1969 = vrot.slane %v657, %v1968
        %1971 = vbcast.lane.b32.xlu0 %v1969, 256
        %v1972 = vpop.permute.xlu0 %1971
        %s1974 = sor.u32 256, 8
        %1975 = vbcast.lane.b32.xlu0 %v1969, %s1974
        %v1976 = vpop.permute.xlu0 %1975
        %v1977 = vlaneseq
        %v1978 = vshrl.u32 %v1977, 7
        %v1979 = vsub.s32 7, %v1978
        %v1980 = vrot.slane %v657, %v1979
        %1982 = vbcast.lane.b32.xlu0 %v1980, 256
        %v1983 = vpop.permute.xlu0 %1982
        %s1985 = sor.u32 256, 8
        %1986 = vbcast.lane.b32.xlu0 %v1980, %s1985
        %v1987 = vpop.permute.xlu0 %1986
        %v1988 = vlaneseq
        %v1989 = vshrl.u32 %v1988, 7
        %v1990 = vsub.s32 0, %v1989
        %v1991 = vrot.slane %v522, %v1990
        %1993 = vbcast.lane.b32.xlu0 %v1991, 256
        %v1994 = vpop.permute.xlu0 %1993
        %s1996 = sor.u32 256, 8
        %1997 = vbcast.lane.b32.xlu0 %v1991, %s1996
        %v1998 = vpop.permute.xlu0 %1997
        %v1999 = vlaneseq
        %v2000 = vshrl.u32 %v1999, 7
        %v2001 = vsub.s32 1, %v2000
        %v2002 = vrot.slane %v522, %v2001
        %2004 = vbcast.lane.b32.xlu0 %v2002, 256
        %v2005 = vpop.permute.xlu0 %2004
        %s2007 = sor.u32 256, 8
        %2008 = vbcast.lane.b32.xlu0 %v2002, %s2007
        %v2009 = vpop.permute.xlu0 %2008
        %v2010 = vlaneseq
        %v2011 = vshrl.u32 %v2010, 7
        %v2012 = vsub.s32 2, %v2011
        %v2013 = vrot.slane %v522, %v2012
        %2015 = vbcast.lane.b32.xlu0 %v2013, 256
        %v2016 = vpop.permute.xlu0 %2015
        %s2018 = sor.u32 256, 8
        %2019 = vbcast.lane.b32.xlu0 %v2013, %s2018
        %v2020 = vpop.permute.xlu0 %2019
        %v2021 = vlaneseq
        %v2022 = vshrl.u32 %v2021, 7
        %v2023 = vsub.s32 3, %v2022
        %v2024 = vrot.slane %v522, %v2023
        %2026 = vbcast.lane.b32.xlu0 %v2024, 256
        %v2027 = vpop.permute.xlu0 %2026
        %s2029 = sor.u32 256, 8
        %2030 = vbcast.lane.b32.xlu0 %v2024, %s2029
        %v2031 = vpop.permute.xlu0 %2030
        %v2032 = vlaneseq
        %v2033 = vshrl.u32 %v2032, 7
        %v2034 = vsub.s32 4, %v2033
        %v2035 = vrot.slane %v522, %v2034
        %2037 = vbcast.lane.b32.xlu0 %v2035, 256
        %v2038 = vpop.permute.xlu0 %2037
        %s2040 = sor.u32 256, 8
        %2041 = vbcast.lane.b32.xlu0 %v2035, %s2040
        %v2042 = vpop.permute.xlu0 %2041
        %v2043 = vlaneseq
        %v2044 = vshrl.u32 %v2043, 7
        %v2045 = vsub.s32 5, %v2044
        %v2046 = vrot.slane %v522, %v2045
        %2048 = vbcast.lane.b32.xlu0 %v2046, 256
        %v2049 = vpop.permute.xlu0 %2048
        %s2051 = sor.u32 256, 8
        %2052 = vbcast.lane.b32.xlu0 %v2046, %s2051
        %v2053 = vpop.permute.xlu0 %2052
        %v2054 = vlaneseq
        %v2055 = vshrl.u32 %v2054, 7
        %v2056 = vsub.s32 6, %v2055
        %v2057 = vrot.slane %v522, %v2056
        %2059 = vbcast.lane.b32.xlu0 %v2057, 256
        %v2060 = vpop.permute.xlu0 %2059
        %s2062 = sor.u32 256, 8
        %2063 = vbcast.lane.b32.xlu0 %v2057, %s2062
        %v2064 = vpop.permute.xlu0 %2063
        %v2065 = vlaneseq
        %v2066 = vshrl.u32 %v2065, 7
        %v2067 = vsub.s32 7, %v2066
        %v2068 = vrot.slane %v522, %v2067
        %2070 = vbcast.lane.b32.xlu0 %v2068, 256
        %v2071 = vpop.permute.xlu0 %2070
        %s2073 = sor.u32 256, 8
        %2074 = vbcast.lane.b32.xlu0 %v2068, %s2073
        %v2075 = vpop.permute.xlu0 %2074
        %v2076 = vlaneseq
        %v2077 = vshrl.u32 %v2076, 7
        %v2078 = vsub.s32 0, %v2077
        %v2079 = vrot.slane %v658, %v2078
        %2081 = vbcast.lane.b32.xlu0 %v2079, 256
        %v2082 = vpop.permute.xlu0 %2081
        %s2084 = sor.u32 256, 8
        %2085 = vbcast.lane.b32.xlu0 %v2079, %s2084
        %v2086 = vpop.permute.xlu0 %2085
        %v2087 = vlaneseq
        %v2088 = vshrl.u32 %v2087, 7
        %v2089 = vsub.s32 1, %v2088
        %v2090 = vrot.slane %v658, %v2089
        %2092 = vbcast.lane.b32.xlu0 %v2090, 256
        %v2093 = vpop.permute.xlu0 %2092
        %s2095 = sor.u32 256, 8
        %2096 = vbcast.lane.b32.xlu0 %v2090, %s2095
        %v2097 = vpop.permute.xlu0 %2096
        %v2098 = vlaneseq
        %v2099 = vshrl.u32 %v2098, 7
        %v2100 = vsub.s32 2, %v2099
        %v2101 = vrot.slane %v658, %v2100
        %2103 = vbcast.lane.b32.xlu0 %v2101, 256
        %v2104 = vpop.permute.xlu0 %2103
        %s2106 = sor.u32 256, 8
        %2107 = vbcast.lane.b32.xlu0 %v2101, %s2106
        %v2108 = vpop.permute.xlu0 %2107
        %v2109 = vlaneseq
        %v2110 = vshrl.u32 %v2109, 7
        %v2111 = vsub.s32 3, %v2110
        %v2112 = vrot.slane %v658, %v2111
        %2114 = vbcast.lane.b32.xlu0 %v2112, 256
        %v2115 = vpop.permute.xlu0 %2114
        %s2117 = sor.u32 256, 8
        %2118 = vbcast.lane.b32.xlu0 %v2112, %s2117
        %v2119 = vpop.permute.xlu0 %2118
        %v2120 = vlaneseq
        %v2121 = vshrl.u32 %v2120, 7
        %v2122 = vsub.s32 4, %v2121
        %v2123 = vrot.slane %v658, %v2122
        %2125 = vbcast.lane.b32.xlu0 %v2123, 256
        %v2126 = vpop.permute.xlu0 %2125
        %s2128 = sor.u32 256, 8
        %2129 = vbcast.lane.b32.xlu0 %v2123, %s2128
        %v2130 = vpop.permute.xlu0 %2129
        %v2131 = vlaneseq
        %v2132 = vshrl.u32 %v2131, 7
        %v2133 = vsub.s32 5, %v2132
        %v2134 = vrot.slane %v658, %v2133
        %2136 = vbcast.lane.b32.xlu0 %v2134, 256
        %v2137 = vpop.permute.xlu0 %2136
        %s2139 = sor.u32 256, 8
        %2140 = vbcast.lane.b32.xlu0 %v2134, %s2139
        %v2141 = vpop.permute.xlu0 %2140
        %v2142 = vlaneseq
        %v2143 = vshrl.u32 %v2142, 7
        %v2144 = vsub.s32 6, %v2143
        %v2145 = vrot.slane %v658, %v2144
        %2147 = vbcast.lane.b32.xlu0 %v2145, 256
        %v2148 = vpop.permute.xlu0 %2147
        %s2150 = sor.u32 256, 8
        %2151 = vbcast.lane.b32.xlu0 %v2145, %s2150
        %v2152 = vpop.permute.xlu0 %2151
        %v2153 = vlaneseq
        %v2154 = vshrl.u32 %v2153, 7
        %v2155 = vsub.s32 7, %v2154
        %v2156 = vrot.slane %v658, %v2155
        %2158 = vbcast.lane.b32.xlu0 %v2156, 256
        %v2159 = vpop.permute.xlu0 %2158
        %s2161 = sor.u32 256, 8
        %2162 = vbcast.lane.b32.xlu0 %v2156, %s2161
        %v2163 = vpop.permute.xlu0 %2162
        %v2164 = vlaneseq
        %v2165 = vshrl.u32 %v2164, 7
        %v2166 = vsub.s32 0, %v2165
        %v2167 = vrot.slane %v523, %v2166
        %2169 = vbcast.lane.b32.xlu0 %v2167, 256
        %v2170 = vpop.permute.xlu0 %2169
        %s2172 = sor.u32 256, 8
        %2173 = vbcast.lane.b32.xlu0 %v2167, %s2172
        %v2174 = vpop.permute.xlu0 %2173
        %v2175 = vlaneseq
        %v2176 = vshrl.u32 %v2175, 7
        %v2177 = vsub.s32 1, %v2176
        %v2178 = vrot.slane %v523, %v2177
        %2180 = vbcast.lane.b32.xlu0 %v2178, 256
        %v2181 = vpop.permute.xlu0 %2180
        %s2183 = sor.u32 256, 8
        %2184 = vbcast.lane.b32.xlu0 %v2178, %s2183
        %v2185 = vpop.permute.xlu0 %2184
        %v2186 = vlaneseq
        %v2187 = vshrl.u32 %v2186, 7
        %v2188 = vsub.s32 2, %v2187
        %v2189 = vrot.slane %v523, %v2188
        %2191 = vbcast.lane.b32.xlu0 %v2189, 256
        %v2192 = vpop.permute.xlu0 %2191
        %s2194 = sor.u32 256, 8
        %2195 = vbcast.lane.b32.xlu0 %v2189, %s2194
        %v2196 = vpop.permute.xlu0 %2195
        %v2197 = vlaneseq
        %v2198 = vshrl.u32 %v2197, 7
        %v2199 = vsub.s32 3, %v2198
        %v2200 = vrot.slane %v523, %v2199
        %2202 = vbcast.lane.b32.xlu0 %v2200, 256
        %v2203 = vpop.permute.xlu0 %2202
        %s2205 = sor.u32 256, 8
        %2206 = vbcast.lane.b32.xlu0 %v2200, %s2205
        %v2207 = vpop.permute.xlu0 %2206
        %v2208 = vlaneseq
        %v2209 = vshrl.u32 %v2208, 7
        %v2210 = vsub.s32 4, %v2209
        %v2211 = vrot.slane %v523, %v2210
        %2213 = vbcast.lane.b32.xlu0 %v2211, 256
        %v2214 = vpop.permute.xlu0 %2213
        %s2216 = sor.u32 256, 8
        %2217 = vbcast.lane.b32.xlu0 %v2211, %s2216
        %v2218 = vpop.permute.xlu0 %2217
        %v2219 = vlaneseq
        %v2220 = vshrl.u32 %v2219, 7
        %v2221 = vsub.s32 5, %v2220
        %v2222 = vrot.slane %v523, %v2221
        %2224 = vbcast.lane.b32.xlu0 %v2222, 256
        %v2225 = vpop.permute.xlu0 %2224
        %s2227 = sor.u32 256, 8
        %2228 = vbcast.lane.b32.xlu0 %v2222, %s2227
        %v2229 = vpop.permute.xlu0 %2228
        %v2230 = vlaneseq
        %v2231 = vshrl.u32 %v2230, 7
        %v2232 = vsub.s32 6, %v2231
        %v2233 = vrot.slane %v523, %v2232
        %2235 = vbcast.lane.b32.xlu0 %v2233, 256
        %v2236 = vpop.permute.xlu0 %2235
        %s2238 = sor.u32 256, 8
        %2239 = vbcast.lane.b32.xlu0 %v2233, %s2238
        %v2240 = vpop.permute.xlu0 %2239
        %v2241 = vlaneseq
        %v2242 = vshrl.u32 %v2241, 7
        %v2243 = vsub.s32 7, %v2242
        %v2244 = vrot.slane %v523, %v2243
        %2246 = vbcast.lane.b32.xlu0 %v2244, 256
        %v2247 = vpop.permute.xlu0 %2246
        %s2249 = sor.u32 256, 8
        %2250 = vbcast.lane.b32.xlu0 %v2244, %s2249
        %v2251 = vpop.permute.xlu0 %2250
        %v2252 = vlaneseq
        %v2253 = vshrl.u32 %v2252, 7
        %v2254 = vsub.s32 0, %v2253
        %v2255 = vrot.slane %v659, %v2254
        %2257 = vbcast.lane.b32.xlu0 %v2255, 256
        %v2258 = vpop.permute.xlu0 %2257
        %s2260 = sor.u32 256, 8
        %2261 = vbcast.lane.b32.xlu0 %v2255, %s2260
        %v2262 = vpop.permute.xlu0 %2261
        %v2263 = vlaneseq
        %v2264 = vshrl.u32 %v2263, 7
        %v2265 = vsub.s32 1, %v2264
        %v2266 = vrot.slane %v659, %v2265
        %2268 = vbcast.lane.b32.xlu0 %v2266, 256
        %v2269 = vpop.permute.xlu0 %2268
        %s2271 = sor.u32 256, 8
        %2272 = vbcast.lane.b32.xlu0 %v2266, %s2271
        %v2273 = vpop.permute.xlu0 %2272
        %v2274 = vlaneseq
        %v2275 = vshrl.u32 %v2274, 7
        %v2276 = vsub.s32 2, %v2275
        %v2277 = vrot.slane %v659, %v2276
        %2279 = vbcast.lane.b32.xlu0 %v2277, 256
        %v2280 = vpop.permute.xlu0 %2279
        %s2282 = sor.u32 256, 8
        %2283 = vbcast.lane.b32.xlu0 %v2277, %s2282
        %v2284 = vpop.permute.xlu0 %2283
        %v2285 = vlaneseq
        %v2286 = vshrl.u32 %v2285, 7
        %v2287 = vsub.s32 3, %v2286
        %v2288 = vrot.slane %v659, %v2287
        %2290 = vbcast.lane.b32.xlu0 %v2288, 256
        %v2291 = vpop.permute.xlu0 %2290
        %s2293 = sor.u32 256, 8
        %2294 = vbcast.lane.b32.xlu0 %v2288, %s2293
        %v2295 = vpop.permute.xlu0 %2294
        %v2296 = vlaneseq
        %v2297 = vshrl.u32 %v2296, 7
        %v2298 = vsub.s32 4, %v2297
        %v2299 = vrot.slane %v659, %v2298
        %2301 = vbcast.lane.b32.xlu0 %v2299, 256
        %v2302 = vpop.permute.xlu0 %2301
        %s2304 = sor.u32 256, 8
        %2305 = vbcast.lane.b32.xlu0 %v2299, %s2304
        %v2306 = vpop.permute.xlu0 %2305
        %v2307 = vlaneseq
        %v2308 = vshrl.u32 %v2307, 7
        %v2309 = vsub.s32 5, %v2308
        %v2310 = vrot.slane %v659, %v2309
        %2312 = vbcast.lane.b32.xlu0 %v2310, 256
        %v2313 = vpop.permute.xlu0 %2312
        %s2315 = sor.u32 256, 8
        %2316 = vbcast.lane.b32.xlu0 %v2310, %s2315
        %v2317 = vpop.permute.xlu0 %2316
        %v2318 = vlaneseq
        %v2319 = vshrl.u32 %v2318, 7
        %v2320 = vsub.s32 6, %v2319
        %v2321 = vrot.slane %v659, %v2320
        %2323 = vbcast.lane.b32.xlu0 %v2321, 256
        %v2324 = vpop.permute.xlu0 %2323
        %s2326 = sor.u32 256, 8
        %2327 = vbcast.lane.b32.xlu0 %v2321, %s2326
        %v2328 = vpop.permute.xlu0 %2327
        %v2329 = vlaneseq
        %v2330 = vshrl.u32 %v2329, 7
        %v2331 = vsub.s32 7, %v2330
        %v2332 = vrot.slane %v659, %v2331
        %2334 = vbcast.lane.b32.xlu0 %v2332, 256
        %v2335 = vpop.permute.xlu0 %2334
        %s2337 = sor.u32 256, 8
        %2338 = vbcast.lane.b32.xlu0 %v2332, %s2337
        %v2339 = vpop.permute.xlu0 %2338
        %vm2340 = vcmask 7168
        %v2341 = vsel %vm2340, %v938, %v1642
        %v2342 = vsel %vm2340, %v942, %v1646
        %v2343 = vsel %vm2340, %v949, %v1653
        %v2344 = vsel %vm2340, %v953, %v1657
        %v2345 = vsel %vm2340, %v960, %v1664
        %v2346 = vsel %vm2340, %v964, %v1668
        %v2347 = vsel %vm2340, %v971, %v1675
        %v2348 = vsel %vm2340, %v975, %v1679
        %v2349 = vsel %vm2340, %v982, %v1686
        %v2350 = vsel %vm2340, %v986, %v1690
        %v2351 = vsel %vm2340, %v993, %v1697
        %v2352 = vsel %vm2340, %v997, %v1701
        %v2353 = vsel %vm2340, %v1004, %v1708
        %v2354 = vsel %vm2340, %v1008, %v1712
        %v2355 = vsel %vm2340, %v1015, %v1719
        %v2356 = vsel %vm2340, %v1019, %v1723
        %v2357 = vsel %vm2340, %v1026, %v1730
        %v2358 = vsel %vm2340, %v1030, %v1734
        %v2359 = vsel %vm2340, %v1037, %v1741
        %v2360 = vsel %vm2340, %v1041, %v1745
        %v2361 = vsel %vm2340, %v1048, %v1752
        %v2362 = vsel %vm2340, %v1052, %v1756
        %v2363 = vsel %vm2340, %v1059, %v1763
        %v2364 = vsel %vm2340, %v1063, %v1767
        %v2365 = vsel %vm2340, %v1070, %v1774
        %v2366 = vsel %vm2340, %v1074, %v1778
        %v2367 = vsel %vm2340, %v1081, %v1785
        %v2368 = vsel %vm2340, %v1085, %v1789
        %v2369 = vsel %vm2340, %v1092, %v1796
        %v2370 = vsel %vm2340, %v1096, %v1800
        %v2371 = vsel %vm2340, %v1103, %v1807
        %v2372 = vsel %vm2340, %v1107, %v1811
        %v2373 = vsel %vm2340, %v1114, %v1818
        %v2374 = vsel %vm2340, %v1118, %v1822
        %v2375 = vsel %vm2340, %v1125, %v1829
        %v2376 = vsel %vm2340, %v1129, %v1833
        %v2377 = vsel %vm2340, %v1136, %v1840
        %v2378 = vsel %vm2340, %v1140, %v1844
        %v2379 = vsel %vm2340, %v1147, %v1851
        %v2380 = vsel %vm2340, %v1151, %v1855
        %v2381 = vsel %vm2340, %v1158, %v1862
        %v2382 = vsel %vm2340, %v1162, %v1866
        %v2383 = vsel %vm2340, %v1169, %v1873
        %v2384 = vsel %vm2340, %v1173, %v1877
        %v2385 = vsel %vm2340, %v1180, %v1884
        %v2386 = vsel %vm2340, %v1184, %v1888
        %v2387 = vsel %vm2340, %v1191, %v1895
        %v2388 = vsel %vm2340, %v1195, %v1899
        %v2389 = vsel %vm2340, %v1202, %v1906
        %v2390 = vsel %vm2340, %v1206, %v1910
        %v2391 = vsel %vm2340, %v1213, %v1917
        %v2392 = vsel %vm2340, %v1217, %v1921
        %v2393 = vsel %vm2340, %v1224, %v1928
        %v2394 = vsel %vm2340, %v1228, %v1932
        %v2395 = vsel %vm2340, %v1235, %v1939
        %v2396 = vsel %vm2340, %v1239, %v1943
        %v2397 = vsel %vm2340, %v1246, %v1950
        %v2398 = vsel %vm2340, %v1250, %v1954
        %v2399 = vsel %vm2340, %v1257, %v1961
        %v2400 = vsel %vm2340, %v1261, %v1965
        %v2401 = vsel %vm2340, %v1268, %v1972
        %v2402 = vsel %vm2340, %v1272, %v1976
        %v2403 = vsel %vm2340, %v1279, %v1983
        %v2404 = vsel %vm2340, %v1283, %v1987
        %v2405 = vsel %vm2340, %v1290, %v1994
        %v2406 = vsel %vm2340, %v1294, %v1998
        %v2407 = vsel %vm2340, %v1301, %v2005
        %v2408 = vsel %vm2340, %v1305, %v2009
        %v2409 = vsel %vm2340, %v1312, %v2016
        %v2410 = vsel %vm2340, %v1316, %v2020
        %v2411 = vsel %vm2340, %v1323, %v2027
        %v2412 = vsel %vm2340, %v1327, %v2031
        %v2413 = vsel %vm2340, %v1334, %v2038
        %v2414 = vsel %vm2340, %v1338, %v2042
        %v2415 = vsel %vm2340, %v1345, %v2049
        %v2416 = vsel %vm2340, %v1349, %v2053
        %v2417 = vsel %vm2340, %v1356, %v2060
        %v2418 = vsel %vm2340, %v1360, %v2064
        %v2419 = vsel %vm2340, %v1367, %v2071
        %v2420 = vsel %vm2340, %v1371, %v2075
        %v2421 = vsel %vm2340, %v1378, %v2082
        %v2422 = vsel %vm2340, %v1382, %v2086
        %v2423 = vsel %vm2340, %v1389, %v2093
        %v2424 = vsel %vm2340, %v1393, %v2097
        %v2425 = vsel %vm2340, %v1400, %v2104
        %v2426 = vsel %vm2340, %v1404, %v2108
        %v2427 = vsel %vm2340, %v1411, %v2115
        %v2428 = vsel %vm2340, %v1415, %v2119
        %v2429 = vsel %vm2340, %v1422, %v2126
        %v2430 = vsel %vm2340, %v1426, %v2130
        %v2431 = vsel %vm2340, %v1433, %v2137
        %v2432 = vsel %vm2340, %v1437, %v2141
        %v2433 = vsel %vm2340, %v1444, %v2148
        %v2434 = vsel %vm2340, %v1448, %v2152
        %v2435 = vsel %vm2340, %v1455, %v2159
        %v2436 = vsel %vm2340, %v1459, %v2163
        %v2437 = vsel %vm2340, %v1466, %v2170
        %v2438 = vsel %vm2340, %v1470, %v2174
        %v2439 = vsel %vm2340, %v1477, %v2181
        %v2440 = vsel %vm2340, %v1481, %v2185
        %v2441 = vsel %vm2340, %v1488, %v2192
        %v2442 = vsel %vm2340, %v1492, %v2196
        %v2443 = vsel %vm2340, %v1499, %v2203
        %v2444 = vsel %vm2340, %v1503, %v2207
        %v2445 = vsel %vm2340, %v1510, %v2214
        %v2446 = vsel %vm2340, %v1514, %v2218
        %v2447 = vsel %vm2340, %v1521, %v2225
        %v2448 = vsel %vm2340, %v1525, %v2229
        %v2449 = vsel %vm2340, %v1532, %v2236
        %v2450 = vsel %vm2340, %v1536, %v2240
        %v2451 = vsel %vm2340, %v1543, %v2247
        %v2452 = vsel %vm2340, %v1547, %v2251
        %v2453 = vsel %vm2340, %v1554, %v2258
        %v2454 = vsel %vm2340, %v1558, %v2262
        %v2455 = vsel %vm2340, %v1565, %v2269
        %v2456 = vsel %vm2340, %v1569, %v2273
        %v2457 = vsel %vm2340, %v1576, %v2280
        %v2458 = vsel %vm2340, %v1580, %v2284
        %v2459 = vsel %vm2340, %v1587, %v2291
        %v2460 = vsel %vm2340, %v1591, %v2295
        %v2461 = vsel %vm2340, %v1598, %v2302
        %v2462 = vsel %vm2340, %v1602, %v2306
        %v2463 = vsel %vm2340, %v1609, %v2313
        %v2464 = vsel %vm2340, %v1613, %v2317
        %v2465 = vsel %vm2340, %v1620, %v2324
        %v2466 = vsel %vm2340, %v1624, %v2328
        %v2467 = vsel %vm2340, %v1631, %v2335
        %v2468 = vsel %vm2340, %v1635, %v2339
        %v2469 = vlaneseq
        %v2470 = vshrl.u32 %v2469, 7
        %v2471 = vsub.s32 0, %v2470
        %v2472 = vrot.slane %v788, %v2471
        %2474 = vbcast.lane.b32.xlu0 %v2472, 256
        %v2475 = vpop.permute.xlu0 %2474
        %s2477 = sor.u32 256, 8
        %2478 = vbcast.lane.b32.xlu0 %v2472, %s2477
        %v2479 = vpop.permute.xlu0 %2478
        %v2480 = vlaneseq
        %v2481 = vshrl.u32 %v2480, 7
        %v2482 = vsub.s32 1, %v2481
        %v2483 = vrot.slane %v788, %v2482
        %2485 = vbcast.lane.b32.xlu0 %v2483, 256
        %v2486 = vpop.permute.xlu0 %2485
        %s2488 = sor.u32 256, 8
        %2489 = vbcast.lane.b32.xlu0 %v2483, %s2488
        %v2490 = vpop.permute.xlu0 %2489
        %v2491 = vlaneseq
        %v2492 = vshrl.u32 %v2491, 7
        %v2493 = vsub.s32 2, %v2492
        %v2494 = vrot.slane %v788, %v2493
        %2496 = vbcast.lane.b32.xlu0 %v2494, 256
        %v2497 = vpop.permute.xlu0 %2496
        %s2499 = sor.u32 256, 8
        %2500 = vbcast.lane.b32.xlu0 %v2494, %s2499
        %v2501 = vpop.permute.xlu0 %2500
        %v2502 = vlaneseq
        %v2503 = vshrl.u32 %v2502, 7
        %v2504 = vsub.s32 3, %v2503
        %v2505 = vrot.slane %v788, %v2504
        %2507 = vbcast.lane.b32.xlu0 %v2505, 256
        %v2508 = vpop.permute.xlu0 %2507
        %s2510 = sor.u32 256, 8
        %2511 = vbcast.lane.b32.xlu0 %v2505, %s2510
        %v2512 = vpop.permute.xlu0 %2511
        %v2513 = vlaneseq
        %v2514 = vshrl.u32 %v2513, 7
        %v2515 = vsub.s32 4, %v2514
        %v2516 = vrot.slane %v788, %v2515
        %2518 = vbcast.lane.b32.xlu0 %v2516, 256
        %v2519 = vpop.permute.xlu0 %2518
        %s2521 = sor.u32 256, 8
        %2522 = vbcast.lane.b32.xlu0 %v2516, %s2521
        %v2523 = vpop.permute.xlu0 %2522
        %v2524 = vlaneseq
        %v2525 = vshrl.u32 %v2524, 7
        %v2526 = vsub.s32 5, %v2525
        %v2527 = vrot.slane %v788, %v2526
        %2529 = vbcast.lane.b32.xlu0 %v2527, 256
        %v2530 = vpop.permute.xlu0 %2529
        %s2532 = sor.u32 256, 8
        %2533 = vbcast.lane.b32.xlu0 %v2527, %s2532
        %v2534 = vpop.permute.xlu0 %2533
        %v2535 = vlaneseq
        %v2536 = vshrl.u32 %v2535, 7
        %v2537 = vsub.s32 6, %v2536
        %v2538 = vrot.slane %v788, %v2537
        %2540 = vbcast.lane.b32.xlu0 %v2538, 256
        %v2541 = vpop.permute.xlu0 %2540
        %s2543 = sor.u32 256, 8
        %2544 = vbcast.lane.b32.xlu0 %v2538, %s2543
        %v2545 = vpop.permute.xlu0 %2544
        %v2546 = vlaneseq
        %v2547 = vshrl.u32 %v2546, 7
        %v2548 = vsub.s32 7, %v2547
        %v2549 = vrot.slane %v788, %v2548
        %2551 = vbcast.lane.b32.xlu0 %v2549, 256
        %v2552 = vpop.permute.xlu0 %2551
        %s2554 = sor.u32 256, 8
        %2555 = vbcast.lane.b32.xlu0 %v2549, %s2554
        %v2556 = vpop.permute.xlu0 %2555
        %v2557 = vlaneseq
        %v2558 = vshrl.u32 %v2557, 7
        %v2559 = vsub.s32 0, %v2558
        %v2560 = vrot.slane %v924, %v2559
        %2562 = vbcast.lane.b32.xlu0 %v2560, 256
        %v2563 = vpop.permute.xlu0 %2562
        %s2565 = sor.u32 256, 8
        %2566 = vbcast.lane.b32.xlu0 %v2560, %s2565
        %v2567 = vpop.permute.xlu0 %2566
        %v2568 = vlaneseq
        %v2569 = vshrl.u32 %v2568, 7
        %v2570 = vsub.s32 1, %v2569
        %v2571 = vrot.slane %v924, %v2570
        %2573 = vbcast.lane.b32.xlu0 %v2571, 256
        %v2574 = vpop.permute.xlu0 %2573
        %s2576 = sor.u32 256, 8
        %2577 = vbcast.lane.b32.xlu0 %v2571, %s2576
        %v2578 = vpop.permute.xlu0 %2577
        %v2579 = vlaneseq
        %v2580 = vshrl.u32 %v2579, 7
        %v2581 = vsub.s32 2, %v2580
        %v2582 = vrot.slane %v924, %v2581
        %2584 = vbcast.lane.b32.xlu0 %v2582, 256
        %v2585 = vpop.permute.xlu0 %2584
        %s2587 = sor.u32 256, 8
        %2588 = vbcast.lane.b32.xlu0 %v2582, %s2587
        %v2589 = vpop.permute.xlu0 %2588
        %v2590 = vlaneseq
        %v2591 = vshrl.u32 %v2590, 7
        %v2592 = vsub.s32 3, %v2591
        %v2593 = vrot.slane %v924, %v2592
        %2595 = vbcast.lane.b32.xlu0 %v2593, 256
        %v2596 = vpop.permute.xlu0 %2595
        %s2598 = sor.u32 256, 8
        %2599 = vbcast.lane.b32.xlu0 %v2593, %s2598
        %v2600 = vpop.permute.xlu0 %2599
        %v2601 = vlaneseq
        %v2602 = vshrl.u32 %v2601, 7
        %v2603 = vsub.s32 4, %v2602
        %v2604 = vrot.slane %v924, %v2603
        %2606 = vbcast.lane.b32.xlu0 %v2604, 256
        %v2607 = vpop.permute.xlu0 %2606
        %s2609 = sor.u32 256, 8
        %2610 = vbcast.lane.b32.xlu0 %v2604, %s2609
        %v2611 = vpop.permute.xlu0 %2610
        %v2612 = vlaneseq
        %v2613 = vshrl.u32 %v2612, 7
        %v2614 = vsub.s32 5, %v2613
        %v2615 = vrot.slane %v924, %v2614
        %2617 = vbcast.lane.b32.xlu0 %v2615, 256
        %v2618 = vpop.permute.xlu0 %2617
        %s2620 = sor.u32 256, 8
        %2621 = vbcast.lane.b32.xlu0 %v2615, %s2620
        %v2622 = vpop.permute.xlu0 %2621
        %v2623 = vlaneseq
        %v2624 = vshrl.u32 %v2623, 7
        %v2625 = vsub.s32 6, %v2624
        %v2626 = vrot.slane %v924, %v2625
        %2628 = vbcast.lane.b32.xlu0 %v2626, 256
        %v2629 = vpop.permute.xlu0 %2628
        %s2631 = sor.u32 256, 8
        %2632 = vbcast.lane.b32.xlu0 %v2626, %s2631
        %v2633 = vpop.permute.xlu0 %2632
        %v2634 = vlaneseq
        %v2635 = vshrl.u32 %v2634, 7
        %v2636 = vsub.s32 7, %v2635
        %v2637 = vrot.slane %v924, %v2636
        %2639 = vbcast.lane.b32.xlu0 %v2637, 256
        %v2640 = vpop.permute.xlu0 %2639
        %s2642 = sor.u32 256, 8
        %2643 = vbcast.lane.b32.xlu0 %v2637, %s2642
        %v2644 = vpop.permute.xlu0 %2643
        %v2645 = vlaneseq
        %v2646 = vshrl.u32 %v2645, 7
        %v2647 = vsub.s32 0, %v2646
        %v2648 = vrot.slane %v789, %v2647
        %2650 = vbcast.lane.b32.xlu0 %v2648, 256
        %v2651 = vpop.permute.xlu0 %2650
        %s2653 = sor.u32 256, 8
        %2654 = vbcast.lane.b32.xlu0 %v2648, %s2653
        %v2655 = vpop.permute.xlu0 %2654
        %v2656 = vlaneseq
        %v2657 = vshrl.u32 %v2656, 7
        %v2658 = vsub.s32 1, %v2657
        %v2659 = vrot.slane %v789, %v2658
        %2661 = vbcast.lane.b32.xlu0 %v2659, 256
        %v2662 = vpop.permute.xlu0 %2661
        %s2664 = sor.u32 256, 8
        %2665 = vbcast.lane.b32.xlu0 %v2659, %s2664
        %v2666 = vpop.permute.xlu0 %2665
        %v2667 = vlaneseq
        %v2668 = vshrl.u32 %v2667, 7
        %v2669 = vsub.s32 2, %v2668
        %v2670 = vrot.slane %v789, %v2669
        %2672 = vbcast.lane.b32.xlu0 %v2670, 256
        %v2673 = vpop.permute.xlu0 %2672
        %s2675 = sor.u32 256, 8
        %2676 = vbcast.lane.b32.xlu0 %v2670, %s2675
        %v2677 = vpop.permute.xlu0 %2676
        %v2678 = vlaneseq
        %v2679 = vshrl.u32 %v2678, 7
        %v2680 = vsub.s32 3, %v2679
        %v2681 = vrot.slane %v789, %v2680
        %2683 = vbcast.lane.b32.xlu0 %v2681, 256
        %v2684 = vpop.permute.xlu0 %2683
        %s2686 = sor.u32 256, 8
        %2687 = vbcast.lane.b32.xlu0 %v2681, %s2686
        %v2688 = vpop.permute.xlu0 %2687
        %v2689 = vlaneseq
        %v2690 = vshrl.u32 %v2689, 7
        %v2691 = vsub.s32 4, %v2690
        %v2692 = vrot.slane %v789, %v2691
        %2694 = vbcast.lane.b32.xlu0 %v2692, 256
        %v2695 = vpop.permute.xlu0 %2694
        %s2697 = sor.u32 256, 8
        %2698 = vbcast.lane.b32.xlu0 %v2692, %s2697
        %v2699 = vpop.permute.xlu0 %2698
        %v2700 = vlaneseq
        %v2701 = vshrl.u32 %v2700, 7
        %v2702 = vsub.s32 5, %v2701
        %v2703 = vrot.slane %v789, %v2702
        %2705 = vbcast.lane.b32.xlu0 %v2703, 256
        %v2706 = vpop.permute.xlu0 %2705
        %s2708 = sor.u32 256, 8
        %2709 = vbcast.lane.b32.xlu0 %v2703, %s2708
        %v2710 = vpop.permute.xlu0 %2709
        %v2711 = vlaneseq
        %v2712 = vshrl.u32 %v2711, 7
        %v2713 = vsub.s32 6, %v2712
        %v2714 = vrot.slane %v789, %v2713
        %2716 = vbcast.lane.b32.xlu0 %v2714, 256
        %v2717 = vpop.permute.xlu0 %2716
        %s2719 = sor.u32 256, 8
        %2720 = vbcast.lane.b32.xlu0 %v2714, %s2719
        %v2721 = vpop.permute.xlu0 %2720
        %v2722 = vlaneseq
        %v2723 = vshrl.u32 %v2722, 7
        %v2724 = vsub.s32 7, %v2723
        %v2725 = vrot.slane %v789, %v2724
        %2727 = vbcast.lane.b32.xlu0 %v2725, 256
        %v2728 = vpop.permute.xlu0 %2727
        %s2730 = sor.u32 256, 8
        %2731 = vbcast.lane.b32.xlu0 %v2725, %s2730
        %v2732 = vpop.permute.xlu0 %2731
        %v2733 = vlaneseq
        %v2734 = vshrl.u32 %v2733, 7
        %v2735 = vsub.s32 0, %v2734
        %v2736 = vrot.slane %v925, %v2735
        %2738 = vbcast.lane.b32.xlu0 %v2736, 256
        %v2739 = vpop.permute.xlu0 %2738
        %s2741 = sor.u32 256, 8
        %2742 = vbcast.lane.b32.xlu0 %v2736, %s2741
        %v2743 = vpop.permute.xlu0 %2742
        %v2744 = vlaneseq
        %v2745 = vshrl.u32 %v2744, 7
        %v2746 = vsub.s32 1, %v2745
        %v2747 = vrot.slane %v925, %v2746
        %2749 = vbcast.lane.b32.xlu0 %v2747, 256
        %v2750 = vpop.permute.xlu0 %2749
        %s2752 = sor.u32 256, 8
        %2753 = vbcast.lane.b32.xlu0 %v2747, %s2752
        %v2754 = vpop.permute.xlu0 %2753
        %v2755 = vlaneseq
        %v2756 = vshrl.u32 %v2755, 7
        %v2757 = vsub.s32 2, %v2756
        %v2758 = vrot.slane %v925, %v2757
        %2760 = vbcast.lane.b32.xlu0 %v2758, 256
        %v2761 = vpop.permute.xlu0 %2760
        %s2763 = sor.u32 256, 8
        %2764 = vbcast.lane.b32.xlu0 %v2758, %s2763
        %v2765 = vpop.permute.xlu0 %2764
        %v2766 = vlaneseq
        %v2767 = vshrl.u32 %v2766, 7
        %v2768 = vsub.s32 3, %v2767
        %v2769 = vrot.slane %v925, %v2768
        %2771 = vbcast.lane.b32.xlu0 %v2769, 256
        %v2772 = vpop.permute.xlu0 %2771
        %s2774 = sor.u32 256, 8
        %2775 = vbcast.lane.b32.xlu0 %v2769, %s2774
        %v2776 = vpop.permute.xlu0 %2775
        %v2777 = vlaneseq
        %v2778 = vshrl.u32 %v2777, 7
        %v2779 = vsub.s32 4, %v2778
        %v2780 = vrot.slane %v925, %v2779
        %2782 = vbcast.lane.b32.xlu0 %v2780, 256
        %v2783 = vpop.permute.xlu0 %2782
        %s2785 = sor.u32 256, 8
        %2786 = vbcast.lane.b32.xlu0 %v2780, %s2785
        %v2787 = vpop.permute.xlu0 %2786
        %v2788 = vlaneseq
        %v2789 = vshrl.u32 %v2788, 7
        %v2790 = vsub.s32 5, %v2789
        %v2791 = vrot.slane %v925, %v2790
        %2793 = vbcast.lane.b32.xlu0 %v2791, 256
        %v2794 = vpop.permute.xlu0 %2793
        %s2796 = sor.u32 256, 8
        %2797 = vbcast.lane.b32.xlu0 %v2791, %s2796
        %v2798 = vpop.permute.xlu0 %2797
        %v2799 = vlaneseq
        %v2800 = vshrl.u32 %v2799, 7
        %v2801 = vsub.s32 6, %v2800
        %v2802 = vrot.slane %v925, %v2801
        %2804 = vbcast.lane.b32.xlu0 %v2802, 256
        %v2805 = vpop.permute.xlu0 %2804
        %s2807 = sor.u32 256, 8
        %2808 = vbcast.lane.b32.xlu0 %v2802, %s2807
        %v2809 = vpop.permute.xlu0 %2808
        %v2810 = vlaneseq
        %v2811 = vshrl.u32 %v2810, 7
        %v2812 = vsub.s32 7, %v2811
        %v2813 = vrot.slane %v925, %v2812
        %2815 = vbcast.lane.b32.xlu0 %v2813, 256
        %v2816 = vpop.permute.xlu0 %2815
        %s2818 = sor.u32 256, 8
        %2819 = vbcast.lane.b32.xlu0 %v2813, %s2818
        %v2820 = vpop.permute.xlu0 %2819
        %v2821 = vlaneseq
        %v2822 = vshrl.u32 %v2821, 7
        %v2823 = vsub.s32 0, %v2822
        %v2824 = vrot.slane %v790, %v2823
        %2826 = vbcast.lane.b32.xlu0 %v2824, 256
        %v2827 = vpop.permute.xlu0 %2826
        %s2829 = sor.u32 256, 8
        %2830 = vbcast.lane.b32.xlu0 %v2824, %s2829
        %v2831 = vpop.permute.xlu0 %2830
        %v2832 = vlaneseq
        %v2833 = vshrl.u32 %v2832, 7
        %v2834 = vsub.s32 1, %v2833
        %v2835 = vrot.slane %v790, %v2834
        %2837 = vbcast.lane.b32.xlu0 %v2835, 256
        %v2838 = vpop.permute.xlu0 %2837
        %s2840 = sor.u32 256, 8
        %2841 = vbcast.lane.b32.xlu0 %v2835, %s2840
        %v2842 = vpop.permute.xlu0 %2841
        %v2843 = vlaneseq
        %v2844 = vshrl.u32 %v2843, 7
        %v2845 = vsub.s32 2, %v2844
        %v2846 = vrot.slane %v790, %v2845
        %2848 = vbcast.lane.b32.xlu0 %v2846, 256
        %v2849 = vpop.permute.xlu0 %2848
        %s2851 = sor.u32 256, 8
        %2852 = vbcast.lane.b32.xlu0 %v2846, %s2851
        %v2853 = vpop.permute.xlu0 %2852
        %v2854 = vlaneseq
        %v2855 = vshrl.u32 %v2854, 7
        %v2856 = vsub.s32 3, %v2855
        %v2857 = vrot.slane %v790, %v2856
        %2859 = vbcast.lane.b32.xlu0 %v2857, 256
        %v2860 = vpop.permute.xlu0 %2859
        %s2862 = sor.u32 256, 8
        %2863 = vbcast.lane.b32.xlu0 %v2857, %s2862
        %v2864 = vpop.permute.xlu0 %2863
        %v2865 = vlaneseq
        %v2866 = vshrl.u32 %v2865, 7
        %v2867 = vsub.s32 4, %v2866
        %v2868 = vrot.slane %v790, %v2867
        %2870 = vbcast.lane.b32.xlu0 %v2868, 256
        %v2871 = vpop.permute.xlu0 %2870
        %s2873 = sor.u32 256, 8
        %2874 = vbcast.lane.b32.xlu0 %v2868, %s2873
        %v2875 = vpop.permute.xlu0 %2874
        %v2876 = vlaneseq
        %v2877 = vshrl.u32 %v2876, 7
        %v2878 = vsub.s32 5, %v2877
        %v2879 = vrot.slane %v790, %v2878
        %2881 = vbcast.lane.b32.xlu0 %v2879, 256
        %v2882 = vpop.permute.xlu0 %2881
        %s2884 = sor.u32 256, 8
        %2885 = vbcast.lane.b32.xlu0 %v2879, %s2884
        %v2886 = vpop.permute.xlu0 %2885
        %v2887 = vlaneseq
        %v2888 = vshrl.u32 %v2887, 7
        %v2889 = vsub.s32 6, %v2888
        %v2890 = vrot.slane %v790, %v2889
        %2892 = vbcast.lane.b32.xlu0 %v2890, 256
        %v2893 = vpop.permute.xlu0 %2892
        %s2895 = sor.u32 256, 8
        %2896 = vbcast.lane.b32.xlu0 %v2890, %s2895
        %v2897 = vpop.permute.xlu0 %2896
        %v2898 = vlaneseq
        %v2899 = vshrl.u32 %v2898, 7
        %v2900 = vsub.s32 7, %v2899
        %v2901 = vrot.slane %v790, %v2900
        %2903 = vbcast.lane.b32.xlu0 %v2901, 256
        %v2904 = vpop.permute.xlu0 %2903
        %s2906 = sor.u32 256, 8
        %2907 = vbcast.lane.b32.xlu0 %v2901, %s2906
        %v2908 = vpop.permute.xlu0 %2907
        %v2909 = vlaneseq
        %v2910 = vshrl.u32 %v2909, 7
        %v2911 = vsub.s32 0, %v2910
        %v2912 = vrot.slane %v926, %v2911
        %2914 = vbcast.lane.b32.xlu0 %v2912, 256
        %v2915 = vpop.permute.xlu0 %2914
        %s2917 = sor.u32 256, 8
        %2918 = vbcast.lane.b32.xlu0 %v2912, %s2917
        %v2919 = vpop.permute.xlu0 %2918
        %v2920 = vlaneseq
        %v2921 = vshrl.u32 %v2920, 7
        %v2922 = vsub.s32 1, %v2921
        %v2923 = vrot.slane %v926, %v2922
        %2925 = vbcast.lane.b32.xlu0 %v2923, 256
        %v2926 = vpop.permute.xlu0 %2925
        %s2928 = sor.u32 256, 8
        %2929 = vbcast.lane.b32.xlu0 %v2923, %s2928
        %v2930 = vpop.permute.xlu0 %2929
        %v2931 = vlaneseq
        %v2932 = vshrl.u32 %v2931, 7
        %v2933 = vsub.s32 2, %v2932
        %v2934 = vrot.slane %v926, %v2933
        %2936 = vbcast.lane.b32.xlu0 %v2934, 256
        %v2937 = vpop.permute.xlu0 %2936
        %s2939 = sor.u32 256, 8
        %2940 = vbcast.lane.b32.xlu0 %v2934, %s2939
        %v2941 = vpop.permute.xlu0 %2940
        %v2942 = vlaneseq
        %v2943 = vshrl.u32 %v2942, 7
        %v2944 = vsub.s32 3, %v2943
        %v2945 = vrot.slane %v926, %v2944
        %2947 = vbcast.lane.b32.xlu0 %v2945, 256
        %v2948 = vpop.permute.xlu0 %2947
        %s2950 = sor.u32 256, 8
        %2951 = vbcast.lane.b32.xlu0 %v2945, %s2950
        %v2952 = vpop.permute.xlu0 %2951
        %v2953 = vlaneseq
        %v2954 = vshrl.u32 %v2953, 7
        %v2955 = vsub.s32 4, %v2954
        %v2956 = vrot.slane %v926, %v2955
        %2958 = vbcast.lane.b32.xlu0 %v2956, 256
        %v2959 = vpop.permute.xlu0 %2958
        %s2961 = sor.u32 256, 8
        %2962 = vbcast.lane.b32.xlu0 %v2956, %s2961
        %v2963 = vpop.permute.xlu0 %2962
        %v2964 = vlaneseq
        %v2965 = vshrl.u32 %v2964, 7
        %v2966 = vsub.s32 5, %v2965
        %v2967 = vrot.slane %v926, %v2966
        %2969 = vbcast.lane.b32.xlu0 %v2967, 256
        %v2970 = vpop.permute.xlu0 %2969
        %s2972 = sor.u32 256, 8
        %2973 = vbcast.lane.b32.xlu0 %v2967, %s2972
        %v2974 = vpop.permute.xlu0 %2973
        %v2975 = vlaneseq
        %v2976 = vshrl.u32 %v2975, 7
        %v2977 = vsub.s32 6, %v2976
        %v2978 = vrot.slane %v926, %v2977
        %2980 = vbcast.lane.b32.xlu0 %v2978, 256
        %v2981 = vpop.permute.xlu0 %2980
        %s2983 = sor.u32 256, 8
        %2984 = vbcast.lane.b32.xlu0 %v2978, %s2983
        %v2985 = vpop.permute.xlu0 %2984
        %v2986 = vlaneseq
        %v2987 = vshrl.u32 %v2986, 7
        %v2988 = vsub.s32 7, %v2987
        %v2989 = vrot.slane %v926, %v2988
        %2991 = vbcast.lane.b32.xlu0 %v2989, 256
        %v2992 = vpop.permute.xlu0 %2991
        %s2994 = sor.u32 256, 8
        %2995 = vbcast.lane.b32.xlu0 %v2989, %s2994
        %v2996 = vpop.permute.xlu0 %2995
        %v2997 = vlaneseq
        %v2998 = vshrl.u32 %v2997, 7
        %v2999 = vsub.s32 0, %v2998
        %v3000 = vrot.slane %v791, %v2999
        %3002 = vbcast.lane.b32.xlu0 %v3000, 256
        %v3003 = vpop.permute.xlu0 %3002
        %s3005 = sor.u32 256, 8
        %3006 = vbcast.lane.b32.xlu0 %v3000, %s3005
        %v3007 = vpop.permute.xlu0 %3006
        %v3008 = vlaneseq
        %v3009 = vshrl.u32 %v3008, 7
        %v3010 = vsub.s32 1, %v3009
        %v3011 = vrot.slane %v791, %v3010
        %3013 = vbcast.lane.b32.xlu0 %v3011, 256
        %v3014 = vpop.permute.xlu0 %3013
        %s3016 = sor.u32 256, 8
        %3017 = vbcast.lane.b32.xlu0 %v3011, %s3016
        %v3018 = vpop.permute.xlu0 %3017
        %v3019 = vlaneseq
        %v3020 = vshrl.u32 %v3019, 7
        %v3021 = vsub.s32 2, %v3020
        %v3022 = vrot.slane %v791, %v3021
        %3024 = vbcast.lane.b32.xlu0 %v3022, 256
        %v3025 = vpop.permute.xlu0 %3024
        %s3027 = sor.u32 256, 8
        %3028 = vbcast.lane.b32.xlu0 %v3022, %s3027
        %v3029 = vpop.permute.xlu0 %3028
        %v3030 = vlaneseq
        %v3031 = vshrl.u32 %v3030, 7
        %v3032 = vsub.s32 3, %v3031
        %v3033 = vrot.slane %v791, %v3032
        %3035 = vbcast.lane.b32.xlu0 %v3033, 256
        %v3036 = vpop.permute.xlu0 %3035
        %s3038 = sor.u32 256, 8
        %3039 = vbcast.lane.b32.xlu0 %v3033, %s3038
        %v3040 = vpop.permute.xlu0 %3039
        %v3041 = vlaneseq
        %v3042 = vshrl.u32 %v3041, 7
        %v3043 = vsub.s32 4, %v3042
        %v3044 = vrot.slane %v791, %v3043
        %3046 = vbcast.lane.b32.xlu0 %v3044, 256
        %v3047 = vpop.permute.xlu0 %3046
        %s3049 = sor.u32 256, 8
        %3050 = vbcast.lane.b32.xlu0 %v3044, %s3049
        %v3051 = vpop.permute.xlu0 %3050
        %v3052 = vlaneseq
        %v3053 = vshrl.u32 %v3052, 7
        %v3054 = vsub.s32 5, %v3053
        %v3055 = vrot.slane %v791, %v3054
        %3057 = vbcast.lane.b32.xlu0 %v3055, 256
        %v3058 = vpop.permute.xlu0 %3057
        %s3060 = sor.u32 256, 8
        %3061 = vbcast.lane.b32.xlu0 %v3055, %s3060
        %v3062 = vpop.permute.xlu0 %3061
        %v3063 = vlaneseq
        %v3064 = vshrl.u32 %v3063, 7
        %v3065 = vsub.s32 6, %v3064
        %v3066 = vrot.slane %v791, %v3065
        %3068 = vbcast.lane.b32.xlu0 %v3066, 256
        %v3069 = vpop.permute.xlu0 %3068
        %s3071 = sor.u32 256, 8
        %3072 = vbcast.lane.b32.xlu0 %v3066, %s3071
        %v3073 = vpop.permute.xlu0 %3072
        %v3074 = vlaneseq
        %v3075 = vshrl.u32 %v3074, 7
        %v3076 = vsub.s32 7, %v3075
        %v3077 = vrot.slane %v791, %v3076
        %3079 = vbcast.lane.b32.xlu0 %v3077, 256
        %v3080 = vpop.permute.xlu0 %3079
        %s3082 = sor.u32 256, 8
        %3083 = vbcast.lane.b32.xlu0 %v3077, %s3082
        %v3084 = vpop.permute.xlu0 %3083
        %v3085 = vlaneseq
        %v3086 = vshrl.u32 %v3085, 7
        %v3087 = vsub.s32 0, %v3086
        %v3088 = vrot.slane %v927, %v3087
        %3090 = vbcast.lane.b32.xlu0 %v3088, 256
        %v3091 = vpop.permute.xlu0 %3090
        %s3093 = sor.u32 256, 8
        %3094 = vbcast.lane.b32.xlu0 %v3088, %s3093
        %v3095 = vpop.permute.xlu0 %3094
        %v3096 = vlaneseq
        %v3097 = vshrl.u32 %v3096, 7
        %v3098 = vsub.s32 1, %v3097
        %v3099 = vrot.slane %v927, %v3098
        %3101 = vbcast.lane.b32.xlu0 %v3099, 256
        %v3102 = vpop.permute.xlu0 %3101
        %s3104 = sor.u32 256, 8
        %3105 = vbcast.lane.b32.xlu0 %v3099, %s3104
        %v3106 = vpop.permute.xlu0 %3105
        %v3107 = vlaneseq
        %v3108 = vshrl.u32 %v3107, 7
        %v3109 = vsub.s32 2, %v3108
        %v3110 = vrot.slane %v927, %v3109
        %3112 = vbcast.lane.b32.xlu0 %v3110, 256
        %v3113 = vpop.permute.xlu0 %3112
        %s3115 = sor.u32 256, 8
        %3116 = vbcast.lane.b32.xlu0 %v3110, %s3115
        %v3117 = vpop.permute.xlu0 %3116
        %v3118 = vlaneseq
        %v3119 = vshrl.u32 %v3118, 7
        %v3120 = vsub.s32 3, %v3119
        %v3121 = vrot.slane %v927, %v3120
        %3123 = vbcast.lane.b32.xlu0 %v3121, 256
        %v3124 = vpop.permute.xlu0 %3123
        %s3126 = sor.u32 256, 8
        %3127 = vbcast.lane.b32.xlu0 %v3121, %s3126
        %v3128 = vpop.permute.xlu0 %3127
        %v3129 = vlaneseq
        %v3130 = vshrl.u32 %v3129, 7
        %v3131 = vsub.s32 4, %v3130
        %v3132 = vrot.slane %v927, %v3131
        %3134 = vbcast.lane.b32.xlu0 %v3132, 256
        %v3135 = vpop.permute.xlu0 %3134
        %s3137 = sor.u32 256, 8
        %3138 = vbcast.lane.b32.xlu0 %v3132, %s3137
        %v3139 = vpop.permute.xlu0 %3138
        %v3140 = vlaneseq
        %v3141 = vshrl.u32 %v3140, 7
        %v3142 = vsub.s32 5, %v3141
        %v3143 = vrot.slane %v927, %v3142
        %3145 = vbcast.lane.b32.xlu0 %v3143, 256
        %v3146 = vpop.permute.xlu0 %3145
        %s3148 = sor.u32 256, 8
        %3149 = vbcast.lane.b32.xlu0 %v3143, %s3148
        %v3150 = vpop.permute.xlu0 %3149
        %v3151 = vlaneseq
        %v3152 = vshrl.u32 %v3151, 7
        %v3153 = vsub.s32 6, %v3152
        %v3154 = vrot.slane %v927, %v3153
        %3156 = vbcast.lane.b32.xlu0 %v3154, 256
        %v3157 = vpop.permute.xlu0 %3156
        %s3159 = sor.u32 256, 8
        %3160 = vbcast.lane.b32.xlu0 %v3154, %s3159
        %v3161 = vpop.permute.xlu0 %3160
        %v3162 = vlaneseq
        %v3163 = vshrl.u32 %v3162, 7
        %v3164 = vsub.s32 7, %v3163
        %v3165 = vrot.slane %v927, %v3164
        %3167 = vbcast.lane.b32.xlu0 %v3165, 256
        %v3168 = vpop.permute.xlu0 %3167
        %s3170 = sor.u32 256, 8
        %3171 = vbcast.lane.b32.xlu0 %v3165, %s3170
        %v3172 = vpop.permute.xlu0 %3171
        %v3173 = vlaneseq
        %v3174 = vshrl.u32 %v3173, 7
        %v3175 = vsub.s32 0, %v3174
        %v3176 = vrot.slane %v792, %v3175
        %3178 = vbcast.lane.b32.xlu0 %v3176, 256
        %v3179 = vpop.permute.xlu0 %3178
        %s3181 = sor.u32 256, 8
        %3182 = vbcast.lane.b32.xlu0 %v3176, %s3181
        %v3183 = vpop.permute.xlu0 %3182
        %v3184 = vlaneseq
        %v3185 = vshrl.u32 %v3184, 7
        %v3186 = vsub.s32 1, %v3185
        %v3187 = vrot.slane %v792, %v3186
        %3189 = vbcast.lane.b32.xlu0 %v3187, 256
        %v3190 = vpop.permute.xlu0 %3189
        %s3192 = sor.u32 256, 8
        %3193 = vbcast.lane.b32.xlu0 %v3187, %s3192
        %v3194 = vpop.permute.xlu0 %3193
        %v3195 = vlaneseq
        %v3196 = vshrl.u32 %v3195, 7
        %v3197 = vsub.s32 2, %v3196
        %v3198 = vrot.slane %v792, %v3197
        %3200 = vbcast.lane.b32.xlu0 %v3198, 256
        %v3201 = vpop.permute.xlu0 %3200
        %s3203 = sor.u32 256, 8
        %3204 = vbcast.lane.b32.xlu0 %v3198, %s3203
        %v3205 = vpop.permute.xlu0 %3204
        %v3206 = vlaneseq
        %v3207 = vshrl.u32 %v3206, 7
        %v3208 = vsub.s32 3, %v3207
        %v3209 = vrot.slane %v792, %v3208
        %3211 = vbcast.lane.b32.xlu0 %v3209, 256
        %v3212 = vpop.permute.xlu0 %3211
        %s3214 = sor.u32 256, 8
        %3215 = vbcast.lane.b32.xlu0 %v3209, %s3214
        %v3216 = vpop.permute.xlu0 %3215
        %v3217 = vlaneseq
        %v3218 = vshrl.u32 %v3217, 7
        %v3219 = vsub.s32 4, %v3218
        %v3220 = vrot.slane %v792, %v3219
        %3222 = vbcast.lane.b32.xlu0 %v3220, 256
        %v3223 = vpop.permute.xlu0 %3222
        %s3225 = sor.u32 256, 8
        %3226 = vbcast.lane.b32.xlu0 %v3220, %s3225
        %v3227 = vpop.permute.xlu0 %3226
        %v3228 = vlaneseq
        %v3229 = vshrl.u32 %v3228, 7
        %v3230 = vsub.s32 5, %v3229
        %v3231 = vrot.slane %v792, %v3230
        %3233 = vbcast.lane.b32.xlu0 %v3231, 256
        %v3234 = vpop.permute.xlu0 %3233
        %s3236 = sor.u32 256, 8
        %3237 = vbcast.lane.b32.xlu0 %v3231, %s3236
        %v3238 = vpop.permute.xlu0 %3237
        %v3239 = vlaneseq
        %v3240 = vshrl.u32 %v3239, 7
        %v3241 = vsub.s32 6, %v3240
        %v3242 = vrot.slane %v792, %v3241
        %3244 = vbcast.lane.b32.xlu0 %v3242, 256
        %v3245 = vpop.permute.xlu0 %3244
        %s3247 = sor.u32 256, 8
        %3248 = vbcast.lane.b32.xlu0 %v3242, %s3247
        %v3249 = vpop.permute.xlu0 %3248
        %v3250 = vlaneseq
        %v3251 = vshrl.u32 %v3250, 7
        %v3252 = vsub.s32 7, %v3251
        %v3253 = vrot.slane %v792, %v3252
        %3255 = vbcast.lane.b32.xlu0 %v3253, 256
        %v3256 = vpop.permute.xlu0 %3255
        %s3258 = sor.u32 256, 8
        %3259 = vbcast.lane.b32.xlu0 %v3253, %s3258
        %v3260 = vpop.permute.xlu0 %3259
        %v3261 = vlaneseq
        %v3262 = vshrl.u32 %v3261, 7
        %v3263 = vsub.s32 0, %v3262
        %v3264 = vrot.slane %v928, %v3263
        %3266 = vbcast.lane.b32.xlu0 %v3264, 256
        %v3267 = vpop.permute.xlu0 %3266
        %s3269 = sor.u32 256, 8
        %3270 = vbcast.lane.b32.xlu0 %v3264, %s3269
        %v3271 = vpop.permute.xlu0 %3270
        %v3272 = vlaneseq
        %v3273 = vshrl.u32 %v3272, 7
        %v3274 = vsub.s32 1, %v3273
        %v3275 = vrot.slane %v928, %v3274
        %3277 = vbcast.lane.b32.xlu0 %v3275, 256
        %v3278 = vpop.permute.xlu0 %3277
        %s3280 = sor.u32 256, 8
        %3281 = vbcast.lane.b32.xlu0 %v3275, %s3280
        %v3282 = vpop.permute.xlu0 %3281
        %v3283 = vlaneseq
        %v3284 = vshrl.u32 %v3283, 7
        %v3285 = vsub.s32 2, %v3284
        %v3286 = vrot.slane %v928, %v3285
        %3288 = vbcast.lane.b32.xlu0 %v3286, 256
        %v3289 = vpop.permute.xlu0 %3288
        %s3291 = sor.u32 256, 8
        %3292 = vbcast.lane.b32.xlu0 %v3286, %s3291
        %v3293 = vpop.permute.xlu0 %3292
        %v3294 = vlaneseq
        %v3295 = vshrl.u32 %v3294, 7
        %v3296 = vsub.s32 3, %v3295
        %v3297 = vrot.slane %v928, %v3296
        %3299 = vbcast.lane.b32.xlu0 %v3297, 256
        %v3300 = vpop.permute.xlu0 %3299
        %s3302 = sor.u32 256, 8
        %3303 = vbcast.lane.b32.xlu0 %v3297, %s3302
        %v3304 = vpop.permute.xlu0 %3303
        %v3305 = vlaneseq
        %v3306 = vshrl.u32 %v3305, 7
        %v3307 = vsub.s32 4, %v3306
        %v3308 = vrot.slane %v928, %v3307
        %3310 = vbcast.lane.b32.xlu0 %v3308, 256
        %v3311 = vpop.permute.xlu0 %3310
        %s3313 = sor.u32 256, 8
        %3314 = vbcast.lane.b32.xlu0 %v3308, %s3313
        %v3315 = vpop.permute.xlu0 %3314
        %v3316 = vlaneseq
        %v3317 = vshrl.u32 %v3316, 7
        %v3318 = vsub.s32 5, %v3317
        %v3319 = vrot.slane %v928, %v3318
        %3321 = vbcast.lane.b32.xlu0 %v3319, 256
        %v3322 = vpop.permute.xlu0 %3321
        %s3324 = sor.u32 256, 8
        %3325 = vbcast.lane.b32.xlu0 %v3319, %s3324
        %v3326 = vpop.permute.xlu0 %3325
        %v3327 = vlaneseq
        %v3328 = vshrl.u32 %v3327, 7
        %v3329 = vsub.s32 6, %v3328
        %v3330 = vrot.slane %v928, %v3329
        %3332 = vbcast.lane.b32.xlu0 %v3330, 256
        %v3333 = vpop.permute.xlu0 %3332
        %s3335 = sor.u32 256, 8
        %3336 = vbcast.lane.b32.xlu0 %v3330, %s3335
        %v3337 = vpop.permute.xlu0 %3336
        %v3338 = vlaneseq
        %v3339 = vshrl.u32 %v3338, 7
        %v3340 = vsub.s32 7, %v3339
        %v3341 = vrot.slane %v928, %v3340
        %3343 = vbcast.lane.b32.xlu0 %v3341, 256
        %v3344 = vpop.permute.xlu0 %3343
        %s3346 = sor.u32 256, 8
        %3347 = vbcast.lane.b32.xlu0 %v3341, %s3346
        %v3348 = vpop.permute.xlu0 %3347
        %v3349 = vlaneseq
        %v3350 = vshrl.u32 %v3349, 7
        %v3351 = vsub.s32 0, %v3350
        %v3352 = vrot.slane %v793, %v3351
        %3354 = vbcast.lane.b32.xlu0 %v3352, 256
        %v3355 = vpop.permute.xlu0 %3354
        %s3357 = sor.u32 256, 8
        %3358 = vbcast.lane.b32.xlu0 %v3352, %s3357
        %v3359 = vpop.permute.xlu0 %3358
        %v3360 = vlaneseq
        %v3361 = vshrl.u32 %v3360, 7
        %v3362 = vsub.s32 1, %v3361
        %v3363 = vrot.slane %v793, %v3362
        %3365 = vbcast.lane.b32.xlu0 %v3363, 256
        %v3366 = vpop.permute.xlu0 %3365
        %s3368 = sor.u32 256, 8
        %3369 = vbcast.lane.b32.xlu0 %v3363, %s3368
        %v3370 = vpop.permute.xlu0 %3369
        %v3371 = vlaneseq
        %v3372 = vshrl.u32 %v3371, 7
        %v3373 = vsub.s32 2, %v3372
        %v3374 = vrot.slane %v793, %v3373
        %3376 = vbcast.lane.b32.xlu0 %v3374, 256
        %v3377 = vpop.permute.xlu0 %3376
        %s3379 = sor.u32 256, 8
        %3380 = vbcast.lane.b32.xlu0 %v3374, %s3379
        %v3381 = vpop.permute.xlu0 %3380
        %v3382 = vlaneseq
        %v3383 = vshrl.u32 %v3382, 7
        %v3384 = vsub.s32 3, %v3383
        %v3385 = vrot.slane %v793, %v3384
        %3387 = vbcast.lane.b32.xlu0 %v3385, 256
        %v3388 = vpop.permute.xlu0 %3387
        %s3390 = sor.u32 256, 8
        %3391 = vbcast.lane.b32.xlu0 %v3385, %s3390
        %v3392 = vpop.permute.xlu0 %3391
        %v3393 = vlaneseq
        %v3394 = vshrl.u32 %v3393, 7
        %v3395 = vsub.s32 4, %v3394
        %v3396 = vrot.slane %v793, %v3395
        %3398 = vbcast.lane.b32.xlu0 %v3396, 256
        %v3399 = vpop.permute.xlu0 %3398
        %s3401 = sor.u32 256, 8
        %3402 = vbcast.lane.b32.xlu0 %v3396, %s3401
        %v3403 = vpop.permute.xlu0 %3402
        %v3404 = vlaneseq
        %v3405 = vshrl.u32 %v3404, 7
        %v3406 = vsub.s32 5, %v3405
        %v3407 = vrot.slane %v793, %v3406
        %3409 = vbcast.lane.b32.xlu0 %v3407, 256
        %v3410 = vpop.permute.xlu0 %3409
        %s3412 = sor.u32 256, 8
        %3413 = vbcast.lane.b32.xlu0 %v3407, %s3412
        %v3414 = vpop.permute.xlu0 %3413
        %v3415 = vlaneseq
        %v3416 = vshrl.u32 %v3415, 7
        %v3417 = vsub.s32 6, %v3416
        %v3418 = vrot.slane %v793, %v3417
        %3420 = vbcast.lane.b32.xlu0 %v3418, 256
        %v3421 = vpop.permute.xlu0 %3420
        %s3423 = sor.u32 256, 8
        %3424 = vbcast.lane.b32.xlu0 %v3418, %s3423
        %v3425 = vpop.permute.xlu0 %3424
        %v3426 = vlaneseq
        %v3427 = vshrl.u32 %v3426, 7
        %v3428 = vsub.s32 7, %v3427
        %v3429 = vrot.slane %v793, %v3428
        %3431 = vbcast.lane.b32.xlu0 %v3429, 256
        %v3432 = vpop.permute.xlu0 %3431
        %s3434 = sor.u32 256, 8
        %3435 = vbcast.lane.b32.xlu0 %v3429, %s3434
        %v3436 = vpop.permute.xlu0 %3435
        %v3437 = vlaneseq
        %v3438 = vshrl.u32 %v3437, 7
        %v3439 = vsub.s32 0, %v3438
        %v3440 = vrot.slane %v929, %v3439
        %3442 = vbcast.lane.b32.xlu0 %v3440, 256
        %v3443 = vpop.permute.xlu0 %3442
        %s3445 = sor.u32 256, 8
        %3446 = vbcast.lane.b32.xlu0 %v3440, %s3445
        %v3447 = vpop.permute.xlu0 %3446
        %v3448 = vlaneseq
        %v3449 = vshrl.u32 %v3448, 7
        %v3450 = vsub.s32 1, %v3449
        %v3451 = vrot.slane %v929, %v3450
        %3453 = vbcast.lane.b32.xlu0 %v3451, 256
        %v3454 = vpop.permute.xlu0 %3453
        %s3456 = sor.u32 256, 8
        %3457 = vbcast.lane.b32.xlu0 %v3451, %s3456
        %v3458 = vpop.permute.xlu0 %3457
        %v3459 = vlaneseq
        %v3460 = vshrl.u32 %v3459, 7
        %v3461 = vsub.s32 2, %v3460
        %v3462 = vrot.slane %v929, %v3461
        %3464 = vbcast.lane.b32.xlu0 %v3462, 256
        %v3465 = vpop.permute.xlu0 %3464
        %s3467 = sor.u32 256, 8
        %3468 = vbcast.lane.b32.xlu0 %v3462, %s3467
        %v3469 = vpop.permute.xlu0 %3468
        %v3470 = vlaneseq
        %v3471 = vshrl.u32 %v3470, 7
        %v3472 = vsub.s32 3, %v3471
        %v3473 = vrot.slane %v929, %v3472
        %3475 = vbcast.lane.b32.xlu0 %v3473, 256
        %v3476 = vpop.permute.xlu0 %3475
        %s3478 = sor.u32 256, 8
        %3479 = vbcast.lane.b32.xlu0 %v3473, %s3478
        %v3480 = vpop.permute.xlu0 %3479
        %v3481 = vlaneseq
        %v3482 = vshrl.u32 %v3481, 7
        %v3483 = vsub.s32 4, %v3482
        %v3484 = vrot.slane %v929, %v3483
        %3486 = vbcast.lane.b32.xlu0 %v3484, 256
        %v3487 = vpop.permute.xlu0 %3486
        %s3489 = sor.u32 256, 8
        %3490 = vbcast.lane.b32.xlu0 %v3484, %s3489
        %v3491 = vpop.permute.xlu0 %3490
        %v3492 = vlaneseq
        %v3493 = vshrl.u32 %v3492, 7
        %v3494 = vsub.s32 5, %v3493
        %v3495 = vrot.slane %v929, %v3494
        %3497 = vbcast.lane.b32.xlu0 %v3495, 256
        %v3498 = vpop.permute.xlu0 %3497
        %s3500 = sor.u32 256, 8
        %3501 = vbcast.lane.b32.xlu0 %v3495, %s3500
        %v3502 = vpop.permute.xlu0 %3501
        %v3503 = vlaneseq
        %v3504 = vshrl.u32 %v3503, 7
        %v3505 = vsub.s32 6, %v3504
        %v3506 = vrot.slane %v929, %v3505
        %3508 = vbcast.lane.b32.xlu0 %v3506, 256
        %v3509 = vpop.permute.xlu0 %3508
        %s3511 = sor.u32 256, 8
        %3512 = vbcast.lane.b32.xlu0 %v3506, %s3511
        %v3513 = vpop.permute.xlu0 %3512
        %v3514 = vlaneseq
        %v3515 = vshrl.u32 %v3514, 7
        %v3516 = vsub.s32 7, %v3515
        %v3517 = vrot.slane %v929, %v3516
        %3519 = vbcast.lane.b32.xlu0 %v3517, 256
        %v3520 = vpop.permute.xlu0 %3519
        %s3522 = sor.u32 256, 8
        %3523 = vbcast.lane.b32.xlu0 %v3517, %s3522
        %v3524 = vpop.permute.xlu0 %3523
        %v3525 = vlaneseq
        %v3526 = vshrl.u32 %v3525, 7
        %v3527 = vsub.s32 0, %v3526
        %v3528 = vrot.slane %v794, %v3527
        %3530 = vbcast.lane.b32.xlu0 %v3528, 256
        %v3531 = vpop.permute.xlu0 %3530
        %s3533 = sor.u32 256, 8
        %3534 = vbcast.lane.b32.xlu0 %v3528, %s3533
        %v3535 = vpop.permute.xlu0 %3534
        %v3536 = vlaneseq
        %v3537 = vshrl.u32 %v3536, 7
        %v3538 = vsub.s32 1, %v3537
        %v3539 = vrot.slane %v794, %v3538
        %3541 = vbcast.lane.b32.xlu0 %v3539, 256
        %v3542 = vpop.permute.xlu0 %3541
        %s3544 = sor.u32 256, 8
        %3545 = vbcast.lane.b32.xlu0 %v3539, %s3544
        %v3546 = vpop.permute.xlu0 %3545
        %v3547 = vlaneseq
        %v3548 = vshrl.u32 %v3547, 7
        %v3549 = vsub.s32 2, %v3548
        %v3550 = vrot.slane %v794, %v3549
        %3552 = vbcast.lane.b32.xlu0 %v3550, 256
        %v3553 = vpop.permute.xlu0 %3552
        %s3555 = sor.u32 256, 8
        %3556 = vbcast.lane.b32.xlu0 %v3550, %s3555
        %v3557 = vpop.permute.xlu0 %3556
        %v3558 = vlaneseq
        %v3559 = vshrl.u32 %v3558, 7
        %v3560 = vsub.s32 3, %v3559
        %v3561 = vrot.slane %v794, %v3560
        %3563 = vbcast.lane.b32.xlu0 %v3561, 256
        %v3564 = vpop.permute.xlu0 %3563
        %s3566 = sor.u32 256, 8
        %3567 = vbcast.lane.b32.xlu0 %v3561, %s3566
        %v3568 = vpop.permute.xlu0 %3567
        %v3569 = vlaneseq
        %v3570 = vshrl.u32 %v3569, 7
        %v3571 = vsub.s32 4, %v3570
        %v3572 = vrot.slane %v794, %v3571
        %3574 = vbcast.lane.b32.xlu0 %v3572, 256
        %v3575 = vpop.permute.xlu0 %3574
        %s3577 = sor.u32 256, 8
        %3578 = vbcast.lane.b32.xlu0 %v3572, %s3577
        %v3579 = vpop.permute.xlu0 %3578
        %v3580 = vlaneseq
        %v3581 = vshrl.u32 %v3580, 7
        %v3582 = vsub.s32 5, %v3581
        %v3583 = vrot.slane %v794, %v3582
        %3585 = vbcast.lane.b32.xlu0 %v3583, 256
        %v3586 = vpop.permute.xlu0 %3585
        %s3588 = sor.u32 256, 8
        %3589 = vbcast.lane.b32.xlu0 %v3583, %s3588
        %v3590 = vpop.permute.xlu0 %3589
        %v3591 = vlaneseq
        %v3592 = vshrl.u32 %v3591, 7
        %v3593 = vsub.s32 6, %v3592
        %v3594 = vrot.slane %v794, %v3593
        %3596 = vbcast.lane.b32.xlu0 %v3594, 256
        %v3597 = vpop.permute.xlu0 %3596
        %s3599 = sor.u32 256, 8
        %3600 = vbcast.lane.b32.xlu0 %v3594, %s3599
        %v3601 = vpop.permute.xlu0 %3600
        %v3602 = vlaneseq
        %v3603 = vshrl.u32 %v3602, 7
        %v3604 = vsub.s32 7, %v3603
        %v3605 = vrot.slane %v794, %v3604
        %3607 = vbcast.lane.b32.xlu0 %v3605, 256
        %v3608 = vpop.permute.xlu0 %3607
        %s3610 = sor.u32 256, 8
        %3611 = vbcast.lane.b32.xlu0 %v3605, %s3610
        %v3612 = vpop.permute.xlu0 %3611
        %v3613 = vlaneseq
        %v3614 = vshrl.u32 %v3613, 7
        %v3615 = vsub.s32 0, %v3614
        %v3616 = vrot.slane %v930, %v3615
        %3618 = vbcast.lane.b32.xlu0 %v3616, 256
        %v3619 = vpop.permute.xlu0 %3618
        %s3621 = sor.u32 256, 8
        %3622 = vbcast.lane.b32.xlu0 %v3616, %s3621
        %v3623 = vpop.permute.xlu0 %3622
        %v3624 = vlaneseq
        %v3625 = vshrl.u32 %v3624, 7
        %v3626 = vsub.s32 1, %v3625
        %v3627 = vrot.slane %v930, %v3626
        %3629 = vbcast.lane.b32.xlu0 %v3627, 256
        %v3630 = vpop.permute.xlu0 %3629
        %s3632 = sor.u32 256, 8
        %3633 = vbcast.lane.b32.xlu0 %v3627, %s3632
        %v3634 = vpop.permute.xlu0 %3633
        %v3635 = vlaneseq
        %v3636 = vshrl.u32 %v3635, 7
        %v3637 = vsub.s32 2, %v3636
        %v3638 = vrot.slane %v930, %v3637
        %3640 = vbcast.lane.b32.xlu0 %v3638, 256
        %v3641 = vpop.permute.xlu0 %3640
        %s3643 = sor.u32 256, 8
        %3644 = vbcast.lane.b32.xlu0 %v3638, %s3643
        %v3645 = vpop.permute.xlu0 %3644
        %v3646 = vlaneseq
        %v3647 = vshrl.u32 %v3646, 7
        %v3648 = vsub.s32 3, %v3647
        %v3649 = vrot.slane %v930, %v3648
        %3651 = vbcast.lane.b32.xlu0 %v3649, 256
        %v3652 = vpop.permute.xlu0 %3651
        %s3654 = sor.u32 256, 8
        %3655 = vbcast.lane.b32.xlu0 %v3649, %s3654
        %v3656 = vpop.permute.xlu0 %3655
        %v3657 = vlaneseq
        %v3658 = vshrl.u32 %v3657, 7
        %v3659 = vsub.s32 4, %v3658
        %v3660 = vrot.slane %v930, %v3659
        %3662 = vbcast.lane.b32.xlu0 %v3660, 256
        %v3663 = vpop.permute.xlu0 %3662
        %s3665 = sor.u32 256, 8
        %3666 = vbcast.lane.b32.xlu0 %v3660, %s3665
        %v3667 = vpop.permute.xlu0 %3666
        %v3668 = vlaneseq
        %v3669 = vshrl.u32 %v3668, 7
        %v3670 = vsub.s32 5, %v3669
        %v3671 = vrot.slane %v930, %v3670
        %3673 = vbcast.lane.b32.xlu0 %v3671, 256
        %v3674 = vpop.permute.xlu0 %3673
        %s3676 = sor.u32 256, 8
        %3677 = vbcast.lane.b32.xlu0 %v3671, %s3676
        %v3678 = vpop.permute.xlu0 %3677
        %v3679 = vlaneseq
        %v3680 = vshrl.u32 %v3679, 7
        %v3681 = vsub.s32 6, %v3680
        %v3682 = vrot.slane %v930, %v3681
        %3684 = vbcast.lane.b32.xlu0 %v3682, 256
        %v3685 = vpop.permute.xlu0 %3684
        %s3687 = sor.u32 256, 8
        %3688 = vbcast.lane.b32.xlu0 %v3682, %s3687
        %v3689 = vpop.permute.xlu0 %3688
        %v3690 = vlaneseq
        %v3691 = vshrl.u32 %v3690, 7
        %v3692 = vsub.s32 7, %v3691
        %v3693 = vrot.slane %v930, %v3692
        %3695 = vbcast.lane.b32.xlu0 %v3693, 256
        %v3696 = vpop.permute.xlu0 %3695
        %s3698 = sor.u32 256, 8
        %3699 = vbcast.lane.b32.xlu0 %v3693, %s3698
        %v3700 = vpop.permute.xlu0 %3699
        %v3701 = vlaneseq
        %v3702 = vshrl.u32 %v3701, 7
        %v3703 = vsub.s32 0, %v3702
        %v3704 = vrot.slane %v795, %v3703
        %3706 = vbcast.lane.b32.xlu0 %v3704, 256
        %v3707 = vpop.permute.xlu0 %3706
        %s3709 = sor.u32 256, 8
        %3710 = vbcast.lane.b32.xlu0 %v3704, %s3709
        %v3711 = vpop.permute.xlu0 %3710
        %v3712 = vlaneseq
        %v3713 = vshrl.u32 %v3712, 7
        %v3714 = vsub.s32 1, %v3713
        %v3715 = vrot.slane %v795, %v3714
        %3717 = vbcast.lane.b32.xlu0 %v3715, 256
        %v3718 = vpop.permute.xlu0 %3717
        %s3720 = sor.u32 256, 8
        %3721 = vbcast.lane.b32.xlu0 %v3715, %s3720
        %v3722 = vpop.permute.xlu0 %3721
        %v3723 = vlaneseq
        %v3724 = vshrl.u32 %v3723, 7
        %v3725 = vsub.s32 2, %v3724
        %v3726 = vrot.slane %v795, %v3725
        %3728 = vbcast.lane.b32.xlu0 %v3726, 256
        %v3729 = vpop.permute.xlu0 %3728
        %s3731 = sor.u32 256, 8
        %3732 = vbcast.lane.b32.xlu0 %v3726, %s3731
        %v3733 = vpop.permute.xlu0 %3732
        %v3734 = vlaneseq
        %v3735 = vshrl.u32 %v3734, 7
        %v3736 = vsub.s32 3, %v3735
        %v3737 = vrot.slane %v795, %v3736
        %3739 = vbcast.lane.b32.xlu0 %v3737, 256
        %v3740 = vpop.permute.xlu0 %3739
        %s3742 = sor.u32 256, 8
        %3743 = vbcast.lane.b32.xlu0 %v3737, %s3742
        %v3744 = vpop.permute.xlu0 %3743
        %v3745 = vlaneseq
        %v3746 = vshrl.u32 %v3745, 7
        %v3747 = vsub.s32 4, %v3746
        %v3748 = vrot.slane %v795, %v3747
        %3750 = vbcast.lane.b32.xlu0 %v3748, 256
        %v3751 = vpop.permute.xlu0 %3750
        %s3753 = sor.u32 256, 8
        %3754 = vbcast.lane.b32.xlu0 %v3748, %s3753
        %v3755 = vpop.permute.xlu0 %3754
        %v3756 = vlaneseq
        %v3757 = vshrl.u32 %v3756, 7
        %v3758 = vsub.s32 5, %v3757
        %v3759 = vrot.slane %v795, %v3758
        %3761 = vbcast.lane.b32.xlu0 %v3759, 256
        %v3762 = vpop.permute.xlu0 %3761
        %s3764 = sor.u32 256, 8
        %3765 = vbcast.lane.b32.xlu0 %v3759, %s3764
        %v3766 = vpop.permute.xlu0 %3765
        %v3767 = vlaneseq
        %v3768 = vshrl.u32 %v3767, 7
        %v3769 = vsub.s32 6, %v3768
        %v3770 = vrot.slane %v795, %v3769
        %3772 = vbcast.lane.b32.xlu0 %v3770, 256
        %v3773 = vpop.permute.xlu0 %3772
        %s3775 = sor.u32 256, 8
        %3776 = vbcast.lane.b32.xlu0 %v3770, %s3775
        %v3777 = vpop.permute.xlu0 %3776
        %v3778 = vlaneseq
        %v3779 = vshrl.u32 %v3778, 7
        %v3780 = vsub.s32 7, %v3779
        %v3781 = vrot.slane %v795, %v3780
        %3783 = vbcast.lane.b32.xlu0 %v3781, 256
        %v3784 = vpop.permute.xlu0 %3783
        %s3786 = sor.u32 256, 8
        %3787 = vbcast.lane.b32.xlu0 %v3781, %s3786
        %v3788 = vpop.permute.xlu0 %3787
        %v3789 = vlaneseq
        %v3790 = vshrl.u32 %v3789, 7
        %v3791 = vsub.s32 0, %v3790
        %v3792 = vrot.slane %v931, %v3791
        %3794 = vbcast.lane.b32.xlu0 %v3792, 256
        %v3795 = vpop.permute.xlu0 %3794
        %s3797 = sor.u32 256, 8
        %3798 = vbcast.lane.b32.xlu0 %v3792, %s3797
        %v3799 = vpop.permute.xlu0 %3798
        %v3800 = vlaneseq
        %v3801 = vshrl.u32 %v3800, 7
        %v3802 = vsub.s32 1, %v3801
        %v3803 = vrot.slane %v931, %v3802
        %3805 = vbcast.lane.b32.xlu0 %v3803, 256
        %v3806 = vpop.permute.xlu0 %3805
        %s3808 = sor.u32 256, 8
        %3809 = vbcast.lane.b32.xlu0 %v3803, %s3808
        %v3810 = vpop.permute.xlu0 %3809
        %v3811 = vlaneseq
        %v3812 = vshrl.u32 %v3811, 7
        %v3813 = vsub.s32 2, %v3812
        %v3814 = vrot.slane %v931, %v3813
        %3816 = vbcast.lane.b32.xlu0 %v3814, 256
        %v3817 = vpop.permute.xlu0 %3816
        %s3819 = sor.u32 256, 8
        %3820 = vbcast.lane.b32.xlu0 %v3814, %s3819
        %v3821 = vpop.permute.xlu0 %3820
        %v3822 = vlaneseq
        %v3823 = vshrl.u32 %v3822, 7
        %v3824 = vsub.s32 3, %v3823
        %v3825 = vrot.slane %v931, %v3824
        %3827 = vbcast.lane.b32.xlu0 %v3825, 256
        %v3828 = vpop.permute.xlu0 %3827
        %s3830 = sor.u32 256, 8
        %3831 = vbcast.lane.b32.xlu0 %v3825, %s3830
        %v3832 = vpop.permute.xlu0 %3831
        %v3833 = vlaneseq
        %v3834 = vshrl.u32 %v3833, 7
        %v3835 = vsub.s32 4, %v3834
        %v3836 = vrot.slane %v931, %v3835
        %3838 = vbcast.lane.b32.xlu0 %v3836, 256
        %v3839 = vpop.permute.xlu0 %3838
        %s3841 = sor.u32 256, 8
        %3842 = vbcast.lane.b32.xlu0 %v3836, %s3841
        %v3843 = vpop.permute.xlu0 %3842
        %v3844 = vlaneseq
        %v3845 = vshrl.u32 %v3844, 7
        %v3846 = vsub.s32 5, %v3845
        %v3847 = vrot.slane %v931, %v3846
        %3849 = vbcast.lane.b32.xlu0 %v3847, 256
        %v3850 = vpop.permute.xlu0 %3849
        %s3852 = sor.u32 256, 8
        %3853 = vbcast.lane.b32.xlu0 %v3847, %s3852
        %v3854 = vpop.permute.xlu0 %3853
        %v3855 = vlaneseq
        %v3856 = vshrl.u32 %v3855, 7
        %v3857 = vsub.s32 6, %v3856
        %v3858 = vrot.slane %v931, %v3857
        %3860 = vbcast.lane.b32.xlu0 %v3858, 256
        %v3861 = vpop.permute.xlu0 %3860
        %s3863 = sor.u32 256, 8
        %3864 = vbcast.lane.b32.xlu0 %v3858, %s3863
        %v3865 = vpop.permute.xlu0 %3864
        %v3866 = vlaneseq
        %v3867 = vshrl.u32 %v3866, 7
        %v3868 = vsub.s32 7, %v3867
        %v3869 = vrot.slane %v931, %v3868
        %3871 = vbcast.lane.b32.xlu0 %v3869, 256
        %v3872 = vpop.permute.xlu0 %3871
        %s3874 = sor.u32 256, 8
        %3875 = vbcast.lane.b32.xlu0 %v3869, %s3874
        %v3876 = vpop.permute.xlu0 %3875
        %v3877 = vsel %vm2340, %v2475, %v3179
        %v3878 = vsel %vm2340, %v2479, %v3183
        %v3879 = vsel %vm2340, %v2486, %v3190
        %v3880 = vsel %vm2340, %v2490, %v3194
        %v3881 = vsel %vm2340, %v2497, %v3201
        %v3882 = vsel %vm2340, %v2501, %v3205
        %v3883 = vsel %vm2340, %v2508, %v3212
        %v3884 = vsel %vm2340, %v2512, %v3216
        %v3885 = vsel %vm2340, %v2519, %v3223
        %v3886 = vsel %vm2340, %v2523, %v3227
        %v3887 = vsel %vm2340, %v2530, %v3234
        %v3888 = vsel %vm2340, %v2534, %v3238
        %v3889 = vsel %vm2340, %v2541, %v3245
        %v3890 = vsel %vm2340, %v2545, %v3249
        %v3891 = vsel %vm2340, %v2552, %v3256
        %v3892 = vsel %vm2340, %v2556, %v3260
        %v3893 = vsel %vm2340, %v2563, %v3267
        %v3894 = vsel %vm2340, %v2567, %v3271
        %v3895 = vsel %vm2340, %v2574, %v3278
        %v3896 = vsel %vm2340, %v2578, %v3282
        %v3897 = vsel %vm2340, %v2585, %v3289
        %v3898 = vsel %vm2340, %v2589, %v3293
        %v3899 = vsel %vm2340, %v2596, %v3300
        %v3900 = vsel %vm2340, %v2600, %v3304
        %v3901 = vsel %vm2340, %v2607, %v3311
        %v3902 = vsel %vm2340, %v2611, %v3315
        %v3903 = vsel %vm2340, %v2618, %v3322
        %v3904 = vsel %vm2340, %v2622, %v3326
        %v3905 = vsel %vm2340, %v2629, %v3333
        %v3906 = vsel %vm2340, %v2633, %v3337
        %v3907 = vsel %vm2340, %v2640, %v3344
        %v3908 = vsel %vm2340, %v2644, %v3348
        %v3909 = vsel %vm2340, %v2651, %v3355
        %v3910 = vsel %vm2340, %v2655, %v3359
        %v3911 = vsel %vm2340, %v2662, %v3366
        %v3912 = vsel %vm2340, %v2666, %v3370
        %v3913 = vsel %vm2340, %v2673, %v3377
        %v3914 = vsel %vm2340, %v2677, %v3381
        %v3915 = vsel %vm2340, %v2684, %v3388
        %v3916 = vsel %vm2340, %v2688, %v3392
        %v3917 = vsel %vm2340, %v2695, %v3399
        %v3918 = vsel %vm2340, %v2699, %v3403
        %v3919 = vsel %vm2340, %v2706, %v3410
        %v3920 = vsel %vm2340, %v2710, %v3414
        %v3921 = vsel %vm2340, %v2717, %v3421
        %v3922 = vsel %vm2340, %v2721, %v3425
        %v3923 = vsel %vm2340, %v2728, %v3432
        %v3924 = vsel %vm2340, %v2732, %v3436
        %v3925 = vsel %vm2340, %v2739, %v3443
        %v3926 = vsel %vm2340, %v2743, %v3447
        %v3927 = vsel %vm2340, %v2750, %v3454
        %v3928 = vsel %vm2340, %v2754, %v3458
        %v3929 = vsel %vm2340, %v2761, %v3465
        %v3930 = vsel %vm2340, %v2765, %v3469
        %v3931 = vsel %vm2340, %v2772, %v3476
        %v3932 = vsel %vm2340, %v2776, %v3480
        %v3933 = vsel %vm2340, %v2783, %v3487
        %v3934 = vsel %vm2340, %v2787, %v3491
        %v3935 = vsel %vm2340, %v2794, %v3498
        %v3936 = vsel %vm2340, %v2798, %v3502
        %v3937 = vsel %vm2340, %v2805, %v3509
        %v3938 = vsel %vm2340, %v2809, %v3513
        %v3939 = vsel %vm2340, %v2816, %v3520
        %v3940 = vsel %vm2340, %v2820, %v3524
        %v3941 = vsel %vm2340, %v2827, %v3531
        %v3942 = vsel %vm2340, %v2831, %v3535
        %v3943 = vsel %vm2340, %v2838, %v3542
        %v3944 = vsel %vm2340, %v2842, %v3546
        %v3945 = vsel %vm2340, %v2849, %v3553
        %v3946 = vsel %vm2340, %v2853, %v3557
        %v3947 = vsel %vm2340, %v2860, %v3564
        %v3948 = vsel %vm2340, %v2864, %v3568
        %v3949 = vsel %vm2340, %v2871, %v3575
        %v3950 = vsel %vm2340, %v2875, %v3579
        %v3951 = vsel %vm2340, %v2882, %v3586
        %v3952 = vsel %vm2340, %v2886, %v3590
        %v3953 = vsel %vm2340, %v2893, %v3597
        %v3954 = vsel %vm2340, %v2897, %v3601
        %v3955 = vsel %vm2340, %v2904, %v3608
        %v3956 = vsel %vm2340, %v2908, %v3612
        %v3957 = vsel %vm2340, %v2915, %v3619
        %v3958 = vsel %vm2340, %v2919, %v3623
        %v3959 = vsel %vm2340, %v2926, %v3630
        %v3960 = vsel %vm2340, %v2930, %v3634
        %v3961 = vsel %vm2340, %v2937, %v3641
        %v3962 = vsel %vm2340, %v2941, %v3645
        %v3963 = vsel %vm2340, %v2948, %v3652
        %v3964 = vsel %vm2340, %v2952, %v3656
        %v3965 = vsel %vm2340, %v2959, %v3663
        %v3966 = vsel %vm2340, %v2963, %v3667
        %v3967 = vsel %vm2340, %v2970, %v3674
        %v3968 = vsel %vm2340, %v2974, %v3678
        %v3969 = vsel %vm2340, %v2981, %v3685
        %v3970 = vsel %vm2340, %v2985, %v3689
        %v3971 = vsel %vm2340, %v2992, %v3696
        %v3972 = vsel %vm2340, %v2996, %v3700
        %v3973 = vsel %vm2340, %v3003, %v3707
        %v3974 = vsel %vm2340, %v3007, %v3711
        %v3975 = vsel %vm2340, %v3014, %v3718
        %v3976 = vsel %vm2340, %v3018, %v3722
        %v3977 = vsel %vm2340, %v3025, %v3729
        %v3978 = vsel %vm2340, %v3029, %v3733
        %v3979 = vsel %vm2340, %v3036, %v3740
        %v3980 = vsel %vm2340, %v3040, %v3744
        %v3981 = vsel %vm2340, %v3047, %v3751
        %v3982 = vsel %vm2340, %v3051, %v3755
        %v3983 = vsel %vm2340, %v3058, %v3762
        %v3984 = vsel %vm2340, %v3062, %v3766
        %v3985 = vsel %vm2340, %v3069, %v3773
        %v3986 = vsel %vm2340, %v3073, %v3777
        %v3987 = vsel %vm2340, %v3080, %v3784
        %v3988 = vsel %vm2340, %v3084, %v3788
        %v3989 = vsel %vm2340, %v3091, %v3795
        %v3990 = vsel %vm2340, %v3095, %v3799
        %v3991 = vsel %vm2340, %v3102, %v3806
        %v3992 = vsel %vm2340, %v3106, %v3810
        %v3993 = vsel %vm2340, %v3113, %v3817
        %v3994 = vsel %vm2340, %v3117, %v3821
        %v3995 = vsel %vm2340, %v3124, %v3828
        %v3996 = vsel %vm2340, %v3128, %v3832
        %v3997 = vsel %vm2340, %v3135, %v3839
        %v3998 = vsel %vm2340, %v3139, %v3843
        %v3999 = vsel %vm2340, %v3146, %v3850
        %v4000 = vsel %vm2340, %v3150, %v3854
        %v4001 = vsel %vm2340, %v3157, %v3861
        %v4002 = vsel %vm2340, %v3161, %v3865
        %v4003 = vsel %vm2340, %v3168, %v3872
        %v4004 = vsel %vm2340, %v3172, %v3876
        %v4005 = vcombine.low %v2341, %v2345
        %v4006 = vcombine.high %v2341, %v2345
        %v4008 = vunpack.c.l.s4 1983009808
        %v4009 = vunpack.c.0.s8 %v4008
        %v4010 = vlaneseq
        %v4011 = vshrl.u32 %v4010, 7
        %v4012 = vsub.s32 %v4009, %v4011
        %v4013 = vrot.slane %v4005, %v4012
        %v4015 = vunpack.c.l.s4 1983009808
        %v4016 = vunpack.c.0.s8 %v4015
        %v4017 = vlaneseq
        %v4018 = vshrl.u32 %v4017, 7
        %v4019 = vsub.s32 %v4016, %v4018
        %v4020 = vrot.slane %v4006, %v4019
        %v4021 = vcombine.low %v2343, %v2347
        %v4022 = vcombine.high %v2343, %v2347
        %v4024 = vunpack.c.l.s4 1983009808
        %v4025 = vunpack.c.0.s8 %v4024
        %v4026 = vlaneseq
        %v4027 = vshrl.u32 %v4026, 7
        %v4028 = vsub.s32 %v4025, %v4027
        %v4029 = vrot.slane %v4021, %v4028
        %v4031 = vunpack.c.l.s4 1983009808
        %v4032 = vunpack.c.0.s8 %v4031
        %v4033 = vlaneseq
        %v4034 = vshrl.u32 %v4033, 7
        %v4035 = vsub.s32 %v4032, %v4034
        %v4036 = vrot.slane %v4022, %v4035
        %v4037 = vcombine.low %v2349, %v2353
        %v4038 = vcombine.high %v2349, %v2353
        %v4040 = vunpack.c.l.s4 1983009808
        %v4041 = vunpack.c.0.s8 %v4040
        %v4042 = vlaneseq
        %v4043 = vshrl.u32 %v4042, 7
        %v4044 = vsub.s32 %v4041, %v4043
        %v4045 = vrot.slane %v4037, %v4044
        %v4047 = vunpack.c.l.s4 1983009808
        %v4048 = vunpack.c.0.s8 %v4047
        %v4049 = vlaneseq
        %v4050 = vshrl.u32 %v4049, 7
        %v4051 = vsub.s32 %v4048, %v4050
        %v4052 = vrot.slane %v4038, %v4051
        %v4053 = vcombine.low %v2351, %v2355
        %v4054 = vcombine.high %v2351, %v2355
        %v4056 = vunpack.c.l.s4 1983009808
        %v4057 = vunpack.c.0.s8 %v4056
        %v4058 = vlaneseq
        %v4059 = vshrl.u32 %v4058, 7
        %v4060 = vsub.s32 %v4057, %v4059
        %v4061 = vrot.slane %v4053, %v4060
        %v4063 = vunpack.c.l.s4 1983009808
        %v4064 = vunpack.c.0.s8 %v4063
        %v4065 = vlaneseq
        %v4066 = vshrl.u32 %v4065, 7
        %v4067 = vsub.s32 %v4064, %v4066
        %v4068 = vrot.slane %v4054, %v4067
        %v4069 = vcombine.low %v4013, %v4029
        %v4070 = vcombine.high %v4013, %v4029
        %v4072 = vunpack.c.l.s4 1934713408
        %v4073 = vunpack.c.0.s8 %v4072
        %v4074 = vlaneseq
        %v4075 = vshrl.u32 %v4074, 7
        %v4076 = vsub.s32 %v4073, %v4075
        %v4077 = vrot.slane %v4069, %v4076
        %v4079 = vunpack.c.l.s4 1934713408
        %v4080 = vunpack.c.0.s8 %v4079
        %v4081 = vlaneseq
        %v4082 = vshrl.u32 %v4081, 7
        %v4083 = vsub.s32 %v4080, %v4082
        %v4084 = vrot.slane %v4070, %v4083
        %v4085 = vcombine.low %v4020, %v4036
        %v4086 = vcombine.high %v4020, %v4036
        %v4088 = vunpack.c.l.s4 1934713408
        %v4089 = vunpack.c.0.s8 %v4088
        %v4090 = vlaneseq
        %v4091 = vshrl.u32 %v4090, 7
        %v4092 = vsub.s32 %v4089, %v4091
        %v4093 = vrot.slane %v4085, %v4092
        %v4095 = vunpack.c.l.s4 1934713408
        %v4096 = vunpack.c.0.s8 %v4095
        %v4097 = vlaneseq
        %v4098 = vshrl.u32 %v4097, 7
        %v4099 = vsub.s32 %v4096, %v4098
        %v4100 = vrot.slane %v4086, %v4099
        %v4101 = vcombine.low %v4045, %v4061
        %v4102 = vcombine.high %v4045, %v4061
        %v4104 = vunpack.c.l.s4 1934713408
        %v4105 = vunpack.c.0.s8 %v4104
        %v4106 = vlaneseq
        %v4107 = vshrl.u32 %v4106, 7
        %v4108 = vsub.s32 %v4105, %v4107
        %v4109 = vrot.slane %v4101, %v4108
        %v4111 = vunpack.c.l.s4 1934713408
        %v4112 = vunpack.c.0.s8 %v4111
        %v4113 = vlaneseq
        %v4114 = vshrl.u32 %v4113, 7
        %v4115 = vsub.s32 %v4112, %v4114
        %v4116 = vrot.slane %v4102, %v4115
        %v4117 = vcombine.low %v4052, %v4068
        %v4118 = vcombine.high %v4052, %v4068
        %v4120 = vunpack.c.l.s4 1934713408
        %v4121 = vunpack.c.0.s8 %v4120
        %v4122 = vlaneseq
        %v4123 = vshrl.u32 %v4122, 7
        %v4124 = vsub.s32 %v4121, %v4123
        %v4125 = vrot.slane %v4117, %v4124
        %v4127 = vunpack.c.l.s4 1934713408
        %v4128 = vunpack.c.0.s8 %v4127
        %v4129 = vlaneseq
        %v4130 = vshrl.u32 %v4129, 7
        %v4131 = vsub.s32 %v4128, %v4130
        %v4132 = vrot.slane %v4118, %v4131
        %v4133 = vcombine.low %v4077, %v4109
        %v4134 = vcombine.high %v4077, %v4109
        %v4135 = vcombine.low %v4084, %v4116
        %v4136 = vcombine.high %v4084, %v4116
        %v4137 = vcombine.low %v4093, %v4125
        %v4138 = vcombine.high %v4093, %v4125
        %v4139 = vcombine.low %v4100, %v4132
        %v4140 = vcombine.high %v4100, %v4132
        %v4141 = vcombine.low %v2357, %v2361
        %v4142 = vcombine.high %v2357, %v2361
        %v4144 = vunpack.c.l.s4 1983009808
        %v4145 = vunpack.c.0.s8 %v4144
        %v4146 = vlaneseq
        %v4147 = vshrl.u32 %v4146, 7
        %v4148 = vsub.s32 %v4145, %v4147
        %v4149 = vrot.slane %v4141, %v4148
        %v4151 = vunpack.c.l.s4 1983009808
        %v4152 = vunpack.c.0.s8 %v4151
        %v4153 = vlaneseq
        %v4154 = vshrl.u32 %v4153, 7
        %v4155 = vsub.s32 %v4152, %v4154
        %v4156 = vrot.slane %v4142, %v4155
        %v4157 = vcombine.low %v2359, %v2363
        %v4158 = vcombine.high %v2359, %v2363
        %v4160 = vunpack.c.l.s4 1983009808
        %v4161 = vunpack.c.0.s8 %v4160
        %v4162 = vlaneseq
        %v4163 = vshrl.u32 %v4162, 7
        %v4164 = vsub.s32 %v4161, %v4163
        %v4165 = vrot.slane %v4157, %v4164
        %v4167 = vunpack.c.l.s4 1983009808
        %v4168 = vunpack.c.0.s8 %v4167
        %v4169 = vlaneseq
        %v4170 = vshrl.u32 %v4169, 7
        %v4171 = vsub.s32 %v4168, %v4170
        %v4172 = vrot.slane %v4158, %v4171
        %v4173 = vcombine.low %v2365, %v2369
        %v4174 = vcombine.high %v2365, %v2369
        %v4176 = vunpack.c.l.s4 1983009808
        %v4177 = vunpack.c.0.s8 %v4176
        %v4178 = vlaneseq
        %v4179 = vshrl.u32 %v4178, 7
        %v4180 = vsub.s32 %v4177, %v4179
        %v4181 = vrot.slane %v4173, %v4180
        %v4183 = vunpack.c.l.s4 1983009808
        %v4184 = vunpack.c.0.s8 %v4183
        %v4185 = vlaneseq
        %v4186 = vshrl.u32 %v4185, 7
        %v4187 = vsub.s32 %v4184, %v4186
        %v4188 = vrot.slane %v4174, %v4187
        %v4189 = vcombine.low %v2367, %v2371
        %v4190 = vcombine.high %v2367, %v2371
        %v4192 = vunpack.c.l.s4 1983009808
        %v4193 = vunpack.c.0.s8 %v4192
        %v4194 = vlaneseq
        %v4195 = vshrl.u32 %v4194, 7
        %v4196 = vsub.s32 %v4193, %v4195
        %v4197 = vrot.slane %v4189, %v4196
        %v4199 = vunpack.c.l.s4 1983009808
        %v4200 = vunpack.c.0.s8 %v4199
        %v4201 = vlaneseq
        %v4202 = vshrl.u32 %v4201, 7
        %v4203 = vsub.s32 %v4200, %v4202
        %v4204 = vrot.slane %v4190, %v4203
        %v4205 = vcombine.low %v4149, %v4165
        %v4206 = vcombine.high %v4149, %v4165
        %v4208 = vunpack.c.l.s4 1934713408
        %v4209 = vunpack.c.0.s8 %v4208
        %v4210 = vlaneseq
        %v4211 = vshrl.u32 %v4210, 7
        %v4212 = vsub.s32 %v4209, %v4211
        %v4213 = vrot.slane %v4205, %v4212
        %v4215 = vunpack.c.l.s4 1934713408
        %v4216 = vunpack.c.0.s8 %v4215
        %v4217 = vlaneseq
        %v4218 = vshrl.u32 %v4217, 7
        %v4219 = vsub.s32 %v4216, %v4218
        %v4220 = vrot.slane %v4206, %v4219
        %v4221 = vcombine.low %v4156, %v4172
        %v4222 = vcombine.high %v4156, %v4172
        %v4224 = vunpack.c.l.s4 1934713408
        %v4225 = vunpack.c.0.s8 %v4224
        %v4226 = vlaneseq
        %v4227 = vshrl.u32 %v4226, 7
        %v4228 = vsub.s32 %v4225, %v4227
        %v4229 = vrot.slane %v4221, %v4228
        %v4231 = vunpack.c.l.s4 1934713408
        %v4232 = vunpack.c.0.s8 %v4231
        %v4233 = vlaneseq
        %v4234 = vshrl.u32 %v4233, 7
        %v4235 = vsub.s32 %v4232, %v4234
        %v4236 = vrot.slane %v4222, %v4235
        %v4237 = vcombine.low %v4181, %v4197
        %v4238 = vcombine.high %v4181, %v4197
        %v4240 = vunpack.c.l.s4 1934713408
        %v4241 = vunpack.c.0.s8 %v4240
        %v4242 = vlaneseq
        %v4243 = vshrl.u32 %v4242, 7
        %v4244 = vsub.s32 %v4241, %v4243
        %v4245 = vrot.slane %v4237, %v4244
        %v4247 = vunpack.c.l.s4 1934713408
        %v4248 = vunpack.c.0.s8 %v4247
        %v4249 = vlaneseq
        %v4250 = vshrl.u32 %v4249, 7
        %v4251 = vsub.s32 %v4248, %v4250
        %v4252 = vrot.slane %v4238, %v4251
        %v4253 = vcombine.low %v4188, %v4204
        %v4254 = vcombine.high %v4188, %v4204
        %v4256 = vunpack.c.l.s4 1934713408
        %v4257 = vunpack.c.0.s8 %v4256
        %v4258 = vlaneseq
        %v4259 = vshrl.u32 %v4258, 7
        %v4260 = vsub.s32 %v4257, %v4259
        %v4261 = vrot.slane %v4253, %v4260
        %v4263 = vunpack.c.l.s4 1934713408
        %v4264 = vunpack.c.0.s8 %v4263
        %v4265 = vlaneseq
        %v4266 = vshrl.u32 %v4265, 7
        %v4267 = vsub.s32 %v4264, %v4266
        %v4268 = vrot.slane %v4254, %v4267
        %v4269 = vcombine.low %v4213, %v4245
        %v4270 = vcombine.high %v4213, %v4245
        %v4271 = vcombine.low %v4220, %v4252
        %v4272 = vcombine.high %v4220, %v4252
        %v4273 = vcombine.low %v4229, %v4261
        %v4274 = vcombine.high %v4229, %v4261
        %v4275 = vcombine.low %v4236, %v4268
        %v4276 = vcombine.high %v4236, %v4268
        %v4277 = vcombine.low %v2342, %v2346
        %v4278 = vcombine.high %v2342, %v2346
        %v4280 = vunpack.c.l.s4 1983009808
        %v4281 = vunpack.c.0.s8 %v4280
        %v4282 = vlaneseq
        %v4283 = vshrl.u32 %v4282, 7
        %v4284 = vsub.s32 %v4281, %v4283
        %v4285 = vrot.slane %v4277, %v4284
        %v4287 = vunpack.c.l.s4 1983009808
        %v4288 = vunpack.c.0.s8 %v4287
        %v4289 = vlaneseq
        %v4290 = vshrl.u32 %v4289, 7
        %v4291 = vsub.s32 %v4288, %v4290
        %v4292 = vrot.slane %v4278, %v4291
        %v4293 = vcombine.low %v2344, %v2348
        %v4294 = vcombine.high %v2344, %v2348
        %v4296 = vunpack.c.l.s4 1983009808
        %v4297 = vunpack.c.0.s8 %v4296
        %v4298 = vlaneseq
        %v4299 = vshrl.u32 %v4298, 7
        %v4300 = vsub.s32 %v4297, %v4299
        %v4301 = vrot.slane %v4293, %v4300
        %v4303 = vunpack.c.l.s4 1983009808
        %v4304 = vunpack.c.0.s8 %v4303
        %v4305 = vlaneseq
        %v4306 = vshrl.u32 %v4305, 7
        %v4307 = vsub.s32 %v4304, %v4306
        %v4308 = vrot.slane %v4294, %v4307
        %v4309 = vcombine.low %v2350, %v2354
        %v4310 = vcombine.high %v2350, %v2354
        %v4312 = vunpack.c.l.s4 1983009808
        %v4313 = vunpack.c.0.s8 %v4312
        %v4314 = vlaneseq
        %v4315 = vshrl.u32 %v4314, 7
        %v4316 = vsub.s32 %v4313, %v4315
        %v4317 = vrot.slane %v4309, %v4316
        %v4319 = vunpack.c.l.s4 1983009808
        %v4320 = vunpack.c.0.s8 %v4319
        %v4321 = vlaneseq
        %v4322 = vshrl.u32 %v4321, 7
        %v4323 = vsub.s32 %v4320, %v4322
        %v4324 = vrot.slane %v4310, %v4323
        %v4325 = vcombine.low %v2352, %v2356
        %v4326 = vcombine.high %v2352, %v2356
        %v4328 = vunpack.c.l.s4 1983009808
        %v4329 = vunpack.c.0.s8 %v4328
        %v4330 = vlaneseq
        %v4331 = vshrl.u32 %v4330, 7
        %v4332 = vsub.s32 %v4329, %v4331
        %v4333 = vrot.slane %v4325, %v4332
        %v4335 = vunpack.c.l.s4 1983009808
        %v4336 = vunpack.c.0.s8 %v4335
        %v4337 = vlaneseq
        %v4338 = vshrl.u32 %v4337, 7
        %v4339 = vsub.s32 %v4336, %v4338
        %v4340 = vrot.slane %v4326, %v4339
        %v4341 = vcombine.low %v4285, %v4301
        %v4342 = vcombine.high %v4285, %v4301
        %v4344 = vunpack.c.l.s4 1934713408
        %v4345 = vunpack.c.0.s8 %v4344
        %v4346 = vlaneseq
        %v4347 = vshrl.u32 %v4346, 7
        %v4348 = vsub.s32 %v4345, %v4347
        %v4349 = vrot.slane %v4341, %v4348
        %v4351 = vunpack.c.l.s4 1934713408
        %v4352 = vunpack.c.0.s8 %v4351
        %v4353 = vlaneseq
        %v4354 = vshrl.u32 %v4353, 7
        %v4355 = vsub.s32 %v4352, %v4354
        %v4356 = vrot.slane %v4342, %v4355
        %v4357 = vcombine.low %v4292, %v4308
        %v4358 = vcombine.high %v4292, %v4308
        %v4360 = vunpack.c.l.s4 1934713408
        %v4361 = vunpack.c.0.s8 %v4360
        %v4362 = vlaneseq
        %v4363 = vshrl.u32 %v4362, 7
        %v4364 = vsub.s32 %v4361, %v4363
        %v4365 = vrot.slane %v4357, %v4364
        %v4367 = vunpack.c.l.s4 1934713408
        %v4368 = vunpack.c.0.s8 %v4367
        %v4369 = vlaneseq
        %v4370 = vshrl.u32 %v4369, 7
        %v4371 = vsub.s32 %v4368, %v4370
        %v4372 = vrot.slane %v4358, %v4371
        %v4373 = vcombine.low %v4317, %v4333
        %v4374 = vcombine.high %v4317, %v4333
        %v4376 = vunpack.c.l.s4 1934713408
        %v4377 = vunpack.c.0.s8 %v4376
        %v4378 = vlaneseq
        %v4379 = vshrl.u32 %v4378, 7
        %v4380 = vsub.s32 %v4377, %v4379
        %v4381 = vrot.slane %v4373, %v4380
        %v4383 = vunpack.c.l.s4 1934713408
        %v4384 = vunpack.c.0.s8 %v4383
        %v4385 = vlaneseq
        %v4386 = vshrl.u32 %v4385, 7
        %v4387 = vsub.s32 %v4384, %v4386
        %v4388 = vrot.slane %v4374, %v4387
        %v4389 = vcombine.low %v4324, %v4340
        %v4390 = vcombine.high %v4324, %v4340
        %v4392 = vunpack.c.l.s4 1934713408
        %v4393 = vunpack.c.0.s8 %v4392
        %v4394 = vlaneseq
        %v4395 = vshrl.u32 %v4394, 7
        %v4396 = vsub.s32 %v4393, %v4395
        %v4397 = vrot.slane %v4389, %v4396
        %v4399 = vunpack.c.l.s4 1934713408
        %v4400 = vunpack.c.0.s8 %v4399
        %v4401 = vlaneseq
        %v4402 = vshrl.u32 %v4401, 7
        %v4403 = vsub.s32 %v4400, %v4402
        %v4404 = vrot.slane %v4390, %v4403
        %v4405 = vcombine.low %v4349, %v4381
        %v4406 = vcombine.high %v4349, %v4381
        %v4407 = vcombine.low %v4356, %v4388
        %v4408 = vcombine.high %v4356, %v4388
        %v4409 = vcombine.low %v4365, %v4397
        %v4410 = vcombine.high %v4365, %v4397
        %v4411 = vcombine.low %v4372, %v4404
        %v4412 = vcombine.high %v4372, %v4404
        %v4413 = vcombine.low %v2358, %v2362
        %v4414 = vcombine.high %v2358, %v2362
        %v4416 = vunpack.c.l.s4 1983009808
        %v4417 = vunpack.c.0.s8 %v4416
        %v4418 = vlaneseq
        %v4419 = vshrl.u32 %v4418, 7
        %v4420 = vsub.s32 %v4417, %v4419
        %v4421 = vrot.slane %v4413, %v4420
        %v4423 = vunpack.c.l.s4 1983009808
        %v4424 = vunpack.c.0.s8 %v4423
        %v4425 = vlaneseq
        %v4426 = vshrl.u32 %v4425, 7
        %v4427 = vsub.s32 %v4424, %v4426
        %v4428 = vrot.slane %v4414, %v4427
        %v4429 = vcombine.low %v2360, %v2364
        %v4430 = vcombine.high %v2360, %v2364
        %v4432 = vunpack.c.l.s4 1983009808
        %v4433 = vunpack.c.0.s8 %v4432
        %v4434 = vlaneseq
        %v4435 = vshrl.u32 %v4434, 7
        %v4436 = vsub.s32 %v4433, %v4435
        %v4437 = vrot.slane %v4429, %v4436
        %v4439 = vunpack.c.l.s4 1983009808
        %v4440 = vunpack.c.0.s8 %v4439
        %v4441 = vlaneseq
        %v4442 = vshrl.u32 %v4441, 7
        %v4443 = vsub.s32 %v4440, %v4442
        %v4444 = vrot.slane %v4430, %v4443
        %v4445 = vcombine.low %v2366, %v2370
        %v4446 = vcombine.high %v2366, %v2370
        %v4448 = vunpack.c.l.s4 1983009808
        %v4449 = vunpack.c.0.s8 %v4448
        %v4450 = vlaneseq
        %v4451 = vshrl.u32 %v4450, 7
        %v4452 = vsub.s32 %v4449, %v4451
        %v4453 = vrot.slane %v4445, %v4452
        %v4455 = vunpack.c.l.s4 1983009808
        %v4456 = vunpack.c.0.s8 %v4455
        %v4457 = vlaneseq
        %v4458 = vshrl.u32 %v4457, 7
        %v4459 = vsub.s32 %v4456, %v4458
        %v4460 = vrot.slane %v4446, %v4459
        %v4461 = vcombine.low %v2368, %v2372
        %v4462 = vcombine.high %v2368, %v2372
        %v4464 = vunpack.c.l.s4 1983009808
        %v4465 = vunpack.c.0.s8 %v4464
        %v4466 = vlaneseq
        %v4467 = vshrl.u32 %v4466, 7
        %v4468 = vsub.s32 %v4465, %v4467
        %v4469 = vrot.slane %v4461, %v4468
        %v4471 = vunpack.c.l.s4 1983009808
        %v4472 = vunpack.c.0.s8 %v4471
        %v4473 = vlaneseq
        %v4474 = vshrl.u32 %v4473, 7
        %v4475 = vsub.s32 %v4472, %v4474
        %v4476 = vrot.slane %v4462, %v4475
        %v4477 = vcombine.low %v4421, %v4437
        %v4478 = vcombine.high %v4421, %v4437
        %v4480 = vunpack.c.l.s4 1934713408
        %v4481 = vunpack.c.0.s8 %v4480
        %v4482 = vlaneseq
        %v4483 = vshrl.u32 %v4482, 7
        %v4484 = vsub.s32 %v4481, %v4483
        %v4485 = vrot.slane %v4477, %v4484
        %v4487 = vunpack.c.l.s4 1934713408
        %v4488 = vunpack.c.0.s8 %v4487
        %v4489 = vlaneseq
        %v4490 = vshrl.u32 %v4489, 7
        %v4491 = vsub.s32 %v4488, %v4490
        %v4492 = vrot.slane %v4478, %v4491
        %v4493 = vcombine.low %v4428, %v4444
        %v4494 = vcombine.high %v4428, %v4444
        %v4496 = vunpack.c.l.s4 1934713408
        %v4497 = vunpack.c.0.s8 %v4496
        %v4498 = vlaneseq
        %v4499 = vshrl.u32 %v4498, 7
        %v4500 = vsub.s32 %v4497, %v4499
        %v4501 = vrot.slane %v4493, %v4500
        %v4503 = vunpack.c.l.s4 1934713408
        %v4504 = vunpack.c.0.s8 %v4503
        %v4505 = vlaneseq
        %v4506 = vshrl.u32 %v4505, 7
        %v4507 = vsub.s32 %v4504, %v4506
        %v4508 = vrot.slane %v4494, %v4507
        %v4509 = vcombine.low %v4453, %v4469
        %v4510 = vcombine.high %v4453, %v4469
        %v4512 = vunpack.c.l.s4 1934713408
        %v4513 = vunpack.c.0.s8 %v4512
        %v4514 = vlaneseq
        %v4515 = vshrl.u32 %v4514, 7
        %v4516 = vsub.s32 %v4513, %v4515
        %v4517 = vrot.slane %v4509, %v4516
        %v4519 = vunpack.c.l.s4 1934713408
        %v4520 = vunpack.c.0.s8 %v4519
        %v4521 = vlaneseq
        %v4522 = vshrl.u32 %v4521, 7
        %v4523 = vsub.s32 %v4520, %v4522
        %v4524 = vrot.slane %v4510, %v4523
        %v4525 = vcombine.low %v4460, %v4476
        %v4526 = vcombine.high %v4460, %v4476
        %v4528 = vunpack.c.l.s4 1934713408
        %v4529 = vunpack.c.0.s8 %v4528
        %v4530 = vlaneseq
        %v4531 = vshrl.u32 %v4530, 7
        %v4532 = vsub.s32 %v4529, %v4531
        %v4533 = vrot.slane %v4525, %v4532
        %v4535 = vunpack.c.l.s4 1934713408
        %v4536 = vunpack.c.0.s8 %v4535
        %v4537 = vlaneseq
        %v4538 = vshrl.u32 %v4537, 7
        %v4539 = vsub.s32 %v4536, %v4538
        %v4540 = vrot.slane %v4526, %v4539
        %v4541 = vcombine.low %v4485, %v4517
        %v4542 = vcombine.high %v4485, %v4517
        %v4543 = vcombine.low %v4492, %v4524
        %v4544 = vcombine.high %v4492, %v4524
        %v4545 = vcombine.low %v4501, %v4533
        %v4546 = vcombine.high %v4501, %v4533
        %v4547 = vcombine.low %v4508, %v4540
        %v4548 = vcombine.high %v4508, %v4540
        %v4549 = vcombine.low %v2373, %v2377
        %v4550 = vcombine.high %v2373, %v2377
        %v4552 = vunpack.c.l.s4 1983009808
        %v4553 = vunpack.c.0.s8 %v4552
        %v4554 = vlaneseq
        %v4555 = vshrl.u32 %v4554, 7
        %v4556 = vsub.s32 %v4553, %v4555
        %v4557 = vrot.slane %v4549, %v4556
        %v4559 = vunpack.c.l.s4 1983009808
        %v4560 = vunpack.c.0.s8 %v4559
        %v4561 = vlaneseq
        %v4562 = vshrl.u32 %v4561, 7
        %v4563 = vsub.s32 %v4560, %v4562
        %v4564 = vrot.slane %v4550, %v4563
        %v4565 = vcombine.low %v2375, %v2379
        %v4566 = vcombine.high %v2375, %v2379
        %v4568 = vunpack.c.l.s4 1983009808
        %v4569 = vunpack.c.0.s8 %v4568
        %v4570 = vlaneseq
        %v4571 = vshrl.u32 %v4570, 7
        %v4572 = vsub.s32 %v4569, %v4571
        %v4573 = vrot.slane %v4565, %v4572
        %v4575 = vunpack.c.l.s4 1983009808
        %v4576 = vunpack.c.0.s8 %v4575
        %v4577 = vlaneseq
        %v4578 = vshrl.u32 %v4577, 7
        %v4579 = vsub.s32 %v4576, %v4578
        %v4580 = vrot.slane %v4566, %v4579
        %v4581 = vcombine.low %v2381, %v2385
        %v4582 = vcombine.high %v2381, %v2385
        %v4584 = vunpack.c.l.s4 1983009808
        %v4585 = vunpack.c.0.s8 %v4584
        %v4586 = vlaneseq
        %v4587 = vshrl.u32 %v4586, 7
        %v4588 = vsub.s32 %v4585, %v4587
        %v4589 = vrot.slane %v4581, %v4588
        %v4591 = vunpack.c.l.s4 1983009808
        %v4592 = vunpack.c.0.s8 %v4591
        %v4593 = vlaneseq
        %v4594 = vshrl.u32 %v4593, 7
        %v4595 = vsub.s32 %v4592, %v4594
        %v4596 = vrot.slane %v4582, %v4595
        %v4597 = vcombine.low %v2383, %v2387
        %v4598 = vcombine.high %v2383, %v2387
        %v4600 = vunpack.c.l.s4 1983009808
        %v4601 = vunpack.c.0.s8 %v4600
        %v4602 = vlaneseq
        %v4603 = vshrl.u32 %v4602, 7
        %v4604 = vsub.s32 %v4601, %v4603
        %v4605 = vrot.slane %v4597, %v4604
        %v4607 = vunpack.c.l.s4 1983009808
        %v4608 = vunpack.c.0.s8 %v4607
        %v4609 = vlaneseq
        %v4610 = vshrl.u32 %v4609, 7
        %v4611 = vsub.s32 %v4608, %v4610
        %v4612 = vrot.slane %v4598, %v4611
        %v4613 = vcombine.low %v4557, %v4573
        %v4614 = vcombine.high %v4557, %v4573
        %v4616 = vunpack.c.l.s4 1934713408
        %v4617 = vunpack.c.0.s8 %v4616
        %v4618 = vlaneseq
        %v4619 = vshrl.u32 %v4618, 7
        %v4620 = vsub.s32 %v4617, %v4619
        %v4621 = vrot.slane %v4613, %v4620
        %v4623 = vunpack.c.l.s4 1934713408
        %v4624 = vunpack.c.0.s8 %v4623
        %v4625 = vlaneseq
        %v4626 = vshrl.u32 %v4625, 7
        %v4627 = vsub.s32 %v4624, %v4626
        %v4628 = vrot.slane %v4614, %v4627
        %v4629 = vcombine.low %v4564, %v4580
        %v4630 = vcombine.high %v4564, %v4580
        %v4632 = vunpack.c.l.s4 1934713408
        %v4633 = vunpack.c.0.s8 %v4632
        %v4634 = vlaneseq
        %v4635 = vshrl.u32 %v4634, 7
        %v4636 = vsub.s32 %v4633, %v4635
        %v4637 = vrot.slane %v4629, %v4636
        %v4639 = vunpack.c.l.s4 1934713408
        %v4640 = vunpack.c.0.s8 %v4639
        %v4641 = vlaneseq
        %v4642 = vshrl.u32 %v4641, 7
        %v4643 = vsub.s32 %v4640, %v4642
        %v4644 = vrot.slane %v4630, %v4643
        %v4645 = vcombine.low %v4589, %v4605
        %v4646 = vcombine.high %v4589, %v4605
        %v4648 = vunpack.c.l.s4 1934713408
        %v4649 = vunpack.c.0.s8 %v4648
        %v4650 = vlaneseq
        %v4651 = vshrl.u32 %v4650, 7
        %v4652 = vsub.s32 %v4649, %v4651
        %v4653 = vrot.slane %v4645, %v4652
        %v4655 = vunpack.c.l.s4 1934713408
        %v4656 = vunpack.c.0.s8 %v4655
        %v4657 = vlaneseq
        %v4658 = vshrl.u32 %v4657, 7
        %v4659 = vsub.s32 %v4656, %v4658
        %v4660 = vrot.slane %v4646, %v4659
        %v4661 = vcombine.low %v4596, %v4612
        %v4662 = vcombine.high %v4596, %v4612
        %v4664 = vunpack.c.l.s4 1934713408
        %v4665 = vunpack.c.0.s8 %v4664
        %v4666 = vlaneseq
        %v4667 = vshrl.u32 %v4666, 7
        %v4668 = vsub.s32 %v4665, %v4667
        %v4669 = vrot.slane %v4661, %v4668
        %v4671 = vunpack.c.l.s4 1934713408
        %v4672 = vunpack.c.0.s8 %v4671
        %v4673 = vlaneseq
        %v4674 = vshrl.u32 %v4673, 7
        %v4675 = vsub.s32 %v4672, %v4674
        %v4676 = vrot.slane %v4662, %v4675
        %v4677 = vcombine.low %v4621, %v4653
        %v4678 = vcombine.high %v4621, %v4653
        %v4679 = vcombine.low %v4628, %v4660
        %v4680 = vcombine.high %v4628, %v4660
        %v4681 = vcombine.low %v4637, %v4669
        %v4682 = vcombine.high %v4637, %v4669
        %v4683 = vcombine.low %v4644, %v4676
        %v4684 = vcombine.high %v4644, %v4676
        %v4685 = vcombine.low %v2389, %v2393
        %v4686 = vcombine.high %v2389, %v2393
        %v4688 = vunpack.c.l.s4 1983009808
        %v4689 = vunpack.c.0.s8 %v4688
        %v4690 = vlaneseq
        %v4691 = vshrl.u32 %v4690, 7
        %v4692 = vsub.s32 %v4689, %v4691
        %v4693 = vrot.slane %v4685, %v4692
        %v4695 = vunpack.c.l.s4 1983009808
        %v4696 = vunpack.c.0.s8 %v4695
        %v4697 = vlaneseq
        %v4698 = vshrl.u32 %v4697, 7
        %v4699 = vsub.s32 %v4696, %v4698
        %v4700 = vrot.slane %v4686, %v4699
        %v4701 = vcombine.low %v2391, %v2395
        %v4702 = vcombine.high %v2391, %v2395
        %v4704 = vunpack.c.l.s4 1983009808
        %v4705 = vunpack.c.0.s8 %v4704
        %v4706 = vlaneseq
        %v4707 = vshrl.u32 %v4706, 7
        %v4708 = vsub.s32 %v4705, %v4707
        %v4709 = vrot.slane %v4701, %v4708
        %v4711 = vunpack.c.l.s4 1983009808
        %v4712 = vunpack.c.0.s8 %v4711
        %v4713 = vlaneseq
        %v4714 = vshrl.u32 %v4713, 7
        %v4715 = vsub.s32 %v4712, %v4714
        %v4716 = vrot.slane %v4702, %v4715
        %v4717 = vcombine.low %v2397, %v2401
        %v4718 = vcombine.high %v2397, %v2401
        %v4720 = vunpack.c.l.s4 1983009808
        %v4721 = vunpack.c.0.s8 %v4720
        %v4722 = vlaneseq
        %v4723 = vshrl.u32 %v4722, 7
        %v4724 = vsub.s32 %v4721, %v4723
        %v4725 = vrot.slane %v4717, %v4724
        %v4727 = vunpack.c.l.s4 1983009808
        %v4728 = vunpack.c.0.s8 %v4727
        %v4729 = vlaneseq
        %v4730 = vshrl.u32 %v4729, 7
        %v4731 = vsub.s32 %v4728, %v4730
        %v4732 = vrot.slane %v4718, %v4731
        %v4733 = vcombine.low %v2399, %v2403
        %v4734 = vcombine.high %v2399, %v2403
        %v4736 = vunpack.c.l.s4 1983009808
        %v4737 = vunpack.c.0.s8 %v4736
        %v4738 = vlaneseq
        %v4739 = vshrl.u32 %v4738, 7
        %v4740 = vsub.s32 %v4737, %v4739
        %v4741 = vrot.slane %v4733, %v4740
        %v4743 = vunpack.c.l.s4 1983009808
        %v4744 = vunpack.c.0.s8 %v4743
        %v4745 = vlaneseq
        %v4746 = vshrl.u32 %v4745, 7
        %v4747 = vsub.s32 %v4744, %v4746
        %v4748 = vrot.slane %v4734, %v4747
        %v4749 = vcombine.low %v4693, %v4709
        %v4750 = vcombine.high %v4693, %v4709
        %v4752 = vunpack.c.l.s4 1934713408
        %v4753 = vunpack.c.0.s8 %v4752
        %v4754 = vlaneseq
        %v4755 = vshrl.u32 %v4754, 7
        %v4756 = vsub.s32 %v4753, %v4755
        %v4757 = vrot.slane %v4749, %v4756
        %v4759 = vunpack.c.l.s4 1934713408
        %v4760 = vunpack.c.0.s8 %v4759
        %v4761 = vlaneseq
        %v4762 = vshrl.u32 %v4761, 7
        %v4763 = vsub.s32 %v4760, %v4762
        %v4764 = vrot.slane %v4750, %v4763
        %v4765 = vcombine.low %v4700, %v4716
        %v4766 = vcombine.high %v4700, %v4716
        %v4768 = vunpack.c.l.s4 1934713408
        %v4769 = vunpack.c.0.s8 %v4768
        %v4770 = vlaneseq
        %v4771 = vshrl.u32 %v4770, 7
        %v4772 = vsub.s32 %v4769, %v4771
        %v4773 = vrot.slane %v4765, %v4772
        %v4775 = vunpack.c.l.s4 1934713408
        %v4776 = vunpack.c.0.s8 %v4775
        %v4777 = vlaneseq
        %v4778 = vshrl.u32 %v4777, 7
        %v4779 = vsub.s32 %v4776, %v4778
        %v4780 = vrot.slane %v4766, %v4779
        %v4781 = vcombine.low %v4725, %v4741
        %v4782 = vcombine.high %v4725, %v4741
        %v4784 = vunpack.c.l.s4 1934713408
        %v4785 = vunpack.c.0.s8 %v4784
        %v4786 = vlaneseq
        %v4787 = vshrl.u32 %v4786, 7
        %v4788 = vsub.s32 %v4785, %v4787
        %v4789 = vrot.slane %v4781, %v4788
        %v4791 = vunpack.c.l.s4 1934713408
        %v4792 = vunpack.c.0.s8 %v4791
        %v4793 = vlaneseq
        %v4794 = vshrl.u32 %v4793, 7
        %v4795 = vsub.s32 %v4792, %v4794
        %v4796 = vrot.slane %v4782, %v4795
        %v4797 = vcombine.low %v4732, %v4748
        %v4798 = vcombine.high %v4732, %v4748
        %v4800 = vunpack.c.l.s4 1934713408
        %v4801 = vunpack.c.0.s8 %v4800
        %v4802 = vlaneseq
        %v4803 = vshrl.u32 %v4802, 7
        %v4804 = vsub.s32 %v4801, %v4803
        %v4805 = vrot.slane %v4797, %v4804
        %v4807 = vunpack.c.l.s4 1934713408
        %v4808 = vunpack.c.0.s8 %v4807
        %v4809 = vlaneseq
        %v4810 = vshrl.u32 %v4809, 7
        %v4811 = vsub.s32 %v4808, %v4810
        %v4812 = vrot.slane %v4798, %v4811
        %v4813 = vcombine.low %v4757, %v4789
        %v4814 = vcombine.high %v4757, %v4789
        %v4815 = vcombine.low %v4764, %v4796
        %v4816 = vcombine.high %v4764, %v4796
        %v4817 = vcombine.low %v4773, %v4805
        %v4818 = vcombine.high %v4773, %v4805
        %v4819 = vcombine.low %v4780, %v4812
        %v4820 = vcombine.high %v4780, %v4812
        %v4821 = vcombine.low %v2374, %v2378
        %v4822 = vcombine.high %v2374, %v2378
        %v4824 = vunpack.c.l.s4 1983009808
        %v4825 = vunpack.c.0.s8 %v4824
        %v4826 = vlaneseq
        %v4827 = vshrl.u32 %v4826, 7
        %v4828 = vsub.s32 %v4825, %v4827
        %v4829 = vrot.slane %v4821, %v4828
        %v4831 = vunpack.c.l.s4 1983009808
        %v4832 = vunpack.c.0.s8 %v4831
        %v4833 = vlaneseq
        %v4834 = vshrl.u32 %v4833, 7
        %v4835 = vsub.s32 %v4832, %v4834
        %v4836 = vrot.slane %v4822, %v4835
        %v4837 = vcombine.low %v2376, %v2380
        %v4838 = vcombine.high %v2376, %v2380
        %v4840 = vunpack.c.l.s4 1983009808
        %v4841 = vunpack.c.0.s8 %v4840
        %v4842 = vlaneseq
        %v4843 = vshrl.u32 %v4842, 7
        %v4844 = vsub.s32 %v4841, %v4843
        %v4845 = vrot.slane %v4837, %v4844
        %v4847 = vunpack.c.l.s4 1983009808
        %v4848 = vunpack.c.0.s8 %v4847
        %v4849 = vlaneseq
        %v4850 = vshrl.u32 %v4849, 7
        %v4851 = vsub.s32 %v4848, %v4850
        %v4852 = vrot.slane %v4838, %v4851
        %v4853 = vcombine.low %v2382, %v2386
        %v4854 = vcombine.high %v2382, %v2386
        %v4856 = vunpack.c.l.s4 1983009808
        %v4857 = vunpack.c.0.s8 %v4856
        %v4858 = vlaneseq
        %v4859 = vshrl.u32 %v4858, 7
        %v4860 = vsub.s32 %v4857, %v4859
        %v4861 = vrot.slane %v4853, %v4860
        %v4863 = vunpack.c.l.s4 1983009808
        %v4864 = vunpack.c.0.s8 %v4863
        %v4865 = vlaneseq
        %v4866 = vshrl.u32 %v4865, 7
        %v4867 = vsub.s32 %v4864, %v4866
        %v4868 = vrot.slane %v4854, %v4867
        %v4869 = vcombine.low %v2384, %v2388
        %v4870 = vcombine.high %v2384, %v2388
        %v4872 = vunpack.c.l.s4 1983009808
        %v4873 = vunpack.c.0.s8 %v4872
        %v4874 = vlaneseq
        %v4875 = vshrl.u32 %v4874, 7
        %v4876 = vsub.s32 %v4873, %v4875
        %v4877 = vrot.slane %v4869, %v4876
        %v4879 = vunpack.c.l.s4 1983009808
        %v4880 = vunpack.c.0.s8 %v4879
        %v4881 = vlaneseq
        %v4882 = vshrl.u32 %v4881, 7
        %v4883 = vsub.s32 %v4880, %v4882
        %v4884 = vrot.slane %v4870, %v4883
        %v4885 = vcombine.low %v4829, %v4845
        %v4886 = vcombine.high %v4829, %v4845
        %v4888 = vunpack.c.l.s4 1934713408
        %v4889 = vunpack.c.0.s8 %v4888
        %v4890 = vlaneseq
        %v4891 = vshrl.u32 %v4890, 7
        %v4892 = vsub.s32 %v4889, %v4891
        %v4893 = vrot.slane %v4885, %v4892
        %v4895 = vunpack.c.l.s4 1934713408
        %v4896 = vunpack.c.0.s8 %v4895
        %v4897 = vlaneseq
        %v4898 = vshrl.u32 %v4897, 7
        %v4899 = vsub.s32 %v4896, %v4898
        %v4900 = vrot.slane %v4886, %v4899
        %v4901 = vcombine.low %v4836, %v4852
        %v4902 = vcombine.high %v4836, %v4852
        %v4904 = vunpack.c.l.s4 1934713408
        %v4905 = vunpack.c.0.s8 %v4904
        %v4906 = vlaneseq
        %v4907 = vshrl.u32 %v4906, 7
        %v4908 = vsub.s32 %v4905, %v4907
        %v4909 = vrot.slane %v4901, %v4908
        %v4911 = vunpack.c.l.s4 1934713408
        %v4912 = vunpack.c.0.s8 %v4911
        %v4913 = vlaneseq
        %v4914 = vshrl.u32 %v4913, 7
        %v4915 = vsub.s32 %v4912, %v4914
        %v4916 = vrot.slane %v4902, %v4915
        %v4917 = vcombine.low %v4861, %v4877
        %v4918 = vcombine.high %v4861, %v4877
        %v4920 = vunpack.c.l.s4 1934713408
        %v4921 = vunpack.c.0.s8 %v4920
        %v4922 = vlaneseq
        %v4923 = vshrl.u32 %v4922, 7
        %v4924 = vsub.s32 %v4921, %v4923
        %v4925 = vrot.slane %v4917, %v4924
        %v4927 = vunpack.c.l.s4 1934713408
        %v4928 = vunpack.c.0.s8 %v4927
        %v4929 = vlaneseq
        %v4930 = vshrl.u32 %v4929, 7
        %v4931 = vsub.s32 %v4928, %v4930
        %v4932 = vrot.slane %v4918, %v4931
        %v4933 = vcombine.low %v4868, %v4884
        %v4934 = vcombine.high %v4868, %v4884
        %v4936 = vunpack.c.l.s4 1934713408
        %v4937 = vunpack.c.0.s8 %v4936
        %v4938 = vlaneseq
        %v4939 = vshrl.u32 %v4938, 7
        %v4940 = vsub.s32 %v4937, %v4939
        %v4941 = vrot.slane %v4933, %v4940
        %v4943 = vunpack.c.l.s4 1934713408
        %v4944 = vunpack.c.0.s8 %v4943
        %v4945 = vlaneseq
        %v4946 = vshrl.u32 %v4945, 7
        %v4947 = vsub.s32 %v4944, %v4946
        %v4948 = vrot.slane %v4934, %v4947
        %v4949 = vcombine.low %v4893, %v4925
        %v4950 = vcombine.high %v4893, %v4925
        %v4951 = vcombine.low %v4900, %v4932
        %v4952 = vcombine.high %v4900, %v4932
        %v4953 = vcombine.low %v4909, %v4941
        %v4954 = vcombine.high %v4909, %v4941
        %v4955 = vcombine.low %v4916, %v4948
        %v4956 = vcombine.high %v4916, %v4948
        %v4957 = vcombine.low %v2390, %v2394
        %v4958 = vcombine.high %v2390, %v2394
        %v4960 = vunpack.c.l.s4 1983009808
        %v4961 = vunpack.c.0.s8 %v4960
        %v4962 = vlaneseq
        %v4963 = vshrl.u32 %v4962, 7
        %v4964 = vsub.s32 %v4961, %v4963
        %v4965 = vrot.slane %v4957, %v4964
        %v4967 = vunpack.c.l.s4 1983009808
        %v4968 = vunpack.c.0.s8 %v4967
        %v4969 = vlaneseq
        %v4970 = vshrl.u32 %v4969, 7
        %v4971 = vsub.s32 %v4968, %v4970
        %v4972 = vrot.slane %v4958, %v4971
        %v4973 = vcombine.low %v2392, %v2396
        %v4974 = vcombine.high %v2392, %v2396
        %v4976 = vunpack.c.l.s4 1983009808
        %v4977 = vunpack.c.0.s8 %v4976
        %v4978 = vlaneseq
        %v4979 = vshrl.u32 %v4978, 7
        %v4980 = vsub.s32 %v4977, %v4979
        %v4981 = vrot.slane %v4973, %v4980
        %v4983 = vunpack.c.l.s4 1983009808
        %v4984 = vunpack.c.0.s8 %v4983
        %v4985 = vlaneseq
        %v4986 = vshrl.u32 %v4985, 7
        %v4987 = vsub.s32 %v4984, %v4986
        %v4988 = vrot.slane %v4974, %v4987
        %v4989 = vcombine.low %v2398, %v2402
        %v4990 = vcombine.high %v2398, %v2402
        %v4992 = vunpack.c.l.s4 1983009808
        %v4993 = vunpack.c.0.s8 %v4992
        %v4994 = vlaneseq
        %v4995 = vshrl.u32 %v4994, 7
        %v4996 = vsub.s32 %v4993, %v4995
        %v4997 = vrot.slane %v4989, %v4996
        %v4999 = vunpack.c.l.s4 1983009808
        %v5000 = vunpack.c.0.s8 %v4999
        %v5001 = vlaneseq
        %v5002 = vshrl.u32 %v5001, 7
        %v5003 = vsub.s32 %v5000, %v5002
        %v5004 = vrot.slane %v4990, %v5003
        %v5005 = vcombine.low %v2400, %v2404
        %v5006 = vcombine.high %v2400, %v2404
        %v5008 = vunpack.c.l.s4 1983009808
        %v5009 = vunpack.c.0.s8 %v5008
        %v5010 = vlaneseq
        %v5011 = vshrl.u32 %v5010, 7
        %v5012 = vsub.s32 %v5009, %v5011
        %v5013 = vrot.slane %v5005, %v5012
        %v5015 = vunpack.c.l.s4 1983009808
        %v5016 = vunpack.c.0.s8 %v5015
        %v5017 = vlaneseq
        %v5018 = vshrl.u32 %v5017, 7
        %v5019 = vsub.s32 %v5016, %v5018
        %v5020 = vrot.slane %v5006, %v5019
        %v5021 = vcombine.low %v4965, %v4981
        %v5022 = vcombine.high %v4965, %v4981
        %v5024 = vunpack.c.l.s4 1934713408
        %v5025 = vunpack.c.0.s8 %v5024
        %v5026 = vlaneseq
        %v5027 = vshrl.u32 %v5026, 7
        %v5028 = vsub.s32 %v5025, %v5027
        %v5029 = vrot.slane %v5021, %v5028
        %v5031 = vunpack.c.l.s4 1934713408
        %v5032 = vunpack.c.0.s8 %v5031
        %v5033 = vlaneseq
        %v5034 = vshrl.u32 %v5033, 7
        %v5035 = vsub.s32 %v5032, %v5034
        %v5036 = vrot.slane %v5022, %v5035
        %v5037 = vcombine.low %v4972, %v4988
        %v5038 = vcombine.high %v4972, %v4988
        %v5040 = vunpack.c.l.s4 1934713408
        %v5041 = vunpack.c.0.s8 %v5040
        %v5042 = vlaneseq
        %v5043 = vshrl.u32 %v5042, 7
        %v5044 = vsub.s32 %v5041, %v5043
        %v5045 = vrot.slane %v5037, %v5044
        %v5047 = vunpack.c.l.s4 1934713408
        %v5048 = vunpack.c.0.s8 %v5047
        %v5049 = vlaneseq
        %v5050 = vshrl.u32 %v5049, 7
        %v5051 = vsub.s32 %v5048, %v5050
        %v5052 = vrot.slane %v5038, %v5051
        %v5053 = vcombine.low %v4997, %v5013
        %v5054 = vcombine.high %v4997, %v5013
        %v5056 = vunpack.c.l.s4 1934713408
        %v5057 = vunpack.c.0.s8 %v5056
        %v5058 = vlaneseq
        %v5059 = vshrl.u32 %v5058, 7
        %v5060 = vsub.s32 %v5057, %v5059
        %v5061 = vrot.slane %v5053, %v5060
        %v5063 = vunpack.c.l.s4 1934713408
        %v5064 = vunpack.c.0.s8 %v5063
        %v5065 = vlaneseq
        %v5066 = vshrl.u32 %v5065, 7
        %v5067 = vsub.s32 %v5064, %v5066
        %v5068 = vrot.slane %v5054, %v5067
        %v5069 = vcombine.low %v5004, %v5020
        %v5070 = vcombine.high %v5004, %v5020
        %v5072 = vunpack.c.l.s4 1934713408
        %v5073 = vunpack.c.0.s8 %v5072
        %v5074 = vlaneseq
        %v5075 = vshrl.u32 %v5074, 7
        %v5076 = vsub.s32 %v5073, %v5075
        %v5077 = vrot.slane %v5069, %v5076
        %v5079 = vunpack.c.l.s4 1934713408
        %v5080 = vunpack.c.0.s8 %v5079
        %v5081 = vlaneseq
        %v5082 = vshrl.u32 %v5081, 7
        %v5083 = vsub.s32 %v5080, %v5082
        %v5084 = vrot.slane %v5070, %v5083
        %v5085 = vcombine.low %v5029, %v5061
        %v5086 = vcombine.high %v5029, %v5061
        %v5087 = vcombine.low %v5036, %v5068
        %v5088 = vcombine.high %v5036, %v5068
        %v5089 = vcombine.low %v5045, %v5077
        %v5090 = vcombine.high %v5045, %v5077
        %v5091 = vcombine.low %v5052, %v5084
        %v5092 = vcombine.high %v5052, %v5084
        %v5093 = vcombine.low %v2405, %v2409
        %v5094 = vcombine.high %v2405, %v2409
        %v5096 = vunpack.c.l.s4 1983009808
        %v5097 = vunpack.c.0.s8 %v5096
        %v5098 = vlaneseq
        %v5099 = vshrl.u32 %v5098, 7
        %v5100 = vsub.s32 %v5097, %v5099
        %v5101 = vrot.slane %v5093, %v5100
        %v5103 = vunpack.c.l.s4 1983009808
        %v5104 = vunpack.c.0.s8 %v5103
        %v5105 = vlaneseq
        %v5106 = vshrl.u32 %v5105, 7
        %v5107 = vsub.s32 %v5104, %v5106
        %v5108 = vrot.slane %v5094, %v5107
        %v5109 = vcombine.low %v2407, %v2411
        %v5110 = vcombine.high %v2407, %v2411
        %v5112 = vunpack.c.l.s4 1983009808
        %v5113 = vunpack.c.0.s8 %v5112
        %v5114 = vlaneseq
        %v5115 = vshrl.u32 %v5114, 7
        %v5116 = vsub.s32 %v5113, %v5115
        %v5117 = vrot.slane %v5109, %v5116
        %v5119 = vunpack.c.l.s4 1983009808
        %v5120 = vunpack.c.0.s8 %v5119
        %v5121 = vlaneseq
        %v5122 = vshrl.u32 %v5121, 7
        %v5123 = vsub.s32 %v5120, %v5122
        %v5124 = vrot.slane %v5110, %v5123
        %v5125 = vcombine.low %v2413, %v2417
        %v5126 = vcombine.high %v2413, %v2417
        %v5128 = vunpack.c.l.s4 1983009808
        %v5129 = vunpack.c.0.s8 %v5128
        %v5130 = vlaneseq
        %v5131 = vshrl.u32 %v5130, 7
        %v5132 = vsub.s32 %v5129, %v5131
        %v5133 = vrot.slane %v5125, %v5132
        %v5135 = vunpack.c.l.s4 1983009808
        %v5136 = vunpack.c.0.s8 %v5135
        %v5137 = vlaneseq
        %v5138 = vshrl.u32 %v5137, 7
        %v5139 = vsub.s32 %v5136, %v5138
        %v5140 = vrot.slane %v5126, %v5139
        %v5141 = vcombine.low %v2415, %v2419
        %v5142 = vcombine.high %v2415, %v2419
        %v5144 = vunpack.c.l.s4 1983009808
        %v5145 = vunpack.c.0.s8 %v5144
        %v5146 = vlaneseq
        %v5147 = vshrl.u32 %v5146, 7
        %v5148 = vsub.s32 %v5145, %v5147
        %v5149 = vrot.slane %v5141, %v5148
        %v5151 = vunpack.c.l.s4 1983009808
        %v5152 = vunpack.c.0.s8 %v5151
        %v5153 = vlaneseq
        %v5154 = vshrl.u32 %v5153, 7
        %v5155 = vsub.s32 %v5152, %v5154
        %v5156 = vrot.slane %v5142, %v5155
        %v5157 = vcombine.low %v5101, %v5117
        %v5158 = vcombine.high %v5101, %v5117
        %v5160 = vunpack.c.l.s4 1934713408
        %v5161 = vunpack.c.0.s8 %v5160
        %v5162 = vlaneseq
        %v5163 = vshrl.u32 %v5162, 7
        %v5164 = vsub.s32 %v5161, %v5163
        %v5165 = vrot.slane %v5157, %v5164
        %v5167 = vunpack.c.l.s4 1934713408
        %v5168 = vunpack.c.0.s8 %v5167
        %v5169 = vlaneseq
        %v5170 = vshrl.u32 %v5169, 7
        %v5171 = vsub.s32 %v5168, %v5170
        %v5172 = vrot.slane %v5158, %v5171
        %v5173 = vcombine.low %v5108, %v5124
        %v5174 = vcombine.high %v5108, %v5124
        %v5176 = vunpack.c.l.s4 1934713408
        %v5177 = vunpack.c.0.s8 %v5176
        %v5178 = vlaneseq
        %v5179 = vshrl.u32 %v5178, 7
        %v5180 = vsub.s32 %v5177, %v5179
        %v5181 = vrot.slane %v5173, %v5180
        %v5183 = vunpack.c.l.s4 1934713408
        %v5184 = vunpack.c.0.s8 %v5183
        %v5185 = vlaneseq
        %v5186 = vshrl.u32 %v5185, 7
        %v5187 = vsub.s32 %v5184, %v5186
        %v5188 = vrot.slane %v5174, %v5187
        %v5189 = vcombine.low %v5133, %v5149
        %v5190 = vcombine.high %v5133, %v5149
        %v5192 = vunpack.c.l.s4 1934713408
        %v5193 = vunpack.c.0.s8 %v5192
        %v5194 = vlaneseq
        %v5195 = vshrl.u32 %v5194, 7
        %v5196 = vsub.s32 %v5193, %v5195
        %v5197 = vrot.slane %v5189, %v5196
        %v5199 = vunpack.c.l.s4 1934713408
        %v5200 = vunpack.c.0.s8 %v5199
        %v5201 = vlaneseq
        %v5202 = vshrl.u32 %v5201, 7
        %v5203 = vsub.s32 %v5200, %v5202
        %v5204 = vrot.slane %v5190, %v5203
        %v5205 = vcombine.low %v5140, %v5156
        %v5206 = vcombine.high %v5140, %v5156
        %v5208 = vunpack.c.l.s4 1934713408
        %v5209 = vunpack.c.0.s8 %v5208
        %v5210 = vlaneseq
        %v5211 = vshrl.u32 %v5210, 7
        %v5212 = vsub.s32 %v5209, %v5211
        %v5213 = vrot.slane %v5205, %v5212
        %v5215 = vunpack.c.l.s4 1934713408
        %v5216 = vunpack.c.0.s8 %v5215
        %v5217 = vlaneseq
        %v5218 = vshrl.u32 %v5217, 7
        %v5219 = vsub.s32 %v5216, %v5218
        %v5220 = vrot.slane %v5206, %v5219
        %v5221 = vcombine.low %v5165, %v5197
        %v5222 = vcombine.high %v5165, %v5197
        %v5223 = vcombine.low %v5172, %v5204
        %v5224 = vcombine.high %v5172, %v5204
        %v5225 = vcombine.low %v5181, %v5213
        %v5226 = vcombine.high %v5181, %v5213
        %v5227 = vcombine.low %v5188, %v5220
        %v5228 = vcombine.high %v5188, %v5220
        %v5229 = vcombine.low %v2421, %v2425
        %v5230 = vcombine.high %v2421, %v2425
        %v5232 = vunpack.c.l.s4 1983009808
        %v5233 = vunpack.c.0.s8 %v5232
        %v5234 = vlaneseq
        %v5235 = vshrl.u32 %v5234, 7
        %v5236 = vsub.s32 %v5233, %v5235
        %v5237 = vrot.slane %v5229, %v5236
        %v5239 = vunpack.c.l.s4 1983009808
        %v5240 = vunpack.c.0.s8 %v5239
        %v5241 = vlaneseq
        %v5242 = vshrl.u32 %v5241, 7
        %v5243 = vsub.s32 %v5240, %v5242
        %v5244 = vrot.slane %v5230, %v5243
        %v5245 = vcombine.low %v2423, %v2427
        %v5246 = vcombine.high %v2423, %v2427
        %v5248 = vunpack.c.l.s4 1983009808
        %v5249 = vunpack.c.0.s8 %v5248
        %v5250 = vlaneseq
        %v5251 = vshrl.u32 %v5250, 7
        %v5252 = vsub.s32 %v5249, %v5251
        %v5253 = vrot.slane %v5245, %v5252
        %v5255 = vunpack.c.l.s4 1983009808
        %v5256 = vunpack.c.0.s8 %v5255
        %v5257 = vlaneseq
        %v5258 = vshrl.u32 %v5257, 7
        %v5259 = vsub.s32 %v5256, %v5258
        %v5260 = vrot.slane %v5246, %v5259
        %v5261 = vcombine.low %v2429, %v2433
        %v5262 = vcombine.high %v2429, %v2433
        %v5264 = vunpack.c.l.s4 1983009808
        %v5265 = vunpack.c.0.s8 %v5264
        %v5266 = vlaneseq
        %v5267 = vshrl.u32 %v5266, 7
        %v5268 = vsub.s32 %v5265, %v5267
        %v5269 = vrot.slane %v5261, %v5268
        %v5271 = vunpack.c.l.s4 1983009808
        %v5272 = vunpack.c.0.s8 %v5271
        %v5273 = vlaneseq
        %v5274 = vshrl.u32 %v5273, 7
        %v5275 = vsub.s32 %v5272, %v5274
        %v5276 = vrot.slane %v5262, %v5275
        %v5277 = vcombine.low %v2431, %v2435
        %v5278 = vcombine.high %v2431, %v2435
        %v5280 = vunpack.c.l.s4 1983009808
        %v5281 = vunpack.c.0.s8 %v5280
        %v5282 = vlaneseq
        %v5283 = vshrl.u32 %v5282, 7
        %v5284 = vsub.s32 %v5281, %v5283
        %v5285 = vrot.slane %v5277, %v5284
        %v5287 = vunpack.c.l.s4 1983009808
        %v5288 = vunpack.c.0.s8 %v5287
        %v5289 = vlaneseq
        %v5290 = vshrl.u32 %v5289, 7
        %v5291 = vsub.s32 %v5288, %v5290
        %v5292 = vrot.slane %v5278, %v5291
        %v5293 = vcombine.low %v5237, %v5253
        %v5294 = vcombine.high %v5237, %v5253
        %v5296 = vunpack.c.l.s4 1934713408
        %v5297 = vunpack.c.0.s8 %v5296
        %v5298 = vlaneseq
        %v5299 = vshrl.u32 %v5298, 7
        %v5300 = vsub.s32 %v5297, %v5299
        %v5301 = vrot.slane %v5293, %v5300
        %v5303 = vunpack.c.l.s4 1934713408
        %v5304 = vunpack.c.0.s8 %v5303
        %v5305 = vlaneseq
        %v5306 = vshrl.u32 %v5305, 7
        %v5307 = vsub.s32 %v5304, %v5306
        %v5308 = vrot.slane %v5294, %v5307
        %v5309 = vcombine.low %v5244, %v5260
        %v5310 = vcombine.high %v5244, %v5260
        %v5312 = vunpack.c.l.s4 1934713408
        %v5313 = vunpack.c.0.s8 %v5312
        %v5314 = vlaneseq
        %v5315 = vshrl.u32 %v5314, 7
        %v5316 = vsub.s32 %v5313, %v5315
        %v5317 = vrot.slane %v5309, %v5316
        %v5319 = vunpack.c.l.s4 1934713408
        %v5320 = vunpack.c.0.s8 %v5319
        %v5321 = vlaneseq
        %v5322 = vshrl.u32 %v5321, 7
        %v5323 = vsub.s32 %v5320, %v5322
        %v5324 = vrot.slane %v5310, %v5323
        %v5325 = vcombine.low %v5269, %v5285
        %v5326 = vcombine.high %v5269, %v5285
        %v5328 = vunpack.c.l.s4 1934713408
        %v5329 = vunpack.c.0.s8 %v5328
        %v5330 = vlaneseq
        %v5331 = vshrl.u32 %v5330, 7
        %v5332 = vsub.s32 %v5329, %v5331
        %v5333 = vrot.slane %v5325, %v5332
        %v5335 = vunpack.c.l.s4 1934713408
        %v5336 = vunpack.c.0.s8 %v5335
        %v5337 = vlaneseq
        %v5338 = vshrl.u32 %v5337, 7
        %v5339 = vsub.s32 %v5336, %v5338
        %v5340 = vrot.slane %v5326, %v5339
        %v5341 = vcombine.low %v5276, %v5292
        %v5342 = vcombine.high %v5276, %v5292
        %v5344 = vunpack.c.l.s4 1934713408
        %v5345 = vunpack.c.0.s8 %v5344
        %v5346 = vlaneseq
        %v5347 = vshrl.u32 %v5346, 7
        %v5348 = vsub.s32 %v5345, %v5347
        %v5349 = vrot.slane %v5341, %v5348
        %v5351 = vunpack.c.l.s4 1934713408
        %v5352 = vunpack.c.0.s8 %v5351
        %v5353 = vlaneseq
        %v5354 = vshrl.u32 %v5353, 7
        %v5355 = vsub.s32 %v5352, %v5354
        %v5356 = vrot.slane %v5342, %v5355
        %v5357 = vcombine.low %v5301, %v5333
        %v5358 = vcombine.high %v5301, %v5333
        %v5359 = vcombine.low %v5308, %v5340
        %v5360 = vcombine.high %v5308, %v5340
        %v5361 = vcombine.low %v5317, %v5349
        %v5362 = vcombine.high %v5317, %v5349
        %v5363 = vcombine.low %v5324, %v5356
        %v5364 = vcombine.high %v5324, %v5356
        %v5365 = vcombine.low %v2406, %v2410
        %v5366 = vcombine.high %v2406, %v2410
        %v5368 = vunpack.c.l.s4 1983009808
        %v5369 = vunpack.c.0.s8 %v5368
        %v5370 = vlaneseq
        %v5371 = vshrl.u32 %v5370, 7
        %v5372 = vsub.s32 %v5369, %v5371
        %v5373 = vrot.slane %v5365, %v5372
        %v5375 = vunpack.c.l.s4 1983009808
        %v5376 = vunpack.c.0.s8 %v5375
        %v5377 = vlaneseq
        %v5378 = vshrl.u32 %v5377, 7
        %v5379 = vsub.s32 %v5376, %v5378
        %v5380 = vrot.slane %v5366, %v5379
        %v5381 = vcombine.low %v2408, %v2412
        %v5382 = vcombine.high %v2408, %v2412
        %v5384 = vunpack.c.l.s4 1983009808
        %v5385 = vunpack.c.0.s8 %v5384
        %v5386 = vlaneseq
        %v5387 = vshrl.u32 %v5386, 7
        %v5388 = vsub.s32 %v5385, %v5387
        %v5389 = vrot.slane %v5381, %v5388
        %v5391 = vunpack.c.l.s4 1983009808
        %v5392 = vunpack.c.0.s8 %v5391
        %v5393 = vlaneseq
        %v5394 = vshrl.u32 %v5393, 7
        %v5395 = vsub.s32 %v5392, %v5394
        %v5396 = vrot.slane %v5382, %v5395
        %v5397 = vcombine.low %v2414, %v2418
        %v5398 = vcombine.high %v2414, %v2418
        %v5400 = vunpack.c.l.s4 1983009808
        %v5401 = vunpack.c.0.s8 %v5400
        %v5402 = vlaneseq
        %v5403 = vshrl.u32 %v5402, 7
        %v5404 = vsub.s32 %v5401, %v5403
        %v5405 = vrot.slane %v5397, %v5404
        %v5407 = vunpack.c.l.s4 1983009808
        %v5408 = vunpack.c.0.s8 %v5407
        %v5409 = vlaneseq
        %v5410 = vshrl.u32 %v5409, 7
        %v5411 = vsub.s32 %v5408, %v5410
        %v5412 = vrot.slane %v5398, %v5411
        %v5413 = vcombine.low %v2416, %v2420
        %v5414 = vcombine.high %v2416, %v2420
        %v5416 = vunpack.c.l.s4 1983009808
        %v5417 = vunpack.c.0.s8 %v5416
        %v5418 = vlaneseq
        %v5419 = vshrl.u32 %v5418, 7
        %v5420 = vsub.s32 %v5417, %v5419
        %v5421 = vrot.slane %v5413, %v5420
        %v5423 = vunpack.c.l.s4 1983009808
        %v5424 = vunpack.c.0.s8 %v5423
        %v5425 = vlaneseq
        %v5426 = vshrl.u32 %v5425, 7
        %v5427 = vsub.s32 %v5424, %v5426
        %v5428 = vrot.slane %v5414, %v5427
        %v5429 = vcombine.low %v5373, %v5389
        %v5430 = vcombine.high %v5373, %v5389
        %v5432 = vunpack.c.l.s4 1934713408
        %v5433 = vunpack.c.0.s8 %v5432
        %v5434 = vlaneseq
        %v5435 = vshrl.u32 %v5434, 7
        %v5436 = vsub.s32 %v5433, %v5435
        %v5437 = vrot.slane %v5429, %v5436
        %v5439 = vunpack.c.l.s4 1934713408
        %v5440 = vunpack.c.0.s8 %v5439
        %v5441 = vlaneseq
        %v5442 = vshrl.u32 %v5441, 7
        %v5443 = vsub.s32 %v5440, %v5442
        %v5444 = vrot.slane %v5430, %v5443
        %v5445 = vcombine.low %v5380, %v5396
        %v5446 = vcombine.high %v5380, %v5396
        %v5448 = vunpack.c.l.s4 1934713408
        %v5449 = vunpack.c.0.s8 %v5448
        %v5450 = vlaneseq
        %v5451 = vshrl.u32 %v5450, 7
        %v5452 = vsub.s32 %v5449, %v5451
        %v5453 = vrot.slane %v5445, %v5452
        %v5455 = vunpack.c.l.s4 1934713408
        %v5456 = vunpack.c.0.s8 %v5455
        %v5457 = vlaneseq
        %v5458 = vshrl.u32 %v5457, 7
        %v5459 = vsub.s32 %v5456, %v5458
        %v5460 = vrot.slane %v5446, %v5459
        %v5461 = vcombine.low %v5405, %v5421
        %v5462 = vcombine.high %v5405, %v5421
        %v5464 = vunpack.c.l.s4 1934713408
        %v5465 = vunpack.c.0.s8 %v5464
        %v5466 = vlaneseq
        %v5467 = vshrl.u32 %v5466, 7
        %v5468 = vsub.s32 %v5465, %v5467
        %v5469 = vrot.slane %v5461, %v5468
        %v5471 = vunpack.c.l.s4 1934713408
        %v5472 = vunpack.c.0.s8 %v5471
        %v5473 = vlaneseq
        %v5474 = vshrl.u32 %v5473, 7
        %v5475 = vsub.s32 %v5472, %v5474
        %v5476 = vrot.slane %v5462, %v5475
        %v5477 = vcombine.low %v5412, %v5428
        %v5478 = vcombine.high %v5412, %v5428
        %v5480 = vunpack.c.l.s4 1934713408
        %v5481 = vunpack.c.0.s8 %v5480
        %v5482 = vlaneseq
        %v5483 = vshrl.u32 %v5482, 7
        %v5484 = vsub.s32 %v5481, %v5483
        %v5485 = vrot.slane %v5477, %v5484
        %v5487 = vunpack.c.l.s4 1934713408
        %v5488 = vunpack.c.0.s8 %v5487
        %v5489 = vlaneseq
        %v5490 = vshrl.u32 %v5489, 7
        %v5491 = vsub.s32 %v5488, %v5490
        %v5492 = vrot.slane %v5478, %v5491
        %v5493 = vcombine.low %v5437, %v5469
        %v5494 = vcombine.high %v5437, %v5469
        %v5495 = vcombine.low %v5444, %v5476
        %v5496 = vcombine.high %v5444, %v5476
        %v5497 = vcombine.low %v5453, %v5485
        %v5498 = vcombine.high %v5453, %v5485
        %v5499 = vcombine.low %v5460, %v5492
        %v5500 = vcombine.high %v5460, %v5492
        %v5501 = vcombine.low %v2422, %v2426
        %v5502 = vcombine.high %v2422, %v2426
        %v5504 = vunpack.c.l.s4 1983009808
        %v5505 = vunpack.c.0.s8 %v5504
        %v5506 = vlaneseq
        %v5507 = vshrl.u32 %v5506, 7
        %v5508 = vsub.s32 %v5505, %v5507
        %v5509 = vrot.slane %v5501, %v5508
        %v5511 = vunpack.c.l.s4 1983009808
        %v5512 = vunpack.c.0.s8 %v5511
        %v5513 = vlaneseq
        %v5514 = vshrl.u32 %v5513, 7
        %v5515 = vsub.s32 %v5512, %v5514
        %v5516 = vrot.slane %v5502, %v5515
        %v5517 = vcombine.low %v2424, %v2428
        %v5518 = vcombine.high %v2424, %v2428
        %v5520 = vunpack.c.l.s4 1983009808
        %v5521 = vunpack.c.0.s8 %v5520
        %v5522 = vlaneseq
        %v5523 = vshrl.u32 %v5522, 7
        %v5524 = vsub.s32 %v5521, %v5523
        %v5525 = vrot.slane %v5517, %v5524
        %v5527 = vunpack.c.l.s4 1983009808
        %v5528 = vunpack.c.0.s8 %v5527
        %v5529 = vlaneseq
        %v5530 = vshrl.u32 %v5529, 7
        %v5531 = vsub.s32 %v5528, %v5530
        %v5532 = vrot.slane %v5518, %v5531
        %v5533 = vcombine.low %v2430, %v2434
        %v5534 = vcombine.high %v2430, %v2434
        %v5536 = vunpack.c.l.s4 1983009808
        %v5537 = vunpack.c.0.s8 %v5536
        %v5538 = vlaneseq
        %v5539 = vshrl.u32 %v5538, 7
        %v5540 = vsub.s32 %v5537, %v5539
        %v5541 = vrot.slane %v5533, %v5540
        %v5543 = vunpack.c.l.s4 1983009808
        %v5544 = vunpack.c.0.s8 %v5543
        %v5545 = vlaneseq
        %v5546 = vshrl.u32 %v5545, 7
        %v5547 = vsub.s32 %v5544, %v5546
        %v5548 = vrot.slane %v5534, %v5547
        %v5549 = vcombine.low %v2432, %v2436
        %v5550 = vcombine.high %v2432, %v2436
        %v5552 = vunpack.c.l.s4 1983009808
        %v5553 = vunpack.c.0.s8 %v5552
        %v5554 = vlaneseq
        %v5555 = vshrl.u32 %v5554, 7
        %v5556 = vsub.s32 %v5553, %v5555
        %v5557 = vrot.slane %v5549, %v5556
        %v5559 = vunpack.c.l.s4 1983009808
        %v5560 = vunpack.c.0.s8 %v5559
        %v5561 = vlaneseq
        %v5562 = vshrl.u32 %v5561, 7
        %v5563 = vsub.s32 %v5560, %v5562
        %v5564 = vrot.slane %v5550, %v5563
        %v5565 = vcombine.low %v5509, %v5525
        %v5566 = vcombine.high %v5509, %v5525
        %v5568 = vunpack.c.l.s4 1934713408
        %v5569 = vunpack.c.0.s8 %v5568
        %v5570 = vlaneseq
        %v5571 = vshrl.u32 %v5570, 7
        %v5572 = vsub.s32 %v5569, %v5571
        %v5573 = vrot.slane %v5565, %v5572
        %v5575 = vunpack.c.l.s4 1934713408
        %v5576 = vunpack.c.0.s8 %v5575
        %v5577 = vlaneseq
        %v5578 = vshrl.u32 %v5577, 7
        %v5579 = vsub.s32 %v5576, %v5578
        %v5580 = vrot.slane %v5566, %v5579
        %v5581 = vcombine.low %v5516, %v5532
        %v5582 = vcombine.high %v5516, %v5532
        %v5584 = vunpack.c.l.s4 1934713408
        %v5585 = vunpack.c.0.s8 %v5584
        %v5586 = vlaneseq
        %v5587 = vshrl.u32 %v5586, 7
        %v5588 = vsub.s32 %v5585, %v5587
        %v5589 = vrot.slane %v5581, %v5588
        %v5591 = vunpack.c.l.s4 1934713408
        %v5592 = vunpack.c.0.s8 %v5591
        %v5593 = vlaneseq
        %v5594 = vshrl.u32 %v5593, 7
        %v5595 = vsub.s32 %v5592, %v5594
        %v5596 = vrot.slane %v5582, %v5595
        %v5597 = vcombine.low %v5541, %v5557
        %v5598 = vcombine.high %v5541, %v5557
        %v5600 = vunpack.c.l.s4 1934713408
        %v5601 = vunpack.c.0.s8 %v5600
        %v5602 = vlaneseq
        %v5603 = vshrl.u32 %v5602, 7
        %v5604 = vsub.s32 %v5601, %v5603
        %v5605 = vrot.slane %v5597, %v5604
        %v5607 = vunpack.c.l.s4 1934713408
        %v5608 = vunpack.c.0.s8 %v5607
        %v5609 = vlaneseq
        %v5610 = vshrl.u32 %v5609, 7
        %v5611 = vsub.s32 %v5608, %v5610
        %v5612 = vrot.slane %v5598, %v5611
        %v5613 = vcombine.low %v5548, %v5564
        %v5614 = vcombine.high %v5548, %v5564
        %v5616 = vunpack.c.l.s4 1934713408
        %v5617 = vunpack.c.0.s8 %v5616
        %v5618 = vlaneseq
        %v5619 = vshrl.u32 %v5618, 7
        %v5620 = vsub.s32 %v5617, %v5619
        %v5621 = vrot.slane %v5613, %v5620
        %v5623 = vunpack.c.l.s4 1934713408
        %v5624 = vunpack.c.0.s8 %v5623
        %v5625 = vlaneseq
        %v5626 = vshrl.u32 %v5625, 7
        %v5627 = vsub.s32 %v5624, %v5626
        %v5628 = vrot.slane %v5614, %v5627
        %v5629 = vcombine.low %v5573, %v5605
        %v5630 = vcombine.high %v5573, %v5605
        %v5631 = vcombine.low %v5580, %v5612
        %v5632 = vcombine.high %v5580, %v5612
        %v5633 = vcombine.low %v5589, %v5621
        %v5634 = vcombine.high %v5589, %v5621
        %v5635 = vcombine.low %v5596, %v5628
        %v5636 = vcombine.high %v5596, %v5628
        %v5637 = vcombine.low %v2437, %v2441
        %v5638 = vcombine.high %v2437, %v2441
        %v5640 = vunpack.c.l.s4 1983009808
        %v5641 = vunpack.c.0.s8 %v5640
        %v5642 = vlaneseq
        %v5643 = vshrl.u32 %v5642, 7
        %v5644 = vsub.s32 %v5641, %v5643
        %v5645 = vrot.slane %v5637, %v5644
        %v5647 = vunpack.c.l.s4 1983009808
        %v5648 = vunpack.c.0.s8 %v5647
        %v5649 = vlaneseq
        %v5650 = vshrl.u32 %v5649, 7
        %v5651 = vsub.s32 %v5648, %v5650
        %v5652 = vrot.slane %v5638, %v5651
        %v5653 = vcombine.low %v2439, %v2443
        %v5654 = vcombine.high %v2439, %v2443
        %v5656 = vunpack.c.l.s4 1983009808
        %v5657 = vunpack.c.0.s8 %v5656
        %v5658 = vlaneseq
        %v5659 = vshrl.u32 %v5658, 7
        %v5660 = vsub.s32 %v5657, %v5659
        %v5661 = vrot.slane %v5653, %v5660
        %v5663 = vunpack.c.l.s4 1983009808
        %v5664 = vunpack.c.0.s8 %v5663
        %v5665 = vlaneseq
        %v5666 = vshrl.u32 %v5665, 7
        %v5667 = vsub.s32 %v5664, %v5666
        %v5668 = vrot.slane %v5654, %v5667
        %v5669 = vcombine.low %v2445, %v2449
        %v5670 = vcombine.high %v2445, %v2449
        %v5672 = vunpack.c.l.s4 1983009808
        %v5673 = vunpack.c.0.s8 %v5672
        %v5674 = vlaneseq
        %v5675 = vshrl.u32 %v5674, 7
        %v5676 = vsub.s32 %v5673, %v5675
        %v5677 = vrot.slane %v5669, %v5676
        %v5679 = vunpack.c.l.s4 1983009808
        %v5680 = vunpack.c.0.s8 %v5679
        %v5681 = vlaneseq
        %v5682 = vshrl.u32 %v5681, 7
        %v5683 = vsub.s32 %v5680, %v5682
        %v5684 = vrot.slane %v5670, %v5683
        %v5685 = vcombine.low %v2447, %v2451
        %v5686 = vcombine.high %v2447, %v2451
        %v5688 = vunpack.c.l.s4 1983009808
        %v5689 = vunpack.c.0.s8 %v5688
        %v5690 = vlaneseq
        %v5691 = vshrl.u32 %v5690, 7
        %v5692 = vsub.s32 %v5689, %v5691
        %v5693 = vrot.slane %v5685, %v5692
        %v5695 = vunpack.c.l.s4 1983009808
        %v5696 = vunpack.c.0.s8 %v5695
        %v5697 = vlaneseq
        %v5698 = vshrl.u32 %v5697, 7
        %v5699 = vsub.s32 %v5696, %v5698
        %v5700 = vrot.slane %v5686, %v5699
        %v5701 = vcombine.low %v5645, %v5661
        %v5702 = vcombine.high %v5645, %v5661
        %v5704 = vunpack.c.l.s4 1934713408
        %v5705 = vunpack.c.0.s8 %v5704
        %v5706 = vlaneseq
        %v5707 = vshrl.u32 %v5706, 7
        %v5708 = vsub.s32 %v5705, %v5707
        %v5709 = vrot.slane %v5701, %v5708
        %v5711 = vunpack.c.l.s4 1934713408
        %v5712 = vunpack.c.0.s8 %v5711
        %v5713 = vlaneseq
        %v5714 = vshrl.u32 %v5713, 7
        %v5715 = vsub.s32 %v5712, %v5714
        %v5716 = vrot.slane %v5702, %v5715
        %v5717 = vcombine.low %v5652, %v5668
        %v5718 = vcombine.high %v5652, %v5668
        %v5720 = vunpack.c.l.s4 1934713408
        %v5721 = vunpack.c.0.s8 %v5720
        %v5722 = vlaneseq
        %v5723 = vshrl.u32 %v5722, 7
        %v5724 = vsub.s32 %v5721, %v5723
        %v5725 = vrot.slane %v5717, %v5724
        %v5727 = vunpack.c.l.s4 1934713408
        %v5728 = vunpack.c.0.s8 %v5727
        %v5729 = vlaneseq
        %v5730 = vshrl.u32 %v5729, 7
        %v5731 = vsub.s32 %v5728, %v5730
        %v5732 = vrot.slane %v5718, %v5731
        %v5733 = vcombine.low %v5677, %v5693
        %v5734 = vcombine.high %v5677, %v5693
        %v5736 = vunpack.c.l.s4 1934713408
        %v5737 = vunpack.c.0.s8 %v5736
        %v5738 = vlaneseq
        %v5739 = vshrl.u32 %v5738, 7
        %v5740 = vsub.s32 %v5737, %v5739
        %v5741 = vrot.slane %v5733, %v5740
        %v5743 = vunpack.c.l.s4 1934713408
        %v5744 = vunpack.c.0.s8 %v5743
        %v5745 = vlaneseq
        %v5746 = vshrl.u32 %v5745, 7
        %v5747 = vsub.s32 %v5744, %v5746
        %v5748 = vrot.slane %v5734, %v5747
        %v5749 = vcombine.low %v5684, %v5700
        %v5750 = vcombine.high %v5684, %v5700
        %v5752 = vunpack.c.l.s4 1934713408
        %v5753 = vunpack.c.0.s8 %v5752
        %v5754 = vlaneseq
        %v5755 = vshrl.u32 %v5754, 7
        %v5756 = vsub.s32 %v5753, %v5755
        %v5757 = vrot.slane %v5749, %v5756
        %v5759 = vunpack.c.l.s4 1934713408
        %v5760 = vunpack.c.0.s8 %v5759
        %v5761 = vlaneseq
        %v5762 = vshrl.u32 %v5761, 7
        %v5763 = vsub.s32 %v5760, %v5762
        %v5764 = vrot.slane %v5750, %v5763
        %v5765 = vcombine.low %v5709, %v5741
        %v5766 = vcombine.high %v5709, %v5741
        %v5767 = vcombine.low %v5716, %v5748
        %v5768 = vcombine.high %v5716, %v5748
        %v5769 = vcombine.low %v5725, %v5757
        %v5770 = vcombine.high %v5725, %v5757
        %v5771 = vcombine.low %v5732, %v5764
        %v5772 = vcombine.high %v5732, %v5764
        %v5773 = vcombine.low %v2453, %v2457
        %v5774 = vcombine.high %v2453, %v2457
        %v5776 = vunpack.c.l.s4 1983009808
        %v5777 = vunpack.c.0.s8 %v5776
        %v5778 = vlaneseq
        %v5779 = vshrl.u32 %v5778, 7
        %v5780 = vsub.s32 %v5777, %v5779
        %v5781 = vrot.slane %v5773, %v5780
        %v5783 = vunpack.c.l.s4 1983009808
        %v5784 = vunpack.c.0.s8 %v5783
        %v5785 = vlaneseq
        %v5786 = vshrl.u32 %v5785, 7
        %v5787 = vsub.s32 %v5784, %v5786
        %v5788 = vrot.slane %v5774, %v5787
        %v5789 = vcombine.low %v2455, %v2459
        %v5790 = vcombine.high %v2455, %v2459
        %v5792 = vunpack.c.l.s4 1983009808
        %v5793 = vunpack.c.0.s8 %v5792
        %v5794 = vlaneseq
        %v5795 = vshrl.u32 %v5794, 7
        %v5796 = vsub.s32 %v5793, %v5795
        %v5797 = vrot.slane %v5789, %v5796
        %v5799 = vunpack.c.l.s4 1983009808
        %v5800 = vunpack.c.0.s8 %v5799
        %v5801 = vlaneseq
        %v5802 = vshrl.u32 %v5801, 7
        %v5803 = vsub.s32 %v5800, %v5802
        %v5804 = vrot.slane %v5790, %v5803
        %v5805 = vcombine.low %v2461, %v2465
        %v5806 = vcombine.high %v2461, %v2465
        %v5808 = vunpack.c.l.s4 1983009808
        %v5809 = vunpack.c.0.s8 %v5808
        %v5810 = vlaneseq
        %v5811 = vshrl.u32 %v5810, 7
        %v5812 = vsub.s32 %v5809, %v5811
        %v5813 = vrot.slane %v5805, %v5812
        %v5815 = vunpack.c.l.s4 1983009808
        %v5816 = vunpack.c.0.s8 %v5815
        %v5817 = vlaneseq
        %v5818 = vshrl.u32 %v5817, 7
        %v5819 = vsub.s32 %v5816, %v5818
        %v5820 = vrot.slane %v5806, %v5819
        %v5821 = vcombine.low %v2463, %v2467
        %v5822 = vcombine.high %v2463, %v2467
        %v5824 = vunpack.c.l.s4 1983009808
        %v5825 = vunpack.c.0.s8 %v5824
        %v5826 = vlaneseq
        %v5827 = vshrl.u32 %v5826, 7
        %v5828 = vsub.s32 %v5825, %v5827
        %v5829 = vrot.slane %v5821, %v5828
        %v5831 = vunpack.c.l.s4 1983009808
        %v5832 = vunpack.c.0.s8 %v5831
        %v5833 = vlaneseq
        %v5834 = vshrl.u32 %v5833, 7
        %v5835 = vsub.s32 %v5832, %v5834
        %v5836 = vrot.slane %v5822, %v5835
        %v5837 = vcombine.low %v5781, %v5797
        %v5838 = vcombine.high %v5781, %v5797
        %v5840 = vunpack.c.l.s4 1934713408
        %v5841 = vunpack.c.0.s8 %v5840
        %v5842 = vlaneseq
        %v5843 = vshrl.u32 %v5842, 7
        %v5844 = vsub.s32 %v5841, %v5843
        %v5845 = vrot.slane %v5837, %v5844
        %v5847 = vunpack.c.l.s4 1934713408
        %v5848 = vunpack.c.0.s8 %v5847
        %v5849 = vlaneseq
        %v5850 = vshrl.u32 %v5849, 7
        %v5851 = vsub.s32 %v5848, %v5850
        %v5852 = vrot.slane %v5838, %v5851
        %v5853 = vcombine.low %v5788, %v5804
        %v5854 = vcombine.high %v5788, %v5804
        %v5856 = vunpack.c.l.s4 1934713408
        %v5857 = vunpack.c.0.s8 %v5856
        %v5858 = vlaneseq
        %v5859 = vshrl.u32 %v5858, 7
        %v5860 = vsub.s32 %v5857, %v5859
        %v5861 = vrot.slane %v5853, %v5860
        %v5863 = vunpack.c.l.s4 1934713408
        %v5864 = vunpack.c.0.s8 %v5863
        %v5865 = vlaneseq
        %v5866 = vshrl.u32 %v5865, 7
        %v5867 = vsub.s32 %v5864, %v5866
        %v5868 = vrot.slane %v5854, %v5867
        %v5869 = vcombine.low %v5813, %v5829
        %v5870 = vcombine.high %v5813, %v5829
        %v5872 = vunpack.c.l.s4 1934713408
        %v5873 = vunpack.c.0.s8 %v5872
        %v5874 = vlaneseq
        %v5875 = vshrl.u32 %v5874, 7
        %v5876 = vsub.s32 %v5873, %v5875
        %v5877 = vrot.slane %v5869, %v5876
        %v5879 = vunpack.c.l.s4 1934713408
        %v5880 = vunpack.c.0.s8 %v5879
        %v5881 = vlaneseq
        %v5882 = vshrl.u32 %v5881, 7
        %v5883 = vsub.s32 %v5880, %v5882
        %v5884 = vrot.slane %v5870, %v5883
        %v5885 = vcombine.low %v5820, %v5836
        %v5886 = vcombine.high %v5820, %v5836
        %v5888 = vunpack.c.l.s4 1934713408
        %v5889 = vunpack.c.0.s8 %v5888
        %v5890 = vlaneseq
        %v5891 = vshrl.u32 %v5890, 7
        %v5892 = vsub.s32 %v5889, %v5891
        %v5893 = vrot.slane %v5885, %v5892
        %v5895 = vunpack.c.l.s4 1934713408
        %v5896 = vunpack.c.0.s8 %v5895
        %v5897 = vlaneseq
        %v5898 = vshrl.u32 %v5897, 7
        %v5899 = vsub.s32 %v5896, %v5898
        %v5900 = vrot.slane %v5886, %v5899
        %v5901 = vcombine.low %v5845, %v5877
        %v5902 = vcombine.high %v5845, %v5877
        %v5903 = vcombine.low %v5852, %v5884
        %v5904 = vcombine.high %v5852, %v5884
        %v5905 = vcombine.low %v5861, %v5893
        %v5906 = vcombine.high %v5861, %v5893
        %v5907 = vcombine.low %v5868, %v5900
        %v5908 = vcombine.high %v5868, %v5900
        %v5909 = vcombine.low %v2438, %v2442
        %v5910 = vcombine.high %v2438, %v2442
        %v5912 = vunpack.c.l.s4 1983009808
        %v5913 = vunpack.c.0.s8 %v5912
        %v5914 = vlaneseq
        %v5915 = vshrl.u32 %v5914, 7
        %v5916 = vsub.s32 %v5913, %v5915
        %v5917 = vrot.slane %v5909, %v5916
        %v5919 = vunpack.c.l.s4 1983009808
        %v5920 = vunpack.c.0.s8 %v5919
        %v5921 = vlaneseq
        %v5922 = vshrl.u32 %v5921, 7
        %v5923 = vsub.s32 %v5920, %v5922
        %v5924 = vrot.slane %v5910, %v5923
        %v5925 = vcombine.low %v2440, %v2444
        %v5926 = vcombine.high %v2440, %v2444
        %v5928 = vunpack.c.l.s4 1983009808
        %v5929 = vunpack.c.0.s8 %v5928
        %v5930 = vlaneseq
        %v5931 = vshrl.u32 %v5930, 7
        %v5932 = vsub.s32 %v5929, %v5931
        %v5933 = vrot.slane %v5925, %v5932
        %v5935 = vunpack.c.l.s4 1983009808
        %v5936 = vunpack.c.0.s8 %v5935
        %v5937 = vlaneseq
        %v5938 = vshrl.u32 %v5937, 7
        %v5939 = vsub.s32 %v5936, %v5938
        %v5940 = vrot.slane %v5926, %v5939
        %v5941 = vcombine.low %v2446, %v2450
        %v5942 = vcombine.high %v2446, %v2450
        %v5944 = vunpack.c.l.s4 1983009808
        %v5945 = vunpack.c.0.s8 %v5944
        %v5946 = vlaneseq
        %v5947 = vshrl.u32 %v5946, 7
        %v5948 = vsub.s32 %v5945, %v5947
        %v5949 = vrot.slane %v5941, %v5948
        %v5951 = vunpack.c.l.s4 1983009808
        %v5952 = vunpack.c.0.s8 %v5951
        %v5953 = vlaneseq
        %v5954 = vshrl.u32 %v5953, 7
        %v5955 = vsub.s32 %v5952, %v5954
        %v5956 = vrot.slane %v5942, %v5955
        %v5957 = vcombine.low %v2448, %v2452
        %v5958 = vcombine.high %v2448, %v2452
        %v5960 = vunpack.c.l.s4 1983009808
        %v5961 = vunpack.c.0.s8 %v5960
        %v5962 = vlaneseq
        %v5963 = vshrl.u32 %v5962, 7
        %v5964 = vsub.s32 %v5961, %v5963
        %v5965 = vrot.slane %v5957, %v5964
        %v5967 = vunpack.c.l.s4 1983009808
        %v5968 = vunpack.c.0.s8 %v5967
        %v5969 = vlaneseq
        %v5970 = vshrl.u32 %v5969, 7
        %v5971 = vsub.s32 %v5968, %v5970
        %v5972 = vrot.slane %v5958, %v5971
        %v5973 = vcombine.low %v5917, %v5933
        %v5974 = vcombine.high %v5917, %v5933
        %v5976 = vunpack.c.l.s4 1934713408
        %v5977 = vunpack.c.0.s8 %v5976
        %v5978 = vlaneseq
        %v5979 = vshrl.u32 %v5978, 7
        %v5980 = vsub.s32 %v5977, %v5979
        %v5981 = vrot.slane %v5973, %v5980
        %v5983 = vunpack.c.l.s4 1934713408
        %v5984 = vunpack.c.0.s8 %v5983
        %v5985 = vlaneseq
        %v5986 = vshrl.u32 %v5985, 7
        %v5987 = vsub.s32 %v5984, %v5986
        %v5988 = vrot.slane %v5974, %v5987
        %v5989 = vcombine.low %v5924, %v5940
        %v5990 = vcombine.high %v5924, %v5940
        %v5992 = vunpack.c.l.s4 1934713408
        %v5993 = vunpack.c.0.s8 %v5992
        %v5994 = vlaneseq
        %v5995 = vshrl.u32 %v5994, 7
        %v5996 = vsub.s32 %v5993, %v5995
        %v5997 = vrot.slane %v5989, %v5996
        %v5999 = vunpack.c.l.s4 1934713408
        %v6000 = vunpack.c.0.s8 %v5999
        %v6001 = vlaneseq
        %v6002 = vshrl.u32 %v6001, 7
        %v6003 = vsub.s32 %v6000, %v6002
        %v6004 = vrot.slane %v5990, %v6003
        %v6005 = vcombine.low %v5949, %v5965
        %v6006 = vcombine.high %v5949, %v5965
        %v6008 = vunpack.c.l.s4 1934713408
        %v6009 = vunpack.c.0.s8 %v6008
        %v6010 = vlaneseq
        %v6011 = vshrl.u32 %v6010, 7
        %v6012 = vsub.s32 %v6009, %v6011
        %v6013 = vrot.slane %v6005, %v6012
        %v6015 = vunpack.c.l.s4 1934713408
        %v6016 = vunpack.c.0.s8 %v6015
        %v6017 = vlaneseq
        %v6018 = vshrl.u32 %v6017, 7
        %v6019 = vsub.s32 %v6016, %v6018
        %v6020 = vrot.slane %v6006, %v6019
        %v6021 = vcombine.low %v5956, %v5972
        %v6022 = vcombine.high %v5956, %v5972
        %v6024 = vunpack.c.l.s4 1934713408
        %v6025 = vunpack.c.0.s8 %v6024
        %v6026 = vlaneseq
        %v6027 = vshrl.u32 %v6026, 7
        %v6028 = vsub.s32 %v6025, %v6027
        %v6029 = vrot.slane %v6021, %v6028
        %v6031 = vunpack.c.l.s4 1934713408
        %v6032 = vunpack.c.0.s8 %v6031
        %v6033 = vlaneseq
        %v6034 = vshrl.u32 %v6033, 7
        %v6035 = vsub.s32 %v6032, %v6034
        %v6036 = vrot.slane %v6022, %v6035
        %v6037 = vcombine.low %v5981, %v6013
        %v6038 = vcombine.high %v5981, %v6013
        %v6039 = vcombine.low %v5988, %v6020
        %v6040 = vcombine.high %v5988, %v6020
        %v6041 = vcombine.low %v5997, %v6029
        %v6042 = vcombine.high %v5997, %v6029
        %v6043 = vcombine.low %v6004, %v6036
        %v6044 = vcombine.high %v6004, %v6036
        %v6045 = vcombine.low %v2454, %v2458
        %v6046 = vcombine.high %v2454, %v2458
        %v6048 = vunpack.c.l.s4 1983009808
        %v6049 = vunpack.c.0.s8 %v6048
        %v6050 = vlaneseq
        %v6051 = vshrl.u32 %v6050, 7
        %v6052 = vsub.s32 %v6049, %v6051
        %v6053 = vrot.slane %v6045, %v6052
        %v6055 = vunpack.c.l.s4 1983009808
        %v6056 = vunpack.c.0.s8 %v6055
        %v6057 = vlaneseq
        %v6058 = vshrl.u32 %v6057, 7
        %v6059 = vsub.s32 %v6056, %v6058
        %v6060 = vrot.slane %v6046, %v6059
        %v6061 = vcombine.low %v2456, %v2460
        %v6062 = vcombine.high %v2456, %v2460
        %v6064 = vunpack.c.l.s4 1983009808
        %v6065 = vunpack.c.0.s8 %v6064
        %v6066 = vlaneseq
        %v6067 = vshrl.u32 %v6066, 7
        %v6068 = vsub.s32 %v6065, %v6067
        %v6069 = vrot.slane %v6061, %v6068
        %v6071 = vunpack.c.l.s4 1983009808
        %v6072 = vunpack.c.0.s8 %v6071
        %v6073 = vlaneseq
        %v6074 = vshrl.u32 %v6073, 7
        %v6075 = vsub.s32 %v6072, %v6074
        %v6076 = vrot.slane %v6062, %v6075
        %v6077 = vcombine.low %v2462, %v2466
        %v6078 = vcombine.high %v2462, %v2466
        %v6080 = vunpack.c.l.s4 1983009808
        %v6081 = vunpack.c.0.s8 %v6080
        %v6082 = vlaneseq
        %v6083 = vshrl.u32 %v6082, 7
        %v6084 = vsub.s32 %v6081, %v6083
        %v6085 = vrot.slane %v6077, %v6084
        %v6087 = vunpack.c.l.s4 1983009808
        %v6088 = vunpack.c.0.s8 %v6087
        %v6089 = vlaneseq
        %v6090 = vshrl.u32 %v6089, 7
        %v6091 = vsub.s32 %v6088, %v6090
        %v6092 = vrot.slane %v6078, %v6091
        %v6093 = vcombine.low %v2464, %v2468
        %v6094 = vcombine.high %v2464, %v2468
        %v6096 = vunpack.c.l.s4 1983009808
        %v6097 = vunpack.c.0.s8 %v6096
        %v6098 = vlaneseq
        %v6099 = vshrl.u32 %v6098, 7
        %v6100 = vsub.s32 %v6097, %v6099
        %v6101 = vrot.slane %v6093, %v6100
        %v6103 = vunpack.c.l.s4 1983009808
        %v6104 = vunpack.c.0.s8 %v6103
        %v6105 = vlaneseq
        %v6106 = vshrl.u32 %v6105, 7
        %v6107 = vsub.s32 %v6104, %v6106
        %v6108 = vrot.slane %v6094, %v6107
        %v6109 = vcombine.low %v6053, %v6069
        %v6110 = vcombine.high %v6053, %v6069
        %v6112 = vunpack.c.l.s4 1934713408
        %v6113 = vunpack.c.0.s8 %v6112
        %v6114 = vlaneseq
        %v6115 = vshrl.u32 %v6114, 7
        %v6116 = vsub.s32 %v6113, %v6115
        %v6117 = vrot.slane %v6109, %v6116
        %v6119 = vunpack.c.l.s4 1934713408
        %v6120 = vunpack.c.0.s8 %v6119
        %v6121 = vlaneseq
        %v6122 = vshrl.u32 %v6121, 7
        %v6123 = vsub.s32 %v6120, %v6122
        %v6124 = vrot.slane %v6110, %v6123
        %v6125 = vcombine.low %v6060, %v6076
        %v6126 = vcombine.high %v6060, %v6076
        %v6128 = vunpack.c.l.s4 1934713408
        %v6129 = vunpack.c.0.s8 %v6128
        %v6130 = vlaneseq
        %v6131 = vshrl.u32 %v6130, 7
        %v6132 = vsub.s32 %v6129, %v6131
        %v6133 = vrot.slane %v6125, %v6132
        %v6135 = vunpack.c.l.s4 1934713408
        %v6136 = vunpack.c.0.s8 %v6135
        %v6137 = vlaneseq
        %v6138 = vshrl.u32 %v6137, 7
        %v6139 = vsub.s32 %v6136, %v6138
        %v6140 = vrot.slane %v6126, %v6139
        %v6141 = vcombine.low %v6085, %v6101
        %v6142 = vcombine.high %v6085, %v6101
        %v6144 = vunpack.c.l.s4 1934713408
        %v6145 = vunpack.c.0.s8 %v6144
        %v6146 = vlaneseq
        %v6147 = vshrl.u32 %v6146, 7
        %v6148 = vsub.s32 %v6145, %v6147
        %v6149 = vrot.slane %v6141, %v6148
        %v6151 = vunpack.c.l.s4 1934713408
        %v6152 = vunpack.c.0.s8 %v6151
        %v6153 = vlaneseq
        %v6154 = vshrl.u32 %v6153, 7
        %v6155 = vsub.s32 %v6152, %v6154
        %v6156 = vrot.slane %v6142, %v6155
        %v6157 = vcombine.low %v6092, %v6108
        %v6158 = vcombine.high %v6092, %v6108
        %v6160 = vunpack.c.l.s4 1934713408
        %v6161 = vunpack.c.0.s8 %v6160
        %v6162 = vlaneseq
        %v6163 = vshrl.u32 %v6162, 7
        %v6164 = vsub.s32 %v6161, %v6163
        %v6165 = vrot.slane %v6157, %v6164
        %v6167 = vunpack.c.l.s4 1934713408
        %v6168 = vunpack.c.0.s8 %v6167
        %v6169 = vlaneseq
        %v6170 = vshrl.u32 %v6169, 7
        %v6171 = vsub.s32 %v6168, %v6170
        %v6172 = vrot.slane %v6158, %v6171
        %v6173 = vcombine.low %v6117, %v6149
        %v6174 = vcombine.high %v6117, %v6149
        %v6175 = vcombine.low %v6124, %v6156
        %v6176 = vcombine.high %v6124, %v6156
        %v6177 = vcombine.low %v6133, %v6165
        %v6178 = vcombine.high %v6133, %v6165
        %v6179 = vcombine.low %v6140, %v6172
        %v6180 = vcombine.high %v6140, %v6172
        %6189 = vrot.lane.b32.xlu0 %v4134, 2
        %v6190 = vpop.permute.xlu0 %6189
        %6191 = vrot.lane.b32.xlu0 %v4270, 2
        %v6192 = vpop.permute.xlu0 %6191
        %6193 = vrot.lane.b32.xlu0 %v4678, 2
        %v6194 = vpop.permute.xlu0 %6193
        %6195 = vrot.lane.b32.xlu0 %v4814, 2
        %v6196 = vpop.permute.xlu0 %6195
        %6197 = vrot.lane.b32.xlu0 %v5222, 2
        %v6198 = vpop.permute.xlu0 %6197
        %6199 = vrot.lane.b32.xlu0 %v5358, 2
        %v6200 = vpop.permute.xlu0 %6199
        %6201 = vrot.lane.b32.xlu0 %v5766, 2
        %v6202 = vpop.permute.xlu0 %6201
        %6203 = vrot.lane.b32.xlu0 %v5902, 2
        %v6204 = vpop.permute.xlu0 %6203
        %6221 = vrot.lane.b32.xlu0 %v4135, 4
        %v6222 = vpop.permute.xlu0 %6221
        %6223 = vrot.lane.b32.xlu0 %v4271, 4
        %v6224 = vpop.permute.xlu0 %6223
        %6225 = vrot.lane.b32.xlu0 %v4679, 4
        %v6226 = vpop.permute.xlu0 %6225
        %6227 = vrot.lane.b32.xlu0 %v4815, 4
        %v6228 = vpop.permute.xlu0 %6227
        %6229 = vrot.lane.b32.xlu0 %v5223, 4
        %v6230 = vpop.permute.xlu0 %6229
        %6231 = vrot.lane.b32.xlu0 %v5359, 4
        %v6232 = vpop.permute.xlu0 %6231
        %6233 = vrot.lane.b32.xlu0 %v5767, 4
        %v6234 = vpop.permute.xlu0 %6233
        %6235 = vrot.lane.b32.xlu0 %v5903, 4
        %v6236 = vpop.permute.xlu0 %6235
        %6253 = vrot.lane.b32.xlu0 %v4136, 6
        %v6254 = vpop.permute.xlu0 %6253
        %6255 = vrot.lane.b32.xlu0 %v4272, 6
        %v6256 = vpop.permute.xlu0 %6255
        %6257 = vrot.lane.b32.xlu0 %v4680, 6
        %v6258 = vpop.permute.xlu0 %6257
        %6259 = vrot.lane.b32.xlu0 %v4816, 6
        %v6260 = vpop.permute.xlu0 %6259
        %6261 = vrot.lane.b32.xlu0 %v5224, 6
        %v6262 = vpop.permute.xlu0 %6261
        %6263 = vrot.lane.b32.xlu0 %v5360, 6
        %v6264 = vpop.permute.xlu0 %6263
        %6265 = vrot.lane.b32.xlu0 %v5768, 6
        %v6266 = vpop.permute.xlu0 %6265
        %6267 = vrot.lane.b32.xlu0 %v5904, 6
        %v6268 = vpop.permute.xlu0 %6267
        %6285 = vrot.lane.b32.xlu0 %v4137, 8
        %v6286 = vpop.permute.xlu0 %6285
        %6287 = vrot.lane.b32.xlu0 %v4273, 8
        %v6288 = vpop.permute.xlu0 %6287
        %6289 = vrot.lane.b32.xlu0 %v4681, 8
        %v6290 = vpop.permute.xlu0 %6289
        %6291 = vrot.lane.b32.xlu0 %v4817, 8
        %v6292 = vpop.permute.xlu0 %6291
        %6293 = vrot.lane.b32.xlu0 %v5225, 8
        %v6294 = vpop.permute.xlu0 %6293
        %6295 = vrot.lane.b32.xlu0 %v5361, 8
        %v6296 = vpop.permute.xlu0 %6295
        %6297 = vrot.lane.b32.xlu0 %v5769, 8
        %v6298 = vpop.permute.xlu0 %6297
        %6299 = vrot.lane.b32.xlu0 %v5905, 8
        %v6300 = vpop.permute.xlu0 %6299
        %6317 = vrot.lane.b32.xlu0 %v4138, 10
        %v6318 = vpop.permute.xlu0 %6317
        %6319 = vrot.lane.b32.xlu0 %v4274, 10
        %v6320 = vpop.permute.xlu0 %6319
        %6321 = vrot.lane.b32.xlu0 %v4682, 10
        %v6322 = vpop.permute.xlu0 %6321
        %6323 = vrot.lane.b32.xlu0 %v4818, 10
        %v6324 = vpop.permute.xlu0 %6323
        %6325 = vrot.lane.b32.xlu0 %v5226, 10
        %v6326 = vpop.permute.xlu0 %6325
        %6327 = vrot.lane.b32.xlu0 %v5362, 10
        %v6328 = vpop.permute.xlu0 %6327
        %6329 = vrot.lane.b32.xlu0 %v5770, 10
        %v6330 = vpop.permute.xlu0 %6329
        %6331 = vrot.lane.b32.xlu0 %v5906, 10
        %v6332 = vpop.permute.xlu0 %6331
        %6349 = vrot.lane.b32.xlu0 %v4139, 12
        %v6350 = vpop.permute.xlu0 %6349
        %6351 = vrot.lane.b32.xlu0 %v4275, 12
        %v6352 = vpop.permute.xlu0 %6351
        %6353 = vrot.lane.b32.xlu0 %v4683, 12
        %v6354 = vpop.permute.xlu0 %6353
        %6355 = vrot.lane.b32.xlu0 %v4819, 12
        %v6356 = vpop.permute.xlu0 %6355
        %6357 = vrot.lane.b32.xlu0 %v5227, 12
        %v6358 = vpop.permute.xlu0 %6357
        %6359 = vrot.lane.b32.xlu0 %v5363, 12
        %v6360 = vpop.permute.xlu0 %6359
        %6361 = vrot.lane.b32.xlu0 %v5771, 12
        %v6362 = vpop.permute.xlu0 %6361
        %6363 = vrot.lane.b32.xlu0 %v5907, 12
        %v6364 = vpop.permute.xlu0 %6363
        %6381 = vrot.lane.b32.xlu0 %v4140, 14
        %v6382 = vpop.permute.xlu0 %6381
        %6383 = vrot.lane.b32.xlu0 %v4276, 14
        %v6384 = vpop.permute.xlu0 %6383
        %6385 = vrot.lane.b32.xlu0 %v4684, 14
        %v6386 = vpop.permute.xlu0 %6385
        %6387 = vrot.lane.b32.xlu0 %v4820, 14
        %v6388 = vpop.permute.xlu0 %6387
        %6389 = vrot.lane.b32.xlu0 %v5228, 14
        %v6390 = vpop.permute.xlu0 %6389
        %6391 = vrot.lane.b32.xlu0 %v5364, 14
        %v6392 = vpop.permute.xlu0 %6391
        %6393 = vrot.lane.b32.xlu0 %v5772, 14
        %v6394 = vpop.permute.xlu0 %6393
        %6395 = vrot.lane.b32.xlu0 %v5908, 14
        %v6396 = vpop.permute.xlu0 %6395
        %6413 = vrot.lane.b32.xlu0 %v4405, 16
        %v6414 = vpop.permute.xlu0 %6413
        %6415 = vrot.lane.b32.xlu0 %v4541, 16
        %v6416 = vpop.permute.xlu0 %6415
        %6417 = vrot.lane.b32.xlu0 %v4949, 16
        %v6418 = vpop.permute.xlu0 %6417
        %6419 = vrot.lane.b32.xlu0 %v5085, 16
        %v6420 = vpop.permute.xlu0 %6419
        %6421 = vrot.lane.b32.xlu0 %v5493, 16
        %v6422 = vpop.permute.xlu0 %6421
        %6423 = vrot.lane.b32.xlu0 %v5629, 16
        %v6424 = vpop.permute.xlu0 %6423
        %6425 = vrot.lane.b32.xlu0 %v6037, 16
        %v6426 = vpop.permute.xlu0 %6425
        %6427 = vrot.lane.b32.xlu0 %v6173, 16
        %v6428 = vpop.permute.xlu0 %6427
        %6445 = vrot.lane.b32.xlu0 %v4406, 18
        %v6446 = vpop.permute.xlu0 %6445
        %6447 = vrot.lane.b32.xlu0 %v4542, 18
        %v6448 = vpop.permute.xlu0 %6447
        %6449 = vrot.lane.b32.xlu0 %v4950, 18
        %v6450 = vpop.permute.xlu0 %6449
        %6451 = vrot.lane.b32.xlu0 %v5086, 18
        %v6452 = vpop.permute.xlu0 %6451
        %6453 = vrot.lane.b32.xlu0 %v5494, 18
        %v6454 = vpop.permute.xlu0 %6453
        %6455 = vrot.lane.b32.xlu0 %v5630, 18
        %v6456 = vpop.permute.xlu0 %6455
        %6457 = vrot.lane.b32.xlu0 %v6038, 18
        %v6458 = vpop.permute.xlu0 %6457
        %6459 = vrot.lane.b32.xlu0 %v6174, 18
        %v6460 = vpop.permute.xlu0 %6459
        %6477 = vrot.lane.b32.xlu0 %v4407, 20
        %v6478 = vpop.permute.xlu0 %6477
        %6479 = vrot.lane.b32.xlu0 %v4543, 20
        %v6480 = vpop.permute.xlu0 %6479
        %6481 = vrot.lane.b32.xlu0 %v4951, 20
        %v6482 = vpop.permute.xlu0 %6481
        %6483 = vrot.lane.b32.xlu0 %v5087, 20
        %v6484 = vpop.permute.xlu0 %6483
        %6485 = vrot.lane.b32.xlu0 %v5495, 20
        %v6486 = vpop.permute.xlu0 %6485
        %6487 = vrot.lane.b32.xlu0 %v5631, 20
        %v6488 = vpop.permute.xlu0 %6487
        %6489 = vrot.lane.b32.xlu0 %v6039, 20
        %v6490 = vpop.permute.xlu0 %6489
        %6491 = vrot.lane.b32.xlu0 %v6175, 20
        %v6492 = vpop.permute.xlu0 %6491
        %6509 = vrot.lane.b32.xlu0 %v4408, 22
        %v6510 = vpop.permute.xlu0 %6509
        %6511 = vrot.lane.b32.xlu0 %v4544, 22
        %v6512 = vpop.permute.xlu0 %6511
        %6513 = vrot.lane.b32.xlu0 %v4952, 22
        %v6514 = vpop.permute.xlu0 %6513
        %6515 = vrot.lane.b32.xlu0 %v5088, 22
        %v6516 = vpop.permute.xlu0 %6515
        %6517 = vrot.lane.b32.xlu0 %v5496, 22
        %v6518 = vpop.permute.xlu0 %6517
        %6519 = vrot.lane.b32.xlu0 %v5632, 22
        %v6520 = vpop.permute.xlu0 %6519
        %6521 = vrot.lane.b32.xlu0 %v6040, 22
        %v6522 = vpop.permute.xlu0 %6521
        %6523 = vrot.lane.b32.xlu0 %v6176, 22
        %v6524 = vpop.permute.xlu0 %6523
        %6541 = vrot.lane.b32.xlu0 %v4409, 24
        %v6542 = vpop.permute.xlu0 %6541
        %6543 = vrot.lane.b32.xlu0 %v4545, 24
        %v6544 = vpop.permute.xlu0 %6543
        %6545 = vrot.lane.b32.xlu0 %v4953, 24
        %v6546 = vpop.permute.xlu0 %6545
        %6547 = vrot.lane.b32.xlu0 %v5089, 24
        %v6548 = vpop.permute.xlu0 %6547
        %6549 = vrot.lane.b32.xlu0 %v5497, 24
        %v6550 = vpop.permute.xlu0 %6549
        %6551 = vrot.lane.b32.xlu0 %v5633, 24
        %v6552 = vpop.permute.xlu0 %6551
        %6553 = vrot.lane.b32.xlu0 %v6041, 24
        %v6554 = vpop.permute.xlu0 %6553
        %6555 = vrot.lane.b32.xlu0 %v6177, 24
        %v6556 = vpop.permute.xlu0 %6555
        %6573 = vrot.lane.b32.xlu0 %v4410, 26
        %v6574 = vpop.permute.xlu0 %6573
        %6575 = vrot.lane.b32.xlu0 %v4546, 26
        %v6576 = vpop.permute.xlu0 %6575
        %6577 = vrot.lane.b32.xlu0 %v4954, 26
        %v6578 = vpop.permute.xlu0 %6577
        %6579 = vrot.lane.b32.xlu0 %v5090, 26
        %v6580 = vpop.permute.xlu0 %6579
        %6581 = vrot.lane.b32.xlu0 %v5498, 26
        %v6582 = vpop.permute.xlu0 %6581
        %6583 = vrot.lane.b32.xlu0 %v5634, 26
        %v6584 = vpop.permute.xlu0 %6583
        %6585 = vrot.lane.b32.xlu0 %v6042, 26
        %v6586 = vpop.permute.xlu0 %6585
        %6587 = vrot.lane.b32.xlu0 %v6178, 26
        %v6588 = vpop.permute.xlu0 %6587
        %6605 = vrot.lane.b32.xlu0 %v4411, 28
        %v6606 = vpop.permute.xlu0 %6605
        %6607 = vrot.lane.b32.xlu0 %v4547, 28
        %v6608 = vpop.permute.xlu0 %6607
        %6609 = vrot.lane.b32.xlu0 %v4955, 28
        %v6610 = vpop.permute.xlu0 %6609
        %6611 = vrot.lane.b32.xlu0 %v5091, 28
        %v6612 = vpop.permute.xlu0 %6611
        %6613 = vrot.lane.b32.xlu0 %v5499, 28
        %v6614 = vpop.permute.xlu0 %6613
        %6615 = vrot.lane.b32.xlu0 %v5635, 28
        %v6616 = vpop.permute.xlu0 %6615
        %6617 = vrot.lane.b32.xlu0 %v6043, 28
        %v6618 = vpop.permute.xlu0 %6617
        %6619 = vrot.lane.b32.xlu0 %v6179, 28
        %v6620 = vpop.permute.xlu0 %6619
        %6637 = vrot.lane.b32.xlu0 %v4412, 30
        %v6638 = vpop.permute.xlu0 %6637
        %6639 = vrot.lane.b32.xlu0 %v4548, 30
        %v6640 = vpop.permute.xlu0 %6639
        %6641 = vrot.lane.b32.xlu0 %v4956, 30
        %v6642 = vpop.permute.xlu0 %6641
        %6643 = vrot.lane.b32.xlu0 %v5092, 30
        %v6644 = vpop.permute.xlu0 %6643
        %6645 = vrot.lane.b32.xlu0 %v5500, 30
        %v6646 = vpop.permute.xlu0 %6645
        %6647 = vrot.lane.b32.xlu0 %v5636, 30
        %v6648 = vpop.permute.xlu0 %6647
        %6649 = vrot.lane.b32.xlu0 %v6044, 30
        %v6650 = vpop.permute.xlu0 %6649
        %6651 = vrot.lane.b32.xlu0 %v6180, 30
        %v6652 = vpop.permute.xlu0 %6651
        %vm6661 = vcmask 15360
        %v6662 = vsel %vm6661, %v4133, %v6190
        %v6663 = vsel %vm6661, %v4269, %v6192
        %v6664 = vsel %vm6661, %v4677, %v6194
        %v6665 = vsel %vm6661, %v4813, %v6196
        %v6666 = vsel %vm6661, %v5221, %v6198
        %v6667 = vsel %vm6661, %v5357, %v6200
        %v6668 = vsel %vm6661, %v5765, %v6202
        %v6669 = vsel %vm6661, %v5901, %v6204
        %vm6670 = vcmask 31744
        %v6671 = vsel %vm6670, %v6662, %v6222
        %v6672 = vsel %vm6670, %v6663, %v6224
        %v6673 = vsel %vm6670, %v6664, %v6226
        %v6674 = vsel %vm6670, %v6665, %v6228
        %v6675 = vsel %vm6670, %v6666, %v6230
        %v6676 = vsel %vm6670, %v6667, %v6232
        %v6677 = vsel %vm6670, %v6668, %v6234
        %v6678 = vsel %vm6670, %v6669, %v6236
        %vm6679 = vcmask 48128
        %v6680 = vsel %vm6679, %v6671, %v6254
        %v6681 = vsel %vm6679, %v6672, %v6256
        %v6682 = vsel %vm6679, %v6673, %v6258
        %v6683 = vsel %vm6679, %v6674, %v6260
        %v6684 = vsel %vm6679, %v6675, %v6262
        %v6685 = vsel %vm6679, %v6676, %v6264
        %v6686 = vsel %vm6679, %v6677, %v6266
        %v6687 = vsel %vm6679, %v6678, %v6268
        %v6688 = vsel %vm216, %v6680, %v6286
        %v6689 = vsel %vm216, %v6681, %v6288
        %v6690 = vsel %vm216, %v6682, %v6290
        %v6691 = vsel %vm216, %v6683, %v6292
        %v6692 = vsel %vm216, %v6684, %v6294
        %v6693 = vsel %vm216, %v6685, %v6296
        %v6694 = vsel %vm216, %v6686, %v6298
        %v6695 = vsel %vm216, %v6687, %v6300
        %vm6696 = vcmask 80896
        %v6697 = vsel %vm6696, %v6688, %v6318
        %v6698 = vsel %vm6696, %v6689, %v6320
        %v6699 = vsel %vm6696, %v6690, %v6322
        %v6700 = vsel %vm6696, %v6691, %v6324
        %v6701 = vsel %vm6696, %v6692, %v6326
        %v6702 = vsel %vm6696, %v6693, %v6328
        %v6703 = vsel %vm6696, %v6694, %v6330
        %v6704 = vsel %vm6696, %v6695, %v6332
        %vm6705 = vcmask 97280
        %v6706 = vsel %vm6705, %v6697, %v6350
        %v6707 = vsel %vm6705, %v6698, %v6352
        %v6708 = vsel %vm6705, %v6699, %v6354
        %v6709 = vsel %vm6705, %v6700, %v6356
        %v6710 = vsel %vm6705, %v6701, %v6358
        %v6711 = vsel %vm6705, %v6702, %v6360
        %v6712 = vsel %vm6705, %v6703, %v6362
        %v6713 = vsel %vm6705, %v6704, %v6364
        %vm6714 = vcmask 113664
        %v6715 = vsel %vm6714, %v6706, %v6382
        %v6716 = vsel %vm6714, %v6707, %v6384
        %v6717 = vsel %vm6714, %v6708, %v6386
        %v6718 = vsel %vm6714, %v6709, %v6388
        %v6719 = vsel %vm6714, %v6710, %v6390
        %v6720 = vsel %vm6714, %v6711, %v6392
        %v6721 = vsel %vm6714, %v6712, %v6394
        %v6722 = vsel %vm6714, %v6713, %v6396
        %vm6723 = vcmask 130048
        %v6724 = vsel %vm6723, %v6715, %v6414
        %v6725 = vsel %vm6723, %v6716, %v6416
        %v6726 = vsel %vm6723, %v6717, %v6418
        %v6727 = vsel %vm6723, %v6718, %v6420
        %v6728 = vsel %vm6723, %v6719, %v6422
        %v6729 = vsel %vm6723, %v6720, %v6424
        %v6730 = vsel %vm6723, %v6721, %v6426
        %v6731 = vsel %vm6723, %v6722, %v6428
        %vm6732 = vcmask 146432
        %v6733 = vsel %vm6732, %v6724, %v6446
        %v6734 = vsel %vm6732, %v6725, %v6448
        %v6735 = vsel %vm6732, %v6726, %v6450
        %v6736 = vsel %vm6732, %v6727, %v6452
        %v6737 = vsel %vm6732, %v6728, %v6454
        %v6738 = vsel %vm6732, %v6729, %v6456
        %v6739 = vsel %vm6732, %v6730, %v6458
        %v6740 = vsel %vm6732, %v6731, %v6460
        %vm6741 = vcmask 162816
        %v6742 = vsel %vm6741, %v6733, %v6478
        %v6743 = vsel %vm6741, %v6734, %v6480
        %v6744 = vsel %vm6741, %v6735, %v6482
        %v6745 = vsel %vm6741, %v6736, %v6484
        %v6746 = vsel %vm6741, %v6737, %v6486
        %v6747 = vsel %vm6741, %v6738, %v6488
        %v6748 = vsel %vm6741, %v6739, %v6490
        %v6749 = vsel %vm6741, %v6740, %v6492
        %vm6750 = vcmask 179200
        %v6751 = vsel %vm6750, %v6742, %v6510
        %v6752 = vsel %vm6750, %v6743, %v6512
        %v6753 = vsel %vm6750, %v6744, %v6514
        %v6754 = vsel %vm6750, %v6745, %v6516
        %v6755 = vsel %vm6750, %v6746, %v6518
        %v6756 = vsel %vm6750, %v6747, %v6520
        %v6757 = vsel %vm6750, %v6748, %v6522
        %v6758 = vsel %vm6750, %v6749, %v6524
        %vm6759 = vcmask 195584
        %v6760 = vsel %vm6759, %v6751, %v6542
        %v6761 = vsel %vm6759, %v6752, %v6544
        %v6762 = vsel %vm6759, %v6753, %v6546
        %v6763 = vsel %vm6759, %v6754, %v6548
        %v6764 = vsel %vm6759, %v6755, %v6550
        %v6765 = vsel %vm6759, %v6756, %v6552
        %v6766 = vsel %vm6759, %v6757, %v6554
        %v6767 = vsel %vm6759, %v6758, %v6556
        %vm6768 = vcmask 211968
        %v6769 = vsel %vm6768, %v6760, %v6574
        %v6770 = vsel %vm6768, %v6761, %v6576
        %v6771 = vsel %vm6768, %v6762, %v6578
        %v6772 = vsel %vm6768, %v6763, %v6580
        %v6773 = vsel %vm6768, %v6764, %v6582
        %v6774 = vsel %vm6768, %v6765, %v6584
        %v6775 = vsel %vm6768, %v6766, %v6586
        %v6776 = vsel %vm6768, %v6767, %v6588
        %vm6777 = vcmask 228352
        %v6778 = vsel %vm6777, %v6769, %v6606
        %v6779 = vsel %vm6777, %v6770, %v6608
        %v6780 = vsel %vm6777, %v6771, %v6610
        %v6781 = vsel %vm6777, %v6772, %v6612
        %v6782 = vsel %vm6777, %v6773, %v6614
        %v6783 = vsel %vm6777, %v6774, %v6616
        %v6784 = vsel %vm6777, %v6775, %v6618
        %v6785 = vsel %vm6777, %v6776, %v6620
        %vm6786 = vcmask 244736
        %v6787 = vsel %vm6786, %v6778, %v6638
        %v6788 = vsel %vm6786, %v6779, %v6640
        %v6789 = vsel %vm6786, %v6780, %v6642
        %v6790 = vsel %vm6786, %v6781, %v6644
        %v6791 = vsel %vm6786, %v6782, %v6646
        %v6792 = vsel %vm6786, %v6783, %v6648
        %v6793 = vsel %vm6786, %v6784, %v6650
        %v6794 = vsel %vm6786, %v6785, %v6652
        %vm6795 = vcmask 261120
        %6796 = vst.msk [vmem:[%s188] sm:$0xff] %vm6795, %v6787
        %6797 = vst.msk [vmem:[%s188 + $0x8] sm:$0xff] %vm6795, %v6788
        %6798 = vst.msk [vmem:[%s188 + $0x10] sm:$0xff] %vm6795, %v6789
        %6799 = vst.msk [vmem:[%s188 + $0x18] sm:$0xff] %vm6795, %v6790
        %6800 = vst.msk [vmem:[%s188 + $0x20] sm:$0xff] %vm6795, %v6791
        %6801 = vst.msk [vmem:[%s188 + $0x28] sm:$0xff] %vm6795, %v6792
        %6802 = vst.msk [vmem:[%s188 + $0x30] sm:$0xff] %vm6795, %v6793
        %6803 = vst.msk [vmem:[%s188 + $0x38] sm:$0xff] %vm6795, %v6794
        %v6804 = vcombine.low %v3877, %v3881
        %v6805 = vcombine.high %v3877, %v3881
        %v6807 = vunpack.c.l.s4 1983009808
        %v6808 = vunpack.c.0.s8 %v6807
        %v6809 = vlaneseq
        %v6810 = vshrl.u32 %v6809, 7
        %v6811 = vsub.s32 %v6808, %v6810
        %v6812 = vrot.slane %v6804, %v6811
        %v6814 = vunpack.c.l.s4 1983009808
        %v6815 = vunpack.c.0.s8 %v6814
        %v6816 = vlaneseq
        %v6817 = vshrl.u32 %v6816, 7
        %v6818 = vsub.s32 %v6815, %v6817
        %v6819 = vrot.slane %v6805, %v6818
        %v6820 = vcombine.low %v3879, %v3883
        %v6821 = vcombine.high %v3879, %v3883
        %v6823 = vunpack.c.l.s4 1983009808
        %v6824 = vunpack.c.0.s8 %v6823
        %v6825 = vlaneseq
        %v6826 = vshrl.u32 %v6825, 7
        %v6827 = vsub.s32 %v6824, %v6826
        %v6828 = vrot.slane %v6820, %v6827
        %v6830 = vunpack.c.l.s4 1983009808
        %v6831 = vunpack.c.0.s8 %v6830
        %v6832 = vlaneseq
        %v6833 = vshrl.u32 %v6832, 7
        %v6834 = vsub.s32 %v6831, %v6833
        %v6835 = vrot.slane %v6821, %v6834
        %v6836 = vcombine.low %v3885, %v3889
        %v6837 = vcombine.high %v3885, %v3889
        %v6839 = vunpack.c.l.s4 1983009808
        %v6840 = vunpack.c.0.s8 %v6839
        %v6841 = vlaneseq
        %v6842 = vshrl.u32 %v6841, 7
        %v6843 = vsub.s32 %v6840, %v6842
        %v6844 = vrot.slane %v6836, %v6843
        %v6846 = vunpack.c.l.s4 1983009808
        %v6847 = vunpack.c.0.s8 %v6846
        %v6848 = vlaneseq
        %v6849 = vshrl.u32 %v6848, 7
        %v6850 = vsub.s32 %v6847, %v6849
        %v6851 = vrot.slane %v6837, %v6850
        %v6852 = vcombine.low %v3887, %v3891
        %v6853 = vcombine.high %v3887, %v3891
        %v6855 = vunpack.c.l.s4 1983009808
        %v6856 = vunpack.c.0.s8 %v6855
        %v6857 = vlaneseq
        %v6858 = vshrl.u32 %v6857, 7
        %v6859 = vsub.s32 %v6856, %v6858
        %v6860 = vrot.slane %v6852, %v6859
        %v6862 = vunpack.c.l.s4 1983009808
        %v6863 = vunpack.c.0.s8 %v6862
        %v6864 = vlaneseq
        %v6865 = vshrl.u32 %v6864, 7
        %v6866 = vsub.s32 %v6863, %v6865
        %v6867 = vrot.slane %v6853, %v6866
        %v6868 = vcombine.low %v6812, %v6828
        %v6869 = vcombine.high %v6812, %v6828
        %v6871 = vunpack.c.l.s4 1934713408
        %v6872 = vunpack.c.0.s8 %v6871
        %v6873 = vlaneseq
        %v6874 = vshrl.u32 %v6873, 7
        %v6875 = vsub.s32 %v6872, %v6874
        %v6876 = vrot.slane %v6868, %v6875
        %v6878 = vunpack.c.l.s4 1934713408
        %v6879 = vunpack.c.0.s8 %v6878
        %v6880 = vlaneseq
        %v6881 = vshrl.u32 %v6880, 7
        %v6882 = vsub.s32 %v6879, %v6881
        %v6883 = vrot.slane %v6869, %v6882
        %v6884 = vcombine.low %v6819, %v6835
        %v6885 = vcombine.high %v6819, %v6835
        %v6887 = vunpack.c.l.s4 1934713408
        %v6888 = vunpack.c.0.s8 %v6887
        %v6889 = vlaneseq
        %v6890 = vshrl.u32 %v6889, 7
        %v6891 = vsub.s32 %v6888, %v6890
        %v6892 = vrot.slane %v6884, %v6891
        %v6894 = vunpack.c.l.s4 1934713408
        %v6895 = vunpack.c.0.s8 %v6894
        %v6896 = vlaneseq
        %v6897 = vshrl.u32 %v6896, 7
        %v6898 = vsub.s32 %v6895, %v6897
        %v6899 = vrot.slane %v6885, %v6898
        %v6900 = vcombine.low %v6844, %v6860
        %v6901 = vcombine.high %v6844, %v6860
        %v6903 = vunpack.c.l.s4 1934713408
        %v6904 = vunpack.c.0.s8 %v6903
        %v6905 = vlaneseq
        %v6906 = vshrl.u32 %v6905, 7
        %v6907 = vsub.s32 %v6904, %v6906
        %v6908 = vrot.slane %v6900, %v6907
        %v6910 = vunpack.c.l.s4 1934713408
        %v6911 = vunpack.c.0.s8 %v6910
        %v6912 = vlaneseq
        %v6913 = vshrl.u32 %v6912, 7
        %v6914 = vsub.s32 %v6911, %v6913
        %v6915 = vrot.slane %v6901, %v6914
        %v6916 = vcombine.low %v6851, %v6867
        %v6917 = vcombine.high %v6851, %v6867
        %v6919 = vunpack.c.l.s4 1934713408
        %v6920 = vunpack.c.0.s8 %v6919
        %v6921 = vlaneseq
        %v6922 = vshrl.u32 %v6921, 7
        %v6923 = vsub.s32 %v6920, %v6922
        %v6924 = vrot.slane %v6916, %v6923
        %v6926 = vunpack.c.l.s4 1934713408
        %v6927 = vunpack.c.0.s8 %v6926
        %v6928 = vlaneseq
        %v6929 = vshrl.u32 %v6928, 7
        %v6930 = vsub.s32 %v6927, %v6929
        %v6931 = vrot.slane %v6917, %v6930
        %v6932 = vcombine.low %v6876, %v6908
        %v6933 = vcombine.high %v6876, %v6908
        %v6934 = vcombine.low %v6883, %v6915
        %v6935 = vcombine.high %v6883, %v6915
        %v6936 = vcombine.low %v6892, %v6924
        %v6937 = vcombine.high %v6892, %v6924
        %v6938 = vcombine.low %v6899, %v6931
        %v6939 = vcombine.high %v6899, %v6931
        %v6940 = vcombine.low %v3893, %v3897
        %v6941 = vcombine.high %v3893, %v3897
        %v6943 = vunpack.c.l.s4 1983009808
        %v6944 = vunpack.c.0.s8 %v6943
        %v6945 = vlaneseq
        %v6946 = vshrl.u32 %v6945, 7
        %v6947 = vsub.s32 %v6944, %v6946
        %v6948 = vrot.slane %v6940, %v6947
        %v6950 = vunpack.c.l.s4 1983009808
        %v6951 = vunpack.c.0.s8 %v6950
        %v6952 = vlaneseq
        %v6953 = vshrl.u32 %v6952, 7
        %v6954 = vsub.s32 %v6951, %v6953
        %v6955 = vrot.slane %v6941, %v6954
        %v6956 = vcombine.low %v3895, %v3899
        %v6957 = vcombine.high %v3895, %v3899
        %v6959 = vunpack.c.l.s4 1983009808
        %v6960 = vunpack.c.0.s8 %v6959
        %v6961 = vlaneseq
        %v6962 = vshrl.u32 %v6961, 7
        %v6963 = vsub.s32 %v6960, %v6962
        %v6964 = vrot.slane %v6956, %v6963
        %v6966 = vunpack.c.l.s4 1983009808
        %v6967 = vunpack.c.0.s8 %v6966
        %v6968 = vlaneseq
        %v6969 = vshrl.u32 %v6968, 7
        %v6970 = vsub.s32 %v6967, %v6969
        %v6971 = vrot.slane %v6957, %v6970
        %v6972 = vcombine.low %v3901, %v3905
        %v6973 = vcombine.high %v3901, %v3905
        %v6975 = vunpack.c.l.s4 1983009808
        %v6976 = vunpack.c.0.s8 %v6975
        %v6977 = vlaneseq
        %v6978 = vshrl.u32 %v6977, 7
        %v6979 = vsub.s32 %v6976, %v6978
        %v6980 = vrot.slane %v6972, %v6979
        %v6982 = vunpack.c.l.s4 1983009808
        %v6983 = vunpack.c.0.s8 %v6982
        %v6984 = vlaneseq
        %v6985 = vshrl.u32 %v6984, 7
        %v6986 = vsub.s32 %v6983, %v6985
        %v6987 = vrot.slane %v6973, %v6986
        %v6988 = vcombine.low %v3903, %v3907
        %v6989 = vcombine.high %v3903, %v3907
        %v6991 = vunpack.c.l.s4 1983009808
        %v6992 = vunpack.c.0.s8 %v6991
        %v6993 = vlaneseq
        %v6994 = vshrl.u32 %v6993, 7
        %v6995 = vsub.s32 %v6992, %v6994
        %v6996 = vrot.slane %v6988, %v6995
        %v6998 = vunpack.c.l.s4 1983009808
        %v6999 = vunpack.c.0.s8 %v6998
        %v7000 = vlaneseq
        %v7001 = vshrl.u32 %v7000, 7
        %v7002 = vsub.s32 %v6999, %v7001
        %v7003 = vrot.slane %v6989, %v7002
        %v7004 = vcombine.low %v6948, %v6964
        %v7005 = vcombine.high %v6948, %v6964
        %v7007 = vunpack.c.l.s4 1934713408
        %v7008 = vunpack.c.0.s8 %v7007
        %v7009 = vlaneseq
        %v7010 = vshrl.u32 %v7009, 7
        %v7011 = vsub.s32 %v7008, %v7010
        %v7012 = vrot.slane %v7004, %v7011
        %v7014 = vunpack.c.l.s4 1934713408
        %v7015 = vunpack.c.0.s8 %v7014
        %v7016 = vlaneseq
        %v7017 = vshrl.u32 %v7016, 7
        %v7018 = vsub.s32 %v7015, %v7017
        %v7019 = vrot.slane %v7005, %v7018
        %v7020 = vcombine.low %v6955, %v6971
        %v7021 = vcombine.high %v6955, %v6971
        %v7023 = vunpack.c.l.s4 1934713408
        %v7024 = vunpack.c.0.s8 %v7023
        %v7025 = vlaneseq
        %v7026 = vshrl.u32 %v7025, 7
        %v7027 = vsub.s32 %v7024, %v7026
        %v7028 = vrot.slane %v7020, %v7027
        %v7030 = vunpack.c.l.s4 1934713408
        %v7031 = vunpack.c.0.s8 %v7030
        %v7032 = vlaneseq
        %v7033 = vshrl.u32 %v7032, 7
        %v7034 = vsub.s32 %v7031, %v7033
        %v7035 = vrot.slane %v7021, %v7034
        %v7036 = vcombine.low %v6980, %v6996
        %v7037 = vcombine.high %v6980, %v6996
        %v7039 = vunpack.c.l.s4 1934713408
        %v7040 = vunpack.c.0.s8 %v7039
        %v7041 = vlaneseq
        %v7042 = vshrl.u32 %v7041, 7
        %v7043 = vsub.s32 %v7040, %v7042
        %v7044 = vrot.slane %v7036, %v7043
        %v7046 = vunpack.c.l.s4 1934713408
        %v7047 = vunpack.c.0.s8 %v7046
        %v7048 = vlaneseq
        %v7049 = vshrl.u32 %v7048, 7
        %v7050 = vsub.s32 %v7047, %v7049
        %v7051 = vrot.slane %v7037, %v7050
        %v7052 = vcombine.low %v6987, %v7003
        %v7053 = vcombine.high %v6987, %v7003
        %v7055 = vunpack.c.l.s4 1934713408
        %v7056 = vunpack.c.0.s8 %v7055
        %v7057 = vlaneseq
        %v7058 = vshrl.u32 %v7057, 7
        %v7059 = vsub.s32 %v7056, %v7058
        %v7060 = vrot.slane %v7052, %v7059
        %v7062 = vunpack.c.l.s4 1934713408
        %v7063 = vunpack.c.0.s8 %v7062
        %v7064 = vlaneseq
        %v7065 = vshrl.u32 %v7064, 7
        %v7066 = vsub.s32 %v7063, %v7065
        %v7067 = vrot.slane %v7053, %v7066
        %v7068 = vcombine.low %v7012, %v7044
        %v7069 = vcombine.high %v7012, %v7044
        %v7070 = vcombine.low %v7019, %v7051
        %v7071 = vcombine.high %v7019, %v7051
        %v7072 = vcombine.low %v7028, %v7060
        %v7073 = vcombine.high %v7028, %v7060
        %v7074 = vcombine.low %v7035, %v7067
        %v7075 = vcombine.high %v7035, %v7067
        %v7076 = vcombine.low %v3878, %v3882
        %v7077 = vcombine.high %v3878, %v3882
        %v7079 = vunpack.c.l.s4 1983009808
        %v7080 = vunpack.c.0.s8 %v7079
        %v7081 = vlaneseq
        %v7082 = vshrl.u32 %v7081, 7
        %v7083 = vsub.s32 %v7080, %v7082
        %v7084 = vrot.slane %v7076, %v7083
        %v7086 = vunpack.c.l.s4 1983009808
        %v7087 = vunpack.c.0.s8 %v7086
        %v7088 = vlaneseq
        %v7089 = vshrl.u32 %v7088, 7
        %v7090 = vsub.s32 %v7087, %v7089
        %v7091 = vrot.slane %v7077, %v7090
        %v7092 = vcombine.low %v3880, %v3884
        %v7093 = vcombine.high %v3880, %v3884
        %v7095 = vunpack.c.l.s4 1983009808
        %v7096 = vunpack.c.0.s8 %v7095
        %v7097 = vlaneseq
        %v7098 = vshrl.u32 %v7097, 7
        %v7099 = vsub.s32 %v7096, %v7098
        %v7100 = vrot.slane %v7092, %v7099
        %v7102 = vunpack.c.l.s4 1983009808
        %v7103 = vunpack.c.0.s8 %v7102
        %v7104 = vlaneseq
        %v7105 = vshrl.u32 %v7104, 7
        %v7106 = vsub.s32 %v7103, %v7105
        %v7107 = vrot.slane %v7093, %v7106
        %v7108 = vcombine.low %v3886, %v3890
        %v7109 = vcombine.high %v3886, %v3890
        %v7111 = vunpack.c.l.s4 1983009808
        %v7112 = vunpack.c.0.s8 %v7111
        %v7113 = vlaneseq
        %v7114 = vshrl.u32 %v7113, 7
        %v7115 = vsub.s32 %v7112, %v7114
        %v7116 = vrot.slane %v7108, %v7115
        %v7118 = vunpack.c.l.s4 1983009808
        %v7119 = vunpack.c.0.s8 %v7118
        %v7120 = vlaneseq
        %v7121 = vshrl.u32 %v7120, 7
        %v7122 = vsub.s32 %v7119, %v7121
        %v7123 = vrot.slane %v7109, %v7122
        %v7124 = vcombine.low %v3888, %v3892
        %v7125 = vcombine.high %v3888, %v3892
        %v7127 = vunpack.c.l.s4 1983009808
        %v7128 = vunpack.c.0.s8 %v7127
        %v7129 = vlaneseq
        %v7130 = vshrl.u32 %v7129, 7
        %v7131 = vsub.s32 %v7128, %v7130
        %v7132 = vrot.slane %v7124, %v7131
        %v7134 = vunpack.c.l.s4 1983009808
        %v7135 = vunpack.c.0.s8 %v7134
        %v7136 = vlaneseq
        %v7137 = vshrl.u32 %v7136, 7
        %v7138 = vsub.s32 %v7135, %v7137
        %v7139 = vrot.slane %v7125, %v7138
        %v7140 = vcombine.low %v7084, %v7100
        %v7141 = vcombine.high %v7084, %v7100
        %v7143 = vunpack.c.l.s4 1934713408
        %v7144 = vunpack.c.0.s8 %v7143
        %v7145 = vlaneseq
        %v7146 = vshrl.u32 %v7145, 7
        %v7147 = vsub.s32 %v7144, %v7146
        %v7148 = vrot.slane %v7140, %v7147
        %v7150 = vunpack.c.l.s4 1934713408
        %v7151 = vunpack.c.0.s8 %v7150
        %v7152 = vlaneseq
        %v7153 = vshrl.u32 %v7152, 7
        %v7154 = vsub.s32 %v7151, %v7153
        %v7155 = vrot.slane %v7141, %v7154
        %v7156 = vcombine.low %v7091, %v7107
        %v7157 = vcombine.high %v7091, %v7107
        %v7159 = vunpack.c.l.s4 1934713408
        %v7160 = vunpack.c.0.s8 %v7159
        %v7161 = vlaneseq
        %v7162 = vshrl.u32 %v7161, 7
        %v7163 = vsub.s32 %v7160, %v7162
        %v7164 = vrot.slane %v7156, %v7163
        %v7166 = vunpack.c.l.s4 1934713408
        %v7167 = vunpack.c.0.s8 %v7166
        %v7168 = vlaneseq
        %v7169 = vshrl.u32 %v7168, 7
        %v7170 = vsub.s32 %v7167, %v7169
        %v7171 = vrot.slane %v7157, %v7170
        %v7172 = vcombine.low %v7116, %v7132
        %v7173 = vcombine.high %v7116, %v7132
        %v7175 = vunpack.c.l.s4 1934713408
        %v7176 = vunpack.c.0.s8 %v7175
        %v7177 = vlaneseq
        %v7178 = vshrl.u32 %v7177, 7
        %v7179 = vsub.s32 %v7176, %v7178
        %v7180 = vrot.slane %v7172, %v7179
        %v7182 = vunpack.c.l.s4 1934713408
        %v7183 = vunpack.c.0.s8 %v7182
        %v7184 = vlaneseq
        %v7185 = vshrl.u32 %v7184, 7
        %v7186 = vsub.s32 %v7183, %v7185
        %v7187 = vrot.slane %v7173, %v7186
        %v7188 = vcombine.low %v7123, %v7139
        %v7189 = vcombine.high %v7123, %v7139
        %v7191 = vunpack.c.l.s4 1934713408
        %v7192 = vunpack.c.0.s8 %v7191
        %v7193 = vlaneseq
        %v7194 = vshrl.u32 %v7193, 7
        %v7195 = vsub.s32 %v7192, %v7194
        %v7196 = vrot.slane %v7188, %v7195
        %v7198 = vunpack.c.l.s4 1934713408
        %v7199 = vunpack.c.0.s8 %v7198
        %v7200 = vlaneseq
        %v7201 = vshrl.u32 %v7200, 7
        %v7202 = vsub.s32 %v7199, %v7201
        %v7203 = vrot.slane %v7189, %v7202
        %v7204 = vcombine.low %v7148, %v7180
        %v7205 = vcombine.high %v7148, %v7180
        %v7206 = vcombine.low %v7155, %v7187
        %v7207 = vcombine.high %v7155, %v7187
        %v7208 = vcombine.low %v7164, %v7196
        %v7209 = vcombine.high %v7164, %v7196
        %v7210 = vcombine.low %v7171, %v7203
        %v7211 = vcombine.high %v7171, %v7203
        %v7212 = vcombine.low %v3894, %v3898
        %v7213 = vcombine.high %v3894, %v3898
        %v7215 = vunpack.c.l.s4 1983009808
        %v7216 = vunpack.c.0.s8 %v7215
        %v7217 = vlaneseq
        %v7218 = vshrl.u32 %v7217, 7
        %v7219 = vsub.s32 %v7216, %v7218
        %v7220 = vrot.slane %v7212, %v7219
        %v7222 = vunpack.c.l.s4 1983009808
        %v7223 = vunpack.c.0.s8 %v7222
        %v7224 = vlaneseq
        %v7225 = vshrl.u32 %v7224, 7
        %v7226 = vsub.s32 %v7223, %v7225
        %v7227 = vrot.slane %v7213, %v7226
        %v7228 = vcombine.low %v3896, %v3900
        %v7229 = vcombine.high %v3896, %v3900
        %v7231 = vunpack.c.l.s4 1983009808
        %v7232 = vunpack.c.0.s8 %v7231
        %v7233 = vlaneseq
        %v7234 = vshrl.u32 %v7233, 7
        %v7235 = vsub.s32 %v7232, %v7234
        %v7236 = vrot.slane %v7228, %v7235
        %v7238 = vunpack.c.l.s4 1983009808
        %v7239 = vunpack.c.0.s8 %v7238
        %v7240 = vlaneseq
        %v7241 = vshrl.u32 %v7240, 7
        %v7242 = vsub.s32 %v7239, %v7241
        %v7243 = vrot.slane %v7229, %v7242
        %v7244 = vcombine.low %v3902, %v3906
        %v7245 = vcombine.high %v3902, %v3906
        %v7247 = vunpack.c.l.s4 1983009808
        %v7248 = vunpack.c.0.s8 %v7247
        %v7249 = vlaneseq
        %v7250 = vshrl.u32 %v7249, 7
        %v7251 = vsub.s32 %v7248, %v7250
        %v7252 = vrot.slane %v7244, %v7251
        %v7254 = vunpack.c.l.s4 1983009808
        %v7255 = vunpack.c.0.s8 %v7254
        %v7256 = vlaneseq
        %v7257 = vshrl.u32 %v7256, 7
        %v7258 = vsub.s32 %v7255, %v7257
        %v7259 = vrot.slane %v7245, %v7258
        %v7260 = vcombine.low %v3904, %v3908
        %v7261 = vcombine.high %v3904, %v3908
        %v7263 = vunpack.c.l.s4 1983009808
        %v7264 = vunpack.c.0.s8 %v7263
        %v7265 = vlaneseq
        %v7266 = vshrl.u32 %v7265, 7
        %v7267 = vsub.s32 %v7264, %v7266
        %v7268 = vrot.slane %v7260, %v7267
        %v7270 = vunpack.c.l.s4 1983009808
        %v7271 = vunpack.c.0.s8 %v7270
        %v7272 = vlaneseq
        %v7273 = vshrl.u32 %v7272, 7
        %v7274 = vsub.s32 %v7271, %v7273
        %v7275 = vrot.slane %v7261, %v7274
        %v7276 = vcombine.low %v7220, %v7236
        %v7277 = vcombine.high %v7220, %v7236
        %v7279 = vunpack.c.l.s4 1934713408
        %v7280 = vunpack.c.0.s8 %v7279
        %v7281 = vlaneseq
        %v7282 = vshrl.u32 %v7281, 7
        %v7283 = vsub.s32 %v7280, %v7282
        %v7284 = vrot.slane %v7276, %v7283
        %v7286 = vunpack.c.l.s4 1934713408
        %v7287 = vunpack.c.0.s8 %v7286
        %v7288 = vlaneseq
        %v7289 = vshrl.u32 %v7288, 7
        %v7290 = vsub.s32 %v7287, %v7289
        %v7291 = vrot.slane %v7277, %v7290
        %v7292 = vcombine.low %v7227, %v7243
        %v7293 = vcombine.high %v7227, %v7243
        %v7295 = vunpack.c.l.s4 1934713408
        %v7296 = vunpack.c.0.s8 %v7295
        %v7297 = vlaneseq
        %v7298 = vshrl.u32 %v7297, 7
        %v7299 = vsub.s32 %v7296, %v7298
        %v7300 = vrot.slane %v7292, %v7299
        %v7302 = vunpack.c.l.s4 1934713408
        %v7303 = vunpack.c.0.s8 %v7302
        %v7304 = vlaneseq
        %v7305 = vshrl.u32 %v7304, 7
        %v7306 = vsub.s32 %v7303, %v7305
        %v7307 = vrot.slane %v7293, %v7306
        %v7308 = vcombine.low %v7252, %v7268
        %v7309 = vcombine.high %v7252, %v7268
        %v7311 = vunpack.c.l.s4 1934713408
        %v7312 = vunpack.c.0.s8 %v7311
        %v7313 = vlaneseq
        %v7314 = vshrl.u32 %v7313, 7
        %v7315 = vsub.s32 %v7312, %v7314
        %v7316 = vrot.slane %v7308, %v7315
        %v7318 = vunpack.c.l.s4 1934713408
        %v7319 = vunpack.c.0.s8 %v7318
        %v7320 = vlaneseq
        %v7321 = vshrl.u32 %v7320, 7
        %v7322 = vsub.s32 %v7319, %v7321
        %v7323 = vrot.slane %v7309, %v7322
        %v7324 = vcombine.low %v7259, %v7275
        %v7325 = vcombine.high %v7259, %v7275
        %v7327 = vunpack.c.l.s4 1934713408
        %v7328 = vunpack.c.0.s8 %v7327
        %v7329 = vlaneseq
        %v7330 = vshrl.u32 %v7329, 7
        %v7331 = vsub.s32 %v7328, %v7330
        %v7332 = vrot.slane %v7324, %v7331
        %v7334 = vunpack.c.l.s4 1934713408
        %v7335 = vunpack.c.0.s8 %v7334
        %v7336 = vlaneseq
        %v7337 = vshrl.u32 %v7336, 7
        %v7338 = vsub.s32 %v7335, %v7337
        %v7339 = vrot.slane %v7325, %v7338
        %v7340 = vcombine.low %v7284, %v7316
        %v7341 = vcombine.high %v7284, %v7316
        %v7342 = vcombine.low %v7291, %v7323
        %v7343 = vcombine.high %v7291, %v7323
        %v7344 = vcombine.low %v7300, %v7332
        %v7345 = vcombine.high %v7300, %v7332
        %v7346 = vcombine.low %v7307, %v7339
        %v7347 = vcombine.high %v7307, %v7339
        %v7348 = vcombine.low %v3909, %v3913
        %v7349 = vcombine.high %v3909, %v3913
        %v7351 = vunpack.c.l.s4 1983009808
        %v7352 = vunpack.c.0.s8 %v7351
        %v7353 = vlaneseq
        %v7354 = vshrl.u32 %v7353, 7
        %v7355 = vsub.s32 %v7352, %v7354
        %v7356 = vrot.slane %v7348, %v7355
        %v7358 = vunpack.c.l.s4 1983009808
        %v7359 = vunpack.c.0.s8 %v7358
        %v7360 = vlaneseq
        %v7361 = vshrl.u32 %v7360, 7
        %v7362 = vsub.s32 %v7359, %v7361
        %v7363 = vrot.slane %v7349, %v7362
        %v7364 = vcombine.low %v3911, %v3915
        %v7365 = vcombine.high %v3911, %v3915
        %v7367 = vunpack.c.l.s4 1983009808
        %v7368 = vunpack.c.0.s8 %v7367
        %v7369 = vlaneseq
        %v7370 = vshrl.u32 %v7369, 7
        %v7371 = vsub.s32 %v7368, %v7370
        %v7372 = vrot.slane %v7364, %v7371
        %v7374 = vunpack.c.l.s4 1983009808
        %v7375 = vunpack.c.0.s8 %v7374
        %v7376 = vlaneseq
        %v7377 = vshrl.u32 %v7376, 7
        %v7378 = vsub.s32 %v7375, %v7377
        %v7379 = vrot.slane %v7365, %v7378
        %v7380 = vcombine.low %v3917, %v3921
        %v7381 = vcombine.high %v3917, %v3921
        %v7383 = vunpack.c.l.s4 1983009808
        %v7384 = vunpack.c.0.s8 %v7383
        %v7385 = vlaneseq
        %v7386 = vshrl.u32 %v7385, 7
        %v7387 = vsub.s32 %v7384, %v7386
        %v7388 = vrot.slane %v7380, %v7387
        %v7390 = vunpack.c.l.s4 1983009808
        %v7391 = vunpack.c.0.s8 %v7390
        %v7392 = vlaneseq
        %v7393 = vshrl.u32 %v7392, 7
        %v7394 = vsub.s32 %v7391, %v7393
        %v7395 = vrot.slane %v7381, %v7394
        %v7396 = vcombine.low %v3919, %v3923
        %v7397 = vcombine.high %v3919, %v3923
        %v7399 = vunpack.c.l.s4 1983009808
        %v7400 = vunpack.c.0.s8 %v7399
        %v7401 = vlaneseq
        %v7402 = vshrl.u32 %v7401, 7
        %v7403 = vsub.s32 %v7400, %v7402
        %v7404 = vrot.slane %v7396, %v7403
        %v7406 = vunpack.c.l.s4 1983009808
        %v7407 = vunpack.c.0.s8 %v7406
        %v7408 = vlaneseq
        %v7409 = vshrl.u32 %v7408, 7
        %v7410 = vsub.s32 %v7407, %v7409
        %v7411 = vrot.slane %v7397, %v7410
        %v7412 = vcombine.low %v7356, %v7372
        %v7413 = vcombine.high %v7356, %v7372
        %v7415 = vunpack.c.l.s4 1934713408
        %v7416 = vunpack.c.0.s8 %v7415
        %v7417 = vlaneseq
        %v7418 = vshrl.u32 %v7417, 7
        %v7419 = vsub.s32 %v7416, %v7418
        %v7420 = vrot.slane %v7412, %v7419
        %v7422 = vunpack.c.l.s4 1934713408
        %v7423 = vunpack.c.0.s8 %v7422
        %v7424 = vlaneseq
        %v7425 = vshrl.u32 %v7424, 7
        %v7426 = vsub.s32 %v7423, %v7425
        %v7427 = vrot.slane %v7413, %v7426
        %v7428 = vcombine.low %v7363, %v7379
        %v7429 = vcombine.high %v7363, %v7379
        %v7431 = vunpack.c.l.s4 1934713408
        %v7432 = vunpack.c.0.s8 %v7431
        %v7433 = vlaneseq
        %v7434 = vshrl.u32 %v7433, 7
        %v7435 = vsub.s32 %v7432, %v7434
        %v7436 = vrot.slane %v7428, %v7435
        %v7438 = vunpack.c.l.s4 1934713408
        %v7439 = vunpack.c.0.s8 %v7438
        %v7440 = vlaneseq
        %v7441 = vshrl.u32 %v7440, 7
        %v7442 = vsub.s32 %v7439, %v7441
        %v7443 = vrot.slane %v7429, %v7442
        %v7444 = vcombine.low %v7388, %v7404
        %v7445 = vcombine.high %v7388, %v7404
        %v7447 = vunpack.c.l.s4 1934713408
        %v7448 = vunpack.c.0.s8 %v7447
        %v7449 = vlaneseq
        %v7450 = vshrl.u32 %v7449, 7
        %v7451 = vsub.s32 %v7448, %v7450
        %v7452 = vrot.slane %v7444, %v7451
        %v7454 = vunpack.c.l.s4 1934713408
        %v7455 = vunpack.c.0.s8 %v7454
        %v7456 = vlaneseq
        %v7457 = vshrl.u32 %v7456, 7
        %v7458 = vsub.s32 %v7455, %v7457
        %v7459 = vrot.slane %v7445, %v7458
        %v7460 = vcombine.low %v7395, %v7411
        %v7461 = vcombine.high %v7395, %v7411
        %v7463 = vunpack.c.l.s4 1934713408
        %v7464 = vunpack.c.0.s8 %v7463
        %v7465 = vlaneseq
        %v7466 = vshrl.u32 %v7465, 7
        %v7467 = vsub.s32 %v7464, %v7466
        %v7468 = vrot.slane %v7460, %v7467
        %v7470 = vunpack.c.l.s4 1934713408
        %v7471 = vunpack.c.0.s8 %v7470
        %v7472 = vlaneseq
        %v7473 = vshrl.u32 %v7472, 7
        %v7474 = vsub.s32 %v7471, %v7473
        %v7475 = vrot.slane %v7461, %v7474
        %v7476 = vcombine.low %v7420, %v7452
        %v7477 = vcombine.high %v7420, %v7452
        %v7478 = vcombine.low %v7427, %v7459
        %v7479 = vcombine.high %v7427, %v7459
        %v7480 = vcombine.low %v7436, %v7468
        %v7481 = vcombine.high %v7436, %v7468
        %v7482 = vcombine.low %v7443, %v7475
        %v7483 = vcombine.high %v7443, %v7475
        %v7484 = vcombine.low %v3925, %v3929
        %v7485 = vcombine.high %v3925, %v3929
        %v7487 = vunpack.c.l.s4 1983009808
        %v7488 = vunpack.c.0.s8 %v7487
        %v7489 = vlaneseq
        %v7490 = vshrl.u32 %v7489, 7
        %v7491 = vsub.s32 %v7488, %v7490
        %v7492 = vrot.slane %v7484, %v7491
        %v7494 = vunpack.c.l.s4 1983009808
        %v7495 = vunpack.c.0.s8 %v7494
        %v7496 = vlaneseq
        %v7497 = vshrl.u32 %v7496, 7
        %v7498 = vsub.s32 %v7495, %v7497
        %v7499 = vrot.slane %v7485, %v7498
        %v7500 = vcombine.low %v3927, %v3931
        %v7501 = vcombine.high %v3927, %v3931
        %v7503 = vunpack.c.l.s4 1983009808
        %v7504 = vunpack.c.0.s8 %v7503
        %v7505 = vlaneseq
        %v7506 = vshrl.u32 %v7505, 7
        %v7507 = vsub.s32 %v7504, %v7506
        %v7508 = vrot.slane %v7500, %v7507
        %v7510 = vunpack.c.l.s4 1983009808
        %v7511 = vunpack.c.0.s8 %v7510
        %v7512 = vlaneseq
        %v7513 = vshrl.u32 %v7512, 7
        %v7514 = vsub.s32 %v7511, %v7513
        %v7515 = vrot.slane %v7501, %v7514
        %v7516 = vcombine.low %v3933, %v3937
        %v7517 = vcombine.high %v3933, %v3937
        %v7519 = vunpack.c.l.s4 1983009808
        %v7520 = vunpack.c.0.s8 %v7519
        %v7521 = vlaneseq
        %v7522 = vshrl.u32 %v7521, 7
        %v7523 = vsub.s32 %v7520, %v7522
        %v7524 = vrot.slane %v7516, %v7523
        %v7526 = vunpack.c.l.s4 1983009808
        %v7527 = vunpack.c.0.s8 %v7526
        %v7528 = vlaneseq
        %v7529 = vshrl.u32 %v7528, 7
        %v7530 = vsub.s32 %v7527, %v7529
        %v7531 = vrot.slane %v7517, %v7530
        %v7532 = vcombine.low %v3935, %v3939
        %v7533 = vcombine.high %v3935, %v3939
        %v7535 = vunpack.c.l.s4 1983009808
        %v7536 = vunpack.c.0.s8 %v7535
        %v7537 = vlaneseq
        %v7538 = vshrl.u32 %v7537, 7
        %v7539 = vsub.s32 %v7536, %v7538
        %v7540 = vrot.slane %v7532, %v7539
        %v7542 = vunpack.c.l.s4 1983009808
        %v7543 = vunpack.c.0.s8 %v7542
        %v7544 = vlaneseq
        %v7545 = vshrl.u32 %v7544, 7
        %v7546 = vsub.s32 %v7543, %v7545
        %v7547 = vrot.slane %v7533, %v7546
        %v7548 = vcombine.low %v7492, %v7508
        %v7549 = vcombine.high %v7492, %v7508
        %v7551 = vunpack.c.l.s4 1934713408
        %v7552 = vunpack.c.0.s8 %v7551
        %v7553 = vlaneseq
        %v7554 = vshrl.u32 %v7553, 7
        %v7555 = vsub.s32 %v7552, %v7554
        %v7556 = vrot.slane %v7548, %v7555
        %v7558 = vunpack.c.l.s4 1934713408
        %v7559 = vunpack.c.0.s8 %v7558
        %v7560 = vlaneseq
        %v7561 = vshrl.u32 %v7560, 7
        %v7562 = vsub.s32 %v7559, %v7561
        %v7563 = vrot.slane %v7549, %v7562
        %v7564 = vcombine.low %v7499, %v7515
        %v7565 = vcombine.high %v7499, %v7515
        %v7567 = vunpack.c.l.s4 1934713408
        %v7568 = vunpack.c.0.s8 %v7567
        %v7569 = vlaneseq
        %v7570 = vshrl.u32 %v7569, 7
        %v7571 = vsub.s32 %v7568, %v7570
        %v7572 = vrot.slane %v7564, %v7571
        %v7574 = vunpack.c.l.s4 1934713408
        %v7575 = vunpack.c.0.s8 %v7574
        %v7576 = vlaneseq
        %v7577 = vshrl.u32 %v7576, 7
        %v7578 = vsub.s32 %v7575, %v7577
        %v7579 = vrot.slane %v7565, %v7578
        %v7580 = vcombine.low %v7524, %v7540
        %v7581 = vcombine.high %v7524, %v7540
        %v7583 = vunpack.c.l.s4 1934713408
        %v7584 = vunpack.c.0.s8 %v7583
        %v7585 = vlaneseq
        %v7586 = vshrl.u32 %v7585, 7
        %v7587 = vsub.s32 %v7584, %v7586
        %v7588 = vrot.slane %v7580, %v7587
        %v7590 = vunpack.c.l.s4 1934713408
        %v7591 = vunpack.c.0.s8 %v7590
        %v7592 = vlaneseq
        %v7593 = vshrl.u32 %v7592, 7
        %v7594 = vsub.s32 %v7591, %v7593
        %v7595 = vrot.slane %v7581, %v7594
        %v7596 = vcombine.low %v7531, %v7547
        %v7597 = vcombine.high %v7531, %v7547
        %v7599 = vunpack.c.l.s4 1934713408
        %v7600 = vunpack.c.0.s8 %v7599
        %v7601 = vlaneseq
        %v7602 = vshrl.u32 %v7601, 7
        %v7603 = vsub.s32 %v7600, %v7602
        %v7604 = vrot.slane %v7596, %v7603
        %v7606 = vunpack.c.l.s4 1934713408
        %v7607 = vunpack.c.0.s8 %v7606
        %v7608 = vlaneseq
        %v7609 = vshrl.u32 %v7608, 7
        %v7610 = vsub.s32 %v7607, %v7609
        %v7611 = vrot.slane %v7597, %v7610
        %v7612 = vcombine.low %v7556, %v7588
        %v7613 = vcombine.high %v7556, %v7588
        %v7614 = vcombine.low %v7563, %v7595
        %v7615 = vcombine.high %v7563, %v7595
        %v7616 = vcombine.low %v7572, %v7604
        %v7617 = vcombine.high %v7572, %v7604
        %v7618 = vcombine.low %v7579, %v7611
        %v7619 = vcombine.high %v7579, %v7611
        %v7620 = vcombine.low %v3910, %v3914
        %v7621 = vcombine.high %v3910, %v3914
        %v7623 = vunpack.c.l.s4 1983009808
        %v7624 = vunpack.c.0.s8 %v7623
        %v7625 = vlaneseq
        %v7626 = vshrl.u32 %v7625, 7
        %v7627 = vsub.s32 %v7624, %v7626
        %v7628 = vrot.slane %v7620, %v7627
        %v7630 = vunpack.c.l.s4 1983009808
        %v7631 = vunpack.c.0.s8 %v7630
        %v7632 = vlaneseq
        %v7633 = vshrl.u32 %v7632, 7
        %v7634 = vsub.s32 %v7631, %v7633
        %v7635 = vrot.slane %v7621, %v7634
        %v7636 = vcombine.low %v3912, %v3916
        %v7637 = vcombine.high %v3912, %v3916
        %v7639 = vunpack.c.l.s4 1983009808
        %v7640 = vunpack.c.0.s8 %v7639
        %v7641 = vlaneseq
        %v7642 = vshrl.u32 %v7641, 7
        %v7643 = vsub.s32 %v7640, %v7642
        %v7644 = vrot.slane %v7636, %v7643
        %v7646 = vunpack.c.l.s4 1983009808
        %v7647 = vunpack.c.0.s8 %v7646
        %v7648 = vlaneseq
        %v7649 = vshrl.u32 %v7648, 7
        %v7650 = vsub.s32 %v7647, %v7649
        %v7651 = vrot.slane %v7637, %v7650
        %v7652 = vcombine.low %v3918, %v3922
        %v7653 = vcombine.high %v3918, %v3922
        %v7655 = vunpack.c.l.s4 1983009808
        %v7656 = vunpack.c.0.s8 %v7655
        %v7657 = vlaneseq
        %v7658 = vshrl.u32 %v7657, 7
        %v7659 = vsub.s32 %v7656, %v7658
        %v7660 = vrot.slane %v7652, %v7659
        %v7662 = vunpack.c.l.s4 1983009808
        %v7663 = vunpack.c.0.s8 %v7662
        %v7664 = vlaneseq
        %v7665 = vshrl.u32 %v7664, 7
        %v7666 = vsub.s32 %v7663, %v7665
        %v7667 = vrot.slane %v7653, %v7666
        %v7668 = vcombine.low %v3920, %v3924
        %v7669 = vcombine.high %v3920, %v3924
        %v7671 = vunpack.c.l.s4 1983009808
        %v7672 = vunpack.c.0.s8 %v7671
        %v7673 = vlaneseq
        %v7674 = vshrl.u32 %v7673, 7
        %v7675 = vsub.s32 %v7672, %v7674
        %v7676 = vrot.slane %v7668, %v7675
        %v7678 = vunpack.c.l.s4 1983009808
        %v7679 = vunpack.c.0.s8 %v7678
        %v7680 = vlaneseq
        %v7681 = vshrl.u32 %v7680, 7
        %v7682 = vsub.s32 %v7679, %v7681
        %v7683 = vrot.slane %v7669, %v7682
        %v7684 = vcombine.low %v7628, %v7644
        %v7685 = vcombine.high %v7628, %v7644
        %v7687 = vunpack.c.l.s4 1934713408
        %v7688 = vunpack.c.0.s8 %v7687
        %v7689 = vlaneseq
        %v7690 = vshrl.u32 %v7689, 7
        %v7691 = vsub.s32 %v7688, %v7690
        %v7692 = vrot.slane %v7684, %v7691
        %v7694 = vunpack.c.l.s4 1934713408
        %v7695 = vunpack.c.0.s8 %v7694
        %v7696 = vlaneseq
        %v7697 = vshrl.u32 %v7696, 7
        %v7698 = vsub.s32 %v7695, %v7697
        %v7699 = vrot.slane %v7685, %v7698
        %v7700 = vcombine.low %v7635, %v7651
        %v7701 = vcombine.high %v7635, %v7651
        %v7703 = vunpack.c.l.s4 1934713408
        %v7704 = vunpack.c.0.s8 %v7703
        %v7705 = vlaneseq
        %v7706 = vshrl.u32 %v7705, 7
        %v7707 = vsub.s32 %v7704, %v7706
        %v7708 = vrot.slane %v7700, %v7707
        %v7710 = vunpack.c.l.s4 1934713408
        %v7711 = vunpack.c.0.s8 %v7710
        %v7712 = vlaneseq
        %v7713 = vshrl.u32 %v7712, 7
        %v7714 = vsub.s32 %v7711, %v7713
        %v7715 = vrot.slane %v7701, %v7714
        %v7716 = vcombine.low %v7660, %v7676
        %v7717 = vcombine.high %v7660, %v7676
        %v7719 = vunpack.c.l.s4 1934713408
        %v7720 = vunpack.c.0.s8 %v7719
        %v7721 = vlaneseq
        %v7722 = vshrl.u32 %v7721, 7
        %v7723 = vsub.s32 %v7720, %v7722
        %v7724 = vrot.slane %v7716, %v7723
        %v7726 = vunpack.c.l.s4 1934713408
        %v7727 = vunpack.c.0.s8 %v7726
        %v7728 = vlaneseq
        %v7729 = vshrl.u32 %v7728, 7
        %v7730 = vsub.s32 %v7727, %v7729
        %v7731 = vrot.slane %v7717, %v7730
        %v7732 = vcombine.low %v7667, %v7683
        %v7733 = vcombine.high %v7667, %v7683
        %v7735 = vunpack.c.l.s4 1934713408
        %v7736 = vunpack.c.0.s8 %v7735
        %v7737 = vlaneseq
        %v7738 = vshrl.u32 %v7737, 7
        %v7739 = vsub.s32 %v7736, %v7738
        %v7740 = vrot.slane %v7732, %v7739
        %v7742 = vunpack.c.l.s4 1934713408
        %v7743 = vunpack.c.0.s8 %v7742
        %v7744 = vlaneseq
        %v7745 = vshrl.u32 %v7744, 7
        %v7746 = vsub.s32 %v7743, %v7745
        %v7747 = vrot.slane %v7733, %v7746
        %v7748 = vcombine.low %v7692, %v7724
        %v7749 = vcombine.high %v7692, %v7724
        %v7750 = vcombine.low %v7699, %v7731
        %v7751 = vcombine.high %v7699, %v7731
        %v7752 = vcombine.low %v7708, %v7740
        %v7753 = vcombine.high %v7708, %v7740
        %v7754 = vcombine.low %v7715, %v7747
        %v7755 = vcombine.high %v7715, %v7747
        %v7756 = vcombine.low %v3926, %v3930
        %v7757 = vcombine.high %v3926, %v3930
        %v7759 = vunpack.c.l.s4 1983009808
        %v7760 = vunpack.c.0.s8 %v7759
        %v7761 = vlaneseq
        %v7762 = vshrl.u32 %v7761, 7
        %v7763 = vsub.s32 %v7760, %v7762
        %v7764 = vrot.slane %v7756, %v7763
        %v7766 = vunpack.c.l.s4 1983009808
        %v7767 = vunpack.c.0.s8 %v7766
        %v7768 = vlaneseq
        %v7769 = vshrl.u32 %v7768, 7
        %v7770 = vsub.s32 %v7767, %v7769
        %v7771 = vrot.slane %v7757, %v7770
        %v7772 = vcombine.low %v3928, %v3932
        %v7773 = vcombine.high %v3928, %v3932
        %v7775 = vunpack.c.l.s4 1983009808
        %v7776 = vunpack.c.0.s8 %v7775
        %v7777 = vlaneseq
        %v7778 = vshrl.u32 %v7777, 7
        %v7779 = vsub.s32 %v7776, %v7778
        %v7780 = vrot.slane %v7772, %v7779
        %v7782 = vunpack.c.l.s4 1983009808
        %v7783 = vunpack.c.0.s8 %v7782
        %v7784 = vlaneseq
        %v7785 = vshrl.u32 %v7784, 7
        %v7786 = vsub.s32 %v7783, %v7785
        %v7787 = vrot.slane %v7773, %v7786
        %v7788 = vcombine.low %v3934, %v3938
        %v7789 = vcombine.high %v3934, %v3938
        %v7791 = vunpack.c.l.s4 1983009808
        %v7792 = vunpack.c.0.s8 %v7791
        %v7793 = vlaneseq
        %v7794 = vshrl.u32 %v7793, 7
        %v7795 = vsub.s32 %v7792, %v7794
        %v7796 = vrot.slane %v7788, %v7795
        %v7798 = vunpack.c.l.s4 1983009808
        %v7799 = vunpack.c.0.s8 %v7798
        %v7800 = vlaneseq
        %v7801 = vshrl.u32 %v7800, 7
        %v7802 = vsub.s32 %v7799, %v7801
        %v7803 = vrot.slane %v7789, %v7802
        %v7804 = vcombine.low %v3936, %v3940
        %v7805 = vcombine.high %v3936, %v3940
        %v7807 = vunpack.c.l.s4 1983009808
        %v7808 = vunpack.c.0.s8 %v7807
        %v7809 = vlaneseq
        %v7810 = vshrl.u32 %v7809, 7
        %v7811 = vsub.s32 %v7808, %v7810
        %v7812 = vrot.slane %v7804, %v7811
        %v7814 = vunpack.c.l.s4 1983009808
        %v7815 = vunpack.c.0.s8 %v7814
        %v7816 = vlaneseq
        %v7817 = vshrl.u32 %v7816, 7
        %v7818 = vsub.s32 %v7815, %v7817
        %v7819 = vrot.slane %v7805, %v7818
        %v7820 = vcombine.low %v7764, %v7780
        %v7821 = vcombine.high %v7764, %v7780
        %v7823 = vunpack.c.l.s4 1934713408
        %v7824 = vunpack.c.0.s8 %v7823
        %v7825 = vlaneseq
        %v7826 = vshrl.u32 %v7825, 7
        %v7827 = vsub.s32 %v7824, %v7826
        %v7828 = vrot.slane %v7820, %v7827
        %v7830 = vunpack.c.l.s4 1934713408
        %v7831 = vunpack.c.0.s8 %v7830
        %v7832 = vlaneseq
        %v7833 = vshrl.u32 %v7832, 7
        %v7834 = vsub.s32 %v7831, %v7833
        %v7835 = vrot.slane %v7821, %v7834
        %v7836 = vcombine.low %v7771, %v7787
        %v7837 = vcombine.high %v7771, %v7787
        %v7839 = vunpack.c.l.s4 1934713408
        %v7840 = vunpack.c.0.s8 %v7839
        %v7841 = vlaneseq
        %v7842 = vshrl.u32 %v7841, 7
        %v7843 = vsub.s32 %v7840, %v7842
        %v7844 = vrot.slane %v7836, %v7843
        %v7846 = vunpack.c.l.s4 1934713408
        %v7847 = vunpack.c.0.s8 %v7846
        %v7848 = vlaneseq
        %v7849 = vshrl.u32 %v7848, 7
        %v7850 = vsub.s32 %v7847, %v7849
        %v7851 = vrot.slane %v7837, %v7850
        %v7852 = vcombine.low %v7796, %v7812
        %v7853 = vcombine.high %v7796, %v7812
        %v7855 = vunpack.c.l.s4 1934713408
        %v7856 = vunpack.c.0.s8 %v7855
        %v7857 = vlaneseq
        %v7858 = vshrl.u32 %v7857, 7
        %v7859 = vsub.s32 %v7856, %v7858
        %v7860 = vrot.slane %v7852, %v7859
        %v7862 = vunpack.c.l.s4 1934713408
        %v7863 = vunpack.c.0.s8 %v7862
        %v7864 = vlaneseq
        %v7865 = vshrl.u32 %v7864, 7
        %v7866 = vsub.s32 %v7863, %v7865
        %v7867 = vrot.slane %v7853, %v7866
        %v7868 = vcombine.low %v7803, %v7819
        %v7869 = vcombine.high %v7803, %v7819
        %v7871 = vunpack.c.l.s4 1934713408
        %v7872 = vunpack.c.0.s8 %v7871
        %v7873 = vlaneseq
        %v7874 = vshrl.u32 %v7873, 7
        %v7875 = vsub.s32 %v7872, %v7874
        %v7876 = vrot.slane %v7868, %v7875
        %v7878 = vunpack.c.l.s4 1934713408
        %v7879 = vunpack.c.0.s8 %v7878
        %v7880 = vlaneseq
        %v7881 = vshrl.u32 %v7880, 7
        %v7882 = vsub.s32 %v7879, %v7881
        %v7883 = vrot.slane %v7869, %v7882
        %v7884 = vcombine.low %v7828, %v7860
        %v7885 = vcombine.high %v7828, %v7860
        %v7886 = vcombine.low %v7835, %v7867
        %v7887 = vcombine.high %v7835, %v7867
        %v7888 = vcombine.low %v7844, %v7876
        %v7889 = vcombine.high %v7844, %v7876
        %v7890 = vcombine.low %v7851, %v7883
        %v7891 = vcombine.high %v7851, %v7883
        %v7892 = vcombine.low %v3941, %v3945
        %v7893 = vcombine.high %v3941, %v3945
        %v7895 = vunpack.c.l.s4 1983009808
        %v7896 = vunpack.c.0.s8 %v7895
        %v7897 = vlaneseq
        %v7898 = vshrl.u32 %v7897, 7
        %v7899 = vsub.s32 %v7896, %v7898
        %v7900 = vrot.slane %v7892, %v7899
        %v7902 = vunpack.c.l.s4 1983009808
        %v7903 = vunpack.c.0.s8 %v7902
        %v7904 = vlaneseq
        %v7905 = vshrl.u32 %v7904, 7
        %v7906 = vsub.s32 %v7903, %v7905
        %v7907 = vrot.slane %v7893, %v7906
        %v7908 = vcombine.low %v3943, %v3947
        %v7909 = vcombine.high %v3943, %v3947
        %v7911 = vunpack.c.l.s4 1983009808
        %v7912 = vunpack.c.0.s8 %v7911
        %v7913 = vlaneseq
        %v7914 = vshrl.u32 %v7913, 7
        %v7915 = vsub.s32 %v7912, %v7914
        %v7916 = vrot.slane %v7908, %v7915
        %v7918 = vunpack.c.l.s4 1983009808
        %v7919 = vunpack.c.0.s8 %v7918
        %v7920 = vlaneseq
        %v7921 = vshrl.u32 %v7920, 7
        %v7922 = vsub.s32 %v7919, %v7921
        %v7923 = vrot.slane %v7909, %v7922
        %v7924 = vcombine.low %v3949, %v3953
        %v7925 = vcombine.high %v3949, %v3953
        %v7927 = vunpack.c.l.s4 1983009808
        %v7928 = vunpack.c.0.s8 %v7927
        %v7929 = vlaneseq
        %v7930 = vshrl.u32 %v7929, 7
        %v7931 = vsub.s32 %v7928, %v7930
        %v7932 = vrot.slane %v7924, %v7931
        %v7934 = vunpack.c.l.s4 1983009808
        %v7935 = vunpack.c.0.s8 %v7934
        %v7936 = vlaneseq
        %v7937 = vshrl.u32 %v7936, 7
        %v7938 = vsub.s32 %v7935, %v7937
        %v7939 = vrot.slane %v7925, %v7938
        %v7940 = vcombine.low %v3951, %v3955
        %v7941 = vcombine.high %v3951, %v3955
        %v7943 = vunpack.c.l.s4 1983009808
        %v7944 = vunpack.c.0.s8 %v7943
        %v7945 = vlaneseq
        %v7946 = vshrl.u32 %v7945, 7
        %v7947 = vsub.s32 %v7944, %v7946
        %v7948 = vrot.slane %v7940, %v7947
        %v7950 = vunpack.c.l.s4 1983009808
        %v7951 = vunpack.c.0.s8 %v7950
        %v7952 = vlaneseq
        %v7953 = vshrl.u32 %v7952, 7
        %v7954 = vsub.s32 %v7951, %v7953
        %v7955 = vrot.slane %v7941, %v7954
        %v7956 = vcombine.low %v7900, %v7916
        %v7957 = vcombine.high %v7900, %v7916
        %v7959 = vunpack.c.l.s4 1934713408
        %v7960 = vunpack.c.0.s8 %v7959
        %v7961 = vlaneseq
        %v7962 = vshrl.u32 %v7961, 7
        %v7963 = vsub.s32 %v7960, %v7962
        %v7964 = vrot.slane %v7956, %v7963
        %v7966 = vunpack.c.l.s4 1934713408
        %v7967 = vunpack.c.0.s8 %v7966
        %v7968 = vlaneseq
        %v7969 = vshrl.u32 %v7968, 7
        %v7970 = vsub.s32 %v7967, %v7969
        %v7971 = vrot.slane %v7957, %v7970
        %v7972 = vcombine.low %v7907, %v7923
        %v7973 = vcombine.high %v7907, %v7923
        %v7975 = vunpack.c.l.s4 1934713408
        %v7976 = vunpack.c.0.s8 %v7975
        %v7977 = vlaneseq
        %v7978 = vshrl.u32 %v7977, 7
        %v7979 = vsub.s32 %v7976, %v7978
        %v7980 = vrot.slane %v7972, %v7979
        %v7982 = vunpack.c.l.s4 1934713408
        %v7983 = vunpack.c.0.s8 %v7982
        %v7984 = vlaneseq
        %v7985 = vshrl.u32 %v7984, 7
        %v7986 = vsub.s32 %v7983, %v7985
        %v7987 = vrot.slane %v7973, %v7986
        %v7988 = vcombine.low %v7932, %v7948
        %v7989 = vcombine.high %v7932, %v7948
        %v7991 = vunpack.c.l.s4 1934713408
        %v7992 = vunpack.c.0.s8 %v7991
        %v7993 = vlaneseq
        %v7994 = vshrl.u32 %v7993, 7
        %v7995 = vsub.s32 %v7992, %v7994
        %v7996 = vrot.slane %v7988, %v7995
        %v7998 = vunpack.c.l.s4 1934713408
        %v7999 = vunpack.c.0.s8 %v7998
        %v8000 = vlaneseq
        %v8001 = vshrl.u32 %v8000, 7
        %v8002 = vsub.s32 %v7999, %v8001
        %v8003 = vrot.slane %v7989, %v8002
        %v8004 = vcombine.low %v7939, %v7955
        %v8005 = vcombine.high %v7939, %v7955
        %v8007 = vunpack.c.l.s4 1934713408
        %v8008 = vunpack.c.0.s8 %v8007
        %v8009 = vlaneseq
        %v8010 = vshrl.u32 %v8009, 7
        %v8011 = vsub.s32 %v8008, %v8010
        %v8012 = vrot.slane %v8004, %v8011
        %v8014 = vunpack.c.l.s4 1934713408
        %v8015 = vunpack.c.0.s8 %v8014
        %v8016 = vlaneseq
        %v8017 = vshrl.u32 %v8016, 7
        %v8018 = vsub.s32 %v8015, %v8017
        %v8019 = vrot.slane %v8005, %v8018
        %v8020 = vcombine.low %v7964, %v7996
        %v8021 = vcombine.high %v7964, %v7996
        %v8022 = vcombine.low %v7971, %v8003
        %v8023 = vcombine.high %v7971, %v8003
        %v8024 = vcombine.low %v7980, %v8012
        %v8025 = vcombine.high %v7980, %v8012
        %v8026 = vcombine.low %v7987, %v8019
        %v8027 = vcombine.high %v7987, %v8019
        %v8028 = vcombine.low %v3957, %v3961
        %v8029 = vcombine.high %v3957, %v3961
        %v8031 = vunpack.c.l.s4 1983009808
        %v8032 = vunpack.c.0.s8 %v8031
        %v8033 = vlaneseq
        %v8034 = vshrl.u32 %v8033, 7
        %v8035 = vsub.s32 %v8032, %v8034
        %v8036 = vrot.slane %v8028, %v8035
        %v8038 = vunpack.c.l.s4 1983009808
        %v8039 = vunpack.c.0.s8 %v8038
        %v8040 = vlaneseq
        %v8041 = vshrl.u32 %v8040, 7
        %v8042 = vsub.s32 %v8039, %v8041
        %v8043 = vrot.slane %v8029, %v8042
        %v8044 = vcombine.low %v3959, %v3963
        %v8045 = vcombine.high %v3959, %v3963
        %v8047 = vunpack.c.l.s4 1983009808
        %v8048 = vunpack.c.0.s8 %v8047
        %v8049 = vlaneseq
        %v8050 = vshrl.u32 %v8049, 7
        %v8051 = vsub.s32 %v8048, %v8050
        %v8052 = vrot.slane %v8044, %v8051
        %v8054 = vunpack.c.l.s4 1983009808
        %v8055 = vunpack.c.0.s8 %v8054
        %v8056 = vlaneseq
        %v8057 = vshrl.u32 %v8056, 7
        %v8058 = vsub.s32 %v8055, %v8057
        %v8059 = vrot.slane %v8045, %v8058
        %v8060 = vcombine.low %v3965, %v3969
        %v8061 = vcombine.high %v3965, %v3969
        %v8063 = vunpack.c.l.s4 1983009808
        %v8064 = vunpack.c.0.s8 %v8063
        %v8065 = vlaneseq
        %v8066 = vshrl.u32 %v8065, 7
        %v8067 = vsub.s32 %v8064, %v8066
        %v8068 = vrot.slane %v8060, %v8067
        %v8070 = vunpack.c.l.s4 1983009808
        %v8071 = vunpack.c.0.s8 %v8070
        %v8072 = vlaneseq
        %v8073 = vshrl.u32 %v8072, 7
        %v8074 = vsub.s32 %v8071, %v8073
        %v8075 = vrot.slane %v8061, %v8074
        %v8076 = vcombine.low %v3967, %v3971
        %v8077 = vcombine.high %v3967, %v3971
        %v8079 = vunpack.c.l.s4 1983009808
        %v8080 = vunpack.c.0.s8 %v8079
        %v8081 = vlaneseq
        %v8082 = vshrl.u32 %v8081, 7
        %v8083 = vsub.s32 %v8080, %v8082
        %v8084 = vrot.slane %v8076, %v8083
        %v8086 = vunpack.c.l.s4 1983009808
        %v8087 = vunpack.c.0.s8 %v8086
        %v8088 = vlaneseq
        %v8089 = vshrl.u32 %v8088, 7
        %v8090 = vsub.s32 %v8087, %v8089
        %v8091 = vrot.slane %v8077, %v8090
        %v8092 = vcombine.low %v8036, %v8052
        %v8093 = vcombine.high %v8036, %v8052
        %v8095 = vunpack.c.l.s4 1934713408
        %v8096 = vunpack.c.0.s8 %v8095
        %v8097 = vlaneseq
        %v8098 = vshrl.u32 %v8097, 7
        %v8099 = vsub.s32 %v8096, %v8098
        %v8100 = vrot.slane %v8092, %v8099
        %v8102 = vunpack.c.l.s4 1934713408
        %v8103 = vunpack.c.0.s8 %v8102
        %v8104 = vlaneseq
        %v8105 = vshrl.u32 %v8104, 7
        %v8106 = vsub.s32 %v8103, %v8105
        %v8107 = vrot.slane %v8093, %v8106
        %v8108 = vcombine.low %v8043, %v8059
        %v8109 = vcombine.high %v8043, %v8059
        %v8111 = vunpack.c.l.s4 1934713408
        %v8112 = vunpack.c.0.s8 %v8111
        %v8113 = vlaneseq
        %v8114 = vshrl.u32 %v8113, 7
        %v8115 = vsub.s32 %v8112, %v8114
        %v8116 = vrot.slane %v8108, %v8115
        %v8118 = vunpack.c.l.s4 1934713408
        %v8119 = vunpack.c.0.s8 %v8118
        %v8120 = vlaneseq
        %v8121 = vshrl.u32 %v8120, 7
        %v8122 = vsub.s32 %v8119, %v8121
        %v8123 = vrot.slane %v8109, %v8122
        %v8124 = vcombine.low %v8068, %v8084
        %v8125 = vcombine.high %v8068, %v8084
        %v8127 = vunpack.c.l.s4 1934713408
        %v8128 = vunpack.c.0.s8 %v8127
        %v8129 = vlaneseq
        %v8130 = vshrl.u32 %v8129, 7
        %v8131 = vsub.s32 %v8128, %v8130
        %v8132 = vrot.slane %v8124, %v8131
        %v8134 = vunpack.c.l.s4 1934713408
        %v8135 = vunpack.c.0.s8 %v8134
        %v8136 = vlaneseq
        %v8137 = vshrl.u32 %v8136, 7
        %v8138 = vsub.s32 %v8135, %v8137
        %v8139 = vrot.slane %v8125, %v8138
        %v8140 = vcombine.low %v8075, %v8091
        %v8141 = vcombine.high %v8075, %v8091
        %v8143 = vunpack.c.l.s4 1934713408
        %v8144 = vunpack.c.0.s8 %v8143
        %v8145 = vlaneseq
        %v8146 = vshrl.u32 %v8145, 7
        %v8147 = vsub.s32 %v8144, %v8146
        %v8148 = vrot.slane %v8140, %v8147
        %v8150 = vunpack.c.l.s4 1934713408
        %v8151 = vunpack.c.0.s8 %v8150
        %v8152 = vlaneseq
        %v8153 = vshrl.u32 %v8152, 7
        %v8154 = vsub.s32 %v8151, %v8153
        %v8155 = vrot.slane %v8141, %v8154
        %v8156 = vcombine.low %v8100, %v8132
        %v8157 = vcombine.high %v8100, %v8132
        %v8158 = vcombine.low %v8107, %v8139
        %v8159 = vcombine.high %v8107, %v8139
        %v8160 = vcombine.low %v8116, %v8148
        %v8161 = vcombine.high %v8116, %v8148
        %v8162 = vcombine.low %v8123, %v8155
        %v8163 = vcombine.high %v8123, %v8155
        %v8164 = vcombine.low %v3942, %v3946
        %v8165 = vcombine.high %v3942, %v3946
        %v8167 = vunpack.c.l.s4 1983009808
        %v8168 = vunpack.c.0.s8 %v8167
        %v8169 = vlaneseq
        %v8170 = vshrl.u32 %v8169, 7
        %v8171 = vsub.s32 %v8168, %v8170
        %v8172 = vrot.slane %v8164, %v8171
        %v8174 = vunpack.c.l.s4 1983009808
        %v8175 = vunpack.c.0.s8 %v8174
        %v8176 = vlaneseq
        %v8177 = vshrl.u32 %v8176, 7
        %v8178 = vsub.s32 %v8175, %v8177
        %v8179 = vrot.slane %v8165, %v8178
        %v8180 = vcombine.low %v3944, %v3948
        %v8181 = vcombine.high %v3944, %v3948
        %v8183 = vunpack.c.l.s4 1983009808
        %v8184 = vunpack.c.0.s8 %v8183
        %v8185 = vlaneseq
        %v8186 = vshrl.u32 %v8185, 7
        %v8187 = vsub.s32 %v8184, %v8186
        %v8188 = vrot.slane %v8180, %v8187
        %v8190 = vunpack.c.l.s4 1983009808
        %v8191 = vunpack.c.0.s8 %v8190
        %v8192 = vlaneseq
        %v8193 = vshrl.u32 %v8192, 7
        %v8194 = vsub.s32 %v8191, %v8193
        %v8195 = vrot.slane %v8181, %v8194
        %v8196 = vcombine.low %v3950, %v3954
        %v8197 = vcombine.high %v3950, %v3954
        %v8199 = vunpack.c.l.s4 1983009808
        %v8200 = vunpack.c.0.s8 %v8199
        %v8201 = vlaneseq
        %v8202 = vshrl.u32 %v8201, 7
        %v8203 = vsub.s32 %v8200, %v8202
        %v8204 = vrot.slane %v8196, %v8203
        %v8206 = vunpack.c.l.s4 1983009808
        %v8207 = vunpack.c.0.s8 %v8206
        %v8208 = vlaneseq
        %v8209 = vshrl.u32 %v8208, 7
        %v8210 = vsub.s32 %v8207, %v8209
        %v8211 = vrot.slane %v8197, %v8210
        %v8212 = vcombine.low %v3952, %v3956
        %v8213 = vcombine.high %v3952, %v3956
        %v8215 = vunpack.c.l.s4 1983009808
        %v8216 = vunpack.c.0.s8 %v8215
        %v8217 = vlaneseq
        %v8218 = vshrl.u32 %v8217, 7
        %v8219 = vsub.s32 %v8216, %v8218
        %v8220 = vrot.slane %v8212, %v8219
        %v8222 = vunpack.c.l.s4 1983009808
        %v8223 = vunpack.c.0.s8 %v8222
        %v8224 = vlaneseq
        %v8225 = vshrl.u32 %v8224, 7
        %v8226 = vsub.s32 %v8223, %v8225
        %v8227 = vrot.slane %v8213, %v8226
        %v8228 = vcombine.low %v8172, %v8188
        %v8229 = vcombine.high %v8172, %v8188
        %v8231 = vunpack.c.l.s4 1934713408
        %v8232 = vunpack.c.0.s8 %v8231
        %v8233 = vlaneseq
        %v8234 = vshrl.u32 %v8233, 7
        %v8235 = vsub.s32 %v8232, %v8234
        %v8236 = vrot.slane %v8228, %v8235
        %v8238 = vunpack.c.l.s4 1934713408
        %v8239 = vunpack.c.0.s8 %v8238
        %v8240 = vlaneseq
        %v8241 = vshrl.u32 %v8240, 7
        %v8242 = vsub.s32 %v8239, %v8241
        %v8243 = vrot.slane %v8229, %v8242
        %v8244 = vcombine.low %v8179, %v8195
        %v8245 = vcombine.high %v8179, %v8195
        %v8247 = vunpack.c.l.s4 1934713408
        %v8248 = vunpack.c.0.s8 %v8247
        %v8249 = vlaneseq
        %v8250 = vshrl.u32 %v8249, 7
        %v8251 = vsub.s32 %v8248, %v8250
        %v8252 = vrot.slane %v8244, %v8251
        %v8254 = vunpack.c.l.s4 1934713408
        %v8255 = vunpack.c.0.s8 %v8254
        %v8256 = vlaneseq
        %v8257 = vshrl.u32 %v8256, 7
        %v8258 = vsub.s32 %v8255, %v8257
        %v8259 = vrot.slane %v8245, %v8258
        %v8260 = vcombine.low %v8204, %v8220
        %v8261 = vcombine.high %v8204, %v8220
        %v8263 = vunpack.c.l.s4 1934713408
        %v8264 = vunpack.c.0.s8 %v8263
        %v8265 = vlaneseq
        %v8266 = vshrl.u32 %v8265, 7
        %v8267 = vsub.s32 %v8264, %v8266
        %v8268 = vrot.slane %v8260, %v8267
        %v8270 = vunpack.c.l.s4 1934713408
        %v8271 = vunpack.c.0.s8 %v8270
        %v8272 = vlaneseq
        %v8273 = vshrl.u32 %v8272, 7
        %v8274 = vsub.s32 %v8271, %v8273
        %v8275 = vrot.slane %v8261, %v8274
        %v8276 = vcombine.low %v8211, %v8227
        %v8277 = vcombine.high %v8211, %v8227
        %v8279 = vunpack.c.l.s4 1934713408
        %v8280 = vunpack.c.0.s8 %v8279
        %v8281 = vlaneseq
        %v8282 = vshrl.u32 %v8281, 7
        %v8283 = vsub.s32 %v8280, %v8282
        %v8284 = vrot.slane %v8276, %v8283
        %v8286 = vunpack.c.l.s4 1934713408
        %v8287 = vunpack.c.0.s8 %v8286
        %v8288 = vlaneseq
        %v8289 = vshrl.u32 %v8288, 7
        %v8290 = vsub.s32 %v8287, %v8289
        %v8291 = vrot.slane %v8277, %v8290
        %v8292 = vcombine.low %v8236, %v8268
        %v8293 = vcombine.high %v8236, %v8268
        %v8294 = vcombine.low %v8243, %v8275
        %v8295 = vcombine.high %v8243, %v8275
        %v8296 = vcombine.low %v8252, %v8284
        %v8297 = vcombine.high %v8252, %v8284
        %v8298 = vcombine.low %v8259, %v8291
        %v8299 = vcombine.high %v8259, %v8291
        %v8300 = vcombine.low %v3958, %v3962
        %v8301 = vcombine.high %v3958, %v3962
        %v8303 = vunpack.c.l.s4 1983009808
        %v8304 = vunpack.c.0.s8 %v8303
        %v8305 = vlaneseq
        %v8306 = vshrl.u32 %v8305, 7
        %v8307 = vsub.s32 %v8304, %v8306
        %v8308 = vrot.slane %v8300, %v8307
        %v8310 = vunpack.c.l.s4 1983009808
        %v8311 = vunpack.c.0.s8 %v8310
        %v8312 = vlaneseq
        %v8313 = vshrl.u32 %v8312, 7
        %v8314 = vsub.s32 %v8311, %v8313
        %v8315 = vrot.slane %v8301, %v8314
        %v8316 = vcombine.low %v3960, %v3964
        %v8317 = vcombine.high %v3960, %v3964
        %v8319 = vunpack.c.l.s4 1983009808
        %v8320 = vunpack.c.0.s8 %v8319
        %v8321 = vlaneseq
        %v8322 = vshrl.u32 %v8321, 7
        %v8323 = vsub.s32 %v8320, %v8322
        %v8324 = vrot.slane %v8316, %v8323
        %v8326 = vunpack.c.l.s4 1983009808
        %v8327 = vunpack.c.0.s8 %v8326
        %v8328 = vlaneseq
        %v8329 = vshrl.u32 %v8328, 7
        %v8330 = vsub.s32 %v8327, %v8329
        %v8331 = vrot.slane %v8317, %v8330
        %v8332 = vcombine.low %v3966, %v3970
        %v8333 = vcombine.high %v3966, %v3970
        %v8335 = vunpack.c.l.s4 1983009808
        %v8336 = vunpack.c.0.s8 %v8335
        %v8337 = vlaneseq
        %v8338 = vshrl.u32 %v8337, 7
        %v8339 = vsub.s32 %v8336, %v8338
        %v8340 = vrot.slane %v8332, %v8339
        %v8342 = vunpack.c.l.s4 1983009808
        %v8343 = vunpack.c.0.s8 %v8342
        %v8344 = vlaneseq
        %v8345 = vshrl.u32 %v8344, 7
        %v8346 = vsub.s32 %v8343, %v8345
        %v8347 = vrot.slane %v8333, %v8346
        %v8348 = vcombine.low %v3968, %v3972
        %v8349 = vcombine.high %v3968, %v3972
        %v8351 = vunpack.c.l.s4 1983009808
        %v8352 = vunpack.c.0.s8 %v8351
        %v8353 = vlaneseq
        %v8354 = vshrl.u32 %v8353, 7
        %v8355 = vsub.s32 %v8352, %v8354
        %v8356 = vrot.slane %v8348, %v8355
        %v8358 = vunpack.c.l.s4 1983009808
        %v8359 = vunpack.c.0.s8 %v8358
        %v8360 = vlaneseq
        %v8361 = vshrl.u32 %v8360, 7
        %v8362 = vsub.s32 %v8359, %v8361
        %v8363 = vrot.slane %v8349, %v8362
        %v8364 = vcombine.low %v8308, %v8324
        %v8365 = vcombine.high %v8308, %v8324
        %v8367 = vunpack.c.l.s4 1934713408
        %v8368 = vunpack.c.0.s8 %v8367
        %v8369 = vlaneseq
        %v8370 = vshrl.u32 %v8369, 7
        %v8371 = vsub.s32 %v8368, %v8370
        %v8372 = vrot.slane %v8364, %v8371
        %v8374 = vunpack.c.l.s4 1934713408
        %v8375 = vunpack.c.0.s8 %v8374
        %v8376 = vlaneseq
        %v8377 = vshrl.u32 %v8376, 7
        %v8378 = vsub.s32 %v8375, %v8377
        %v8379 = vrot.slane %v8365, %v8378
        %v8380 = vcombine.low %v8315, %v8331
        %v8381 = vcombine.high %v8315, %v8331
        %v8383 = vunpack.c.l.s4 1934713408
        %v8384 = vunpack.c.0.s8 %v8383
        %v8385 = vlaneseq
        %v8386 = vshrl.u32 %v8385, 7
        %v8387 = vsub.s32 %v8384, %v8386
        %v8388 = vrot.slane %v8380, %v8387
        %v8390 = vunpack.c.l.s4 1934713408
        %v8391 = vunpack.c.0.s8 %v8390
        %v8392 = vlaneseq
        %v8393 = vshrl.u32 %v8392, 7
        %v8394 = vsub.s32 %v8391, %v8393
        %v8395 = vrot.slane %v8381, %v8394
        %v8396 = vcombine.low %v8340, %v8356
        %v8397 = vcombine.high %v8340, %v8356
        %v8399 = vunpack.c.l.s4 1934713408
        %v8400 = vunpack.c.0.s8 %v8399
        %v8401 = vlaneseq
        %v8402 = vshrl.u32 %v8401, 7
        %v8403 = vsub.s32 %v8400, %v8402
        %v8404 = vrot.slane %v8396, %v8403
        %v8406 = vunpack.c.l.s4 1934713408
        %v8407 = vunpack.c.0.s8 %v8406
        %v8408 = vlaneseq
        %v8409 = vshrl.u32 %v8408, 7
        %v8410 = vsub.s32 %v8407, %v8409
        %v8411 = vrot.slane %v8397, %v8410
        %v8412 = vcombine.low %v8347, %v8363
        %v8413 = vcombine.high %v8347, %v8363
        %v8415 = vunpack.c.l.s4 1934713408
        %v8416 = vunpack.c.0.s8 %v8415
        %v8417 = vlaneseq
        %v8418 = vshrl.u32 %v8417, 7
        %v8419 = vsub.s32 %v8416, %v8418
        %v8420 = vrot.slane %v8412, %v8419
        %v8422 = vunpack.c.l.s4 1934713408
        %v8423 = vunpack.c.0.s8 %v8422
        %v8424 = vlaneseq
        %v8425 = vshrl.u32 %v8424, 7
        %v8426 = vsub.s32 %v8423, %v8425
        %v8427 = vrot.slane %v8413, %v8426
        %v8428 = vcombine.low %v8372, %v8404
        %v8429 = vcombine.high %v8372, %v8404
        %v8430 = vcombine.low %v8379, %v8411
        %v8431 = vcombine.high %v8379, %v8411
        %v8432 = vcombine.low %v8388, %v8420
        %v8433 = vcombine.high %v8388, %v8420
        %v8434 = vcombine.low %v8395, %v8427
        %v8435 = vcombine.high %v8395, %v8427
        %v8436 = vcombine.low %v3973, %v3977
        %v8437 = vcombine.high %v3973, %v3977
        %v8439 = vunpack.c.l.s4 1983009808
        %v8440 = vunpack.c.0.s8 %v8439
        %v8441 = vlaneseq
        %v8442 = vshrl.u32 %v8441, 7
        %v8443 = vsub.s32 %v8440, %v8442
        %v8444 = vrot.slane %v8436, %v8443
        %v8446 = vunpack.c.l.s4 1983009808
        %v8447 = vunpack.c.0.s8 %v8446
        %v8448 = vlaneseq
        %v8449 = vshrl.u32 %v8448, 7
        %v8450 = vsub.s32 %v8447, %v8449
        %v8451 = vrot.slane %v8437, %v8450
        %v8452 = vcombine.low %v3975, %v3979
        %v8453 = vcombine.high %v3975, %v3979
        %v8455 = vunpack.c.l.s4 1983009808
        %v8456 = vunpack.c.0.s8 %v8455
        %v8457 = vlaneseq
        %v8458 = vshrl.u32 %v8457, 7
        %v8459 = vsub.s32 %v8456, %v8458
        %v8460 = vrot.slane %v8452, %v8459
        %v8462 = vunpack.c.l.s4 1983009808
        %v8463 = vunpack.c.0.s8 %v8462
        %v8464 = vlaneseq
        %v8465 = vshrl.u32 %v8464, 7
        %v8466 = vsub.s32 %v8463, %v8465
        %v8467 = vrot.slane %v8453, %v8466
        %v8468 = vcombine.low %v3981, %v3985
        %v8469 = vcombine.high %v3981, %v3985
        %v8471 = vunpack.c.l.s4 1983009808
        %v8472 = vunpack.c.0.s8 %v8471
        %v8473 = vlaneseq
        %v8474 = vshrl.u32 %v8473, 7
        %v8475 = vsub.s32 %v8472, %v8474
        %v8476 = vrot.slane %v8468, %v8475
        %v8478 = vunpack.c.l.s4 1983009808
        %v8479 = vunpack.c.0.s8 %v8478
        %v8480 = vlaneseq
        %v8481 = vshrl.u32 %v8480, 7
        %v8482 = vsub.s32 %v8479, %v8481
        %v8483 = vrot.slane %v8469, %v8482
        %v8484 = vcombine.low %v3983, %v3987
        %v8485 = vcombine.high %v3983, %v3987
        %v8487 = vunpack.c.l.s4 1983009808
        %v8488 = vunpack.c.0.s8 %v8487
        %v8489 = vlaneseq
        %v8490 = vshrl.u32 %v8489, 7
        %v8491 = vsub.s32 %v8488, %v8490
        %v8492 = vrot.slane %v8484, %v8491
        %v8494 = vunpack.c.l.s4 1983009808
        %v8495 = vunpack.c.0.s8 %v8494
        %v8496 = vlaneseq
        %v8497 = vshrl.u32 %v8496, 7
        %v8498 = vsub.s32 %v8495, %v8497
        %v8499 = vrot.slane %v8485, %v8498
        %v8500 = vcombine.low %v8444, %v8460
        %v8501 = vcombine.high %v8444, %v8460
        %v8503 = vunpack.c.l.s4 1934713408
        %v8504 = vunpack.c.0.s8 %v8503
        %v8505 = vlaneseq
        %v8506 = vshrl.u32 %v8505, 7
        %v8507 = vsub.s32 %v8504, %v8506
        %v8508 = vrot.slane %v8500, %v8507
        %v8510 = vunpack.c.l.s4 1934713408
        %v8511 = vunpack.c.0.s8 %v8510
        %v8512 = vlaneseq
        %v8513 = vshrl.u32 %v8512, 7
        %v8514 = vsub.s32 %v8511, %v8513
        %v8515 = vrot.slane %v8501, %v8514
        %v8516 = vcombine.low %v8451, %v8467
        %v8517 = vcombine.high %v8451, %v8467
        %v8519 = vunpack.c.l.s4 1934713408
        %v8520 = vunpack.c.0.s8 %v8519
        %v8521 = vlaneseq
        %v8522 = vshrl.u32 %v8521, 7
        %v8523 = vsub.s32 %v8520, %v8522
        %v8524 = vrot.slane %v8516, %v8523
        %v8526 = vunpack.c.l.s4 1934713408
        %v8527 = vunpack.c.0.s8 %v8526
        %v8528 = vlaneseq
        %v8529 = vshrl.u32 %v8528, 7
        %v8530 = vsub.s32 %v8527, %v8529
        %v8531 = vrot.slane %v8517, %v8530
        %v8532 = vcombine.low %v8476, %v8492
        %v8533 = vcombine.high %v8476, %v8492
        %v8535 = vunpack.c.l.s4 1934713408
        %v8536 = vunpack.c.0.s8 %v8535
        %v8537 = vlaneseq
        %v8538 = vshrl.u32 %v8537, 7
        %v8539 = vsub.s32 %v8536, %v8538
        %v8540 = vrot.slane %v8532, %v8539
        %v8542 = vunpack.c.l.s4 1934713408
        %v8543 = vunpack.c.0.s8 %v8542
        %v8544 = vlaneseq
        %v8545 = vshrl.u32 %v8544, 7
        %v8546 = vsub.s32 %v8543, %v8545
        %v8547 = vrot.slane %v8533, %v8546
        %v8548 = vcombine.low %v8483, %v8499
        %v8549 = vcombine.high %v8483, %v8499
        %v8551 = vunpack.c.l.s4 1934713408
        %v8552 = vunpack.c.0.s8 %v8551
        %v8553 = vlaneseq
        %v8554 = vshrl.u32 %v8553, 7
        %v8555 = vsub.s32 %v8552, %v8554
        %v8556 = vrot.slane %v8548, %v8555
        %v8558 = vunpack.c.l.s4 1934713408
        %v8559 = vunpack.c.0.s8 %v8558
        %v8560 = vlaneseq
        %v8561 = vshrl.u32 %v8560, 7
        %v8562 = vsub.s32 %v8559, %v8561
        %v8563 = vrot.slane %v8549, %v8562
        %v8564 = vcombine.low %v8508, %v8540
        %v8565 = vcombine.high %v8508, %v8540
        %v8566 = vcombine.low %v8515, %v8547
        %v8567 = vcombine.high %v8515, %v8547
        %v8568 = vcombine.low %v8524, %v8556
        %v8569 = vcombine.high %v8524, %v8556
        %v8570 = vcombine.low %v8531, %v8563
        %v8571 = vcombine.high %v8531, %v8563
        %v8572 = vcombine.low %v3989, %v3993
        %v8573 = vcombine.high %v3989, %v3993
        %v8575 = vunpack.c.l.s4 1983009808
        %v8576 = vunpack.c.0.s8 %v8575
        %v8577 = vlaneseq
        %v8578 = vshrl.u32 %v8577, 7
        %v8579 = vsub.s32 %v8576, %v8578
        %v8580 = vrot.slane %v8572, %v8579
        %v8582 = vunpack.c.l.s4 1983009808
        %v8583 = vunpack.c.0.s8 %v8582
        %v8584 = vlaneseq
        %v8585 = vshrl.u32 %v8584, 7
        %v8586 = vsub.s32 %v8583, %v8585
        %v8587 = vrot.slane %v8573, %v8586
        %v8588 = vcombine.low %v3991, %v3995
        %v8589 = vcombine.high %v3991, %v3995
        %v8591 = vunpack.c.l.s4 1983009808
        %v8592 = vunpack.c.0.s8 %v8591
        %v8593 = vlaneseq
        %v8594 = vshrl.u32 %v8593, 7
        %v8595 = vsub.s32 %v8592, %v8594
        %v8596 = vrot.slane %v8588, %v8595
        %v8598 = vunpack.c.l.s4 1983009808
        %v8599 = vunpack.c.0.s8 %v8598
        %v8600 = vlaneseq
        %v8601 = vshrl.u32 %v8600, 7
        %v8602 = vsub.s32 %v8599, %v8601
        %v8603 = vrot.slane %v8589, %v8602
        %v8604 = vcombine.low %v3997, %v4001
        %v8605 = vcombine.high %v3997, %v4001
        %v8607 = vunpack.c.l.s4 1983009808
        %v8608 = vunpack.c.0.s8 %v8607
        %v8609 = vlaneseq
        %v8610 = vshrl.u32 %v8609, 7
        %v8611 = vsub.s32 %v8608, %v8610
        %v8612 = vrot.slane %v8604, %v8611
        %v8614 = vunpack.c.l.s4 1983009808
        %v8615 = vunpack.c.0.s8 %v8614
        %v8616 = vlaneseq
        %v8617 = vshrl.u32 %v8616, 7
        %v8618 = vsub.s32 %v8615, %v8617
        %v8619 = vrot.slane %v8605, %v8618
        %v8620 = vcombine.low %v3999, %v4003
        %v8621 = vcombine.high %v3999, %v4003
        %v8623 = vunpack.c.l.s4 1983009808
        %v8624 = vunpack.c.0.s8 %v8623
        %v8625 = vlaneseq
        %v8626 = vshrl.u32 %v8625, 7
        %v8627 = vsub.s32 %v8624, %v8626
        %v8628 = vrot.slane %v8620, %v8627
        %v8630 = vunpack.c.l.s4 1983009808
        %v8631 = vunpack.c.0.s8 %v8630
        %v8632 = vlaneseq
        %v8633 = vshrl.u32 %v8632, 7
        %v8634 = vsub.s32 %v8631, %v8633
        %v8635 = vrot.slane %v8621, %v8634
        %v8636 = vcombine.low %v8580, %v8596
        %v8637 = vcombine.high %v8580, %v8596
        %v8639 = vunpack.c.l.s4 1934713408
        %v8640 = vunpack.c.0.s8 %v8639
        %v8641 = vlaneseq
        %v8642 = vshrl.u32 %v8641, 7
        %v8643 = vsub.s32 %v8640, %v8642
        %v8644 = vrot.slane %v8636, %v8643
        %v8646 = vunpack.c.l.s4 1934713408
        %v8647 = vunpack.c.0.s8 %v8646
        %v8648 = vlaneseq
        %v8649 = vshrl.u32 %v8648, 7
        %v8650 = vsub.s32 %v8647, %v8649
        %v8651 = vrot.slane %v8637, %v8650
        %v8652 = vcombine.low %v8587, %v8603
        %v8653 = vcombine.high %v8587, %v8603
        %v8655 = vunpack.c.l.s4 1934713408
        %v8656 = vunpack.c.0.s8 %v8655
        %v8657 = vlaneseq
        %v8658 = vshrl.u32 %v8657, 7
        %v8659 = vsub.s32 %v8656, %v8658
        %v8660 = vrot.slane %v8652, %v8659
        %v8662 = vunpack.c.l.s4 1934713408
        %v8663 = vunpack.c.0.s8 %v8662
        %v8664 = vlaneseq
        %v8665 = vshrl.u32 %v8664, 7
        %v8666 = vsub.s32 %v8663, %v8665
        %v8667 = vrot.slane %v8653, %v8666
        %v8668 = vcombine.low %v8612, %v8628
        %v8669 = vcombine.high %v8612, %v8628
        %v8671 = vunpack.c.l.s4 1934713408
        %v8672 = vunpack.c.0.s8 %v8671
        %v8673 = vlaneseq
        %v8674 = vshrl.u32 %v8673, 7
        %v8675 = vsub.s32 %v8672, %v8674
        %v8676 = vrot.slane %v8668, %v8675
        %v8678 = vunpack.c.l.s4 1934713408
        %v8679 = vunpack.c.0.s8 %v8678
        %v8680 = vlaneseq
        %v8681 = vshrl.u32 %v8680, 7
        %v8682 = vsub.s32 %v8679, %v8681
        %v8683 = vrot.slane %v8669, %v8682
        %v8684 = vcombine.low %v8619, %v8635
        %v8685 = vcombine.high %v8619, %v8635
        %v8687 = vunpack.c.l.s4 1934713408
        %v8688 = vunpack.c.0.s8 %v8687
        %v8689 = vlaneseq
        %v8690 = vshrl.u32 %v8689, 7
        %v8691 = vsub.s32 %v8688, %v8690
        %v8692 = vrot.slane %v8684, %v8691
        %v8694 = vunpack.c.l.s4 1934713408
        %v8695 = vunpack.c.0.s8 %v8694
        %v8696 = vlaneseq
        %v8697 = vshrl.u32 %v8696, 7
        %v8698 = vsub.s32 %v8695, %v8697
        %v8699 = vrot.slane %v8685, %v8698
        %v8700 = vcombine.low %v8644, %v8676
        %v8701 = vcombine.high %v8644, %v8676
        %v8702 = vcombine.low %v8651, %v8683
        %v8703 = vcombine.high %v8651, %v8683
        %v8704 = vcombine.low %v8660, %v8692
        %v8705 = vcombine.high %v8660, %v8692
        %v8706 = vcombine.low %v8667, %v8699
        %v8707 = vcombine.high %v8667, %v8699
        %v8708 = vcombine.low %v3974, %v3978
        %v8709 = vcombine.high %v3974, %v3978
        %v8711 = vunpack.c.l.s4 1983009808
        %v8712 = vunpack.c.0.s8 %v8711
        %v8713 = vlaneseq
        %v8714 = vshrl.u32 %v8713, 7
        %v8715 = vsub.s32 %v8712, %v8714
        %v8716 = vrot.slane %v8708, %v8715
        %v8718 = vunpack.c.l.s4 1983009808
        %v8719 = vunpack.c.0.s8 %v8718
        %v8720 = vlaneseq
        %v8721 = vshrl.u32 %v8720, 7
        %v8722 = vsub.s32 %v8719, %v8721
        %v8723 = vrot.slane %v8709, %v8722
        %v8724 = vcombine.low %v3976, %v3980
        %v8725 = vcombine.high %v3976, %v3980
        %v8727 = vunpack.c.l.s4 1983009808
        %v8728 = vunpack.c.0.s8 %v8727
        %v8729 = vlaneseq
        %v8730 = vshrl.u32 %v8729, 7
        %v8731 = vsub.s32 %v8728, %v8730
        %v8732 = vrot.slane %v8724, %v8731
        %v8734 = vunpack.c.l.s4 1983009808
        %v8735 = vunpack.c.0.s8 %v8734
        %v8736 = vlaneseq
        %v8737 = vshrl.u32 %v8736, 7
        %v8738 = vsub.s32 %v8735, %v8737
        %v8739 = vrot.slane %v8725, %v8738
        %v8740 = vcombine.low %v3982, %v3986
        %v8741 = vcombine.high %v3982, %v3986
        %v8743 = vunpack.c.l.s4 1983009808
        %v8744 = vunpack.c.0.s8 %v8743
        %v8745 = vlaneseq
        %v8746 = vshrl.u32 %v8745, 7
        %v8747 = vsub.s32 %v8744, %v8746
        %v8748 = vrot.slane %v8740, %v8747
        %v8750 = vunpack.c.l.s4 1983009808
        %v8751 = vunpack.c.0.s8 %v8750
        %v8752 = vlaneseq
        %v8753 = vshrl.u32 %v8752, 7
        %v8754 = vsub.s32 %v8751, %v8753
        %v8755 = vrot.slane %v8741, %v8754
        %v8756 = vcombine.low %v3984, %v3988
        %v8757 = vcombine.high %v3984, %v3988
        %v8759 = vunpack.c.l.s4 1983009808
        %v8760 = vunpack.c.0.s8 %v8759
        %v8761 = vlaneseq
        %v8762 = vshrl.u32 %v8761, 7
        %v8763 = vsub.s32 %v8760, %v8762
        %v8764 = vrot.slane %v8756, %v8763
        %v8766 = vunpack.c.l.s4 1983009808
        %v8767 = vunpack.c.0.s8 %v8766
        %v8768 = vlaneseq
        %v8769 = vshrl.u32 %v8768, 7
        %v8770 = vsub.s32 %v8767, %v8769
        %v8771 = vrot.slane %v8757, %v8770
        %v8772 = vcombine.low %v8716, %v8732
        %v8773 = vcombine.high %v8716, %v8732
        %v8775 = vunpack.c.l.s4 1934713408
        %v8776 = vunpack.c.0.s8 %v8775
        %v8777 = vlaneseq
        %v8778 = vshrl.u32 %v8777, 7
        %v8779 = vsub.s32 %v8776, %v8778
        %v8780 = vrot.slane %v8772, %v8779
        %v8782 = vunpack.c.l.s4 1934713408
        %v8783 = vunpack.c.0.s8 %v8782
        %v8784 = vlaneseq
        %v8785 = vshrl.u32 %v8784, 7
        %v8786 = vsub.s32 %v8783, %v8785
        %v8787 = vrot.slane %v8773, %v8786
        %v8788 = vcombine.low %v8723, %v8739
        %v8789 = vcombine.high %v8723, %v8739
        %v8791 = vunpack.c.l.s4 1934713408
        %v8792 = vunpack.c.0.s8 %v8791
        %v8793 = vlaneseq
        %v8794 = vshrl.u32 %v8793, 7
        %v8795 = vsub.s32 %v8792, %v8794
        %v8796 = vrot.slane %v8788, %v8795
        %v8798 = vunpack.c.l.s4 1934713408
        %v8799 = vunpack.c.0.s8 %v8798
        %v8800 = vlaneseq
        %v8801 = vshrl.u32 %v8800, 7
        %v8802 = vsub.s32 %v8799, %v8801
        %v8803 = vrot.slane %v8789, %v8802
        %v8804 = vcombine.low %v8748, %v8764
        %v8805 = vcombine.high %v8748, %v8764
        %v8807 = vunpack.c.l.s4 1934713408
        %v8808 = vunpack.c.0.s8 %v8807
        %v8809 = vlaneseq
        %v8810 = vshrl.u32 %v8809, 7
        %v8811 = vsub.s32 %v8808, %v8810
        %v8812 = vrot.slane %v8804, %v8811
        %v8814 = vunpack.c.l.s4 1934713408
        %v8815 = vunpack.c.0.s8 %v8814
        %v8816 = vlaneseq
        %v8817 = vshrl.u32 %v8816, 7
        %v8818 = vsub.s32 %v8815, %v8817
        %v8819 = vrot.slane %v8805, %v8818
        %v8820 = vcombine.low %v8755, %v8771
        %v8821 = vcombine.high %v8755, %v8771
        %v8823 = vunpack.c.l.s4 1934713408
        %v8824 = vunpack.c.0.s8 %v8823
        %v8825 = vlaneseq
        %v8826 = vshrl.u32 %v8825, 7
        %v8827 = vsub.s32 %v8824, %v8826
        %v8828 = vrot.slane %v8820, %v8827
        %v8830 = vunpack.c.l.s4 1934713408
        %v8831 = vunpack.c.0.s8 %v8830
        %v8832 = vlaneseq
        %v8833 = vshrl.u32 %v8832, 7
        %v8834 = vsub.s32 %v8831, %v8833
        %v8835 = vrot.slane %v8821, %v8834
        %v8836 = vcombine.low %v8780, %v8812
        %v8837 = vcombine.high %v8780, %v8812
        %v8838 = vcombine.low %v8787, %v8819
        %v8839 = vcombine.high %v8787, %v8819
        %v8840 = vcombine.low %v8796, %v8828
        %v8841 = vcombine.high %v8796, %v8828
        %v8842 = vcombine.low %v8803, %v8835
        %v8843 = vcombine.high %v8803, %v8835
        %v8844 = vcombine.low %v3990, %v3994
        %v8845 = vcombine.high %v3990, %v3994
        %v8847 = vunpack.c.l.s4 1983009808
        %v8848 = vunpack.c.0.s8 %v8847
        %v8849 = vlaneseq
        %v8850 = vshrl.u32 %v8849, 7
        %v8851 = vsub.s32 %v8848, %v8850
        %v8852 = vrot.slane %v8844, %v8851
        %v8854 = vunpack.c.l.s4 1983009808
        %v8855 = vunpack.c.0.s8 %v8854
        %v8856 = vlaneseq
        %v8857 = vshrl.u32 %v8856, 7
        %v8858 = vsub.s32 %v8855, %v8857
        %v8859 = vrot.slane %v8845, %v8858
        %v8860 = vcombine.low %v3992, %v3996
        %v8861 = vcombine.high %v3992, %v3996
        %v8863 = vunpack.c.l.s4 1983009808
        %v8864 = vunpack.c.0.s8 %v8863
        %v8865 = vlaneseq
        %v8866 = vshrl.u32 %v8865, 7
        %v8867 = vsub.s32 %v8864, %v8866
        %v8868 = vrot.slane %v8860, %v8867
        %v8870 = vunpack.c.l.s4 1983009808
        %v8871 = vunpack.c.0.s8 %v8870
        %v8872 = vlaneseq
        %v8873 = vshrl.u32 %v8872, 7
        %v8874 = vsub.s32 %v8871, %v8873
        %v8875 = vrot.slane %v8861, %v8874
        %v8876 = vcombine.low %v3998, %v4002
        %v8877 = vcombine.high %v3998, %v4002
        %v8879 = vunpack.c.l.s4 1983009808
        %v8880 = vunpack.c.0.s8 %v8879
        %v8881 = vlaneseq
        %v8882 = vshrl.u32 %v8881, 7
        %v8883 = vsub.s32 %v8880, %v8882
        %v8884 = vrot.slane %v8876, %v8883
        %v8886 = vunpack.c.l.s4 1983009808
        %v8887 = vunpack.c.0.s8 %v8886
        %v8888 = vlaneseq
        %v8889 = vshrl.u32 %v8888, 7
        %v8890 = vsub.s32 %v8887, %v8889
        %v8891 = vrot.slane %v8877, %v8890
        %v8892 = vcombine.low %v4000, %v4004
        %v8893 = vcombine.high %v4000, %v4004
        %v8895 = vunpack.c.l.s4 1983009808
        %v8896 = vunpack.c.0.s8 %v8895
        %v8897 = vlaneseq
        %v8898 = vshrl.u32 %v8897, 7
        %v8899 = vsub.s32 %v8896, %v8898
        %v8900 = vrot.slane %v8892, %v8899
        %v8902 = vunpack.c.l.s4 1983009808
        %v8903 = vunpack.c.0.s8 %v8902
        %v8904 = vlaneseq
        %v8905 = vshrl.u32 %v8904, 7
        %v8906 = vsub.s32 %v8903, %v8905
        %v8907 = vrot.slane %v8893, %v8906
        %v8908 = vcombine.low %v8852, %v8868
        %v8909 = vcombine.high %v8852, %v8868
        %v8911 = vunpack.c.l.s4 1934713408
        %v8912 = vunpack.c.0.s8 %v8911
        %v8913 = vlaneseq
        %v8914 = vshrl.u32 %v8913, 7
        %v8915 = vsub.s32 %v8912, %v8914
        %v8916 = vrot.slane %v8908, %v8915
        %v8918 = vunpack.c.l.s4 1934713408
        %v8919 = vunpack.c.0.s8 %v8918
        %v8920 = vlaneseq
        %v8921 = vshrl.u32 %v8920, 7
        %v8922 = vsub.s32 %v8919, %v8921
        %v8923 = vrot.slane %v8909, %v8922
        %v8924 = vcombine.low %v8859, %v8875
        %v8925 = vcombine.high %v8859, %v8875
        %v8927 = vunpack.c.l.s4 1934713408
        %v8928 = vunpack.c.0.s8 %v8927
        %v8929 = vlaneseq
        %v8930 = vshrl.u32 %v8929, 7
        %v8931 = vsub.s32 %v8928, %v8930
        %v8932 = vrot.slane %v8924, %v8931
        %v8934 = vunpack.c.l.s4 1934713408
        %v8935 = vunpack.c.0.s8 %v8934
        %v8936 = vlaneseq
        %v8937 = vshrl.u32 %v8936, 7
        %v8938 = vsub.s32 %v8935, %v8937
        %v8939 = vrot.slane %v8925, %v8938
        %v8940 = vcombine.low %v8884, %v8900
        %v8941 = vcombine.high %v8884, %v8900
        %v8943 = vunpack.c.l.s4 1934713408
        %v8944 = vunpack.c.0.s8 %v8943
        %v8945 = vlaneseq
        %v8946 = vshrl.u32 %v8945, 7
        %v8947 = vsub.s32 %v8944, %v8946
        %v8948 = vrot.slane %v8940, %v8947
        %v8950 = vunpack.c.l.s4 1934713408
        %v8951 = vunpack.c.0.s8 %v8950
        %v8952 = vlaneseq
        %v8953 = vshrl.u32 %v8952, 7
        %v8954 = vsub.s32 %v8951, %v8953
        %v8955 = vrot.slane %v8941, %v8954
        %v8956 = vcombine.low %v8891, %v8907
        %v8957 = vcombine.high %v8891, %v8907
        %v8959 = vunpack.c.l.s4 1934713408
        %v8960 = vunpack.c.0.s8 %v8959
        %v8961 = vlaneseq
        %v8962 = vshrl.u32 %v8961, 7
        %v8963 = vsub.s32 %v8960, %v8962
        %v8964 = vrot.slane %v8956, %v8963
        %v8966 = vunpack.c.l.s4 1934713408
        %v8967 = vunpack.c.0.s8 %v8966
        %v8968 = vlaneseq
        %v8969 = vshrl.u32 %v8968, 7
        %v8970 = vsub.s32 %v8967, %v8969
        %v8971 = vrot.slane %v8957, %v8970
        %v8972 = vcombine.low %v8916, %v8948
        %v8973 = vcombine.high %v8916, %v8948
        %v8974 = vcombine.low %v8923, %v8955
        %v8975 = vcombine.high %v8923, %v8955
        %v8976 = vcombine.low %v8932, %v8964
        %v8977 = vcombine.high %v8932, %v8964
        %v8978 = vcombine.low %v8939, %v8971
        %v8979 = vcombine.high %v8939, %v8971
        %8988 = vrot.lane.b32.xlu0 %v6933, 2
        %v8989 = vpop.permute.xlu0 %8988
        %8990 = vrot.lane.b32.xlu0 %v7069, 2
        %v8991 = vpop.permute.xlu0 %8990
        %8992 = vrot.lane.b32.xlu0 %v7477, 2
        %v8993 = vpop.permute.xlu0 %8992
        %8994 = vrot.lane.b32.xlu0 %v7613, 2
        %v8995 = vpop.permute.xlu0 %8994
        %8996 = vrot.lane.b32.xlu0 %v8021, 2
        %v8997 = vpop.permute.xlu0 %8996
        %8998 = vrot.lane.b32.xlu0 %v8157, 2
        %v8999 = vpop.permute.xlu0 %8998
        %9000 = vrot.lane.b32.xlu0 %v8565, 2
        %v9001 = vpop.permute.xlu0 %9000
        %9002 = vrot.lane.b32.xlu0 %v8701, 2
        %v9003 = vpop.permute.xlu0 %9002
        %9020 = vrot.lane.b32.xlu0 %v6934, 4
        %v9021 = vpop.permute.xlu0 %9020
        %9022 = vrot.lane.b32.xlu0 %v7070, 4
        %v9023 = vpop.permute.xlu0 %9022
        %9024 = vrot.lane.b32.xlu0 %v7478, 4
        %v9025 = vpop.permute.xlu0 %9024
        %9026 = vrot.lane.b32.xlu0 %v7614, 4
        %v9027 = vpop.permute.xlu0 %9026
        %9028 = vrot.lane.b32.xlu0 %v8022, 4
        %v9029 = vpop.permute.xlu0 %9028
        %9030 = vrot.lane.b32.xlu0 %v8158, 4
        %v9031 = vpop.permute.xlu0 %9030
        %9032 = vrot.lane.b32.xlu0 %v8566, 4
        %v9033 = vpop.permute.xlu0 %9032
        %9034 = vrot.lane.b32.xlu0 %v8702, 4
        %v9035 = vpop.permute.xlu0 %9034
        %9052 = vrot.lane.b32.xlu0 %v6935, 6
        %v9053 = vpop.permute.xlu0 %9052
        %9054 = vrot.lane.b32.xlu0 %v7071, 6
        %v9055 = vpop.permute.xlu0 %9054
        %9056 = vrot.lane.b32.xlu0 %v7479, 6
        %v9057 = vpop.permute.xlu0 %9056
        %9058 = vrot.lane.b32.xlu0 %v7615, 6
        %v9059 = vpop.permute.xlu0 %9058
        %9060 = vrot.lane.b32.xlu0 %v8023, 6
        %v9061 = vpop.permute.xlu0 %9060
        %9062 = vrot.lane.b32.xlu0 %v8159, 6
        %v9063 = vpop.permute.xlu0 %9062
        %9064 = vrot.lane.b32.xlu0 %v8567, 6
        %v9065 = vpop.permute.xlu0 %9064
        %9066 = vrot.lane.b32.xlu0 %v8703, 6
        %v9067 = vpop.permute.xlu0 %9066
        %9084 = vrot.lane.b32.xlu0 %v6936, 8
        %v9085 = vpop.permute.xlu0 %9084
        %9086 = vrot.lane.b32.xlu0 %v7072, 8
        %v9087 = vpop.permute.xlu0 %9086
        %9088 = vrot.lane.b32.xlu0 %v7480, 8
        %v9089 = vpop.permute.xlu0 %9088
        %9090 = vrot.lane.b32.xlu0 %v7616, 8
        %v9091 = vpop.permute.xlu0 %9090
        %9092 = vrot.lane.b32.xlu0 %v8024, 8
        %v9093 = vpop.permute.xlu0 %9092
        %9094 = vrot.lane.b32.xlu0 %v8160, 8
        %v9095 = vpop.permute.xlu0 %9094
        %9096 = vrot.lane.b32.xlu0 %v8568, 8
        %v9097 = vpop.permute.xlu0 %9096
        %9098 = vrot.lane.b32.xlu0 %v8704, 8
        %v9099 = vpop.permute.xlu0 %9098
        %9116 = vrot.lane.b32.xlu0 %v6937, 10
        %v9117 = vpop.permute.xlu0 %9116
        %9118 = vrot.lane.b32.xlu0 %v7073, 10
        %v9119 = vpop.permute.xlu0 %9118
        %9120 = vrot.lane.b32.xlu0 %v7481, 10
        %v9121 = vpop.permute.xlu0 %9120
        %9122 = vrot.lane.b32.xlu0 %v7617, 10
        %v9123 = vpop.permute.xlu0 %9122
        %9124 = vrot.lane.b32.xlu0 %v8025, 10
        %v9125 = vpop.permute.xlu0 %9124
        %9126 = vrot.lane.b32.xlu0 %v8161, 10
        %v9127 = vpop.permute.xlu0 %9126
        %9128 = vrot.lane.b32.xlu0 %v8569, 10
        %v9129 = vpop.permute.xlu0 %9128
        %9130 = vrot.lane.b32.xlu0 %v8705, 10
        %v9131 = vpop.permute.xlu0 %9130
        %9148 = vrot.lane.b32.xlu0 %v6938, 12
        %v9149 = vpop.permute.xlu0 %9148
        %9150 = vrot.lane.b32.xlu0 %v7074, 12
        %v9151 = vpop.permute.xlu0 %9150
        %9152 = vrot.lane.b32.xlu0 %v7482, 12
        %v9153 = vpop.permute.xlu0 %9152
        %9154 = vrot.lane.b32.xlu0 %v7618, 12
        %v9155 = vpop.permute.xlu0 %9154
        %9156 = vrot.lane.b32.xlu0 %v8026, 12
        %v9157 = vpop.permute.xlu0 %9156
        %9158 = vrot.lane.b32.xlu0 %v8162, 12
        %v9159 = vpop.permute.xlu0 %9158
        %9160 = vrot.lane.b32.xlu0 %v8570, 12
        %v9161 = vpop.permute.xlu0 %9160
        %9162 = vrot.lane.b32.xlu0 %v8706, 12
        %v9163 = vpop.permute.xlu0 %9162
        %9180 = vrot.lane.b32.xlu0 %v6939, 14
        %v9181 = vpop.permute.xlu0 %9180
        %9182 = vrot.lane.b32.xlu0 %v7075, 14
        %v9183 = vpop.permute.xlu0 %9182
        %9184 = vrot.lane.b32.xlu0 %v7483, 14
        %v9185 = vpop.permute.xlu0 %9184
        %9186 = vrot.lane.b32.xlu0 %v7619, 14
        %v9187 = vpop.permute.xlu0 %9186
        %9188 = vrot.lane.b32.xlu0 %v8027, 14
        %v9189 = vpop.permute.xlu0 %9188
        %9190 = vrot.lane.b32.xlu0 %v8163, 14
        %v9191 = vpop.permute.xlu0 %9190
        %9192 = vrot.lane.b32.xlu0 %v8571, 14
        %v9193 = vpop.permute.xlu0 %9192
        %9194 = vrot.lane.b32.xlu0 %v8707, 14
        %v9195 = vpop.permute.xlu0 %9194
        %9212 = vrot.lane.b32.xlu0 %v7204, 16
        %v9213 = vpop.permute.xlu0 %9212
        %9214 = vrot.lane.b32.xlu0 %v7340, 16
        %v9215 = vpop.permute.xlu0 %9214
        %9216 = vrot.lane.b32.xlu0 %v7748, 16
        %v9217 = vpop.permute.xlu0 %9216
        %9218 = vrot.lane.b32.xlu0 %v7884, 16
        %v9219 = vpop.permute.xlu0 %9218
        %9220 = vrot.lane.b32.xlu0 %v8292, 16
        %v9221 = vpop.permute.xlu0 %9220
        %9222 = vrot.lane.b32.xlu0 %v8428, 16
        %v9223 = vpop.permute.xlu0 %9222
        %9224 = vrot.lane.b32.xlu0 %v8836, 16
        %v9225 = vpop.permute.xlu0 %9224
        %9226 = vrot.lane.b32.xlu0 %v8972, 16
        %v9227 = vpop.permute.xlu0 %9226
        %9244 = vrot.lane.b32.xlu0 %v7205, 18
        %v9245 = vpop.permute.xlu0 %9244
        %9246 = vrot.lane.b32.xlu0 %v7341, 18
        %v9247 = vpop.permute.xlu0 %9246
        %9248 = vrot.lane.b32.xlu0 %v7749, 18
        %v9249 = vpop.permute.xlu0 %9248
        %9250 = vrot.lane.b32.xlu0 %v7885, 18
        %v9251 = vpop.permute.xlu0 %9250
        %9252 = vrot.lane.b32.xlu0 %v8293, 18
        %v9253 = vpop.permute.xlu0 %9252
        %9254 = vrot.lane.b32.xlu0 %v8429, 18
        %v9255 = vpop.permute.xlu0 %9254
        %9256 = vrot.lane.b32.xlu0 %v8837, 18
        %v9257 = vpop.permute.xlu0 %9256
        %9258 = vrot.lane.b32.xlu0 %v8973, 18
        %v9259 = vpop.permute.xlu0 %9258
        %9276 = vrot.lane.b32.xlu0 %v7206, 20
        %v9277 = vpop.permute.xlu0 %9276
        %9278 = vrot.lane.b32.xlu0 %v7342, 20
        %v9279 = vpop.permute.xlu0 %9278
        %9280 = vrot.lane.b32.xlu0 %v7750, 20
        %v9281 = vpop.permute.xlu0 %9280
        %9282 = vrot.lane.b32.xlu0 %v7886, 20
        %v9283 = vpop.permute.xlu0 %9282
        %9284 = vrot.lane.b32.xlu0 %v8294, 20
        %v9285 = vpop.permute.xlu0 %9284
        %9286 = vrot.lane.b32.xlu0 %v8430, 20
        %v9287 = vpop.permute.xlu0 %9286
        %9288 = vrot.lane.b32.xlu0 %v8838, 20
        %v9289 = vpop.permute.xlu0 %9288
        %9290 = vrot.lane.b32.xlu0 %v8974, 20
        %v9291 = vpop.permute.xlu0 %9290
        %9308 = vrot.lane.b32.xlu0 %v7207, 22
        %v9309 = vpop.permute.xlu0 %9308
        %9310 = vrot.lane.b32.xlu0 %v7343, 22
        %v9311 = vpop.permute.xlu0 %9310
        %9312 = vrot.lane.b32.xlu0 %v7751, 22
        %v9313 = vpop.permute.xlu0 %9312
        %9314 = vrot.lane.b32.xlu0 %v7887, 22
        %v9315 = vpop.permute.xlu0 %9314
        %9316 = vrot.lane.b32.xlu0 %v8295, 22
        %v9317 = vpop.permute.xlu0 %9316
        %9318 = vrot.lane.b32.xlu0 %v8431, 22
        %v9319 = vpop.permute.xlu0 %9318
        %9320 = vrot.lane.b32.xlu0 %v8839, 22
        %v9321 = vpop.permute.xlu0 %9320
        %9322 = vrot.lane.b32.xlu0 %v8975, 22
        %v9323 = vpop.permute.xlu0 %9322
        %9340 = vrot.lane.b32.xlu0 %v7208, 24
        %v9341 = vpop.permute.xlu0 %9340
        %9342 = vrot.lane.b32.xlu0 %v7344, 24
        %v9343 = vpop.permute.xlu0 %9342
        %9344 = vrot.lane.b32.xlu0 %v7752, 24
        %v9345 = vpop.permute.xlu0 %9344
        %9346 = vrot.lane.b32.xlu0 %v7888, 24
        %v9347 = vpop.permute.xlu0 %9346
        %9348 = vrot.lane.b32.xlu0 %v8296, 24
        %v9349 = vpop.permute.xlu0 %9348
        %9350 = vrot.lane.b32.xlu0 %v8432, 24
        %v9351 = vpop.permute.xlu0 %9350
        %9352 = vrot.lane.b32.xlu0 %v8840, 24
        %v9353 = vpop.permute.xlu0 %9352
        %9354 = vrot.lane.b32.xlu0 %v8976, 24
        %v9355 = vpop.permute.xlu0 %9354
        %9372 = vrot.lane.b32.xlu0 %v7209, 26
        %v9373 = vpop.permute.xlu0 %9372
        %9374 = vrot.lane.b32.xlu0 %v7345, 26
        %v9375 = vpop.permute.xlu0 %9374
        %9376 = vrot.lane.b32.xlu0 %v7753, 26
        %v9377 = vpop.permute.xlu0 %9376
        %9378 = vrot.lane.b32.xlu0 %v7889, 26
        %v9379 = vpop.permute.xlu0 %9378
        %9380 = vrot.lane.b32.xlu0 %v8297, 26
        %v9381 = vpop.permute.xlu0 %9380
        %9382 = vrot.lane.b32.xlu0 %v8433, 26
        %v9383 = vpop.permute.xlu0 %9382
        %9384 = vrot.lane.b32.xlu0 %v8841, 26
        %v9385 = vpop.permute.xlu0 %9384
        %9386 = vrot.lane.b32.xlu0 %v8977, 26
        %v9387 = vpop.permute.xlu0 %9386
        %9404 = vrot.lane.b32.xlu0 %v7210, 28
        %v9405 = vpop.permute.xlu0 %9404
        %9406 = vrot.lane.b32.xlu0 %v7346, 28
        %v9407 = vpop.permute.xlu0 %9406
        %9408 = vrot.lane.b32.xlu0 %v7754, 28
        %v9409 = vpop.permute.xlu0 %9408
        %9410 = vrot.lane.b32.xlu0 %v7890, 28
        %v9411 = vpop.permute.xlu0 %9410
        %9412 = vrot.lane.b32.xlu0 %v8298, 28
        %v9413 = vpop.permute.xlu0 %9412
        %9414 = vrot.lane.b32.xlu0 %v8434, 28
        %v9415 = vpop.permute.xlu0 %9414
        %9416 = vrot.lane.b32.xlu0 %v8842, 28
        %v9417 = vpop.permute.xlu0 %9416
        %9418 = vrot.lane.b32.xlu0 %v8978, 28
        %v9419 = vpop.permute.xlu0 %9418
        %9436 = vrot.lane.b32.xlu0 %v7211, 30
        %v9437 = vpop.permute.xlu0 %9436
        %9438 = vrot.lane.b32.xlu0 %v7347, 30
        %v9439 = vpop.permute.xlu0 %9438
        %9440 = vrot.lane.b32.xlu0 %v7755, 30
        %v9441 = vpop.permute.xlu0 %9440
        %9442 = vrot.lane.b32.xlu0 %v7891, 30
        %v9443 = vpop.permute.xlu0 %9442
        %9444 = vrot.lane.b32.xlu0 %v8299, 30
        %v9445 = vpop.permute.xlu0 %9444
        %9446 = vrot.lane.b32.xlu0 %v8435, 30
        %v9447 = vpop.permute.xlu0 %9446
        %9448 = vrot.lane.b32.xlu0 %v8843, 30
        %v9449 = vpop.permute.xlu0 %9448
        %9450 = vrot.lane.b32.xlu0 %v8979, 30
        %v9451 = vpop.permute.xlu0 %9450
        %v9460 = vsel %vm6661, %v6932, %v8989
        %v9461 = vsel %vm6661, %v7068, %v8991
        %v9462 = vsel %vm6661, %v7476, %v8993
        %v9463 = vsel %vm6661, %v7612, %v8995
        %v9464 = vsel %vm6661, %v8020, %v8997
        %v9465 = vsel %vm6661, %v8156, %v8999
        %v9466 = vsel %vm6661, %v8564, %v9001
        %v9467 = vsel %vm6661, %v8700, %v9003
        %v9468 = vsel %vm6670, %v9460, %v9021
        %v9469 = vsel %vm6670, %v9461, %v9023
        %v9470 = vsel %vm6670, %v9462, %v9025
        %v9471 = vsel %vm6670, %v9463, %v9027
        %v9472 = vsel %vm6670, %v9464, %v9029
        %v9473 = vsel %vm6670, %v9465, %v9031
        %v9474 = vsel %vm6670, %v9466, %v9033
        %v9475 = vsel %vm6670, %v9467, %v9035
        %v9476 = vsel %vm6679, %v9468, %v9053
        %v9477 = vsel %vm6679, %v9469, %v9055
        %v9478 = vsel %vm6679, %v9470, %v9057
        %v9479 = vsel %vm6679, %v9471, %v9059
        %v9480 = vsel %vm6679, %v9472, %v9061
        %v9481 = vsel %vm6679, %v9473, %v9063
        %v9482 = vsel %vm6679, %v9474, %v9065
        %v9483 = vsel %vm6679, %v9475, %v9067
        %v9484 = vsel %vm216, %v9476, %v9085
        %v9485 = vsel %vm216, %v9477, %v9087
        %v9486 = vsel %vm216, %v9478, %v9089
        %v9487 = vsel %vm216, %v9479, %v9091
        %v9488 = vsel %vm216, %v9480, %v9093
        %v9489 = vsel %vm216, %v9481, %v9095
        %v9490 = vsel %vm216, %v9482, %v9097
        %v9491 = vsel %vm216, %v9483, %v9099
        %v9492 = vsel %vm6696, %v9484, %v9117
        %v9493 = vsel %vm6696, %v9485, %v9119
        %v9494 = vsel %vm6696, %v9486, %v9121
        %v9495 = vsel %vm6696, %v9487, %v9123
        %v9496 = vsel %vm6696, %v9488, %v9125
        %v9497 = vsel %vm6696, %v9489, %v9127
        %v9498 = vsel %vm6696, %v9490, %v9129
        %v9499 = vsel %vm6696, %v9491, %v9131
        %v9500 = vsel %vm6705, %v9492, %v9149
        %v9501 = vsel %vm6705, %v9493, %v9151
        %v9502 = vsel %vm6705, %v9494, %v9153
        %v9503 = vsel %vm6705, %v9495, %v9155
        %v9504 = vsel %vm6705, %v9496, %v9157
        %v9505 = vsel %vm6705, %v9497, %v9159
        %v9506 = vsel %vm6705, %v9498, %v9161
        %v9507 = vsel %vm6705, %v9499, %v9163
        %v9508 = vsel %vm6714, %v9500, %v9181
        %v9509 = vsel %vm6714, %v9501, %v9183
        %v9510 = vsel %vm6714, %v9502, %v9185
        %v9511 = vsel %vm6714, %v9503, %v9187
        %v9512 = vsel %vm6714, %v9504, %v9189
        %v9513 = vsel %vm6714, %v9505, %v9191
        %v9514 = vsel %vm6714, %v9506, %v9193
        %v9515 = vsel %vm6714, %v9507, %v9195
        %v9516 = vsel %vm6723, %v9508, %v9213
        %v9517 = vsel %vm6723, %v9509, %v9215
        %v9518 = vsel %vm6723, %v9510, %v9217
        %v9519 = vsel %vm6723, %v9511, %v9219
        %v9520 = vsel %vm6723, %v9512, %v9221
        %v9521 = vsel %vm6723, %v9513, %v9223
        %v9522 = vsel %vm6723, %v9514, %v9225
        %v9523 = vsel %vm6723, %v9515, %v9227
        %v9524 = vsel %vm6732, %v9516, %v9245
        %v9525 = vsel %vm6732, %v9517, %v9247
        %v9526 = vsel %vm6732, %v9518, %v9249
        %v9527 = vsel %vm6732, %v9519, %v9251
        %v9528 = vsel %vm6732, %v9520, %v9253
        %v9529 = vsel %vm6732, %v9521, %v9255
        %v9530 = vsel %vm6732, %v9522, %v9257
        %v9531 = vsel %vm6732, %v9523, %v9259
        %v9532 = vsel %vm6741, %v9524, %v9277
        %v9533 = vsel %vm6741, %v9525, %v9279
        %v9534 = vsel %vm6741, %v9526, %v9281
        %v9535 = vsel %vm6741, %v9527, %v9283
        %v9536 = vsel %vm6741, %v9528, %v9285
        %v9537 = vsel %vm6741, %v9529, %v9287
        %v9538 = vsel %vm6741, %v9530, %v9289
        %v9539 = vsel %vm6741, %v9531, %v9291
        %v9540 = vsel %vm6750, %v9532, %v9309
        %v9541 = vsel %vm6750, %v9533, %v9311
        %v9542 = vsel %vm6750, %v9534, %v9313
        %v9543 = vsel %vm6750, %v9535, %v9315
        %v9544 = vsel %vm6750, %v9536, %v9317
        %v9545 = vsel %vm6750, %v9537, %v9319
        %v9546 = vsel %vm6750, %v9538, %v9321
        %v9547 = vsel %vm6750, %v9539, %v9323
        %v9548 = vsel %vm6759, %v9540, %v9341
        %v9549 = vsel %vm6759, %v9541, %v9343
        %v9550 = vsel %vm6759, %v9542, %v9345
        %v9551 = vsel %vm6759, %v9543, %v9347
        %v9552 = vsel %vm6759, %v9544, %v9349
        %v9553 = vsel %vm6759, %v9545, %v9351
        %v9554 = vsel %vm6759, %v9546, %v9353
        %v9555 = vsel %vm6759, %v9547, %v9355
        %v9556 = vsel %vm6768, %v9548, %v9373
        %v9557 = vsel %vm6768, %v9549, %v9375
        %v9558 = vsel %vm6768, %v9550, %v9377
        %v9559 = vsel %vm6768, %v9551, %v9379
        %v9560 = vsel %vm6768, %v9552, %v9381
        %v9561 = vsel %vm6768, %v9553, %v9383
        %v9562 = vsel %vm6768, %v9554, %v9385
        %v9563 = vsel %vm6768, %v9555, %v9387
        %v9564 = vsel %vm6777, %v9556, %v9405
        %v9565 = vsel %vm6777, %v9557, %v9407
        %v9566 = vsel %vm6777, %v9558, %v9409
        %v9567 = vsel %vm6777, %v9559, %v9411
        %v9568 = vsel %vm6777, %v9560, %v9413
        %v9569 = vsel %vm6777, %v9561, %v9415
        %v9570 = vsel %vm6777, %v9562, %v9417
        %v9571 = vsel %vm6777, %v9563, %v9419
        %v9572 = vsel %vm6786, %v9564, %v9437
        %v9573 = vsel %vm6786, %v9565, %v9439
        %v9574 = vsel %vm6786, %v9566, %v9441
        %v9575 = vsel %vm6786, %v9567, %v9443
        %v9576 = vsel %vm6786, %v9568, %v9445
        %v9577 = vsel %vm6786, %v9569, %v9447
        %v9578 = vsel %vm6786, %v9570, %v9449
        %v9579 = vsel %vm6786, %v9571, %v9451
        %9588 = vrot.lane.b32.xlu0 %v9572, 32
        %v9589 = vpop.permute.xlu0 %9588
        %9590 = vrot.lane.b32.xlu0 %v9573, 32
        %v9591 = vpop.permute.xlu0 %9590
        %9592 = vrot.lane.b32.xlu0 %v9574, 32
        %v9593 = vpop.permute.xlu0 %9592
        %9594 = vrot.lane.b32.xlu0 %v9575, 32
        %v9595 = vpop.permute.xlu0 %9594
        %9596 = vrot.lane.b32.xlu0 %v9576, 32
        %v9597 = vpop.permute.xlu0 %9596
        %9598 = vrot.lane.b32.xlu0 %v9577, 32
        %v9599 = vpop.permute.xlu0 %9598
        %9600 = vrot.lane.b32.xlu0 %v9578, 32
        %v9601 = vpop.permute.xlu0 %9600
        %9602 = vrot.lane.b32.xlu0 %v9579, 32
        %v9603 = vpop.permute.xlu0 %9602
        %vm9612 = vcmask 523520
        %9613 = vst.msk [vmem:[%s188] sm:$0xff] %vm9612, %v9589
        %9614 = vst.msk [vmem:[%s188 + $0x8] sm:$0xff] %vm9612, %v9591
        %9615 = vst.msk [vmem:[%s188 + $0x10] sm:$0xff] %vm9612, %v9593
        %9616 = vst.msk [vmem:[%s188 + $0x18] sm:$0xff] %vm9612, %v9595
        %9617 = vst.msk [vmem:[%s188 + $0x20] sm:$0xff] %vm9612, %v9597
        %9618 = vst.msk [vmem:[%s188 + $0x28] sm:$0xff] %vm9612, %v9599
        %9619 = vst.msk [vmem:[%s188 + $0x30] sm:$0xff] %vm9612, %v9601
        %9620 = vst.msk [vmem:[%s188 + $0x38] sm:$0xff] %vm9612, %v9603
        %s9621 = sand.u32 %s109, 1
        %s9622 = scalar_lea.sflag [#allocation3], %s9621
        %s9623 = sand.u32 %s109, 1
        %s9624 = smul.addr %s9623, 64
        %s9625 = scalar_lea.vmem [#allocation2], %s9624
        // Predicated region
        $region33: #{tpu_custom_call.1} parent=31 // pred_check
          %p9626 = pneg %p119
        $region34: #{tpu_custom_call.1} parent=31 // pred_check_branch
          %9628 = sbr.rel (%p9626) target = $region36
        $region35: #{tpu_custom_call.1} parent=31 // pred_region
          %s9629 = smul.u32 2, %s22
          %s9631 = ssub.s32 1024, 1024
          %9632 = vsyncadd %s9622, %s9631
          %s9633 = smul.addr %s21, 8
          %s9634 = sadd.s32 %s9629, %s9633
          %s9635 = smul.addr %s9634, 128
          %s9636 = scalar_lea.hbm %s3, %s9635
          %s9637 = sshll.u32 %s9625, 4
          %s9638 = int_to_ptr.vmem [resolvable:$true] %s9637
          %9643 = dma.vmem_to_hbm [thread:$0]  %s9638, 1024, %s9636, %s9622, 128, 128, 8
        $region36: #{tpu_custom_call.1} parent=31 // pred_fallthru
          _
      $region32: #{tpu_custom_call.1} parent=5 // pred_fallthru
        _
      %p9644 = scmp.le.s32.totalorder 2, %s12
      // Predicated region
      $region37: #{tpu_custom_call.1} parent=5 // pred_check
        %p9645 = pneg %p9644
      $region38: #{tpu_custom_call.1} parent=5 // pred_check_branch
        %9647 = sbr.rel (%p9645) target = $region40
      $region39: #{tpu_custom_call.1} parent=5 // pred_region
        %s9648 = ssub.s32 %s12, 2
        // Predicated region
        $region41: #{tpu_custom_call.1} parent=39 // pred_check
          %p9649 = pneg %p125
        $region42: #{tpu_custom_call.1} parent=39 // pred_check_branch
          %9651 = sbr.rel (%p9649) target = $region44
        $region43: #{tpu_custom_call.1} parent=39 // pred_region
          %s9652 = sand.u32 %s110, 1
          %s9653 = scalar_lea.sflag [#allocation3], %s9652
          %s9654 = sand.u32 %s110, 1
          %s9655 = smul.addr %s9654, 64
          %s9656 = scalar_lea.vmem [#allocation2], %s9655
          %9657 = dma.done %s9653, 1024
        $region44: #{tpu_custom_call.1} parent=39 // pred_fallthru
          _
      $region40: #{tpu_custom_call.1} parent=5 // pred_fallthru
        _
    $region6: #{tpu_custom_call.1} parent=1 // loop_footer
      %s16 = sadd.s32 1, %s12
    $region7: #{tpu_custom_call.1} parent=1 // loop_footer_branch
      %11 = sbr.rel target = $region3
    $region8: #{tpu_custom_call.1} parent=1 // loop_exit
      _
    %9658 = vsyncpa [#allocation3], 1
    %s9659 = scalar_lea.sflag [#allocation3], 1
    %9660 = vsyncpa %s9659, 1

</llo_original>
